<compile_context>
chip_gen: v7x
topology: tpu7x:2x2x1
jax: 0.10.0
libtpu: 0.0.40
codegen_flags: <defaults>
</compile_context>

<pallas_src>
import functools

import jax
import jax.numpy as jnp
from jax.experimental import pallas as pl
from jax.experimental.pallas import tpu as pltpu


_VMEM_LIMIT = 32 * 1024 * 1024  # safe scoped-VMEM cap on v5e/v6e/v7x


# ----------------------------------------------------------------------------
# activations (semantics of nn.SiLU / nn.GELU(approximate='none'))
# ----------------------------------------------------------------------------
def _silu(z):
    # z * sigmoid(z); reciprocal goes to the EUP slot (approx is well within
    # the bf16-operand tolerance of this kernel).
    return z * pl.reciprocal(1.0 + jnp.exp(-z), approx=True)


def _gelu(z):
    # exact erf GELU (PyTorch default)
    return 0.5 * z * (1.0 + jax.lax.erf(z * jnp.float32(0.7071067811865476)))


# ----------------------------------------------------------------------------
# fused kernel: one image (one grid step) = full C2f_CMUNeXtB forward
# activations are (C, M) with M = H*W on the lane axis
# ----------------------------------------------------------------------------
def _c2f_kernel(*refs, n, H, W, c):
    x_ref = refs[0]
    w_cv1, b_cv1 = refs[1], refs[2]
    m_refs = [refs[3 + 16 * i: 3 + 16 * (i + 1)] for i in range(n)]
    w_cv2, b_cv2 = refs[3 + 16 * n], refs[4 + 16 * n]
    o_ref = refs[5 + 16 * n]
    pad_ref, patch_ref, ycat_ref = refs[6 + 16 * n:]

    M = H * W

    # Zero the halo border once; interiors are overwritten before every use.
    pad_ref[...] = jnp.zeros_like(pad_ref)

    def im2col_dot(a, w_ref, b_ref):
        """Dense 3x3 conv (stride 1, pad 1) as ONE (Cout,9c)@(9c,M) matmul."""
        pad_ref[:, 1:H + 1, 1:W + 1] = a.reshape(c, H, W)
        for ky in range(3):
            for kx in range(3):
                tap = ky * 3 + kx
                patch_ref[tap * c:(tap + 1) * c, :] = (
                    pad_ref[:, ky:ky + H, kx:kx + W].reshape(c, M))
        z = jnp.dot(w_ref[...], patch_ref[...].astype(jnp.bfloat16),
                    preferred_element_type=jnp.float32)
        return z + b_ref[...]

    def dw3x3(a, wd):
        """Depthwise 3x3 conv (pad 1). a: (c, M) f32, wd: (c, 9) f32."""
        pad_ref[:, 1:H + 1, 1:W + 1] = a.reshape(c, H, W)
        acc = jnp.zeros((c, M), jnp.float32)
        for ky in range(3):
            for kx in range(3):
                tap = pad_ref[:, ky:ky + H, kx:kx + W].reshape(c, M)
                acc = acc + tap * wd[:, ky * 3 + kx:ky * 3 + kx + 1]
        return acc

    # ---- C2f.cv1: 1x1 conv (BN folded) + SiLU -> first 2c rows of the concat
    x = x_ref[...].astype(jnp.bfloat16)                               # (C1, M)
    y01 = _silu(jnp.dot(w_cv1[...], x, preferred_element_type=jnp.float32)
                + b_cv1[...])                                         # (2c, M)
    ycat_ref[0:2 * c, :] = y01
    h = y01[c:2 * c, :]                                               # y[-1]

    for i, (w_b, b_b, w_d, b_d, s_d, t_d,
            w_p1, b_p1, s_p1, t_p1, w_p2, b_p2, s_p2, t_p2,
            w_up, b_up) in enumerate(m_refs):
        # Bottleneck.cv1: 3x3 Conv + BN(folded) + SiLU
        h = _silu(im2col_dot(h, w_b, b_b))
        # CMUNeXtBlock.block: Residual(dw3x3 + bias -> GELU -> BN)
        z = dw3x3(h, w_d[...])
        z = _gelu(z + b_d[...]) * s_d[...] + t_d[...]
        u = h + z
        # 1x1 expand (c -> 4c) + bias -> GELU -> BN (4c slab never leaves VMEM)
        z1 = jnp.dot(w_p1[...], u.astype(jnp.bfloat16),
                     preferred_element_type=jnp.float32) + b_p1[...]
        z1 = _gelu(z1) * s_p1[...] + t_p1[...]
        # 1x1 project (4c -> c) + bias -> GELU -> BN
        z2 = jnp.dot(w_p2[...], z1.astype(jnp.bfloat16),
                     preferred_element_type=jnp.float32) + b_p2[...]
        z2 = _gelu(z2) * s_p2[...] + t_p2[...]
        # CMUNeXtBlock.up: 3x3 Conv + BN(folded) + SiLU
        h = _silu(im2col_dot(z2, w_up, b_up))
        ycat_ref[(2 + i) * c:(3 + i) * c, :] = h

    # ---- C2f.cv2: 1x1 conv over concat([y0, y1, m_1..m_n]) (BN folded) + SiLU
    out = _silu(jnp.dot(w_cv2[...], ycat_ref[...].astype(jnp.bfloat16),
                        preferred_element_type=jnp.float32) + b_cv2[...])
    o_ref[...] = out.astype(o_ref.dtype)


# ----------------------------------------------------------------------------
# wrapper
# ----------------------------------------------------------------------------
def _rep_spec(a):
    """Whole-array block replicated across the grid (weights / biases)."""
    idx = (0,) * a.ndim
    return pl.BlockSpec(a.shape, lambda i, _idx=idx: _idx)


def c2f_cmunextb_forward(params, x_nchw):
    N, C1, H, W = x_nchw.shape
    M = H * W
    c = params["c"]
    n = len(params["m"])
    c2 = params["cv2"]["w"].shape[0]

    # NCHW -> (N, C, H*W): channels on sublanes, spatial on lanes.  Free
    # reshape; no transposes outside the kernel.
    x3 = x_nchw.reshape(N, C1, M)

    args = [x3, params["cv1"]["w"], params["cv1"]["b"]]
    for m in params["m"]:
        args += [m["b_cv1"]["w"], m["b_cv1"]["b"],
                 m["dw"]["w"], m["dw"]["b"], m["dw"]["s"], m["dw"]["t"],
                 m["pw1"]["w"], m["pw1"]["b"], m["pw1"]["s"], m["pw1"]["t"],
                 m["pw2"]["w"], m["pw2"]["b"], m["pw2"]["s"], m["pw2"]["t"],
                 m["up"]["w"], m["up"]["b"]]
    args += [params["cv2"]["w"], params["cv2"]["b"]]

    # One image per grid step; leading `None` dim is squeezed (pl.Squeezed()).
    in_specs = [pl.BlockSpec((None, C1, M), lambda i: (i, 0, 0))]
    in_specs += [_rep_spec(a) for a in args[1:]]

    out = pl.pallas_call(
        functools.partial(_c2f_kernel, n=n, H=H, W=W, c=c),
        out_shape=jax.ShapeDtypeStruct((N, c2, M), jnp.float32),
        grid=(N,),
        in_specs=in_specs,
        out_specs=pl.BlockSpec((None, c2, M), lambda i: (i, 0, 0)),
        scratch_shapes=[
            pltpu.VMEM((c, H + 2, W + 2), jnp.float32),   # zero-padded plane
            pltpu.VMEM((9 * c, M), jnp.float32),          # im2col patch matrix
            pltpu.VMEM(((2 + n) * c, M), jnp.float32),    # C2f concat slab
        ],
        compiler_params=pltpu.CompilerParams(
            dimension_semantics=("parallel",),    # v7x: one image per TC
            vmem_limit_bytes=_VMEM_LIMIT),
    )(*args)
    # TODO(synk): for large H*W the whole-image-per-step tiling should be split
    # spatially (halo rows via in-kernel DMA) to stay within the VMEM budget.
    return out.reshape(N, c2, H, W)


# ----------------------------------------------------------------------------
# deterministic synthetic parameters (inference BN, folded / pre-laid-out)
# ----------------------------------------------------------------------------
def _bn_fold(key, cc):
    k1, k2, k3, k4 = jax.random.split(key, 4)
    gamma = 1.0 + 0.1 * jax.random.normal(k1, (cc,), jnp.float32)
    beta = 0.1 * jax.random.normal(k2, (cc,), jnp.float32)
    mean = 0.1 * jax.random.normal(k3, (cc,), jnp.float32)
    var = jax.random.uniform(k4, (cc,), jnp.float32, minval=0.5, maxval=1.5)
    scale = gamma / jnp.sqrt(var + 1e-5)
    shift = beta - mean * scale
    return scale, shift


def _conv_bn_silu_1x1(key, cin, cout):
    kw, kb = jax.random.split(key)
    w = 0.1 * jax.random.normal(kw, (cout, cin), jnp.float32)
    s, t = _bn_fold(kb, cout)
    return dict(w=(w * s[:, None]).astype(jnp.bfloat16),     # BN folded into W
                b=t.reshape(cout, 1).astype(jnp.float32))    # BN shift as bias


def _conv_bn_silu_3x3(key, cin, cout):
    kw, kb = jax.random.split(key)
    # (Cout, ky, kx, Cin) -> (Cout, 9*Cin), tap-major / channel-minor (matches im2col)
    w = 0.1 * jax.random.normal(kw, (cout, 3, 3, cin), jnp.float32)
    s, t = _bn_fold(kb, cout)
    w = (w * s[:, None, None, None]).reshape(cout, 9 * cin)
    return dict(w=w.astype(jnp.bfloat16),
                b=t.reshape(cout, 1).astype(jnp.float32))


def _pw_gelu_bn(key, cin, cout):
    kw, kb, kbn = jax.random.split(key, 3)
    w = 0.1 * jax.random.normal(kw, (cout, cin), jnp.float32)
    b = 0.1 * jax.random.normal(kb, (cout,), jnp.float32)
    s, t = _bn_fold(kbn, cout)
    return dict(w=w.astype(jnp.bfloat16),
                b=b.reshape(cout, 1).astype(jnp.float32),
                s=s.reshape(cout, 1).astype(jnp.float32),
                t=t.reshape(cout, 1).astype(jnp.float32))


def _dw_gelu_bn(key, c):
    kw, kb, kbn = jax.random.split(key, 3)
    w = 0.1 * jax.random.normal(kw, (c, 9), jnp.float32)   # (C, ky*3+kx)
    b = 0.1 * jax.random.normal(kb, (c,), jnp.float32)
    s, t = _bn_fold(kbn, c)
    return dict(w=w.astype(jnp.float32),
                b=b.reshape(c, 1).astype(jnp.float32),
                s=s.reshape(c, 1).astype(jnp.float32),
                t=t.reshape(c, 1).astype(jnp.float32))


def init_params(key, c1, c2, n):
    c = int(c2 * 0.5)
    keys = jax.random.split(key, 2 + n)
    params = {
        "c": c,
        "cv1": _conv_bn_silu_1x1(keys[0], c1, 2 * c),
        "cv2": _conv_bn_silu_1x1(keys[1], (2 + n) * c, c2),
        "m": [],
    }
    for i in range(n):
        ks = jax.random.split(keys[2 + i], 5)
        params["m"].append(dict(
            b_cv1=_conv_bn_silu_3x3(ks[0], c, c),   # Bottleneck.cv1 (3x3 Conv+BN+SiLU)
            dw=_dw_gelu_bn(ks[1], c),               # Residual(dw3x3+bias -> GELU -> BN)
            pw1=_pw_gelu_bn(ks[2], c, 4 * c),       # 1x1 expand -> GELU -> BN
            pw2=_pw_gelu_bn(ks[3], 4 * c, c),       # 1x1 project -> GELU -> BN
            up=_conv_bn_silu_3x3(ks[4], c, c),      # CMUNeXtBlock.up (3x3 Conv+BN+SiLU)
        ))
    return params


if __name__ == "__main__":
    key = jax.random.PRNGKey(0)
    kx, kp = jax.random.split(key)

    # small config consistent with the module: C2f_CMUNeXtB(c1=8, c2=8, n=1)
    c1, c2, n = 8, 8, 1
    N, H, W = 2, 16, 16

    x = jax.random.normal(kx, (N, c1, H, W), jnp.float32)
    params = init_params(kp, c1, c2, n)

    fwd = jax.jit(functools.partial(c2f_cmunextb_forward, params))
    out = jax.block_until_ready(fwd(x))
    assert out.shape == (N, c2, H, W), out.shape
    assert bool(jnp.all(jnp.isfinite(out)))
    print("KERNEL_OK")
</pallas_src>

<mosaic_0001>
module attributes {stable_mosaic.version = 11 : i64} {
  func.func @_c2f_kernel(%arg0: i32, %arg1: memref<1x8x256xf32, #tpu.memory_space<vmem>>, %arg2: memref<8x8xbf16, #tpu.memory_space<vmem>>, %arg3: memref<8x1xf32, #tpu.memory_space<vmem>>, %arg4: memref<4x36xbf16, #tpu.memory_space<vmem>>, %arg5: memref<4x1xf32, #tpu.memory_space<vmem>>, %arg6: memref<4x9xf32, #tpu.memory_space<vmem>>, %arg7: memref<4x1xf32, #tpu.memory_space<vmem>>, %arg8: memref<4x1xf32, #tpu.memory_space<vmem>>, %arg9: memref<4x1xf32, #tpu.memory_space<vmem>>, %arg10: memref<16x4xbf16, #tpu.memory_space<vmem>>, %arg11: memref<16x1xf32, #tpu.memory_space<vmem>>, %arg12: memref<16x1xf32, #tpu.memory_space<vmem>>, %arg13: memref<16x1xf32, #tpu.memory_space<vmem>>, %arg14: memref<4x16xbf16, #tpu.memory_space<vmem>>, %arg15: memref<4x1xf32, #tpu.memory_space<vmem>>, %arg16: memref<4x1xf32, #tpu.memory_space<vmem>>, %arg17: memref<4x1xf32, #tpu.memory_space<vmem>>, %arg18: memref<4x36xbf16, #tpu.memory_space<vmem>>, %arg19: memref<4x1xf32, #tpu.memory_space<vmem>>, %arg20: memref<8x12xbf16, #tpu.memory_space<vmem>>, %arg21: memref<8x1xf32, #tpu.memory_space<vmem>>, %arg22: memref<1x8x256xf32, #tpu.memory_space<vmem>>, %arg23: memref<4x18x18xf32, #tpu.memory_space<vmem>>, %arg24: memref<36x256xf32, #tpu.memory_space<vmem>>, %arg25: memref<12x256xf32, #tpu.memory_space<vmem>>) attributes {dimension_semantics = [#tpu.dimension_semantics<parallel>], iteration_bounds = array<i64: 2>, scalar_prefetch = 0 : i64, scratch_operands = 3 : i64, tpu.core_type = #tpu.core_type<tc>, window_params = [{transform_indices = @transform_0, window_bounds = array<i64: 1, 8, 256>}, {pipeline_mode = #tpu.pipeline_mode<synchronous>, transform_indices = @transform_1, window_bounds = array<i64: 8, 8>}, {pipeline_mode = #tpu.pipeline_mode<synchronous>, transform_indices = @transform_2, window_bounds = array<i64: 8, 1>}, {pipeline_mode = #tpu.pipeline_mode<synchronous>, transform_indices = @transform_3, window_bounds = array<i64: 4, 36>}, {pipeline_mode = #tpu.pipeline_mode<synchronous>, transform_indices = @transform_4, window_bounds = array<i64: 4, 1>}, {pipeline_mode = #tpu.pipeline_mode<synchronous>, transform_indices = @transform_5, window_bounds = array<i64: 4, 9>}, {pipeline_mode = #tpu.pipeline_mode<synchronous>, transform_indices = @transform_6, window_bounds = array<i64: 4, 1>}, {pipeline_mode = #tpu.pipeline_mode<synchronous>, transform_indices = @transform_7, window_bounds = array<i64: 4, 1>}, {pipeline_mode = #tpu.pipeline_mode<synchronous>, transform_indices = @transform_8, window_bounds = array<i64: 4, 1>}, {pipeline_mode = #tpu.pipeline_mode<synchronous>, transform_indices = @transform_9, window_bounds = array<i64: 16, 4>}, {pipeline_mode = #tpu.pipeline_mode<synchronous>, transform_indices = @transform_10, window_bounds = array<i64: 16, 1>}, {pipeline_mode = #tpu.pipeline_mode<synchronous>, transform_indices = @transform_11, window_bounds = array<i64: 16, 1>}, {pipeline_mode = #tpu.pipeline_mode<synchronous>, transform_indices = @transform_12, window_bounds = array<i64: 16, 1>}, {pipeline_mode = #tpu.pipeline_mode<synchronous>, transform_indices = @transform_13, window_bounds = array<i64: 4, 16>}, {pipeline_mode = #tpu.pipeline_mode<synchronous>, transform_indices = @transform_14, window_bounds = array<i64: 4, 1>}, {pipeline_mode = #tpu.pipeline_mode<synchronous>, transform_indices = @transform_15, window_bounds = array<i64: 4, 1>}, {pipeline_mode = #tpu.pipeline_mode<synchronous>, transform_indices = @transform_16, window_bounds = array<i64: 4, 1>}, {pipeline_mode = #tpu.pipeline_mode<synchronous>, transform_indices = @transform_17, window_bounds = array<i64: 4, 36>}, {pipeline_mode = #tpu.pipeline_mode<synchronous>, transform_indices = @transform_18, window_bounds = array<i64: 4, 1>}, {pipeline_mode = #tpu.pipeline_mode<synchronous>, transform_indices = @transform_19, window_bounds = array<i64: 8, 12>}, {pipeline_mode = #tpu.pipeline_mode<synchronous>, transform_indices = @transform_20, window_bounds = array<i64: 8, 1>}, {transform_indices = @transform_21, window_bounds = array<i64: 1, 8, 256>}]} {
    %cst = arith.constant 0.000000e+00 : f32
    %0 = vector.broadcast %cst : f32 to vector<4x18x18xf32>
    %c0 = arith.constant 0 : index
    %c0_0 = arith.constant 0 : index
    %c0_1 = arith.constant 0 : index
    %1 = vector.load %arg23[%c0, %c0_0, %c0_1] : memref<4x18x18xf32, #tpu.memory_space<vmem>>, vector<4x18x18xf32>
    tpu.vector_store %arg23[%c0, %c0_0, %c0_1], %0 {strides = array<i32>} : memref<4x18x18xf32, #tpu.memory_space<vmem>>, vector<4x18x18xf32>,
    %c0_2 = arith.constant 0 : index
    %c0_3 = arith.constant 0 : index
    %c0_4 = arith.constant 0 : index
    %2 = vector.load %arg1[%c0_2, %c0_3, %c0_4] : memref<1x8x256xf32, #tpu.memory_space<vmem>>, vector<1x8x256xf32>
    %3 = vector.shape_cast %2 : vector<1x8x256xf32> to vector<8x256xf32>
    %4 = arith.truncf %3 : vector<8x256xf32> to vector<8x256xbf16>
    %c0_5 = arith.constant 0 : index
    %c0_6 = arith.constant 0 : index
    %5 = vector.load %arg2[%c0_5, %c0_6] : memref<8x8xbf16, #tpu.memory_space<vmem>>, vector<8x8xbf16>
    %cst_7 = arith.constant dense<0.000000e+00> : vector<8x256xf32>
    %6 = tpu.matmul %5, %4, %cst_7 {dimension_numbers = #tpu.dot_dimension_numbers<[1], [0], [0], [1], [0, 0, 1, 1], [], []>} : vector<8x8xbf16>, vector<8x256xbf16>, vector<8x256xf32> -> vector<8x256xf32>
    %c0_8 = arith.constant 0 : index
    %c0_9 = arith.constant 0 : index
    %7 = vector.load %arg3[%c0_8, %c0_9] : memref<8x1xf32, #tpu.memory_space<vmem>>, vector<8x1xf32>
    %8 = vector.broadcast %7 : vector<8x1xf32> to vector<8x256xf32>
    %9 = arith.addf %6, %8 : vector<8x256xf32>
    %cst_10 = arith.constant 0.000000e+00 : f32
    %10 = vector.broadcast %cst_10 : f32 to vector<8x256xf32>
    %11 = arith.subf %10, %9 : vector<8x256xf32>
    %12 = math.exp %11 : vector<8x256xf32>
    %cst_11 = arith.constant 1.000000e+00 : f32
    %13 = vector.broadcast %cst_11 : f32 to vector<8x256xf32>
    %14 = arith.addf %13, %12 : vector<8x256xf32>
    %15 = tpu.reciprocal %14 {approx = true} : vector<8x256xf32> -> vector<8x256xf32>
    %16 = arith.mulf %9, %15 : vector<8x256xf32>
    %c0_12 = arith.constant 0 : index
    %c0_13 = arith.constant 0 : index
    %17 = vector.load %arg25[%c0_12, %c0_13] : memref<12x256xf32, #tpu.memory_space<vmem>>, vector<8x256xf32>
    tpu.vector_store %arg25[%c0_12, %c0_13], %16 {strides = array<i32>} : memref<12x256xf32, #tpu.memory_space<vmem>>, vector<8x256xf32>,
    %18 = vector.extract_strided_slice %16 {offsets = [4, 0], sizes = [4, 256], strides = [1, 1]} : vector<8x256xf32> to vector<4x256xf32>
    %19 = vector.shape_cast %18 : vector<4x256xf32> to vector<4x16x16xf32>
    %c0_14 = arith.constant 0 : index
    %c1 = arith.constant 1 : index
    %c1_15 = arith.constant 1 : index
    %20 = vector.load %arg23[%c0_14, %c1, %c1_15] : memref<4x18x18xf32, #tpu.memory_space<vmem>>, vector<4x16x16xf32>
    tpu.vector_store %arg23[%c0_14, %c1, %c1_15], %19 {strides = array<i32>} : memref<4x18x18xf32, #tpu.memory_space<vmem>>, vector<4x16x16xf32>,
    %c0_16 = arith.constant 0 : index
    %c0_17 = arith.constant 0 : index
    %c0_18 = arith.constant 0 : index
    %21 = vector.load %arg23[%c0_16, %c0_17, %c0_18] : memref<4x18x18xf32, #tpu.memory_space<vmem>>, vector<4x16x16xf32>
    %22 = vector.shape_cast %21 : vector<4x16x16xf32> to vector<4x256xf32>
    %c0_19 = arith.constant 0 : index
    %c0_20 = arith.constant 0 : index
    %23 = vector.load %arg24[%c0_19, %c0_20] : memref<36x256xf32, #tpu.memory_space<vmem>>, vector<4x256xf32>
    tpu.vector_store %arg24[%c0_19, %c0_20], %22 {strides = array<i32>} : memref<36x256xf32, #tpu.memory_space<vmem>>, vector<4x256xf32>,
    %c0_21 = arith.constant 0 : index
    %c0_22 = arith.constant 0 : index
    %c1_23 = arith.constant 1 : index
    %24 = vector.load %arg23[%c0_21, %c0_22, %c1_23] : memref<4x18x18xf32, #tpu.memory_space<vmem>>, vector<4x16x16xf32>
    %25 = vector.shape_cast %24 : vector<4x16x16xf32> to vector<4x256xf32>
    %c4 = arith.constant 4 : index
    %c0_24 = arith.constant 0 : index
    %26 = vector.load %arg24[%c4, %c0_24] : memref<36x256xf32, #tpu.memory_space<vmem>>, vector<4x256xf32>
    tpu.vector_store %arg24[%c4, %c0_24], %25 {strides = array<i32>} : memref<36x256xf32, #tpu.memory_space<vmem>>, vector<4x256xf32>,
    %c0_25 = arith.constant 0 : index
    %c0_26 = arith.constant 0 : index
    %c2 = arith.constant 2 : index
    %27 = vector.load %arg23[%c0_25, %c0_26, %c2] : memref<4x18x18xf32, #tpu.memory_space<vmem>>, vector<4x16x16xf32>
    %28 = vector.shape_cast %27 : vector<4x16x16xf32> to vector<4x256xf32>
    %c8 = arith.constant 8 : index
    %c0_27 = arith.constant 0 : index
    %29 = vector.load %arg24[%c8, %c0_27] : memref<36x256xf32, #tpu.memory_space<vmem>>, vector<4x256xf32>
    tpu.vector_store %arg24[%c8, %c0_27], %28 {strides = array<i32>} : memref<36x256xf32, #tpu.memory_space<vmem>>, vector<4x256xf32>,
    %c0_28 = arith.constant 0 : index
    %c1_29 = arith.constant 1 : index
    %c0_30 = arith.constant 0 : index
    %30 = vector.load %arg23[%c0_28, %c1_29, %c0_30] : memref<4x18x18xf32, #tpu.memory_space<vmem>>, vector<4x16x16xf32>
    %31 = vector.shape_cast %30 : vector<4x16x16xf32> to vector<4x256xf32>
    %c12 = arith.constant 12 : index
    %c0_31 = arith.constant 0 : index
    %32 = vector.load %arg24[%c12, %c0_31] : memref<36x256xf32, #tpu.memory_space<vmem>>, vector<4x256xf32>
    tpu.vector_store %arg24[%c12, %c0_31], %31 {strides = array<i32>} : memref<36x256xf32, #tpu.memory_space<vmem>>, vector<4x256xf32>,
    %c0_32 = arith.constant 0 : index
    %c1_33 = arith.constant 1 : index
    %c1_34 = arith.constant 1 : index
    %33 = vector.load %arg23[%c0_32, %c1_33, %c1_34] : memref<4x18x18xf32, #tpu.memory_space<vmem>>, vector<4x16x16xf32>
    %34 = vector.shape_cast %33 : vector<4x16x16xf32> to vector<4x256xf32>
    %c16 = arith.constant 16 : index
    %c0_35 = arith.constant 0 : index
    %35 = vector.load %arg24[%c16, %c0_35] : memref<36x256xf32, #tpu.memory_space<vmem>>, vector<4x256xf32>
    tpu.vector_store %arg24[%c16, %c0_35], %34 {strides = array<i32>} : memref<36x256xf32, #tpu.memory_space<vmem>>, vector<4x256xf32>,
    %c0_36 = arith.constant 0 : index
    %c1_37 = arith.constant 1 : index
    %c2_38 = arith.constant 2 : index
    %36 = vector.load %arg23[%c0_36, %c1_37, %c2_38] : memref<4x18x18xf32, #tpu.memory_space<vmem>>, vector<4x16x16xf32>
    %37 = vector.shape_cast %36 : vector<4x16x16xf32> to vector<4x256xf32>
    %c20 = arith.constant 20 : index
    %c0_39 = arith.constant 0 : index
    %38 = vector.load %arg24[%c20, %c0_39] : memref<36x256xf32, #tpu.memory_space<vmem>>, vector<4x256xf32>
    tpu.vector_store %arg24[%c20, %c0_39], %37 {strides = array<i32>} : memref<36x256xf32, #tpu.memory_space<vmem>>, vector<4x256xf32>,
    %c0_40 = arith.constant 0 : index
    %c2_41 = arith.constant 2 : index
    %c0_42 = arith.constant 0 : index
    %39 = vector.load %arg23[%c0_40, %c2_41, %c0_42] : memref<4x18x18xf32, #tpu.memory_space<vmem>>, vector<4x16x16xf32>
    %40 = vector.shape_cast %39 : vector<4x16x16xf32> to vector<4x256xf32>
    %c24 = arith.constant 24 : index
    %c0_43 = arith.constant 0 : index
    %41 = vector.load %arg24[%c24, %c0_43] : memref<36x256xf32, #tpu.memory_space<vmem>>, vector<4x256xf32>
    tpu.vector_store %arg24[%c24, %c0_43], %40 {strides = array<i32>} : memref<36x256xf32, #tpu.memory_space<vmem>>, vector<4x256xf32>,
    %c0_44 = arith.constant 0 : index
    %c2_45 = arith.constant 2 : index
    %c1_46 = arith.constant 1 : index
    %42 = vector.load %arg23[%c0_44, %c2_45, %c1_46] : memref<4x18x18xf32, #tpu.memory_space<vmem>>, vector<4x16x16xf32>
    %43 = vector.shape_cast %42 : vector<4x16x16xf32> to vector<4x256xf32>
    %c28 = arith.constant 28 : index
    %c0_47 = arith.constant 0 : index
    %44 = vector.load %arg24[%c28, %c0_47] : memref<36x256xf32, #tpu.memory_space<vmem>>, vector<4x256xf32>
    tpu.vector_store %arg24[%c28, %c0_47], %43 {strides = array<i32>} : memref<36x256xf32, #tpu.memory_space<vmem>>, vector<4x256xf32>,
    %c0_48 = arith.constant 0 : index
    %c2_49 = arith.constant 2 : index
    %c2_50 = arith.constant 2 : index
    %45 = vector.load %arg23[%c0_48, %c2_49, %c2_50] : memref<4x18x18xf32, #tpu.memory_space<vmem>>, vector<4x16x16xf32>
    %46 = vector.shape_cast %45 : vector<4x16x16xf32> to vector<4x256xf32>
    %c32 = arith.constant 32 : index
    %c0_51 = arith.constant 0 : index
    %47 = vector.load %arg24[%c32, %c0_51] : memref<36x256xf32, #tpu.memory_space<vmem>>, vector<4x256xf32>
    tpu.vector_store %arg24[%c32, %c0_51], %46 {strides = array<i32>} : memref<36x256xf32, #tpu.memory_space<vmem>>, vector<4x256xf32>,
    %c0_52 = arith.constant 0 : index
    %c0_53 = arith.constant 0 : index
    %48 = vector.load %arg4[%c0_52, %c0_53] : memref<4x36xbf16, #tpu.memory_space<vmem>>, vector<4x36xbf16>
    %c0_54 = arith.constant 0 : index
    %c0_55 = arith.constant 0 : index
    %49 = vector.load %arg24[%c0_54, %c0_55] : memref<36x256xf32, #tpu.memory_space<vmem>>, vector<36x256xf32>
    %50 = arith.truncf %49 : vector<36x256xf32> to vector<36x256xbf16>
    %cst_56 = arith.constant dense<0.000000e+00> : vector<4x256xf32>
    %51 = tpu.matmul %48, %50, %cst_56 {dimension_numbers = #tpu.dot_dimension_numbers<[1], [0], [0], [1], [0, 0, 1, 1], [], []>} : vector<4x36xbf16>, vector<36x256xbf16>, vector<4x256xf32> -> vector<4x256xf32>
    %c0_57 = arith.constant 0 : index
    %c0_58 = arith.constant 0 : index
    %52 = vector.load %arg5[%c0_57, %c0_58] : memref<4x1xf32, #tpu.memory_space<vmem>>, vector<4x1xf32>
    %53 = vector.broadcast %52 : vector<4x1xf32> to vector<4x256xf32>
    %54 = arith.addf %51, %53 : vector<4x256xf32>
    %cst_59 = arith.constant 0.000000e+00 : f32
    %55 = vector.broadcast %cst_59 : f32 to vector<4x256xf32>
    %56 = arith.subf %55, %54 : vector<4x256xf32>
    %57 = math.exp %56 : vector<4x256xf32>
    %cst_60 = arith.constant 1.000000e+00 : f32
    %58 = vector.broadcast %cst_60 : f32 to vector<4x256xf32>
    %59 = arith.addf %58, %57 : vector<4x256xf32>
    %60 = tpu.reciprocal %59 {approx = true} : vector<4x256xf32> -> vector<4x256xf32>
    %61 = arith.mulf %54, %60 : vector<4x256xf32>
    %c0_61 = arith.constant 0 : index
    %c0_62 = arith.constant 0 : index
    %62 = vector.load %arg6[%c0_61, %c0_62] : memref<4x9xf32, #tpu.memory_space<vmem>>, vector<4x9xf32>
    %63 = vector.shape_cast %61 : vector<4x256xf32> to vector<4x16x16xf32>
    %c0_63 = arith.constant 0 : index
    %c1_64 = arith.constant 1 : index
    %c1_65 = arith.constant 1 : index
    %64 = vector.load %arg23[%c0_63, %c1_64, %c1_65] : memref<4x18x18xf32, #tpu.memory_space<vmem>>, vector<4x16x16xf32>
    tpu.vector_store %arg23[%c0_63, %c1_64, %c1_65], %63 {strides = array<i32>} : memref<4x18x18xf32, #tpu.memory_space<vmem>>, vector<4x16x16xf32>,
    %cst_66 = arith.constant 0.000000e+00 : f32
    %65 = vector.broadcast %cst_66 : f32 to vector<4x256xf32>
    %c0_67 = arith.constant 0 : index
    %c0_68 = arith.constant 0 : index
    %c0_69 = arith.constant 0 : index
    %66 = vector.load %arg23[%c0_67, %c0_68, %c0_69] : memref<4x18x18xf32, #tpu.memory_space<vmem>>, vector<4x16x16xf32>
    %67 = vector.shape_cast %66 : vector<4x16x16xf32> to vector<4x256xf32>
    %68 = vector.extract_strided_slice %62 {offsets = [0, 0], sizes = [4, 1], strides = [1, 1]} : vector<4x9xf32> to vector<4x1xf32>
    %69 = vector.broadcast %68 : vector<4x1xf32> to vector<4x256xf32>
    %70 = arith.mulf %67, %69 : vector<4x256xf32>
    %71 = arith.addf %65, %70 : vector<4x256xf32>
    %c0_70 = arith.constant 0 : index
    %c0_71 = arith.constant 0 : index
    %c1_72 = arith.constant 1 : index
    %72 = vector.load %arg23[%c0_70, %c0_71, %c1_72] : memref<4x18x18xf32, #tpu.memory_space<vmem>>, vector<4x16x16xf32>
    %73 = vector.shape_cast %72 : vector<4x16x16xf32> to vector<4x256xf32>
    %74 = vector.extract_strided_slice %62 {offsets = [0, 1], sizes = [4, 1], strides = [1, 1]} : vector<4x9xf32> to vector<4x1xf32>
    %75 = vector.broadcast %74 : vector<4x1xf32> to vector<4x256xf32>
    %76 = arith.mulf %73, %75 : vector<4x256xf32>
    %77 = arith.addf %71, %76 : vector<4x256xf32>
    %c0_73 = arith.constant 0 : index
    %c0_74 = arith.constant 0 : index
    %c2_75 = arith.constant 2 : index
    %78 = vector.load %arg23[%c0_73, %c0_74, %c2_75] : memref<4x18x18xf32, #tpu.memory_space<vmem>>, vector<4x16x16xf32>
    %79 = vector.shape_cast %78 : vector<4x16x16xf32> to vector<4x256xf32>
    %80 = vector.extract_strided_slice %62 {offsets = [0, 2], sizes = [4, 1], strides = [1, 1]} : vector<4x9xf32> to vector<4x1xf32>
    %81 = vector.broadcast %80 : vector<4x1xf32> to vector<4x256xf32>
    %82 = arith.mulf %79, %81 : vector<4x256xf32>
    %83 = arith.addf %77, %82 : vector<4x256xf32>
    %c0_76 = arith.constant 0 : index
    %c1_77 = arith.constant 1 : index
    %c0_78 = arith.constant 0 : index
    %84 = vector.load %arg23[%c0_76, %c1_77, %c0_78] : memref<4x18x18xf32, #tpu.memory_space<vmem>>, vector<4x16x16xf32>
    %85 = vector.shape_cast %84 : vector<4x16x16xf32> to vector<4x256xf32>
    %86 = vector.extract_strided_slice %62 {offsets = [0, 3], sizes = [4, 1], strides = [1, 1]} : vector<4x9xf32> to vector<4x1xf32>
    %87 = vector.broadcast %86 : vector<4x1xf32> to vector<4x256xf32>
    %88 = arith.mulf %85, %87 : vector<4x256xf32>
    %89 = arith.addf %83, %88 : vector<4x256xf32>
    %c0_79 = arith.constant 0 : index
    %c1_80 = arith.constant 1 : index
    %c1_81 = arith.constant 1 : index
    %90 = vector.load %arg23[%c0_79, %c1_80, %c1_81] : memref<4x18x18xf32, #tpu.memory_space<vmem>>, vector<4x16x16xf32>
    %91 = vector.shape_cast %90 : vector<4x16x16xf32> to vector<4x256xf32>
    %92 = vector.extract_strided_slice %62 {offsets = [0, 4], sizes = [4, 1], strides = [1, 1]} : vector<4x9xf32> to vector<4x1xf32>
    %93 = vector.broadcast %92 : vector<4x1xf32> to vector<4x256xf32>
    %94 = arith.mulf %91, %93 : vector<4x256xf32>
    %95 = arith.addf %89, %94 : vector<4x256xf32>
    %c0_82 = arith.constant 0 : index
    %c1_83 = arith.constant 1 : index
    %c2_84 = arith.constant 2 : index
    %96 = vector.load %arg23[%c0_82, %c1_83, %c2_84] : memref<4x18x18xf32, #tpu.memory_space<vmem>>, vector<4x16x16xf32>
    %97 = vector.shape_cast %96 : vector<4x16x16xf32> to vector<4x256xf32>
    %98 = vector.extract_strided_slice %62 {offsets = [0, 5], sizes = [4, 1], strides = [1, 1]} : vector<4x9xf32> to vector<4x1xf32>
    %99 = vector.broadcast %98 : vector<4x1xf32> to vector<4x256xf32>
    %100 = arith.mulf %97, %99 : vector<4x256xf32>
    %101 = arith.addf %95, %100 : vector<4x256xf32>
    %c0_85 = arith.constant 0 : index
    %c2_86 = arith.constant 2 : index
    %c0_87 = arith.constant 0 : index
    %102 = vector.load %arg23[%c0_85, %c2_86, %c0_87] : memref<4x18x18xf32, #tpu.memory_space<vmem>>, vector<4x16x16xf32>
    %103 = vector.shape_cast %102 : vector<4x16x16xf32> to vector<4x256xf32>
    %104 = vector.extract_strided_slice %62 {offsets = [0, 6], sizes = [4, 1], strides = [1, 1]} : vector<4x9xf32> to vector<4x1xf32>
    %105 = vector.broadcast %104 : vector<4x1xf32> to vector<4x256xf32>
    %106 = arith.mulf %103, %105 : vector<4x256xf32>
    %107 = arith.addf %101, %106 : vector<4x256xf32>
    %c0_88 = arith.constant 0 : index
    %c2_89 = arith.constant 2 : index
    %c1_90 = arith.constant 1 : index
    %108 = vector.load %arg23[%c0_88, %c2_89, %c1_90] : memref<4x18x18xf32, #tpu.memory_space<vmem>>, vector<4x16x16xf32>
    %109 = vector.shape_cast %108 : vector<4x16x16xf32> to vector<4x256xf32>
    %110 = vector.extract_strided_slice %62 {offsets = [0, 7], sizes = [4, 1], strides = [1, 1]} : vector<4x9xf32> to vector<4x1xf32>
    %111 = vector.broadcast %110 : vector<4x1xf32> to vector<4x256xf32>
    %112 = arith.mulf %109, %111 : vector<4x256xf32>
    %113 = arith.addf %107, %112 : vector<4x256xf32>
    %c0_91 = arith.constant 0 : index
    %c2_92 = arith.constant 2 : index
    %c2_93 = arith.constant 2 : index
    %114 = vector.load %arg23[%c0_91, %c2_92, %c2_93] : memref<4x18x18xf32, #tpu.memory_space<vmem>>, vector<4x16x16xf32>
    %115 = vector.shape_cast %114 : vector<4x16x16xf32> to vector<4x256xf32>
    %116 = vector.extract_strided_slice %62 {offsets = [0, 8], sizes = [4, 1], strides = [1, 1]} : vector<4x9xf32> to vector<4x1xf32>
    %117 = vector.broadcast %116 : vector<4x1xf32> to vector<4x256xf32>
    %118 = arith.mulf %115, %117 : vector<4x256xf32>
    %119 = arith.addf %113, %118 : vector<4x256xf32>
    %c0_94 = arith.constant 0 : index
    %c0_95 = arith.constant 0 : index
    %120 = vector.load %arg7[%c0_94, %c0_95] : memref<4x1xf32, #tpu.memory_space<vmem>>, vector<4x1xf32>
    %121 = vector.broadcast %120 : vector<4x1xf32> to vector<4x256xf32>
    %122 = arith.addf %119, %121 : vector<4x256xf32>
    %cst_96 = arith.constant 5.000000e-01 : f32
    %123 = vector.broadcast %cst_96 : f32 to vector<4x256xf32>
    %124 = arith.mulf %123, %122 : vector<4x256xf32>
    %cst_97 = arith.constant 0.707106769 : f32
    %125 = vector.broadcast %cst_97 : f32 to vector<4x256xf32>
    %126 = arith.mulf %122, %125 : vector<4x256xf32>
    %127 = math.erf %126 : vector<4x256xf32>
    %cst_98 = arith.constant 1.000000e+00 : f32
    %128 = vector.broadcast %cst_98 : f32 to vector<4x256xf32>
    %129 = arith.addf %128, %127 : vector<4x256xf32>
    %130 = arith.mulf %124, %129 : vector<4x256xf32>
    %c0_99 = arith.constant 0 : index
    %c0_100 = arith.constant 0 : index
    %131 = vector.load %arg8[%c0_99, %c0_100] : memref<4x1xf32, #tpu.memory_space<vmem>>, vector<4x1xf32>
    %132 = vector.broadcast %131 : vector<4x1xf32> to vector<4x256xf32>
    %133 = arith.mulf %130, %132 : vector<4x256xf32>
    %c0_101 = arith.constant 0 : index
    %c0_102 = arith.constant 0 : index
    %134 = vector.load %arg9[%c0_101, %c0_102] : memref<4x1xf32, #tpu.memory_space<vmem>>, vector<4x1xf32>
    %135 = vector.broadcast %134 : vector<4x1xf32> to vector<4x256xf32>
    %136 = arith.addf %133, %135 : vector<4x256xf32>
    %137 = arith.addf %61, %136 : vector<4x256xf32>
    %c0_103 = arith.constant 0 : index
    %c0_104 = arith.constant 0 : index
    %138 = vector.load %arg10[%c0_103, %c0_104] : memref<16x4xbf16, #tpu.memory_space<vmem>>, vector<16x4xbf16>
    %139 = arith.truncf %137 : vector<4x256xf32> to vector<4x256xbf16>
    %cst_105 = arith.constant dense<0.000000e+00> : vector<16x256xf32>
    %140 = tpu.matmul %138, %139, %cst_105 {dimension_numbers = #tpu.dot_dimension_numbers<[1], [0], [0], [1], [0, 0, 1, 1], [], []>} : vector<16x4xbf16>, vector<4x256xbf16>, vector<16x256xf32> -> vector<16x256xf32>
    %c0_106 = arith.constant 0 : index
    %c0_107 = arith.constant 0 : index
    %141 = vector.load %arg11[%c0_106, %c0_107] : memref<16x1xf32, #tpu.memory_space<vmem>>, vector<16x1xf32>
    %142 = vector.broadcast %141 : vector<16x1xf32> to vector<16x256xf32>
    %143 = arith.addf %140, %142 : vector<16x256xf32>
    %cst_108 = arith.constant 5.000000e-01 : f32
    %144 = vector.broadcast %cst_108 : f32 to vector<16x256xf32>
    %145 = arith.mulf %144, %143 : vector<16x256xf32>
    %cst_109 = arith.constant 0.707106769 : f32
    %146 = vector.broadcast %cst_109 : f32 to vector<16x256xf32>
    %147 = arith.mulf %143, %146 : vector<16x256xf32>
    %148 = math.erf %147 : vector<16x256xf32>
    %cst_110 = arith.constant 1.000000e+00 : f32
    %149 = vector.broadcast %cst_110 : f32 to vector<16x256xf32>
    %150 = arith.addf %149, %148 : vector<16x256xf32>
    %151 = arith.mulf %145, %150 : vector<16x256xf32>
    %c0_111 = arith.constant 0 : index
    %c0_112 = arith.constant 0 : index
    %152 = vector.load %arg12[%c0_111, %c0_112] : memref<16x1xf32, #tpu.memory_space<vmem>>, vector<16x1xf32>
    %153 = vector.broadcast %152 : vector<16x1xf32> to vector<16x256xf32>
    %154 = arith.mulf %151, %153 : vector<16x256xf32>
    %c0_113 = arith.constant 0 : index
    %c0_114 = arith.constant 0 : index
    %155 = vector.load %arg13[%c0_113, %c0_114] : memref<16x1xf32, #tpu.memory_space<vmem>>, vector<16x1xf32>
    %156 = vector.broadcast %155 : vector<16x1xf32> to vector<16x256xf32>
    %157 = arith.addf %154, %156 : vector<16x256xf32>
    %c0_115 = arith.constant 0 : index
    %c0_116 = arith.constant 0 : index
    %158 = vector.load %arg14[%c0_115, %c0_116] : memref<4x16xbf16, #tpu.memory_space<vmem>>, vector<4x16xbf16>
    %159 = arith.truncf %157 : vector<16x256xf32> to vector<16x256xbf16>
    %cst_117 = arith.constant dense<0.000000e+00> : vector<4x256xf32>
    %160 = tpu.matmul %158, %159, %cst_117 {dimension_numbers = #tpu.dot_dimension_numbers<[1], [0], [0], [1], [0, 0, 1, 1], [], []>} : vector<4x16xbf16>, vector<16x256xbf16>, vector<4x256xf32> -> vector<4x256xf32>
    %c0_118 = arith.constant 0 : index
    %c0_119 = arith.constant 0 : index
    %161 = vector.load %arg15[%c0_118, %c0_119] : memref<4x1xf32, #tpu.memory_space<vmem>>, vector<4x1xf32>
    %162 = vector.broadcast %161 : vector<4x1xf32> to vector<4x256xf32>
    %163 = arith.addf %160, %162 : vector<4x256xf32>
    %cst_120 = arith.constant 5.000000e-01 : f32
    %164 = vector.broadcast %cst_120 : f32 to vector<4x256xf32>
    %165 = arith.mulf %164, %163 : vector<4x256xf32>
    %cst_121 = arith.constant 0.707106769 : f32
    %166 = vector.broadcast %cst_121 : f32 to vector<4x256xf32>
    %167 = arith.mulf %163, %166 : vector<4x256xf32>
    %168 = math.erf %167 : vector<4x256xf32>
    %cst_122 = arith.constant 1.000000e+00 : f32
    %169 = vector.broadcast %cst_122 : f32 to vector<4x256xf32>
    %170 = arith.addf %169, %168 : vector<4x256xf32>
    %171 = arith.mulf %165, %170 : vector<4x256xf32>
    %c0_123 = arith.constant 0 : index
    %c0_124 = arith.constant 0 : index
    %172 = vector.load %arg16[%c0_123, %c0_124] : memref<4x1xf32, #tpu.memory_space<vmem>>, vector<4x1xf32>
    %173 = vector.broadcast %172 : vector<4x1xf32> to vector<4x256xf32>
    %174 = arith.mulf %171, %173 : vector<4x256xf32>
    %c0_125 = arith.constant 0 : index
    %c0_126 = arith.constant 0 : index
    %175 = vector.load %arg17[%c0_125, %c0_126] : memref<4x1xf32, #tpu.memory_space<vmem>>, vector<4x1xf32>
    %176 = vector.broadcast %175 : vector<4x1xf32> to vector<4x256xf32>
    %177 = arith.addf %174, %176 : vector<4x256xf32>
    %178 = vector.shape_cast %177 : vector<4x256xf32> to vector<4x16x16xf32>
    %c0_127 = arith.constant 0 : index
    %c1_128 = arith.constant 1 : index
    %c1_129 = arith.constant 1 : index
    %179 = vector.load %arg23[%c0_127, %c1_128, %c1_129] : memref<4x18x18xf32, #tpu.memory_space<vmem>>, vector<4x16x16xf32>
    tpu.vector_store %arg23[%c0_127, %c1_128, %c1_129], %178 {strides = array<i32>} : memref<4x18x18xf32, #tpu.memory_space<vmem>>, vector<4x16x16xf32>,
    %c0_130 = arith.constant 0 : index
    %c0_131 = arith.constant 0 : index
    %c0_132 = arith.constant 0 : index
    %180 = vector.load %arg23[%c0_130, %c0_131, %c0_132] : memref<4x18x18xf32, #tpu.memory_space<vmem>>, vector<4x16x16xf32>
    %181 = vector.shape_cast %180 : vector<4x16x16xf32> to vector<4x256xf32>
    %c0_133 = arith.constant 0 : index
    %c0_134 = arith.constant 0 : index
    %182 = vector.load %arg24[%c0_133, %c0_134] : memref<36x256xf32, #tpu.memory_space<vmem>>, vector<4x256xf32>
    tpu.vector_store %arg24[%c0_133, %c0_134], %181 {strides = array<i32>} : memref<36x256xf32, #tpu.memory_space<vmem>>, vector<4x256xf32>,
    %c0_135 = arith.constant 0 : index
    %c0_136 = arith.constant 0 : index
    %c1_137 = arith.constant 1 : index
    %183 = vector.load %arg23[%c0_135, %c0_136, %c1_137] : memref<4x18x18xf32, #tpu.memory_space<vmem>>, vector<4x16x16xf32>
    %184 = vector.shape_cast %183 : vector<4x16x16xf32> to vector<4x256xf32>
    %c4_138 = arith.constant 4 : index
    %c0_139 = arith.constant 0 : index
    %185 = vector.load %arg24[%c4_138, %c0_139] : memref<36x256xf32, #tpu.memory_space<vmem>>, vector<4x256xf32>
    tpu.vector_store %arg24[%c4_138, %c0_139], %184 {strides = array<i32>} : memref<36x256xf32, #tpu.memory_space<vmem>>, vector<4x256xf32>,
    %c0_140 = arith.constant 0 : index
    %c0_141 = arith.constant 0 : index
    %c2_142 = arith.constant 2 : index
    %186 = vector.load %arg23[%c0_140, %c0_141, %c2_142] : memref<4x18x18xf32, #tpu.memory_space<vmem>>, vector<4x16x16xf32>
    %187 = vector.shape_cast %186 : vector<4x16x16xf32> to vector<4x256xf32>
    %c8_143 = arith.constant 8 : index
    %c0_144 = arith.constant 0 : index
    %188 = vector.load %arg24[%c8_143, %c0_144] : memref<36x256xf32, #tpu.memory_space<vmem>>, vector<4x256xf32>
    tpu.vector_store %arg24[%c8_143, %c0_144], %187 {strides = array<i32>} : memref<36x256xf32, #tpu.memory_space<vmem>>, vector<4x256xf32>,
    %c0_145 = arith.constant 0 : index
    %c1_146 = arith.constant 1 : index
    %c0_147 = arith.constant 0 : index
    %189 = vector.load %arg23[%c0_145, %c1_146, %c0_147] : memref<4x18x18xf32, #tpu.memory_space<vmem>>, vector<4x16x16xf32>
    %190 = vector.shape_cast %189 : vector<4x16x16xf32> to vector<4x256xf32>
    %c12_148 = arith.constant 12 : index
    %c0_149 = arith.constant 0 : index
    %191 = vector.load %arg24[%c12_148, %c0_149] : memref<36x256xf32, #tpu.memory_space<vmem>>, vector<4x256xf32>
    tpu.vector_store %arg24[%c12_148, %c0_149], %190 {strides = array<i32>} : memref<36x256xf32, #tpu.memory_space<vmem>>, vector<4x256xf32>,
    %c0_150 = arith.constant 0 : index
    %c1_151 = arith.constant 1 : index
    %c1_152 = arith.constant 1 : index
    %192 = vector.load %arg23[%c0_150, %c1_151, %c1_152] : memref<4x18x18xf32, #tpu.memory_space<vmem>>, vector<4x16x16xf32>
    %193 = vector.shape_cast %192 : vector<4x16x16xf32> to vector<4x256xf32>
    %c16_153 = arith.constant 16 : index
    %c0_154 = arith.constant 0 : index
    %194 = vector.load %arg24[%c16_153, %c0_154] : memref<36x256xf32, #tpu.memory_space<vmem>>, vector<4x256xf32>
    tpu.vector_store %arg24[%c16_153, %c0_154], %193 {strides = array<i32>} : memref<36x256xf32, #tpu.memory_space<vmem>>, vector<4x256xf32>,
    %c0_155 = arith.constant 0 : index
    %c1_156 = arith.constant 1 : index
    %c2_157 = arith.constant 2 : index
    %195 = vector.load %arg23[%c0_155, %c1_156, %c2_157] : memref<4x18x18xf32, #tpu.memory_space<vmem>>, vector<4x16x16xf32>
    %196 = vector.shape_cast %195 : vector<4x16x16xf32> to vector<4x256xf32>
    %c20_158 = arith.constant 20 : index
    %c0_159 = arith.constant 0 : index
    %197 = vector.load %arg24[%c20_158, %c0_159] : memref<36x256xf32, #tpu.memory_space<vmem>>, vector<4x256xf32>
    tpu.vector_store %arg24[%c20_158, %c0_159], %196 {strides = array<i32>} : memref<36x256xf32, #tpu.memory_space<vmem>>, vector<4x256xf32>,
    %c0_160 = arith.constant 0 : index
    %c2_161 = arith.constant 2 : index
    %c0_162 = arith.constant 0 : index
    %198 = vector.load %arg23[%c0_160, %c2_161, %c0_162] : memref<4x18x18xf32, #tpu.memory_space<vmem>>, vector<4x16x16xf32>
    %199 = vector.shape_cast %198 : vector<4x16x16xf32> to vector<4x256xf32>
    %c24_163 = arith.constant 24 : index
    %c0_164 = arith.constant 0 : index
    %200 = vector.load %arg24[%c24_163, %c0_164] : memref<36x256xf32, #tpu.memory_space<vmem>>, vector<4x256xf32>
    tpu.vector_store %arg24[%c24_163, %c0_164], %199 {strides = array<i32>} : memref<36x256xf32, #tpu.memory_space<vmem>>, vector<4x256xf32>,
    %c0_165 = arith.constant 0 : index
    %c2_166 = arith.constant 2 : index
    %c1_167 = arith.constant 1 : index
    %201 = vector.load %arg23[%c0_165, %c2_166, %c1_167] : memref<4x18x18xf32, #tpu.memory_space<vmem>>, vector<4x16x16xf32>
    %202 = vector.shape_cast %201 : vector<4x16x16xf32> to vector<4x256xf32>
    %c28_168 = arith.constant 28 : index
    %c0_169 = arith.constant 0 : index
    %203 = vector.load %arg24[%c28_168, %c0_169] : memref<36x256xf32, #tpu.memory_space<vmem>>, vector<4x256xf32>
    tpu.vector_store %arg24[%c28_168, %c0_169], %202 {strides = array<i32>} : memref<36x256xf32, #tpu.memory_space<vmem>>, vector<4x256xf32>,
    %c0_170 = arith.constant 0 : index
    %c2_171 = arith.constant 2 : index
    %c2_172 = arith.constant 2 : index
    %204 = vector.load %arg23[%c0_170, %c2_171, %c2_172] : memref<4x18x18xf32, #tpu.memory_space<vmem>>, vector<4x16x16xf32>
    %205 = vector.shape_cast %204 : vector<4x16x16xf32> to vector<4x256xf32>
    %c32_173 = arith.constant 32 : index
    %c0_174 = arith.constant 0 : index
    %206 = vector.load %arg24[%c32_173, %c0_174] : memref<36x256xf32, #tpu.memory_space<vmem>>, vector<4x256xf32>
    tpu.vector_store %arg24[%c32_173, %c0_174], %205 {strides = array<i32>} : memref<36x256xf32, #tpu.memory_space<vmem>>, vector<4x256xf32>,
    %c0_175 = arith.constant 0 : index
    %c0_176 = arith.constant 0 : index
    %207 = vector.load %arg18[%c0_175, %c0_176] : memref<4x36xbf16, #tpu.memory_space<vmem>>, vector<4x36xbf16>
    %c0_177 = arith.constant 0 : index
    %c0_178 = arith.constant 0 : index
    %208 = vector.load %arg24[%c0_177, %c0_178] : memref<36x256xf32, #tpu.memory_space<vmem>>, vector<36x256xf32>
    %209 = arith.truncf %208 : vector<36x256xf32> to vector<36x256xbf16>
    %cst_179 = arith.constant dense<0.000000e+00> : vector<4x256xf32>
    %210 = tpu.matmul %207, %209, %cst_179 {dimension_numbers = #tpu.dot_dimension_numbers<[1], [0], [0], [1], [0, 0, 1, 1], [], []>} : vector<4x36xbf16>, vector<36x256xbf16>, vector<4x256xf32> -> vector<4x256xf32>
    %c0_180 = arith.constant 0 : index
    %c0_181 = arith.constant 0 : index
    %211 = vector.load %arg19[%c0_180, %c0_181] : memref<4x1xf32, #tpu.memory_space<vmem>>, vector<4x1xf32>
    %212 = vector.broadcast %211 : vector<4x1xf32> to vector<4x256xf32>
    %213 = arith.addf %210, %212 : vector<4x256xf32>
    %cst_182 = arith.constant 0.000000e+00 : f32
    %214 = vector.broadcast %cst_182 : f32 to vector<4x256xf32>
    %215 = arith.subf %214, %213 : vector<4x256xf32>
    %216 = math.exp %215 : vector<4x256xf32>
    %cst_183 = arith.constant 1.000000e+00 : f32
    %217 = vector.broadcast %cst_183 : f32 to vector<4x256xf32>
    %218 = arith.addf %217, %216 : vector<4x256xf32>
    %219 = tpu.reciprocal %218 {approx = true} : vector<4x256xf32> -> vector<4x256xf32>
    %220 = arith.mulf %213, %219 : vector<4x256xf32>
    %c8_184 = arith.constant 8 : index
    %c0_185 = arith.constant 0 : index
    %221 = vector.load %arg25[%c8_184, %c0_185] : memref<12x256xf32, #tpu.memory_space<vmem>>, vector<4x256xf32>
    tpu.vector_store %arg25[%c8_184, %c0_185], %220 {strides = array<i32>} : memref<12x256xf32, #tpu.memory_space<vmem>>, vector<4x256xf32>,
    %c0_186 = arith.constant 0 : index
    %c0_187 = arith.constant 0 : index
    %222 = vector.load %arg20[%c0_186, %c0_187] : memref<8x12xbf16, #tpu.memory_space<vmem>>, vector<8x12xbf16>
    %c0_188 = arith.constant 0 : index
    %c0_189 = arith.constant 0 : index
    %223 = vector.load %arg25[%c0_188, %c0_189] : memref<12x256xf32, #tpu.memory_space<vmem>>, vector<12x256xf32>
    %224 = arith.truncf %223 : vector<12x256xf32> to vector<12x256xbf16>
    %cst_190 = arith.constant dense<0.000000e+00> : vector<8x256xf32>
    %225 = tpu.matmul %222, %224, %cst_190 {dimension_numbers = #tpu.dot_dimension_numbers<[1], [0], [0], [1], [0, 0, 1, 1], [], []>} : vector<8x12xbf16>, vector<12x256xbf16>, vector<8x256xf32> -> vector<8x256xf32>
    %c0_191 = arith.constant 0 : index
    %c0_192 = arith.constant 0 : index
    %226 = vector.load %arg21[%c0_191, %c0_192] : memref<8x1xf32, #tpu.memory_space<vmem>>, vector<8x1xf32>
    %227 = vector.broadcast %226 : vector<8x1xf32> to vector<8x256xf32>
    %228 = arith.addf %225, %227 : vector<8x256xf32>
    %cst_193 = arith.constant 0.000000e+00 : f32
    %229 = vector.broadcast %cst_193 : f32 to vector<8x256xf32>
    %230 = arith.subf %229, %228 : vector<8x256xf32>
    %231 = math.exp %230 : vector<8x256xf32>
    %cst_194 = arith.constant 1.000000e+00 : f32
    %232 = vector.broadcast %cst_194 : f32 to vector<8x256xf32>
    %233 = arith.addf %232, %231 : vector<8x256xf32>
    %234 = tpu.reciprocal %233 {approx = true} : vector<8x256xf32> -> vector<8x256xf32>
    %235 = arith.mulf %228, %234 : vector<8x256xf32>
    %c0_195 = arith.constant 0 : index
    %c0_196 = arith.constant 0 : index
    %c0_197 = arith.constant 0 : index
    %236 = vector.load %arg22[%c0_195, %c0_196, %c0_197] : memref<1x8x256xf32, #tpu.memory_space<vmem>>, vector<1x8x256xf32>
    %237 = vector.shape_cast %236 : vector<1x8x256xf32> to vector<8x256xf32>
    %238 = vector.shape_cast %235 : vector<8x256xf32> to vector<1x8x256xf32>
    tpu.vector_store %arg22[%c0_195, %c0_196, %c0_197], %238 {strides = array<i32>} : memref<1x8x256xf32, #tpu.memory_space<vmem>>, vector<1x8x256xf32>,
    return
  }
  func.func @transform_0(%arg0: i32) -> (i32, i32, i32) {
    %c0_i32 = arith.constant 0 : i32
    %c0_i32_0 = arith.constant 0 : i32
    %c0_i32_1 = arith.constant 0 : i32
    return %arg0, %c0_i32, %c0_i32_0 : i32, i32, i32
  }
  func.func @transform_1(%arg0: i32) -> (i32, i32) {
    %c0_i32 = arith.constant 0 : i32
    %c0_i32_0 = arith.constant 0 : i32
    %c0_i32_1 = arith.constant 0 : i32
    return %c0_i32, %c0_i32_0 : i32, i32
  }
  func.func @transform_2(%arg0: i32) -> (i32, i32) {
    %c0_i32 = arith.constant 0 : i32
    %c0_i32_0 = arith.constant 0 : i32
    %c0_i32_1 = arith.constant 0 : i32
    return %c0_i32, %c0_i32_0 : i32, i32
  }
  func.func @transform_3(%arg0: i32) -> (i32, i32) {
    %c0_i32 = arith.constant 0 : i32
    %c0_i32_0 = arith.constant 0 : i32
    %c0_i32_1 = arith.constant 0 : i32
    return %c0_i32, %c0_i32_0 : i32, i32
  }
  func.func @transform_4(%arg0: i32) -> (i32, i32) {
    %c0_i32 = arith.constant 0 : i32
    %c0_i32_0 = arith.constant 0 : i32
    %c0_i32_1 = arith.constant 0 : i32
    return %c0_i32, %c0_i32_0 : i32, i32
  }
  func.func @transform_5(%arg0: i32) -> (i32, i32) {
    %c0_i32 = arith.constant 0 : i32
    %c0_i32_0 = arith.constant 0 : i32
    %c0_i32_1 = arith.constant 0 : i32
    return %c0_i32, %c0_i32_0 : i32, i32
  }
  func.func @transform_6(%arg0: i32) -> (i32, i32) {
    %c0_i32 = arith.constant 0 : i32
    %c0_i32_0 = arith.constant 0 : i32
    %c0_i32_1 = arith.constant 0 : i32
    return %c0_i32, %c0_i32_0 : i32, i32
  }
  func.func @transform_7(%arg0: i32) -> (i32, i32) {
    %c0_i32 = arith.constant 0 : i32
    %c0_i32_0 = arith.constant 0 : i32
    %c0_i32_1 = arith.constant 0 : i32
    return %c0_i32, %c0_i32_0 : i32, i32
  }
  func.func @transform_8(%arg0: i32) -> (i32, i32) {
    %c0_i32 = arith.constant 0 : i32
    %c0_i32_0 = arith.constant 0 : i32
    %c0_i32_1 = arith.constant 0 : i32
    return %c0_i32, %c0_i32_0 : i32, i32
  }
  func.func @transform_9(%arg0: i32) -> (i32, i32) {
    %c0_i32 = arith.constant 0 : i32
    %c0_i32_0 = arith.constant 0 : i32
    %c0_i32_1 = arith.constant 0 : i32
    return %c0_i32, %c0_i32_0 : i32, i32
  }
  func.func @transform_10(%arg0: i32) -> (i32, i32) {
    %c0_i32 = arith.constant 0 : i32
    %c0_i32_0 = arith.constant 0 : i32
    %c0_i32_1 = arith.constant 0 : i32
    return %c0_i32, %c0_i32_0 : i32, i32
  }
  func.func @transform_11(%arg0: i32) -> (i32, i32) {
    %c0_i32 = arith.constant 0 : i32
    %c0_i32_0 = arith.constant 0 : i32
    %c0_i32_1 = arith.constant 0 : i32
    return %c0_i32, %c0_i32_0 : i32, i32
  }
  func.func @transform_12(%arg0: i32) -> (i32, i32) {
    %c0_i32 = arith.constant 0 : i32
    %c0_i32_0 = arith.constant 0 : i32
    %c0_i32_1 = arith.constant 0 : i32
    return %c0_i32, %c0_i32_0 : i32, i32
  }
  func.func @transform_13(%arg0: i32) -> (i32, i32) {
    %c0_i32 = arith.constant 0 : i32
    %c0_i32_0 = arith.constant 0 : i32
    %c0_i32_1 = arith.constant 0 : i32
    return %c0_i32, %c0_i32_0 : i32, i32
  }
  func.func @transform_14(%arg0: i32) -> (i32, i32) {
    %c0_i32 = arith.constant 0 : i32
    %c0_i32_0 = arith.constant 0 : i32
    %c0_i32_1 = arith.constant 0 : i32
    return %c0_i32, %c0_i32_0 : i32, i32
  }
  func.func @transform_15(%arg0: i32) -> (i32, i32) {
    %c0_i32 = arith.constant 0 : i32
    %c0_i32_0 = arith.constant 0 : i32
    %c0_i32_1 = arith.constant 0 : i32
    return %c0_i32, %c0_i32_0 : i32, i32
  }
  func.func @transform_16(%arg0: i32) -> (i32, i32) {
    %c0_i32 = arith.constant 0 : i32
    %c0_i32_0 = arith.constant 0 : i32
    %c0_i32_1 = arith.constant 0 : i32
    return %c0_i32, %c0_i32_0 : i32, i32
  }
  func.func @transform_17(%arg0: i32) -> (i32, i32) {
    %c0_i32 = arith.constant 0 : i32
    %c0_i32_0 = arith.constant 0 : i32
    %c0_i32_1 = arith.constant 0 : i32
    return %c0_i32, %c0_i32_0 : i32, i32
  }
  func.func @transform_18(%arg0: i32) -> (i32, i32) {
    %c0_i32 = arith.constant 0 : i32
    %c0_i32_0 = arith.constant 0 : i32
    %c0_i32_1 = arith.constant 0 : i32
    return %c0_i32, %c0_i32_0 : i32, i32
  }
  func.func @transform_19(%arg0: i32) -> (i32, i32) {
    %c0_i32 = arith.constant 0 : i32
    %c0_i32_0 = arith.constant 0 : i32
    %c0_i32_1 = arith.constant 0 : i32
    return %c0_i32, %c0_i32_0 : i32, i32
  }
  func.func @transform_20(%arg0: i32) -> (i32, i32) {
    %c0_i32 = arith.constant 0 : i32
    %c0_i32_0 = arith.constant 0 : i32
    %c0_i32_1 = arith.constant 0 : i32
    return %c0_i32, %c0_i32_0 : i32, i32
  }
  func.func @transform_21(%arg0: i32) -> (i32, i32, i32) {
    %c0_i32 = arith.constant 0 : i32
    %c0_i32_0 = arith.constant 0 : i32
    %c0_i32_1 = arith.constant 0 : i32
    return %arg0, %c0_i32, %c0_i32_0 : i32, i32, i32
  }
}

</mosaic_0001>

<llo_original>
// kernel: c2f_cmunextb_forward.1
$region0: #{c2f_cmunextb_forward.1}
  #allocation0 [shape = 'u32[]', space=smem, size = 0x4, offset = 0x4, fixed_abs, tag = 'smem constant byte address 0x4 - core index']
  #allocation1 [shape = 'u32[144,128]{1,0:T(1,128)}', space=vmem, size = 0x12000, scoped, tag = 'internal scratch']
  #allocation2 [shape = 'f32[4,18,18]{2,1,0:T(8,128)}', space=vmem, size = 0xc000, scoped, tag = 'scratch operand']
  #allocation3 [shape = 'f32[36,256]{1,0:T(8,128)}', space=vmem, size = 0xa000, scoped, tag = 'scratch operand']
  #allocation4 [shape = 'f32[12,256]{1,0:T(8,128)}', space=vmem, size = 0x4000, scoped, tag = 'scratch operand']
  %s0 = inlined_call_operand.vmem [shape: f32[2,8,256], index: 0, kind: input, shape index: {}]
  %s1 = inlined_call_operand.vmem [shape: bf16[8,8], index: 1, kind: input, shape index: {}]
  %s2 = inlined_call_operand.vmem [shape: f32[8,1], index: 2, kind: input, shape index: {}]
  %s3 = inlined_call_operand.vmem [shape: bf16[4,36], index: 3, kind: input, shape index: {}]
  %s4 = inlined_call_operand.vmem [shape: f32[4,1], index: 4, kind: input, shape index: {}]
  %s5 = inlined_call_operand.vmem [shape: f32[4,9], index: 5, kind: input, shape index: {}]
  %s6 = inlined_call_operand.vmem [shape: f32[4,1], index: 6, kind: input, shape index: {}]
  %s7 = inlined_call_operand.vmem [shape: f32[4,1], index: 7, kind: input, shape index: {}]
  %s8 = inlined_call_operand.vmem [shape: f32[4,1], index: 8, kind: input, shape index: {}]
  %s9 = inlined_call_operand.vmem [shape: bf16[16,4], index: 9, kind: input, shape index: {}]
  %s10 = inlined_call_operand.vmem [shape: f32[16,1], index: 10, kind: input, shape index: {}]
  %s11 = inlined_call_operand.vmem [shape: f32[16,1], index: 11, kind: input, shape index: {}]
  %s12 = inlined_call_operand.vmem [shape: f32[16,1], index: 12, kind: input, shape index: {}]
  %s13 = inlined_call_operand.vmem [shape: bf16[4,16], index: 13, kind: input, shape index: {}]
  %s14 = inlined_call_operand.vmem [shape: f32[4,1], index: 14, kind: input, shape index: {}]
  %s15 = inlined_call_operand.vmem [shape: f32[4,1], index: 15, kind: input, shape index: {}]
  %s16 = inlined_call_operand.vmem [shape: f32[4,1], index: 16, kind: input, shape index: {}]
  %s17 = inlined_call_operand.vmem [shape: bf16[4,36], index: 17, kind: input, shape index: {}]
  %s18 = inlined_call_operand.vmem [shape: f32[4,1], index: 18, kind: input, shape index: {}]
  %s19 = inlined_call_operand.vmem [shape: bf16[8,12], index: 19, kind: input, shape index: {}]
  %s20 = inlined_call_operand.vmem [shape: f32[8,1], index: 20, kind: input, shape index: {}]
  %s21 = inlined_call_operand.vmem [shape: f32[2,8,256], index: 21, kind: output, shape index: {}]
  %s22 = sld [smem:[#allocation0]]
  $region117: #{c2f_cmunextb_forward.1} parent=0
    _
  %s24 = ssub.s32 1, %s22
  %s25 = scalar_select 0, %s24, %s22
  loop: start=0, step=1, limit=4
  $region2: #{c2f_cmunextb_forward.1} parent=0 // loop_pre_header
    _
  $region3: #{c2f_cmunextb_forward.1} parent=0 // loop_header
    %s27 = sphi 0, %s31
    %p28 = scmp.ge.s32.totalorder %s27, 4
    %s37 = sphi 0, %s39
    %s40 = sphi 0, %s37
    %s41 = sphi 0, %s40
    %s57 = sphi 0, %s41
    %s61 = sphi 0, %s61
    %s63 = sphi 0, %s61
    %s64 = sphi 0, %s63
    %s78 = sphi 0, %s64
    %s82 = sphi 0, %s82
    %s84 = sphi 0, %s82
    %s85 = sphi 0, %s84
    %s99 = sphi 0, %s85
    %s103 = sphi 0, %s103
    %s105 = sphi 0, %s103
    %s106 = sphi 0, %s105
    %s120 = sphi 0, %s106
    %s124 = sphi 0, %s124
    %s126 = sphi 0, %s124
    %s127 = sphi 0, %s126
    %s141 = sphi 0, %s127
    %s145 = sphi 0, %s145
    %s147 = sphi 0, %s145
    %s148 = sphi 0, %s147
    %s162 = sphi 0, %s148
    %s166 = sphi 0, %s166
    %s168 = sphi 0, %s166
    %s169 = sphi 0, %s168
    %s183 = sphi 0, %s169
    %s187 = sphi 0, %s187
    %s189 = sphi 0, %s187
    %s190 = sphi 0, %s189
    %s204 = sphi 0, %s190
    %s208 = sphi 0, %s208
    %s210 = sphi 0, %s208
    %s211 = sphi 0, %s210
    %s225 = sphi 0, %s211
    %s229 = sphi 0, %s229
    %s231 = sphi 0, %s229
    %s232 = sphi 0, %s231
    %s246 = sphi 0, %s232
    %s250 = sphi 0, %s250
    %s252 = sphi 0, %s250
    %s253 = sphi 0, %s252
    %s267 = sphi 0, %s253
    %s271 = sphi 0, %s271
    %s273 = sphi 0, %s271
    %s274 = sphi 0, %s273
    %s288 = sphi 0, %s274
    %s292 = sphi 0, %s292
    %s294 = sphi 0, %s292
    %s295 = sphi 0, %s294
    %s309 = sphi 0, %s295
    %s313 = sphi 0, %s313
    %s315 = sphi 0, %s313
    %s316 = sphi 0, %s315
    %s330 = sphi 0, %s316
    %s334 = sphi 0, %s334
    %s336 = sphi 0, %s334
    %s337 = sphi 0, %s336
    %s351 = sphi 0, %s337
    %s355 = sphi 0, %s355
    %s357 = sphi 0, %s355
    %s358 = sphi 0, %s357
    %s372 = sphi 0, %s358
    %s376 = sphi 0, %s376
    %s378 = sphi 0, %s376
    %s379 = sphi 0, %s378
    %s393 = sphi 0, %s379
    %s397 = sphi 0, %s397
    %s399 = sphi 0, %s397
    %s400 = sphi 0, %s399
    %s414 = sphi 0, %s400
    %s418 = sphi 0, %s418
    %s420 = sphi 0, %s418
    %s421 = sphi 0, %s420
    %s435 = sphi 0, %s421
    %s439 = sphi 0, %s439
    %s441 = sphi 0, %s439
    %s442 = sphi 0, %s441
    %s456 = sphi 0, %s442
    %s460 = sphi 0, %s460
    %s462 = sphi 0, %s460
    %s463 = sphi 0, %s462
    %s477 = sphi 0, %s463
    %s483 = sphi 0, %s485
    %s486 = sphi 0, %s483
    %s487 = sphi 0, %s486
    %s503 = sphi 0, %s487
  $region4: #{c2f_cmunextb_forward.1} parent=0 // loop_header_branch
    %30 = sbr.rel (%p28) target = $region8
  $region5: #{c2f_cmunextb_forward.1} parent=0 // loop_body
    %s32 = ssub.s32 %s27, 1
    %s33 = ssub.s32 %s27, 2
    %s34 = sadd.s32 %s27, 1
    %s35 = ssub.s32 %s27, %s34
    %p36 = scmp.eq.s32.totalorder %s35, 0
    %s38 = sadd.s32 %s37, 1
    %s39 = scalar_select %p36, %s37, %s38
    %p42 = pneg %p36
    %p43 = scmp.eq.s32.totalorder %s27, 1
    %p44 = por %p42, %p43
    %p45 = scmp.ne.s32.totalorder %s37, %s40
    %p46 = scmp.eq.s32.totalorder %s27, 0
    %p47 = por %p45, %p46
    %p48 = scmp.ne.s32.totalorder %s37, %s40
    %p49 = scmp.eq.s32.totalorder %s32, 1
    %p50 = por %p48, %p49
    %p51 = scmp.ne.s32.totalorder %s40, %s41
    %p52 = scmp.eq.s32.totalorder %s32, 0
    %p53 = por %p51, %p52
    %p54 = scmp.ne.s32.totalorder %s40, %s41
    %p55 = scmp.eq.s32.totalorder %s33, 1
    %p56 = por %p54, %p55
    %p58 = scmp.ne.s32.totalorder %s41, %s57
    %p59 = scmp.eq.s32.totalorder %s33, 0
    %p60 = por %p58, %p59
    %s62 = sadd.s32 %s61, 1
    %p65 = scmp.eq.s32.totalorder %s27, 1
    %p66 = scmp.ne.s32.totalorder %s61, %s63
    %p67 = scmp.eq.s32.totalorder %s27, 0
    %p68 = por %p66, %p67
    %p69 = scmp.ne.s32.totalorder %s61, %s63
    %p70 = scmp.eq.s32.totalorder %s32, 1
    %p71 = por %p69, %p70
    %p72 = scmp.ne.s32.totalorder %s63, %s64
    %p73 = scmp.eq.s32.totalorder %s32, 0
    %p74 = por %p72, %p73
    %p75 = scmp.ne.s32.totalorder %s63, %s64
    %p76 = scmp.eq.s32.totalorder %s33, 1
    %p77 = por %p75, %p76
    %p79 = scmp.ne.s32.totalorder %s64, %s78
    %p80 = scmp.eq.s32.totalorder %s33, 0
    %p81 = por %p79, %p80
    %s83 = sadd.s32 %s82, 1
    %p86 = scmp.eq.s32.totalorder %s27, 1
    %p87 = scmp.ne.s32.totalorder %s82, %s84
    %p88 = scmp.eq.s32.totalorder %s27, 0
    %p89 = por %p87, %p88
    %p90 = scmp.ne.s32.totalorder %s82, %s84
    %p91 = scmp.eq.s32.totalorder %s32, 1
    %p92 = por %p90, %p91
    %p93 = scmp.ne.s32.totalorder %s84, %s85
    %p94 = scmp.eq.s32.totalorder %s32, 0
    %p95 = por %p93, %p94
    %p96 = scmp.ne.s32.totalorder %s84, %s85
    %p97 = scmp.eq.s32.totalorder %s33, 1
    %p98 = por %p96, %p97
    %p100 = scmp.ne.s32.totalorder %s85, %s99
    %p101 = scmp.eq.s32.totalorder %s33, 0
    %p102 = por %p100, %p101
    %s104 = sadd.s32 %s103, 1
    %p107 = scmp.eq.s32.totalorder %s27, 1
    %p108 = scmp.ne.s32.totalorder %s103, %s105
    %p109 = scmp.eq.s32.totalorder %s27, 0
    %p110 = por %p108, %p109
    %p111 = scmp.ne.s32.totalorder %s103, %s105
    %p112 = scmp.eq.s32.totalorder %s32, 1
    %p113 = por %p111, %p112
    %p114 = scmp.ne.s32.totalorder %s105, %s106
    %p115 = scmp.eq.s32.totalorder %s32, 0
    %p116 = por %p114, %p115
    %p117 = scmp.ne.s32.totalorder %s105, %s106
    %p118 = scmp.eq.s32.totalorder %s33, 1
    %p119 = por %p117, %p118
    %p121 = scmp.ne.s32.totalorder %s106, %s120
    %p122 = scmp.eq.s32.totalorder %s33, 0
    %p123 = por %p121, %p122
    %s125 = sadd.s32 %s124, 1
    %p128 = scmp.eq.s32.totalorder %s27, 1
    %p129 = scmp.ne.s32.totalorder %s124, %s126
    %p130 = scmp.eq.s32.totalorder %s27, 0
    %p131 = por %p129, %p130
    %p132 = scmp.ne.s32.totalorder %s124, %s126
    %p133 = scmp.eq.s32.totalorder %s32, 1
    %p134 = por %p132, %p133
    %p135 = scmp.ne.s32.totalorder %s126, %s127
    %p136 = scmp.eq.s32.totalorder %s32, 0
    %p137 = por %p135, %p136
    %p138 = scmp.ne.s32.totalorder %s126, %s127
    %p139 = scmp.eq.s32.totalorder %s33, 1
    %p140 = por %p138, %p139
    %p142 = scmp.ne.s32.totalorder %s127, %s141
    %p143 = scmp.eq.s32.totalorder %s33, 0
    %p144 = por %p142, %p143
    %s146 = sadd.s32 %s145, 1
    %p149 = scmp.eq.s32.totalorder %s27, 1
    %p150 = scmp.ne.s32.totalorder %s145, %s147
    %p151 = scmp.eq.s32.totalorder %s27, 0
    %p152 = por %p150, %p151
    %p153 = scmp.ne.s32.totalorder %s145, %s147
    %p154 = scmp.eq.s32.totalorder %s32, 1
    %p155 = por %p153, %p154
    %p156 = scmp.ne.s32.totalorder %s147, %s148
    %p157 = scmp.eq.s32.totalorder %s32, 0
    %p158 = por %p156, %p157
    %p159 = scmp.ne.s32.totalorder %s147, %s148
    %p160 = scmp.eq.s32.totalorder %s33, 1
    %p161 = por %p159, %p160
    %p163 = scmp.ne.s32.totalorder %s148, %s162
    %p164 = scmp.eq.s32.totalorder %s33, 0
    %p165 = por %p163, %p164
    %s167 = sadd.s32 %s166, 1
    %p170 = scmp.eq.s32.totalorder %s27, 1
    %p171 = scmp.ne.s32.totalorder %s166, %s168
    %p172 = scmp.eq.s32.totalorder %s27, 0
    %p173 = por %p171, %p172
    %p174 = scmp.ne.s32.totalorder %s166, %s168
    %p175 = scmp.eq.s32.totalorder %s32, 1
    %p176 = por %p174, %p175
    %p177 = scmp.ne.s32.totalorder %s168, %s169
    %p178 = scmp.eq.s32.totalorder %s32, 0
    %p179 = por %p177, %p178
    %p180 = scmp.ne.s32.totalorder %s168, %s169
    %p181 = scmp.eq.s32.totalorder %s33, 1
    %p182 = por %p180, %p181
    %p184 = scmp.ne.s32.totalorder %s169, %s183
    %p185 = scmp.eq.s32.totalorder %s33, 0
    %p186 = por %p184, %p185
    %s188 = sadd.s32 %s187, 1
    %p191 = scmp.eq.s32.totalorder %s27, 1
    %p192 = scmp.ne.s32.totalorder %s187, %s189
    %p193 = scmp.eq.s32.totalorder %s27, 0
    %p194 = por %p192, %p193
    %p195 = scmp.ne.s32.totalorder %s187, %s189
    %p196 = scmp.eq.s32.totalorder %s32, 1
    %p197 = por %p195, %p196
    %p198 = scmp.ne.s32.totalorder %s189, %s190
    %p199 = scmp.eq.s32.totalorder %s32, 0
    %p200 = por %p198, %p199
    %p201 = scmp.ne.s32.totalorder %s189, %s190
    %p202 = scmp.eq.s32.totalorder %s33, 1
    %p203 = por %p201, %p202
    %p205 = scmp.ne.s32.totalorder %s190, %s204
    %p206 = scmp.eq.s32.totalorder %s33, 0
    %p207 = por %p205, %p206
    %s209 = sadd.s32 %s208, 1
    %p212 = scmp.eq.s32.totalorder %s27, 1
    %p213 = scmp.ne.s32.totalorder %s208, %s210
    %p214 = scmp.eq.s32.totalorder %s27, 0
    %p215 = por %p213, %p214
    %p216 = scmp.ne.s32.totalorder %s208, %s210
    %p217 = scmp.eq.s32.totalorder %s32, 1
    %p218 = por %p216, %p217
    %p219 = scmp.ne.s32.totalorder %s210, %s211
    %p220 = scmp.eq.s32.totalorder %s32, 0
    %p221 = por %p219, %p220
    %p222 = scmp.ne.s32.totalorder %s210, %s211
    %p223 = scmp.eq.s32.totalorder %s33, 1
    %p224 = por %p222, %p223
    %p226 = scmp.ne.s32.totalorder %s211, %s225
    %p227 = scmp.eq.s32.totalorder %s33, 0
    %p228 = por %p226, %p227
    %s230 = sadd.s32 %s229, 1
    %p233 = scmp.eq.s32.totalorder %s27, 1
    %p234 = scmp.ne.s32.totalorder %s229, %s231
    %p235 = scmp.eq.s32.totalorder %s27, 0
    %p236 = por %p234, %p235
    %p237 = scmp.ne.s32.totalorder %s229, %s231
    %p238 = scmp.eq.s32.totalorder %s32, 1
    %p239 = por %p237, %p238
    %p240 = scmp.ne.s32.totalorder %s231, %s232
    %p241 = scmp.eq.s32.totalorder %s32, 0
    %p242 = por %p240, %p241
    %p243 = scmp.ne.s32.totalorder %s231, %s232
    %p244 = scmp.eq.s32.totalorder %s33, 1
    %p245 = por %p243, %p244
    %p247 = scmp.ne.s32.totalorder %s232, %s246
    %p248 = scmp.eq.s32.totalorder %s33, 0
    %p249 = por %p247, %p248
    %s251 = sadd.s32 %s250, 1
    %p254 = scmp.eq.s32.totalorder %s27, 1
    %p255 = scmp.ne.s32.totalorder %s250, %s252
    %p256 = scmp.eq.s32.totalorder %s27, 0
    %p257 = por %p255, %p256
    %p258 = scmp.ne.s32.totalorder %s250, %s252
    %p259 = scmp.eq.s32.totalorder %s32, 1
    %p260 = por %p258, %p259
    %p261 = scmp.ne.s32.totalorder %s252, %s253
    %p262 = scmp.eq.s32.totalorder %s32, 0
    %p263 = por %p261, %p262
    %p264 = scmp.ne.s32.totalorder %s252, %s253
    %p265 = scmp.eq.s32.totalorder %s33, 1
    %p266 = por %p264, %p265
    %p268 = scmp.ne.s32.totalorder %s253, %s267
    %p269 = scmp.eq.s32.totalorder %s33, 0
    %p270 = por %p268, %p269
    %s272 = sadd.s32 %s271, 1
    %p275 = scmp.eq.s32.totalorder %s27, 1
    %p276 = scmp.ne.s32.totalorder %s271, %s273
    %p277 = scmp.eq.s32.totalorder %s27, 0
    %p278 = por %p276, %p277
    %p279 = scmp.ne.s32.totalorder %s271, %s273
    %p280 = scmp.eq.s32.totalorder %s32, 1
    %p281 = por %p279, %p280
    %p282 = scmp.ne.s32.totalorder %s273, %s274
    %p283 = scmp.eq.s32.totalorder %s32, 0
    %p284 = por %p282, %p283
    %p285 = scmp.ne.s32.totalorder %s273, %s274
    %p286 = scmp.eq.s32.totalorder %s33, 1
    %p287 = por %p285, %p286
    %p289 = scmp.ne.s32.totalorder %s274, %s288
    %p290 = scmp.eq.s32.totalorder %s33, 0
    %p291 = por %p289, %p290
    %s293 = sadd.s32 %s292, 1
    %p296 = scmp.eq.s32.totalorder %s27, 1
    %p297 = scmp.ne.s32.totalorder %s292, %s294
    %p298 = scmp.eq.s32.totalorder %s27, 0
    %p299 = por %p297, %p298
    %p300 = scmp.ne.s32.totalorder %s292, %s294
    %p301 = scmp.eq.s32.totalorder %s32, 1
    %p302 = por %p300, %p301
    %p303 = scmp.ne.s32.totalorder %s294, %s295
    %p304 = scmp.eq.s32.totalorder %s32, 0
    %p305 = por %p303, %p304
    %p306 = scmp.ne.s32.totalorder %s294, %s295
    %p307 = scmp.eq.s32.totalorder %s33, 1
    %p308 = por %p306, %p307
    %p310 = scmp.ne.s32.totalorder %s295, %s309
    %p311 = scmp.eq.s32.totalorder %s33, 0
    %p312 = por %p310, %p311
    %s314 = sadd.s32 %s313, 1
    %p317 = scmp.eq.s32.totalorder %s27, 1
    %p318 = scmp.ne.s32.totalorder %s313, %s315
    %p319 = scmp.eq.s32.totalorder %s27, 0
    %p320 = por %p318, %p319
    %p321 = scmp.ne.s32.totalorder %s313, %s315
    %p322 = scmp.eq.s32.totalorder %s32, 1
    %p323 = por %p321, %p322
    %p324 = scmp.ne.s32.totalorder %s315, %s316
    %p325 = scmp.eq.s32.totalorder %s32, 0
    %p326 = por %p324, %p325
    %p327 = scmp.ne.s32.totalorder %s315, %s316
    %p328 = scmp.eq.s32.totalorder %s33, 1
    %p329 = por %p327, %p328
    %p331 = scmp.ne.s32.totalorder %s316, %s330
    %p332 = scmp.eq.s32.totalorder %s33, 0
    %p333 = por %p331, %p332
    %s335 = sadd.s32 %s334, 1
    %p338 = scmp.eq.s32.totalorder %s27, 1
    %p339 = scmp.ne.s32.totalorder %s334, %s336
    %p340 = scmp.eq.s32.totalorder %s27, 0
    %p341 = por %p339, %p340
    %p342 = scmp.ne.s32.totalorder %s334, %s336
    %p343 = scmp.eq.s32.totalorder %s32, 1
    %p344 = por %p342, %p343
    %p345 = scmp.ne.s32.totalorder %s336, %s337
    %p346 = scmp.eq.s32.totalorder %s32, 0
    %p347 = por %p345, %p346
    %p348 = scmp.ne.s32.totalorder %s336, %s337
    %p349 = scmp.eq.s32.totalorder %s33, 1
    %p350 = por %p348, %p349
    %p352 = scmp.ne.s32.totalorder %s337, %s351
    %p353 = scmp.eq.s32.totalorder %s33, 0
    %p354 = por %p352, %p353
    %s356 = sadd.s32 %s355, 1
    %p359 = scmp.eq.s32.totalorder %s27, 1
    %p360 = scmp.ne.s32.totalorder %s355, %s357
    %p361 = scmp.eq.s32.totalorder %s27, 0
    %p362 = por %p360, %p361
    %p363 = scmp.ne.s32.totalorder %s355, %s357
    %p364 = scmp.eq.s32.totalorder %s32, 1
    %p365 = por %p363, %p364
    %p366 = scmp.ne.s32.totalorder %s357, %s358
    %p367 = scmp.eq.s32.totalorder %s32, 0
    %p368 = por %p366, %p367
    %p369 = scmp.ne.s32.totalorder %s357, %s358
    %p370 = scmp.eq.s32.totalorder %s33, 1
    %p371 = por %p369, %p370
    %p373 = scmp.ne.s32.totalorder %s358, %s372
    %p374 = scmp.eq.s32.totalorder %s33, 0
    %p375 = por %p373, %p374
    %s377 = sadd.s32 %s376, 1
    %p380 = scmp.eq.s32.totalorder %s27, 1
    %p381 = scmp.ne.s32.totalorder %s376, %s378
    %p382 = scmp.eq.s32.totalorder %s27, 0
    %p383 = por %p381, %p382
    %p384 = scmp.ne.s32.totalorder %s376, %s378
    %p385 = scmp.eq.s32.totalorder %s32, 1
    %p386 = por %p384, %p385
    %p387 = scmp.ne.s32.totalorder %s378, %s379
    %p388 = scmp.eq.s32.totalorder %s32, 0
    %p389 = por %p387, %p388
    %p390 = scmp.ne.s32.totalorder %s378, %s379
    %p391 = scmp.eq.s32.totalorder %s33, 1
    %p392 = por %p390, %p391
    %p394 = scmp.ne.s32.totalorder %s379, %s393
    %p395 = scmp.eq.s32.totalorder %s33, 0
    %p396 = por %p394, %p395
    %s398 = sadd.s32 %s397, 1
    %p401 = scmp.eq.s32.totalorder %s27, 1
    %p402 = scmp.ne.s32.totalorder %s397, %s399
    %p403 = scmp.eq.s32.totalorder %s27, 0
    %p404 = por %p402, %p403
    %p405 = scmp.ne.s32.totalorder %s397, %s399
    %p406 = scmp.eq.s32.totalorder %s32, 1
    %p407 = por %p405, %p406
    %p408 = scmp.ne.s32.totalorder %s399, %s400
    %p409 = scmp.eq.s32.totalorder %s32, 0
    %p410 = por %p408, %p409
    %p411 = scmp.ne.s32.totalorder %s399, %s400
    %p412 = scmp.eq.s32.totalorder %s33, 1
    %p413 = por %p411, %p412
    %p415 = scmp.ne.s32.totalorder %s400, %s414
    %p416 = scmp.eq.s32.totalorder %s33, 0
    %p417 = por %p415, %p416
    %s419 = sadd.s32 %s418, 1
    %p422 = scmp.eq.s32.totalorder %s27, 1
    %p423 = scmp.ne.s32.totalorder %s418, %s420
    %p424 = scmp.eq.s32.totalorder %s27, 0
    %p425 = por %p423, %p424
    %p426 = scmp.ne.s32.totalorder %s418, %s420
    %p427 = scmp.eq.s32.totalorder %s32, 1
    %p428 = por %p426, %p427
    %p429 = scmp.ne.s32.totalorder %s420, %s421
    %p430 = scmp.eq.s32.totalorder %s32, 0
    %p431 = por %p429, %p430
    %p432 = scmp.ne.s32.totalorder %s420, %s421
    %p433 = scmp.eq.s32.totalorder %s33, 1
    %p434 = por %p432, %p433
    %p436 = scmp.ne.s32.totalorder %s421, %s435
    %p437 = scmp.eq.s32.totalorder %s33, 0
    %p438 = por %p436, %p437
    %s440 = sadd.s32 %s439, 1
    %p443 = scmp.eq.s32.totalorder %s27, 1
    %p444 = scmp.ne.s32.totalorder %s439, %s441
    %p445 = scmp.eq.s32.totalorder %s27, 0
    %p446 = por %p444, %p445
    %p447 = scmp.ne.s32.totalorder %s439, %s441
    %p448 = scmp.eq.s32.totalorder %s32, 1
    %p449 = por %p447, %p448
    %p450 = scmp.ne.s32.totalorder %s441, %s442
    %p451 = scmp.eq.s32.totalorder %s32, 0
    %p452 = por %p450, %p451
    %p453 = scmp.ne.s32.totalorder %s441, %s442
    %p454 = scmp.eq.s32.totalorder %s33, 1
    %p455 = por %p453, %p454
    %p457 = scmp.ne.s32.totalorder %s442, %s456
    %p458 = scmp.eq.s32.totalorder %s33, 0
    %p459 = por %p457, %p458
    %s461 = sadd.s32 %s460, 1
    %p464 = scmp.eq.s32.totalorder %s27, 1
    %p465 = scmp.ne.s32.totalorder %s460, %s462
    %p466 = scmp.eq.s32.totalorder %s27, 0
    %p467 = por %p465, %p466
    %p468 = scmp.ne.s32.totalorder %s460, %s462
    %p469 = scmp.eq.s32.totalorder %s32, 1
    %p470 = por %p468, %p469
    %p471 = scmp.ne.s32.totalorder %s462, %s463
    %p472 = scmp.eq.s32.totalorder %s32, 0
    %p473 = por %p471, %p472
    %p474 = scmp.ne.s32.totalorder %s462, %s463
    %p475 = scmp.eq.s32.totalorder %s33, 1
    %p476 = por %p474, %p475
    %p478 = scmp.ne.s32.totalorder %s463, %s477
    %p479 = scmp.eq.s32.totalorder %s33, 0
    %p480 = por %p478, %p479
    %s481 = ssub.s32 %s27, %s34
    %p482 = scmp.eq.s32.totalorder %s481, 0
    %s484 = sadd.s32 %s483, 1
    %s485 = scalar_select %p482, %s483, %s484
    %p488 = pneg %p482
    %p489 = scmp.eq.s32.totalorder %s27, 1
    %p490 = por %p488, %p489
    %p491 = scmp.ne.s32.totalorder %s483, %s486
    %p492 = scmp.eq.s32.totalorder %s27, 0
    %p493 = por %p491, %p492
    %p494 = scmp.ne.s32.totalorder %s483, %s486
    %p495 = scmp.eq.s32.totalorder %s32, 1
    %p496 = por %p494, %p495
    %p497 = scmp.ne.s32.totalorder %s486, %s487
    %p498 = scmp.eq.s32.totalorder %s32, 0
    %p499 = por %p497, %p498
    %p500 = scmp.ne.s32.totalorder %s486, %s487
    %p501 = scmp.eq.s32.totalorder %s33, 1
    %p502 = por %p500, %p501
    %p504 = scmp.ne.s32.totalorder %s487, %s503
    %p505 = scmp.eq.s32.totalorder %s33, 0
    %p506 = por %p504, %p505
    %p507 = scmp.le.s32.totalorder 1, %s27
    %p508 = scmp.lt.s32.totalorder %s27, 3
    %p509 = pnand %p507, %p508
    %p510 = pneg %p509
    // Predicated region
    $region9: #{c2f_cmunextb_forward.1} parent=5 // pred_check
      _
    $region10: #{c2f_cmunextb_forward.1} parent=5 // pred_check_branch
      %512 = sbr.rel (%p509) target = $region12
    $region11: #{c2f_cmunextb_forward.1} parent=5 // pred_region
      %s513 = ssub.s32 %s27, 1
      // Predicated region
      $region13: #{c2f_cmunextb_forward.1} parent=11 // pred_check
        %p514 = pneg %p74
      $region14: #{c2f_cmunextb_forward.1} parent=11 // pred_check_branch
        %516 = sbr.rel (%p514) target = $region16
      $region15: #{c2f_cmunextb_forward.1} parent=11 // pred_region
        _
      $region16: #{c2f_cmunextb_forward.1} parent=11 // pred_fallthru
        _
      // Predicated region
      $region17: #{c2f_cmunextb_forward.1} parent=11 // pred_check
        %p517 = pneg %p95
      $region18: #{c2f_cmunextb_forward.1} parent=11 // pred_check_branch
        %519 = sbr.rel (%p517) target = $region20
      $region19: #{c2f_cmunextb_forward.1} parent=11 // pred_region
        _
      $region20: #{c2f_cmunextb_forward.1} parent=11 // pred_fallthru
        _
      // Predicated region
      $region21: #{c2f_cmunextb_forward.1} parent=11 // pred_check
        %p520 = pneg %p116
      $region22: #{c2f_cmunextb_forward.1} parent=11 // pred_check_branch
        %522 = sbr.rel (%p520) target = $region24
      $region23: #{c2f_cmunextb_forward.1} parent=11 // pred_region
        _
      $region24: #{c2f_cmunextb_forward.1} parent=11 // pred_fallthru
        _
      // Predicated region
      $region25: #{c2f_cmunextb_forward.1} parent=11 // pred_check
        %p523 = pneg %p137
      $region26: #{c2f_cmunextb_forward.1} parent=11 // pred_check_branch
        %525 = sbr.rel (%p523) target = $region28
      $region27: #{c2f_cmunextb_forward.1} parent=11 // pred_region
        _
      $region28: #{c2f_cmunextb_forward.1} parent=11 // pred_fallthru
        _
      // Predicated region
      $region29: #{c2f_cmunextb_forward.1} parent=11 // pred_check
        %p526 = pneg %p158
      $region30: #{c2f_cmunextb_forward.1} parent=11 // pred_check_branch
        %528 = sbr.rel (%p526) target = $region32
      $region31: #{c2f_cmunextb_forward.1} parent=11 // pred_region
        _
      $region32: #{c2f_cmunextb_forward.1} parent=11 // pred_fallthru
        _
      // Predicated region
      $region33: #{c2f_cmunextb_forward.1} parent=11 // pred_check
        %p529 = pneg %p179
      $region34: #{c2f_cmunextb_forward.1} parent=11 // pred_check_branch
        %531 = sbr.rel (%p529) target = $region36
      $region35: #{c2f_cmunextb_forward.1} parent=11 // pred_region
        _
      $region36: #{c2f_cmunextb_forward.1} parent=11 // pred_fallthru
        _
      // Predicated region
      $region37: #{c2f_cmunextb_forward.1} parent=11 // pred_check
        %p532 = pneg %p200
      $region38: #{c2f_cmunextb_forward.1} parent=11 // pred_check_branch
        %534 = sbr.rel (%p532) target = $region40
      $region39: #{c2f_cmunextb_forward.1} parent=11 // pred_region
        _
      $region40: #{c2f_cmunextb_forward.1} parent=11 // pred_fallthru
        _
      // Predicated region
      $region41: #{c2f_cmunextb_forward.1} parent=11 // pred_check
        %p535 = pneg %p221
      $region42: #{c2f_cmunextb_forward.1} parent=11 // pred_check_branch
        %537 = sbr.rel (%p535) target = $region44
      $region43: #{c2f_cmunextb_forward.1} parent=11 // pred_region
        _
      $region44: #{c2f_cmunextb_forward.1} parent=11 // pred_fallthru
        _
      // Predicated region
      $region45: #{c2f_cmunextb_forward.1} parent=11 // pred_check
        %p538 = pneg %p242
      $region46: #{c2f_cmunextb_forward.1} parent=11 // pred_check_branch
        %540 = sbr.rel (%p538) target = $region48
      $region47: #{c2f_cmunextb_forward.1} parent=11 // pred_region
        _
      $region48: #{c2f_cmunextb_forward.1} parent=11 // pred_fallthru
        _
      // Predicated region
      $region49: #{c2f_cmunextb_forward.1} parent=11 // pred_check
        %p541 = pneg %p263
      $region50: #{c2f_cmunextb_forward.1} parent=11 // pred_check_branch
        %543 = sbr.rel (%p541) target = $region52
      $region51: #{c2f_cmunextb_forward.1} parent=11 // pred_region
        _
      $region52: #{c2f_cmunextb_forward.1} parent=11 // pred_fallthru
        _
      // Predicated region
      $region53: #{c2f_cmunextb_forward.1} parent=11 // pred_check
        %p544 = pneg %p284
      $region54: #{c2f_cmunextb_forward.1} parent=11 // pred_check_branch
        %546 = sbr.rel (%p544) target = $region56
      $region55: #{c2f_cmunextb_forward.1} parent=11 // pred_region
        _
      $region56: #{c2f_cmunextb_forward.1} parent=11 // pred_fallthru
        _
      // Predicated region
      $region57: #{c2f_cmunextb_forward.1} parent=11 // pred_check
        %p547 = pneg %p305
      $region58: #{c2f_cmunextb_forward.1} parent=11 // pred_check_branch
        %549 = sbr.rel (%p547) target = $region60
      $region59: #{c2f_cmunextb_forward.1} parent=11 // pred_region
        _
      $region60: #{c2f_cmunextb_forward.1} parent=11 // pred_fallthru
        _
      // Predicated region
      $region61: #{c2f_cmunextb_forward.1} parent=11 // pred_check
        %p550 = pneg %p326
      $region62: #{c2f_cmunextb_forward.1} parent=11 // pred_check_branch
        %552 = sbr.rel (%p550) target = $region64
      $region63: #{c2f_cmunextb_forward.1} parent=11 // pred_region
        _
      $region64: #{c2f_cmunextb_forward.1} parent=11 // pred_fallthru
        _
      // Predicated region
      $region65: #{c2f_cmunextb_forward.1} parent=11 // pred_check
        %p553 = pneg %p347
      $region66: #{c2f_cmunextb_forward.1} parent=11 // pred_check_branch
        %555 = sbr.rel (%p553) target = $region68
      $region67: #{c2f_cmunextb_forward.1} parent=11 // pred_region
        _
      $region68: #{c2f_cmunextb_forward.1} parent=11 // pred_fallthru
        _
      // Predicated region
      $region69: #{c2f_cmunextb_forward.1} parent=11 // pred_check
        %p556 = pneg %p368
      $region70: #{c2f_cmunextb_forward.1} parent=11 // pred_check_branch
        %558 = sbr.rel (%p556) target = $region72
      $region71: #{c2f_cmunextb_forward.1} parent=11 // pred_region
        _
      $region72: #{c2f_cmunextb_forward.1} parent=11 // pred_fallthru
        _
      // Predicated region
      $region73: #{c2f_cmunextb_forward.1} parent=11 // pred_check
        %p559 = pneg %p389
      $region74: #{c2f_cmunextb_forward.1} parent=11 // pred_check_branch
        %561 = sbr.rel (%p559) target = $region76
      $region75: #{c2f_cmunextb_forward.1} parent=11 // pred_region
        _
      $region76: #{c2f_cmunextb_forward.1} parent=11 // pred_fallthru
        _
      // Predicated region
      $region77: #{c2f_cmunextb_forward.1} parent=11 // pred_check
        %p562 = pneg %p410
      $region78: #{c2f_cmunextb_forward.1} parent=11 // pred_check_branch
        %564 = sbr.rel (%p562) target = $region80
      $region79: #{c2f_cmunextb_forward.1} parent=11 // pred_region
        _
      $region80: #{c2f_cmunextb_forward.1} parent=11 // pred_fallthru
        _
      // Predicated region
      $region81: #{c2f_cmunextb_forward.1} parent=11 // pred_check
        %p565 = pneg %p431
      $region82: #{c2f_cmunextb_forward.1} parent=11 // pred_check_branch
        %567 = sbr.rel (%p565) target = $region84
      $region83: #{c2f_cmunextb_forward.1} parent=11 // pred_region
        _
      $region84: #{c2f_cmunextb_forward.1} parent=11 // pred_fallthru
        _
      // Predicated region
      $region85: #{c2f_cmunextb_forward.1} parent=11 // pred_check
        %p568 = pneg %p452
      $region86: #{c2f_cmunextb_forward.1} parent=11 // pred_check_branch
        %570 = sbr.rel (%p568) target = $region88
      $region87: #{c2f_cmunextb_forward.1} parent=11 // pred_region
        _
      $region88: #{c2f_cmunextb_forward.1} parent=11 // pred_fallthru
        _
      // Predicated region
      $region89: #{c2f_cmunextb_forward.1} parent=11 // pred_check
        %p571 = pneg %p473
      $region90: #{c2f_cmunextb_forward.1} parent=11 // pred_check_branch
        %573 = sbr.rel (%p571) target = $region92
      $region91: #{c2f_cmunextb_forward.1} parent=11 // pred_region
        _
      $region92: #{c2f_cmunextb_forward.1} parent=11 // pred_fallthru
        _
    $region12: #{c2f_cmunextb_forward.1} parent=5 // pred_fallthru
      _
    %p574 = scmp.lt.s32.totalorder %s27, 2
    // Predicated region
    $region93: #{c2f_cmunextb_forward.1} parent=5 // pred_check
      %p575 = pneg %p574
    $region94: #{c2f_cmunextb_forward.1} parent=5 // pred_check_branch
      %577 = sbr.rel (%p575) target = $region96
    $region95: #{c2f_cmunextb_forward.1} parent=5 // pred_region
      // Predicated region
      $region97: #{c2f_cmunextb_forward.1} parent=95 // pred_check
        %p578 = pneg %p47
      $region98: #{c2f_cmunextb_forward.1} parent=95 // pred_check_branch
        %580 = sbr.rel (%p578) target = $region100
      $region99: #{c2f_cmunextb_forward.1} parent=95 // pred_region
        %p581 = scmp.lt.s32.totalorder %s27, 1
        %s582 = scalar_select %p581, %s27, 1
        %s583 = smul.addr %s582, 2
        %s584 = smul.addr %s583, 8
        %s585 = scalar_lea.vmem %s0, %s584
      $region100: #{c2f_cmunextb_forward.1} parent=95 // pred_fallthru
        _
    $region96: #{c2f_cmunextb_forward.1} parent=5 // pred_fallthru
      _
    %p586 = scmp.le.s32.totalorder 1, %s27
    %p587 = scmp.lt.s32.totalorder %s27, 3
    %p588 = pnand %p586, %p587
    %p589 = pneg %p588
    // Predicated region
    $region101: #{c2f_cmunextb_forward.1} parent=5 // pred_check
      _
    $region102: #{c2f_cmunextb_forward.1} parent=5 // pred_check_branch
      %591 = sbr.rel (%p588) target = $region104
    $region103: #{c2f_cmunextb_forward.1} parent=5 // pred_region
      %s592 = ssub.s32 %s27, 1
      %p593 = scmp.lt.s32.totalorder %s32, 1
      %s594 = scalar_select %p593, %s32, 1
      %s595 = smul.addr %s594, 2
      %s596 = smul.addr %s595, 8
      %s597 = scalar_lea.vmem %s0, %s596
      %p598 = pneg %p53
      %p599 = pneg %p50
      %p600 = pneg %p74
      %p601 = pneg %p71
      %p602 = pneg %p95
      %p603 = pneg %p92
      %p604 = pneg %p116
      %p605 = pneg %p113
      %p606 = pneg %p137
      %p607 = pneg %p134
      %p608 = pneg %p158
      %p609 = pneg %p155
      %p610 = pneg %p179
      %p611 = pneg %p176
      %p612 = pneg %p200
      %p613 = pneg %p197
      %p614 = pneg %p221
      %p615 = pneg %p218
      %p616 = pneg %p242
      %p617 = pneg %p239
      %p618 = pneg %p263
      %p619 = pneg %p260
      %p620 = pneg %p284
      %p621 = pneg %p281
      %p622 = pneg %p305
      %p623 = pneg %p302
      %p624 = pneg %p326
      %p625 = pneg %p323
      %p626 = pneg %p347
      %p627 = pneg %p344
      %p628 = pneg %p368
      %p629 = pneg %p365
      %p630 = pneg %p389
      %p631 = pneg %p386
      %p632 = pneg %p410
      %p633 = pneg %p407
      %p634 = pneg %p431
      %p635 = pneg %p428
      %p636 = pneg %p452
      %p637 = pneg %p449
      %p638 = pneg %p473
      %p639 = pneg %p470
      %p640 = pneg %p499
      %p641 = pneg %p496
      %p642 = scmp.lt.s32.totalorder %s32, 1
      %s643 = scalar_select %p642, %s32, 1
      %s644 = smul.addr %s643, 2
      %s645 = smul.addr %s644, 8
      %s646 = scalar_lea.vmem %s21, %s645
      %p647 = scmp.lt.s32.totalorder %s32, 1
      %s648 = scalar_select %p647, %s32, 1
      %s649 = smul.addr %s648, 2
      %s650 = smul.addr %s649, 8
      %s651 = scalar_lea.vmem %s0, %s650
      %p652 = scmp.lt.s32.totalorder %s32, 1
      %s653 = scalar_select %p652, %s32, 1
      %s654 = smul.addr %s653, 2
      %s655 = smul.addr %s654, 8
      %s656 = scalar_lea.vmem %s21, %s655
      %vm658 = vcmask 146432
      %659 = vst.msk [vmem:[#allocation2] sm:$0xff] %vm658, 0.0
      %660 = vst.msk [vmem:[#allocation2 + $0x8] sm:$0xff] %vm658, 0.0
      %vm661 = vcmask 140288
      %662 = vst.msk [vmem:[#allocation2 + $0x10] sm:$0x3] %vm661, 0.0
      %663 = vst.msk [vmem:[#allocation2 + $0x18] sm:$0xff] %vm658, 0.0
      %664 = vst.msk [vmem:[#allocation2 + $0x20] sm:$0xff] %vm658, 0.0
      %665 = vst.msk [vmem:[#allocation2 + $0x28] sm:$0x3] %vm661, 0.0
      %666 = vst.msk [vmem:[#allocation2 + $0x30] sm:$0xff] %vm658, 0.0
      %667 = vst.msk [vmem:[#allocation2 + $0x38] sm:$0xff] %vm658, 0.0
      %668 = vst.msk [vmem:[#allocation2 + $0x40] sm:$0x3] %vm661, 0.0
      %669 = vst.msk [vmem:[#allocation2 + $0x48] sm:$0xff] %vm658, 0.0
      %670 = vst.msk [vmem:[#allocation2 + $0x50] sm:$0xff] %vm658, 0.0
      %671 = vst.msk [vmem:[#allocation2 + $0x58] sm:$0x3] %vm661, 0.0
      %v672 = vld [vmem:[%s651] sm:$0xff]
      %v673 = vld [vmem:[%s651 + $0x8] sm:$0xff]
      %v674 = vpack.c.bf16 %v672, %v672
      %v675 = vpack.c.bf16 %v673, %v673
      %v676 = vld [vmem:[%s1] sm:$0xf]
      %v677 = vld [vmem:[%s2] sm:$0xff]
      %679 = vset.pattern.permute.xlu0 0
      %680 = vperm.xlu0 %679, %v677
      %v681 = vpop.permute.xlu0 %680
      %vm683 = vcmask 64512
      %v685 = vsel %vm683, %v676, 0
      %vm687 = vcmask 1043456
      %v689 = vsel %vm687, %v674, 0
      %v692 = vsel %vm687, %v675, 0
      %694 = vmatprep.subr.bf16.mxu0 %v692
      %695 = vmatpush1.bf16.msra.mxu0 %v689
      %696 = vmatprep.subr.bf16.mxu0 0
      %697 = vmatpush1.bf16.msra.mxu0 0
      %698 = vmatprep.subr.bf16.mxu0 0
      %699 = vmatpush1.bf16.msra.mxu0 0
      %700 = vmatprep.subr.bf16.mxu0 0
      %701 = vmatpush1.bf16.msra.mxu0 0
      %702 = vmatprep.subr.bf16.mxu0 0
      %703 = vmatpush1.bf16.msra.mxu0 0
      %704 = vmatprep.subr.bf16.mxu0 0
      %705 = vmatpush1.bf16.msra.mxu0 0
      %706 = vmatprep.subr.bf16.mxu0 0
      %707 = vmatpush1.bf16.msra.mxu0 0
      %708 = vmatprep.subr.bf16.mxu0 0
      %709 = vmatpush1.bf16.msra.mxu0 0
      %710 = vmatprep.subr.bf16.mxu0 0
      %711 = vmatpush1.bf16.msra.mxu0 0
      %712 = vmatprep.subr.bf16.mxu0 0
      %713 = vmatpush1.bf16.msra.mxu0 0
      %714 = vmatprep.subr.bf16.mxu0 0
      %715 = vmatpush1.bf16.msra.mxu0 0
      %716 = vmatprep.subr.bf16.mxu0 0
      %717 = vmatpush1.bf16.msra.mxu0 0
      %718 = vmatprep.subr.bf16.mxu0 0
      %719 = vmatpush1.bf16.msra.mxu0 0
      %720 = vmatprep.subr.bf16.mxu0 0
      %721 = vmatpush1.bf16.msra.mxu0 0
      %722 = vmatprep.subr.bf16.mxu0 0
      %723 = vmatpush1.bf16.msra.mxu0 0
      %724 = vmatprep.subr.bf16.mxu0 0
      %725 = vmatpush1.bf16.msra.mxu0 0
      %726 = vmatprep.mubr.bf16.mxu0 0
      %727 = vmatmul.mubr.bf16.gmra.mrb[0].mxu0 %v685
      %v728 = vpop.f32.mrb[0].mxu0
      %v729 = vadd.f32 %v681, %v728
      %v730 = vpop.f32.mrb[0].mxu0
      %v731 = vadd.f32 %v681, %v730
      %v732 = vpop.f32.mrb[0].mxu0
      %v733 = vpop.f32.mrb[0].mxu0
      %734 = vdwg.mxu0
      %v735 = vsub.f32 0.0, %v729
      %v736 = vsub.f32 0.0, %v731
      %v737 = vmul.f32 %v735, 1.442695
      %v738 = vpow.pop %v737
      %v739 = vmul.f32 %v736, 1.442695
      %v740 = vpow.pop %v739
      %v741 = vadd.f32 %v738, 1.0
      %v742 = vadd.f32 %v740, 1.0
      %v743 = vrcp.pop %v741
      %v744 = vrcp.pop %v742
      %v745 = vmul.f32 %v729, %v743
      %v746 = vmul.f32 %v731, %v744
      %747 = vst [vmem:[#allocation4] sm:$0xff] %v745
      %748 = vst [vmem:[#allocation4 + $0x8] sm:$0xff] %v746
      %750 = vrot.lane.b32.xlu0 %v745, 112
      %v751 = vpop.permute.xlu0 %750
      %752 = vrot.lane.b32.xlu0 %v745, 96
      %v753 = vpop.permute.xlu0 %752
      %754 = vrot.lane.b32.xlu0 %v745, 80
      %v755 = vpop.permute.xlu0 %754
      %756 = vrot.lane.b32.xlu0 %v745, 64
      %v757 = vpop.permute.xlu0 %756
      %758 = vrot.lane.b32.xlu0 %v745, 48
      %v759 = vpop.permute.xlu0 %758
      %760 = vrot.lane.b32.xlu0 %v745, 32
      %v761 = vpop.permute.xlu0 %760
      %762 = vrot.lane.b32.xlu0 %v745, 16
      %v763 = vpop.permute.xlu0 %762
      %765 = vrot.lane.b32.xlu0 %v746, 112
      %v766 = vpop.permute.xlu0 %765
      %767 = vrot.lane.b32.xlu0 %v746, 96
      %v768 = vpop.permute.xlu0 %767
      %769 = vrot.lane.b32.xlu0 %v746, 80
      %v770 = vpop.permute.xlu0 %769
      %771 = vrot.lane.b32.xlu0 %v746, 64
      %v772 = vpop.permute.xlu0 %771
      %773 = vrot.lane.b32.xlu0 %v746, 48
      %v774 = vpop.permute.xlu0 %773
      %775 = vrot.lane.b32.xlu0 %v746, 32
      %v776 = vpop.permute.xlu0 %775
      %777 = vrot.lane.b32.xlu0 %v746, 16
      %v778 = vpop.permute.xlu0 %777
      %v779 = vrot.slane %v745, 4
      %v780 = vrot.slane %v751, 4
      %v781 = vrot.slane %v753, 4
      %v782 = vrot.slane %v755, 4
      %v783 = vrot.slane %v757, 4
      %v784 = vrot.slane %v759, 4
      %v785 = vrot.slane %v761, 4
      %v786 = vrot.slane %v763, 4
      %v787 = vrot.slane %v746, 4
      %v788 = vrot.slane %v766, 4
      %v789 = vrot.slane %v768, 4
      %v790 = vrot.slane %v770, 4
      %v791 = vrot.slane %v772, 4
      %v792 = vrot.slane %v774, 4
      %v793 = vrot.slane %v776, 4
      %v794 = vrot.slane %v778, 4
      %v811 = vcombine.low %v779, %v781
      %v813 = vunpack.c.l.s4 1983009808
      %v814 = vunpack.c.0.s8 %v813
      %v815 = vlaneseq
      %v816 = vshrl.u32 %v815, 7
      %v817 = vsub.s32 %v814, %v816
      %v818 = vrot.slane %v811, %v817
      %v819 = vcombine.low %v780, %v782
      %v821 = vunpack.c.l.s4 1983009808
      %v822 = vunpack.c.0.s8 %v821
      %v823 = vlaneseq
      %v824 = vshrl.u32 %v823, 7
      %v825 = vsub.s32 %v822, %v824
      %v826 = vrot.slane %v819, %v825
      %v827 = vcombine.low %v783, %v785
      %v829 = vunpack.c.l.s4 1983009808
      %v830 = vunpack.c.0.s8 %v829
      %v831 = vlaneseq
      %v832 = vshrl.u32 %v831, 7
      %v833 = vsub.s32 %v830, %v832
      %v834 = vrot.slane %v827, %v833
      %v835 = vcombine.low %v784, %v786
      %v837 = vunpack.c.l.s4 1983009808
      %v838 = vunpack.c.0.s8 %v837
      %v839 = vlaneseq
      %v840 = vshrl.u32 %v839, 7
      %v841 = vsub.s32 %v838, %v840
      %v842 = vrot.slane %v835, %v841
      %v843 = vcombine.low %v818, %v826
      %v844 = vcombine.high %v818, %v826
      %v846 = vunpack.c.l.s4 1934713408
      %v847 = vunpack.c.0.s8 %v846
      %v848 = vlaneseq
      %v849 = vshrl.u32 %v848, 7
      %v850 = vsub.s32 %v847, %v849
      %v851 = vrot.slane %v843, %v850
      %v853 = vunpack.c.l.s4 1934713408
      %v854 = vunpack.c.0.s8 %v853
      %v855 = vlaneseq
      %v856 = vshrl.u32 %v855, 7
      %v857 = vsub.s32 %v854, %v856
      %v858 = vrot.slane %v844, %v857
      %v859 = vcombine.low %v834, %v842
      %v860 = vcombine.high %v834, %v842
      %v862 = vunpack.c.l.s4 1934713408
      %v863 = vunpack.c.0.s8 %v862
      %v864 = vlaneseq
      %v865 = vshrl.u32 %v864, 7
      %v866 = vsub.s32 %v863, %v865
      %v867 = vrot.slane %v859, %v866
      %v869 = vunpack.c.l.s4 1934713408
      %v870 = vunpack.c.0.s8 %v869
      %v871 = vlaneseq
      %v872 = vshrl.u32 %v871, 7
      %v873 = vsub.s32 %v870, %v872
      %v874 = vrot.slane %v860, %v873
      %v875 = vcombine.low %v851, %v867
      %v876 = vcombine.high %v851, %v867
      %v877 = vcombine.low %v858, %v874
      %v878 = vcombine.high %v858, %v874
      %v879 = vcombine.low %v787, %v789
      %v881 = vunpack.c.l.s4 1983009808
      %v882 = vunpack.c.0.s8 %v881
      %v883 = vlaneseq
      %v884 = vshrl.u32 %v883, 7
      %v885 = vsub.s32 %v882, %v884
      %v886 = vrot.slane %v879, %v885
      %v887 = vcombine.low %v788, %v790
      %v889 = vunpack.c.l.s4 1983009808
      %v890 = vunpack.c.0.s8 %v889
      %v891 = vlaneseq
      %v892 = vshrl.u32 %v891, 7
      %v893 = vsub.s32 %v890, %v892
      %v894 = vrot.slane %v887, %v893
      %v895 = vcombine.low %v791, %v793
      %v897 = vunpack.c.l.s4 1983009808
      %v898 = vunpack.c.0.s8 %v897
      %v899 = vlaneseq
      %v900 = vshrl.u32 %v899, 7
      %v901 = vsub.s32 %v898, %v900
      %v902 = vrot.slane %v895, %v901
      %v903 = vcombine.low %v792, %v794
      %v905 = vunpack.c.l.s4 1983009808
      %v906 = vunpack.c.0.s8 %v905
      %v907 = vlaneseq
      %v908 = vshrl.u32 %v907, 7
      %v909 = vsub.s32 %v906, %v908
      %v910 = vrot.slane %v903, %v909
      %v911 = vcombine.low %v886, %v894
      %v912 = vcombine.high %v886, %v894
      %v914 = vunpack.c.l.s4 1934713408
      %v915 = vunpack.c.0.s8 %v914
      %v916 = vlaneseq
      %v917 = vshrl.u32 %v916, 7
      %v918 = vsub.s32 %v915, %v917
      %v919 = vrot.slane %v911, %v918
      %v921 = vunpack.c.l.s4 1934713408
      %v922 = vunpack.c.0.s8 %v921
      %v923 = vlaneseq
      %v924 = vshrl.u32 %v923, 7
      %v925 = vsub.s32 %v922, %v924
      %v926 = vrot.slane %v912, %v925
      %v927 = vcombine.low %v902, %v910
      %v928 = vcombine.high %v902, %v910
      %v930 = vunpack.c.l.s4 1934713408
      %v931 = vunpack.c.0.s8 %v930
      %v932 = vlaneseq
      %v933 = vshrl.u32 %v932, 7
      %v934 = vsub.s32 %v931, %v933
      %v935 = vrot.slane %v927, %v934
      %v937 = vunpack.c.l.s4 1934713408
      %v938 = vunpack.c.0.s8 %v937
      %v939 = vlaneseq
      %v940 = vshrl.u32 %v939, 7
      %v941 = vsub.s32 %v938, %v940
      %v942 = vrot.slane %v928, %v941
      %v943 = vcombine.low %v919, %v935
      %v944 = vcombine.high %v919, %v935
      %v945 = vcombine.low %v926, %v942
      %v946 = vcombine.high %v926, %v942
      %955 = vrot.lane.b32.xlu0 %v875, 1
      %v956 = vpop.permute.xlu0 %955
      %957 = vrot.lane.b32.xlu0 %v943, 1
      %v958 = vpop.permute.xlu0 %957
      %959 = vrot.lane.b32.xlu0 %v876, 1
      %v960 = vpop.permute.xlu0 %959
      %961 = vrot.lane.b32.xlu0 %v944, 1
      %v962 = vpop.permute.xlu0 %961
      %963 = vrot.lane.b32.xlu0 %v877, 1
      %v964 = vpop.permute.xlu0 %963
      %965 = vrot.lane.b32.xlu0 %v945, 1
      %v966 = vpop.permute.xlu0 %965
      %967 = vrot.lane.b32.xlu0 %v878, 1
      %v968 = vpop.permute.xlu0 %967
      %969 = vrot.lane.b32.xlu0 %v946, 1
      %v970 = vpop.permute.xlu0 %969
      %vm979 = vcmask 138248
      %980 = vst.msk [vmem:[#allocation2 + $0x1] sm:$0xff] %vm979, %v956
      %981 = vst.msk [vmem:[#allocation2 + $0x9] sm:$0xff] %vm979, %v958
      %982 = vst.msk [vmem:[#allocation2 + $0x19] sm:$0xff] %vm979, %v960
      %983 = vst.msk [vmem:[#allocation2 + $0x21] sm:$0xff] %vm979, %v962
      %984 = vst.msk [vmem:[#allocation2 + $0x31] sm:$0xff] %vm979, %v964
      %985 = vst.msk [vmem:[#allocation2 + $0x39] sm:$0xff] %vm979, %v966
      %986 = vst.msk [vmem:[#allocation2 + $0x49] sm:$0xff] %vm979, %v968
      %987 = vst.msk [vmem:[#allocation2 + $0x51] sm:$0xff] %vm979, %v970
      %v988 = vld [vmem:[#allocation2] sm:$0xff]
      %v989 = vld [vmem:[#allocation2 + $0x8] sm:$0xff]
      %v990 = vld [vmem:[#allocation2 + $0x18] sm:$0xff]
      %v991 = vld [vmem:[#allocation2 + $0x20] sm:$0xff]
      %v992 = vld [vmem:[#allocation2 + $0x30] sm:$0xff]
      %v993 = vld [vmem:[#allocation2 + $0x38] sm:$0xff]
      %v994 = vld [vmem:[#allocation2 + $0x48] sm:$0xff]
      %v995 = vld [vmem:[#allocation2 + $0x50] sm:$0xff]
      %v996 = vcombine.low %v988, %v992
      %v997 = vcombine.high %v988, %v992
      %v999 = vunpack.c.l.s4 1983009808
      %v1000 = vunpack.c.0.s8 %v999
      %v1001 = vlaneseq
      %v1002 = vshrl.u32 %v1001, 7
      %v1003 = vsub.s32 %v1000, %v1002
      %v1004 = vrot.slane %v996, %v1003
      %v1006 = vunpack.c.l.s4 1983009808
      %v1007 = vunpack.c.0.s8 %v1006
      %v1008 = vlaneseq
      %v1009 = vshrl.u32 %v1008, 7
      %v1010 = vsub.s32 %v1007, %v1009
      %v1011 = vrot.slane %v997, %v1010
      %v1012 = vcombine.low %v990, %v994
      %v1013 = vcombine.high %v990, %v994
      %v1015 = vunpack.c.l.s4 1983009808
      %v1016 = vunpack.c.0.s8 %v1015
      %v1017 = vlaneseq
      %v1018 = vshrl.u32 %v1017, 7
      %v1019 = vsub.s32 %v1016, %v1018
      %v1020 = vrot.slane %v1012, %v1019
      %v1022 = vunpack.c.l.s4 1983009808
      %v1023 = vunpack.c.0.s8 %v1022
      %v1024 = vlaneseq
      %v1025 = vshrl.u32 %v1024, 7
      %v1026 = vsub.s32 %v1023, %v1025
      %v1027 = vrot.slane %v1013, %v1026
      %v1028 = vcombine.low %v1004, %v1020
      %v1029 = vcombine.high %v1004, %v1020
      %v1031 = vunpack.c.l.s4 1934713408
      %v1032 = vunpack.c.0.s8 %v1031
      %v1033 = vlaneseq
      %v1034 = vshrl.u32 %v1033, 7
      %v1035 = vsub.s32 %v1032, %v1034
      %v1036 = vrot.slane %v1028, %v1035
      %v1038 = vunpack.c.l.s4 1934713408
      %v1039 = vunpack.c.0.s8 %v1038
      %v1040 = vlaneseq
      %v1041 = vshrl.u32 %v1040, 7
      %v1042 = vsub.s32 %v1039, %v1041
      %v1043 = vrot.slane %v1029, %v1042
      %v1044 = vcombine.low %v1011, %v1027
      %v1045 = vcombine.high %v1011, %v1027
      %v1047 = vunpack.c.l.s4 1934713408
      %v1048 = vunpack.c.0.s8 %v1047
      %v1049 = vlaneseq
      %v1050 = vshrl.u32 %v1049, 7
      %v1051 = vsub.s32 %v1048, %v1050
      %v1052 = vrot.slane %v1044, %v1051
      %v1054 = vunpack.c.l.s4 1934713408
      %v1055 = vunpack.c.0.s8 %v1054
      %v1056 = vlaneseq
      %v1057 = vshrl.u32 %v1056, 7
      %v1058 = vsub.s32 %v1055, %v1057
      %v1059 = vrot.slane %v1045, %v1058
      %v1060 = vcombine.high %v1036, 0.0
      %v1061 = vcombine.high %v1043, 0.0
      %v1062 = vcombine.high %v1052, 0.0
      %v1063 = vcombine.high %v1059, 0.0
      %v1064 = vcombine.low %v989, %v993
      %v1065 = vcombine.high %v989, %v993
      %v1067 = vunpack.c.l.s4 1983009808
      %v1068 = vunpack.c.0.s8 %v1067
      %v1069 = vlaneseq
      %v1070 = vshrl.u32 %v1069, 7
      %v1071 = vsub.s32 %v1068, %v1070
      %v1072 = vrot.slane %v1064, %v1071
      %v1074 = vunpack.c.l.s4 1983009808
      %v1075 = vunpack.c.0.s8 %v1074
      %v1076 = vlaneseq
      %v1077 = vshrl.u32 %v1076, 7
      %v1078 = vsub.s32 %v1075, %v1077
      %v1079 = vrot.slane %v1065, %v1078
      %v1080 = vcombine.low %v991, %v995
      %v1081 = vcombine.high %v991, %v995
      %v1083 = vunpack.c.l.s4 1983009808
      %v1084 = vunpack.c.0.s8 %v1083
      %v1085 = vlaneseq
      %v1086 = vshrl.u32 %v1085, 7
      %v1087 = vsub.s32 %v1084, %v1086
      %v1088 = vrot.slane %v1080, %v1087
      %v1090 = vunpack.c.l.s4 1983009808
      %v1091 = vunpack.c.0.s8 %v1090
      %v1092 = vlaneseq
      %v1093 = vshrl.u32 %v1092, 7
      %v1094 = vsub.s32 %v1091, %v1093
      %v1095 = vrot.slane %v1081, %v1094
      %v1096 = vcombine.low %v1072, %v1088
      %v1097 = vcombine.high %v1072, %v1088
      %v1099 = vunpack.c.l.s4 1934713408
      %v1100 = vunpack.c.0.s8 %v1099
      %v1101 = vlaneseq
      %v1102 = vshrl.u32 %v1101, 7
      %v1103 = vsub.s32 %v1100, %v1102
      %v1104 = vrot.slane %v1096, %v1103
      %v1106 = vunpack.c.l.s4 1934713408
      %v1107 = vunpack.c.0.s8 %v1106
      %v1108 = vlaneseq
      %v1109 = vshrl.u32 %v1108, 7
      %v1110 = vsub.s32 %v1107, %v1109
      %v1111 = vrot.slane %v1097, %v1110
      %v1112 = vcombine.low %v1079, %v1095
      %v1113 = vcombine.high %v1079, %v1095
      %v1115 = vunpack.c.l.s4 1934713408
      %v1116 = vunpack.c.0.s8 %v1115
      %v1117 = vlaneseq
      %v1118 = vshrl.u32 %v1117, 7
      %v1119 = vsub.s32 %v1116, %v1118
      %v1120 = vrot.slane %v1112, %v1119
      %v1122 = vunpack.c.l.s4 1934713408
      %v1123 = vunpack.c.0.s8 %v1122
      %v1124 = vlaneseq
      %v1125 = vshrl.u32 %v1124, 7
      %v1126 = vsub.s32 %v1123, %v1125
      %v1127 = vrot.slane %v1113, %v1126
      %v1128 = vcombine.high %v1104, 0.0
      %v1129 = vcombine.high %v1111, 0.0
      %v1130 = vcombine.high %v1120, 0.0
      %v1131 = vcombine.high %v1127, 0.0
      %1133 = vrot.lane.b32.xlu0 %v1060, 16
      %v1134 = vpop.permute.xlu0 %1133
      %1137 = vrot.lane.b32.xlu0 %v1043, 32
      %v1138 = vpop.permute.xlu0 %1137
      %1141 = vrot.lane.b32.xlu0 %v1061, 48
      %v1142 = vpop.permute.xlu0 %1141
      %1145 = vrot.lane.b32.xlu0 %v1052, 64
      %v1146 = vpop.permute.xlu0 %1145
      %1149 = vrot.lane.b32.xlu0 %v1062, 80
      %v1150 = vpop.permute.xlu0 %1149
      %1153 = vrot.lane.b32.xlu0 %v1059, 96
      %v1154 = vpop.permute.xlu0 %1153
      %1157 = vrot.lane.b32.xlu0 %v1063, 112
      %v1158 = vpop.permute.xlu0 %1157
      %1161 = vrot.lane.b32.xlu0 %v1128, 16
      %v1162 = vpop.permute.xlu0 %1161
      %1165 = vrot.lane.b32.xlu0 %v1111, 32
      %v1166 = vpop.permute.xlu0 %1165
      %1169 = vrot.lane.b32.xlu0 %v1129, 48
      %v1170 = vpop.permute.xlu0 %1169
      %1173 = vrot.lane.b32.xlu0 %v1120, 64
      %v1174 = vpop.permute.xlu0 %1173
      %1177 = vrot.lane.b32.xlu0 %v1130, 80
      %v1178 = vpop.permute.xlu0 %1177
      %1181 = vrot.lane.b32.xlu0 %v1127, 96
      %v1182 = vpop.permute.xlu0 %1181
      %1185 = vrot.lane.b32.xlu0 %v1131, 112
      %v1186 = vpop.permute.xlu0 %1185
      %vm1188 = vcmask 130048
      %v1189 = vsel %vm1188, %v1036, %v1134
      %vm1190 = vcmask 261120
      %v1191 = vsel %vm1190, %v1189, %v1138
      %vm1192 = vcmask 392192
      %v1193 = vsel %vm1192, %v1191, %v1142
      %vm1194 = vcmask 523264
      %v1195 = vsel %vm1194, %v1193, %v1146
      %vm1196 = vcmask 654336
      %v1197 = vsel %vm1196, %v1195, %v1150
      %vm1198 = vcmask 785408
      %v1199 = vsel %vm1198, %v1197, %v1154
      %vm1200 = vcmask 916480
      %v1201 = vsel %vm1200, %v1199, %v1158
      %v1202 = vsel %vm1188, %v1104, %v1162
      %v1203 = vsel %vm1190, %v1202, %v1166
      %v1204 = vsel %vm1192, %v1203, %v1170
      %v1205 = vsel %vm1194, %v1204, %v1174
      %v1206 = vsel %vm1196, %v1205, %v1178
      %v1207 = vsel %vm1198, %v1206, %v1182
      %v1208 = vsel %vm1200, %v1207, %v1186
      %1209 = vst [vmem:[#allocation3] sm:$0xf] %v1201
      %1210 = vst [vmem:[#allocation3 + $0x8] sm:$0xf] %v1208
      %v1211 = vld [vmem:[#allocation2] sm:$0xff]
      %v1212 = vld [vmem:[#allocation2 + $0x8] sm:$0xff]
      %v1213 = vld [vmem:[#allocation2 + $0x18] sm:$0xff]
      %v1214 = vld [vmem:[#allocation2 + $0x20] sm:$0xff]
      %v1215 = vld [vmem:[#allocation2 + $0x30] sm:$0xff]
      %v1216 = vld [vmem:[#allocation2 + $0x38] sm:$0xff]
      %v1217 = vld [vmem:[#allocation2 + $0x48] sm:$0xff]
      %v1218 = vld [vmem:[#allocation2 + $0x50] sm:$0xff]
      %1227 = vrot.lane.b32.xlu0 %v1211, 127
      %v1228 = vpop.permute.xlu0 %1227
      %1229 = vrot.lane.b32.xlu0 %v1212, 127
      %v1230 = vpop.permute.xlu0 %1229
      %1231 = vrot.lane.b32.xlu0 %v1213, 127
      %v1232 = vpop.permute.xlu0 %1231
      %1233 = vrot.lane.b32.xlu0 %v1214, 127
      %v1234 = vpop.permute.xlu0 %1233
      %1235 = vrot.lane.b32.xlu0 %v1215, 127
      %v1236 = vpop.permute.xlu0 %1235
      %1237 = vrot.lane.b32.xlu0 %v1216, 127
      %v1238 = vpop.permute.xlu0 %1237
      %1239 = vrot.lane.b32.xlu0 %v1217, 127
      %v1240 = vpop.permute.xlu0 %1239
      %1241 = vrot.lane.b32.xlu0 %v1218, 127
      %v1242 = vpop.permute.xlu0 %1241
      %v1251 = vcombine.low %v1228, %v1236
      %v1252 = vcombine.high %v1228, %v1236
      %v1254 = vunpack.c.l.s4 1983009808
      %v1255 = vunpack.c.0.s8 %v1254
      %v1256 = vlaneseq
      %v1257 = vshrl.u32 %v1256, 7
      %v1258 = vsub.s32 %v1255, %v1257
      %v1259 = vrot.slane %v1251, %v1258
      %v1261 = vunpack.c.l.s4 1983009808
      %v1262 = vunpack.c.0.s8 %v1261
      %v1263 = vlaneseq
      %v1264 = vshrl.u32 %v1263, 7
      %v1265 = vsub.s32 %v1262, %v1264
      %v1266 = vrot.slane %v1252, %v1265
      %v1267 = vcombine.low %v1232, %v1240
      %v1268 = vcombine.high %v1232, %v1240
      %v1270 = vunpack.c.l.s4 1983009808
      %v1271 = vunpack.c.0.s8 %v1270
      %v1272 = vlaneseq
      %v1273 = vshrl.u32 %v1272, 7
      %v1274 = vsub.s32 %v1271, %v1273
      %v1275 = vrot.slane %v1267, %v1274
      %v1277 = vunpack.c.l.s4 1983009808
      %v1278 = vunpack.c.0.s8 %v1277
      %v1279 = vlaneseq
      %v1280 = vshrl.u32 %v1279, 7
      %v1281 = vsub.s32 %v1278, %v1280
      %v1282 = vrot.slane %v1268, %v1281
      %v1283 = vcombine.low %v1259, %v1275
      %v1284 = vcombine.high %v1259, %v1275
      %v1286 = vunpack.c.l.s4 1934713408
      %v1287 = vunpack.c.0.s8 %v1286
      %v1288 = vlaneseq
      %v1289 = vshrl.u32 %v1288, 7
      %v1290 = vsub.s32 %v1287, %v1289
      %v1291 = vrot.slane %v1283, %v1290
      %v1293 = vunpack.c.l.s4 1934713408
      %v1294 = vunpack.c.0.s8 %v1293
      %v1295 = vlaneseq
      %v1296 = vshrl.u32 %v1295, 7
      %v1297 = vsub.s32 %v1294, %v1296
      %v1298 = vrot.slane %v1284, %v1297
      %v1299 = vcombine.low %v1266, %v1282
      %v1300 = vcombine.high %v1266, %v1282
      %v1302 = vunpack.c.l.s4 1934713408
      %v1303 = vunpack.c.0.s8 %v1302
      %v1304 = vlaneseq
      %v1305 = vshrl.u32 %v1304, 7
      %v1306 = vsub.s32 %v1303, %v1305
      %v1307 = vrot.slane %v1299, %v1306
      %v1309 = vunpack.c.l.s4 1934713408
      %v1310 = vunpack.c.0.s8 %v1309
      %v1311 = vlaneseq
      %v1312 = vshrl.u32 %v1311, 7
      %v1313 = vsub.s32 %v1310, %v1312
      %v1314 = vrot.slane %v1300, %v1313
      %v1315 = vcombine.high %v1291, 0.0
      %v1316 = vcombine.high %v1298, 0.0
      %v1317 = vcombine.high %v1307, 0.0
      %v1318 = vcombine.high %v1314, 0.0
      %v1319 = vcombine.low %v1230, %v1238
      %v1320 = vcombine.high %v1230, %v1238
      %v1322 = vunpack.c.l.s4 1983009808
      %v1323 = vunpack.c.0.s8 %v1322
      %v1324 = vlaneseq
      %v1325 = vshrl.u32 %v1324, 7
      %v1326 = vsub.s32 %v1323, %v1325
      %v1327 = vrot.slane %v1319, %v1326
      %v1329 = vunpack.c.l.s4 1983009808
      %v1330 = vunpack.c.0.s8 %v1329
      %v1331 = vlaneseq
      %v1332 = vshrl.u32 %v1331, 7
      %v1333 = vsub.s32 %v1330, %v1332
      %v1334 = vrot.slane %v1320, %v1333
      %v1335 = vcombine.low %v1234, %v1242
      %v1336 = vcombine.high %v1234, %v1242
      %v1338 = vunpack.c.l.s4 1983009808
      %v1339 = vunpack.c.0.s8 %v1338
      %v1340 = vlaneseq
      %v1341 = vshrl.u32 %v1340, 7
      %v1342 = vsub.s32 %v1339, %v1341
      %v1343 = vrot.slane %v1335, %v1342
      %v1345 = vunpack.c.l.s4 1983009808
      %v1346 = vunpack.c.0.s8 %v1345
      %v1347 = vlaneseq
      %v1348 = vshrl.u32 %v1347, 7
      %v1349 = vsub.s32 %v1346, %v1348
      %v1350 = vrot.slane %v1336, %v1349
      %v1351 = vcombine.low %v1327, %v1343
      %v1352 = vcombine.high %v1327, %v1343
      %v1354 = vunpack.c.l.s4 1934713408
      %v1355 = vunpack.c.0.s8 %v1354
      %v1356 = vlaneseq
      %v1357 = vshrl.u32 %v1356, 7
      %v1358 = vsub.s32 %v1355, %v1357
      %v1359 = vrot.slane %v1351, %v1358
      %v1361 = vunpack.c.l.s4 1934713408
      %v1362 = vunpack.c.0.s8 %v1361
      %v1363 = vlaneseq
      %v1364 = vshrl.u32 %v1363, 7
      %v1365 = vsub.s32 %v1362, %v1364
      %v1366 = vrot.slane %v1352, %v1365
      %v1367 = vcombine.low %v1334, %v1350
      %v1368 = vcombine.high %v1334, %v1350
      %v1370 = vunpack.c.l.s4 1934713408
      %v1371 = vunpack.c.0.s8 %v1370
      %v1372 = vlaneseq
      %v1373 = vshrl.u32 %v1372, 7
      %v1374 = vsub.s32 %v1371, %v1373
      %v1375 = vrot.slane %v1367, %v1374
      %v1377 = vunpack.c.l.s4 1934713408
      %v1378 = vunpack.c.0.s8 %v1377
      %v1379 = vlaneseq
      %v1380 = vshrl.u32 %v1379, 7
      %v1381 = vsub.s32 %v1378, %v1380
      %v1382 = vrot.slane %v1368, %v1381
      %v1383 = vcombine.high %v1359, 0.0
      %v1384 = vcombine.high %v1366, 0.0
      %v1385 = vcombine.high %v1375, 0.0
      %v1386 = vcombine.high %v1382, 0.0
      %1388 = vrot.lane.b32.xlu0 %v1315, 16
      %v1389 = vpop.permute.xlu0 %1388
      %1392 = vrot.lane.b32.xlu0 %v1298, 32
      %v1393 = vpop.permute.xlu0 %1392
      %1396 = vrot.lane.b32.xlu0 %v1316, 48
      %v1397 = vpop.permute.xlu0 %1396
      %1400 = vrot.lane.b32.xlu0 %v1307, 64
      %v1401 = vpop.permute.xlu0 %1400
      %1404 = vrot.lane.b32.xlu0 %v1317, 80
      %v1405 = vpop.permute.xlu0 %1404
      %1408 = vrot.lane.b32.xlu0 %v1314, 96
      %v1409 = vpop.permute.xlu0 %1408
      %1412 = vrot.lane.b32.xlu0 %v1318, 112
      %v1413 = vpop.permute.xlu0 %1412
      %1416 = vrot.lane.b32.xlu0 %v1383, 16
      %v1417 = vpop.permute.xlu0 %1416
      %1420 = vrot.lane.b32.xlu0 %v1366, 32
      %v1421 = vpop.permute.xlu0 %1420
      %1424 = vrot.lane.b32.xlu0 %v1384, 48
      %v1425 = vpop.permute.xlu0 %1424
      %1428 = vrot.lane.b32.xlu0 %v1375, 64
      %v1429 = vpop.permute.xlu0 %1428
      %1432 = vrot.lane.b32.xlu0 %v1385, 80
      %v1433 = vpop.permute.xlu0 %1432
      %1436 = vrot.lane.b32.xlu0 %v1382, 96
      %v1437 = vpop.permute.xlu0 %1436
      %1440 = vrot.lane.b32.xlu0 %v1386, 112
      %v1441 = vpop.permute.xlu0 %1440
      %v1443 = vsel %vm1188, %v1291, %v1389
      %v1444 = vsel %vm1190, %v1443, %v1393
      %v1445 = vsel %vm1192, %v1444, %v1397
      %v1446 = vsel %vm1194, %v1445, %v1401
      %v1447 = vsel %vm1196, %v1446, %v1405
      %v1448 = vsel %vm1198, %v1447, %v1409
      %v1449 = vsel %vm1200, %v1448, %v1413
      %v1450 = vsel %vm1188, %v1359, %v1417
      %v1451 = vsel %vm1190, %v1450, %v1421
      %v1452 = vsel %vm1192, %v1451, %v1425
      %v1453 = vsel %vm1194, %v1452, %v1429
      %v1454 = vsel %vm1196, %v1453, %v1433
      %v1455 = vsel %vm1198, %v1454, %v1437
      %v1456 = vsel %vm1200, %v1455, %v1441
      %v1459 = vrot.slane %v1449, 4
      %v1460 = vrot.slane %v1456, 4
      %1463 = vst [vmem:[#allocation3] sm:$0xf0] %v1459
      %1464 = vst [vmem:[#allocation3 + $0x8] sm:$0xf0] %v1460
      %v1465 = vld [vmem:[#allocation2] sm:$0xff]
      %v1466 = vld [vmem:[#allocation2 + $0x8] sm:$0xff]
      %v1467 = vld [vmem:[#allocation2 + $0x18] sm:$0xff]
      %v1468 = vld [vmem:[#allocation2 + $0x20] sm:$0xff]
      %v1469 = vld [vmem:[#allocation2 + $0x30] sm:$0xff]
      %v1470 = vld [vmem:[#allocation2 + $0x38] sm:$0xff]
      %v1471 = vld [vmem:[#allocation2 + $0x48] sm:$0xff]
      %v1472 = vld [vmem:[#allocation2 + $0x50] sm:$0xff]
      %1481 = vrot.lane.b32.xlu0 %v1465, 126
      %v1482 = vpop.permute.xlu0 %1481
      %1483 = vrot.lane.b32.xlu0 %v1466, 126
      %v1484 = vpop.permute.xlu0 %1483
      %1485 = vrot.lane.b32.xlu0 %v1467, 126
      %v1486 = vpop.permute.xlu0 %1485
      %1487 = vrot.lane.b32.xlu0 %v1468, 126
      %v1488 = vpop.permute.xlu0 %1487
      %1489 = vrot.lane.b32.xlu0 %v1469, 126
      %v1490 = vpop.permute.xlu0 %1489
      %1491 = vrot.lane.b32.xlu0 %v1470, 126
      %v1492 = vpop.permute.xlu0 %1491
      %1493 = vrot.lane.b32.xlu0 %v1471, 126
      %v1494 = vpop.permute.xlu0 %1493
      %1495 = vrot.lane.b32.xlu0 %v1472, 126
      %v1496 = vpop.permute.xlu0 %1495
      %v1505 = vcombine.low %v1482, %v1490
      %v1506 = vcombine.high %v1482, %v1490
      %v1508 = vunpack.c.l.s4 1983009808
      %v1509 = vunpack.c.0.s8 %v1508
      %v1510 = vlaneseq
      %v1511 = vshrl.u32 %v1510, 7
      %v1512 = vsub.s32 %v1509, %v1511
      %v1513 = vrot.slane %v1505, %v1512
      %v1515 = vunpack.c.l.s4 1983009808
      %v1516 = vunpack.c.0.s8 %v1515
      %v1517 = vlaneseq
      %v1518 = vshrl.u32 %v1517, 7
      %v1519 = vsub.s32 %v1516, %v1518
      %v1520 = vrot.slane %v1506, %v1519
      %v1521 = vcombine.low %v1486, %v1494
      %v1522 = vcombine.high %v1486, %v1494
      %v1524 = vunpack.c.l.s4 1983009808
      %v1525 = vunpack.c.0.s8 %v1524
      %v1526 = vlaneseq
      %v1527 = vshrl.u32 %v1526, 7
      %v1528 = vsub.s32 %v1525, %v1527
      %v1529 = vrot.slane %v1521, %v1528
      %v1531 = vunpack.c.l.s4 1983009808
      %v1532 = vunpack.c.0.s8 %v1531
      %v1533 = vlaneseq
      %v1534 = vshrl.u32 %v1533, 7
      %v1535 = vsub.s32 %v1532, %v1534
      %v1536 = vrot.slane %v1522, %v1535
      %v1537 = vcombine.low %v1513, %v1529
      %v1538 = vcombine.high %v1513, %v1529
      %v1540 = vunpack.c.l.s4 1934713408
      %v1541 = vunpack.c.0.s8 %v1540
      %v1542 = vlaneseq
      %v1543 = vshrl.u32 %v1542, 7
      %v1544 = vsub.s32 %v1541, %v1543
      %v1545 = vrot.slane %v1537, %v1544
      %v1547 = vunpack.c.l.s4 1934713408
      %v1548 = vunpack.c.0.s8 %v1547
      %v1549 = vlaneseq
      %v1550 = vshrl.u32 %v1549, 7
      %v1551 = vsub.s32 %v1548, %v1550
      %v1552 = vrot.slane %v1538, %v1551
      %v1553 = vcombine.low %v1520, %v1536
      %v1554 = vcombine.high %v1520, %v1536
      %v1556 = vunpack.c.l.s4 1934713408
      %v1557 = vunpack.c.0.s8 %v1556
      %v1558 = vlaneseq
      %v1559 = vshrl.u32 %v1558, 7
      %v1560 = vsub.s32 %v1557, %v1559
      %v1561 = vrot.slane %v1553, %v1560
      %v1563 = vunpack.c.l.s4 1934713408
      %v1564 = vunpack.c.0.s8 %v1563
      %v1565 = vlaneseq
      %v1566 = vshrl.u32 %v1565, 7
      %v1567 = vsub.s32 %v1564, %v1566
      %v1568 = vrot.slane %v1554, %v1567
      %v1569 = vcombine.high %v1545, 0.0
      %v1570 = vcombine.high %v1552, 0.0
      %v1571 = vcombine.high %v1561, 0.0
      %v1572 = vcombine.high %v1568, 0.0
      %v1573 = vcombine.low %v1484, %v1492
      %v1574 = vcombine.high %v1484, %v1492
      %v1576 = vunpack.c.l.s4 1983009808
      %v1577 = vunpack.c.0.s8 %v1576
      %v1578 = vlaneseq
      %v1579 = vshrl.u32 %v1578, 7
      %v1580 = vsub.s32 %v1577, %v1579
      %v1581 = vrot.slane %v1573, %v1580
      %v1583 = vunpack.c.l.s4 1983009808
      %v1584 = vunpack.c.0.s8 %v1583
      %v1585 = vlaneseq
      %v1586 = vshrl.u32 %v1585, 7
      %v1587 = vsub.s32 %v1584, %v1586
      %v1588 = vrot.slane %v1574, %v1587
      %v1589 = vcombine.low %v1488, %v1496
      %v1590 = vcombine.high %v1488, %v1496
      %v1592 = vunpack.c.l.s4 1983009808
      %v1593 = vunpack.c.0.s8 %v1592
      %v1594 = vlaneseq
      %v1595 = vshrl.u32 %v1594, 7
      %v1596 = vsub.s32 %v1593, %v1595
      %v1597 = vrot.slane %v1589, %v1596
      %v1599 = vunpack.c.l.s4 1983009808
      %v1600 = vunpack.c.0.s8 %v1599
      %v1601 = vlaneseq
      %v1602 = vshrl.u32 %v1601, 7
      %v1603 = vsub.s32 %v1600, %v1602
      %v1604 = vrot.slane %v1590, %v1603
      %v1605 = vcombine.low %v1581, %v1597
      %v1606 = vcombine.high %v1581, %v1597
      %v1608 = vunpack.c.l.s4 1934713408
      %v1609 = vunpack.c.0.s8 %v1608
      %v1610 = vlaneseq
      %v1611 = vshrl.u32 %v1610, 7
      %v1612 = vsub.s32 %v1609, %v1611
      %v1613 = vrot.slane %v1605, %v1612
      %v1615 = vunpack.c.l.s4 1934713408
      %v1616 = vunpack.c.0.s8 %v1615
      %v1617 = vlaneseq
      %v1618 = vshrl.u32 %v1617, 7
      %v1619 = vsub.s32 %v1616, %v1618
      %v1620 = vrot.slane %v1606, %v1619
      %v1621 = vcombine.low %v1588, %v1604
      %v1622 = vcombine.high %v1588, %v1604
      %v1624 = vunpack.c.l.s4 1934713408
      %v1625 = vunpack.c.0.s8 %v1624
      %v1626 = vlaneseq
      %v1627 = vshrl.u32 %v1626, 7
      %v1628 = vsub.s32 %v1625, %v1627
      %v1629 = vrot.slane %v1621, %v1628
      %v1631 = vunpack.c.l.s4 1934713408
      %v1632 = vunpack.c.0.s8 %v1631
      %v1633 = vlaneseq
      %v1634 = vshrl.u32 %v1633, 7
      %v1635 = vsub.s32 %v1632, %v1634
      %v1636 = vrot.slane %v1622, %v1635
      %v1637 = vcombine.high %v1613, 0.0
      %v1638 = vcombine.high %v1620, 0.0
      %v1639 = vcombine.high %v1629, 0.0
      %v1640 = vcombine.high %v1636, 0.0
      %1642 = vrot.lane.b32.xlu0 %v1569, 16
      %v1643 = vpop.permute.xlu0 %1642
      %1646 = vrot.lane.b32.xlu0 %v1552, 32
      %v1647 = vpop.permute.xlu0 %1646
      %1650 = vrot.lane.b32.xlu0 %v1570, 48
      %v1651 = vpop.permute.xlu0 %1650
      %1654 = vrot.lane.b32.xlu0 %v1561, 64
      %v1655 = vpop.permute.xlu0 %1654
      %1658 = vrot.lane.b32.xlu0 %v1571, 80
      %v1659 = vpop.permute.xlu0 %1658
      %1662 = vrot.lane.b32.xlu0 %v1568, 96
      %v1663 = vpop.permute.xlu0 %1662
      %1666 = vrot.lane.b32.xlu0 %v1572, 112
      %v1667 = vpop.permute.xlu0 %1666
      %1670 = vrot.lane.b32.xlu0 %v1637, 16
      %v1671 = vpop.permute.xlu0 %1670
      %1674 = vrot.lane.b32.xlu0 %v1620, 32
      %v1675 = vpop.permute.xlu0 %1674
      %1678 = vrot.lane.b32.xlu0 %v1638, 48
      %v1679 = vpop.permute.xlu0 %1678
      %1682 = vrot.lane.b32.xlu0 %v1629, 64
      %v1683 = vpop.permute.xlu0 %1682
      %1686 = vrot.lane.b32.xlu0 %v1639, 80
      %v1687 = vpop.permute.xlu0 %1686
      %1690 = vrot.lane.b32.xlu0 %v1636, 96
      %v1691 = vpop.permute.xlu0 %1690
      %1694 = vrot.lane.b32.xlu0 %v1640, 112
      %v1695 = vpop.permute.xlu0 %1694
      %v1697 = vsel %vm1188, %v1545, %v1643
      %v1698 = vsel %vm1190, %v1697, %v1647
      %v1699 = vsel %vm1192, %v1698, %v1651
      %v1700 = vsel %vm1194, %v1699, %v1655
      %v1701 = vsel %vm1196, %v1700, %v1659
      %v1702 = vsel %vm1198, %v1701, %v1663
      %v1703 = vsel %vm1200, %v1702, %v1667
      %v1704 = vsel %vm1188, %v1613, %v1671
      %v1705 = vsel %vm1190, %v1704, %v1675
      %v1706 = vsel %vm1192, %v1705, %v1679
      %v1707 = vsel %vm1194, %v1706, %v1683
      %v1708 = vsel %vm1196, %v1707, %v1687
      %v1709 = vsel %vm1198, %v1708, %v1691
      %v1710 = vsel %vm1200, %v1709, %v1695
      %1711 = vst [vmem:[#allocation3 + $0x10] sm:$0xf] %v1703
      %1712 = vst [vmem:[#allocation3 + $0x18] sm:$0xf] %v1710
      %v1713 = vld [vmem:[#allocation2 + $0x1] sm:$0xff]
      %v1714 = vld [vmem:[#allocation2 + $0x9] sm:$0xff]
      %v1715 = vld [vmem:[#allocation2 + $0x19] sm:$0xff]
      %v1716 = vld [vmem:[#allocation2 + $0x21] sm:$0xff]
      %v1717 = vld [vmem:[#allocation2 + $0x31] sm:$0xff]
      %v1718 = vld [vmem:[#allocation2 + $0x39] sm:$0xff]
      %v1719 = vld [vmem:[#allocation2 + $0x49] sm:$0xff]
      %v1720 = vld [vmem:[#allocation2 + $0x51] sm:$0xff]
      %v1721 = vcombine.low %v1713, %v1717
      %v1722 = vcombine.high %v1713, %v1717
      %v1724 = vunpack.c.l.s4 1983009808
      %v1725 = vunpack.c.0.s8 %v1724
      %v1726 = vlaneseq
      %v1727 = vshrl.u32 %v1726, 7
      %v1728 = vsub.s32 %v1725, %v1727
      %v1729 = vrot.slane %v1721, %v1728
      %v1731 = vunpack.c.l.s4 1983009808
      %v1732 = vunpack.c.0.s8 %v1731
      %v1733 = vlaneseq
      %v1734 = vshrl.u32 %v1733, 7
      %v1735 = vsub.s32 %v1732, %v1734
      %v1736 = vrot.slane %v1722, %v1735
      %v1737 = vcombine.low %v1715, %v1719
      %v1738 = vcombine.high %v1715, %v1719
      %v1740 = vunpack.c.l.s4 1983009808
      %v1741 = vunpack.c.0.s8 %v1740
      %v1742 = vlaneseq
      %v1743 = vshrl.u32 %v1742, 7
      %v1744 = vsub.s32 %v1741, %v1743
      %v1745 = vrot.slane %v1737, %v1744
      %v1747 = vunpack.c.l.s4 1983009808
      %v1748 = vunpack.c.0.s8 %v1747
      %v1749 = vlaneseq
      %v1750 = vshrl.u32 %v1749, 7
      %v1751 = vsub.s32 %v1748, %v1750
      %v1752 = vrot.slane %v1738, %v1751
      %v1753 = vcombine.low %v1729, %v1745
      %v1754 = vcombine.high %v1729, %v1745
      %v1756 = vunpack.c.l.s4 1934713408
      %v1757 = vunpack.c.0.s8 %v1756
      %v1758 = vlaneseq
      %v1759 = vshrl.u32 %v1758, 7
      %v1760 = vsub.s32 %v1757, %v1759
      %v1761 = vrot.slane %v1753, %v1760
      %v1763 = vunpack.c.l.s4 1934713408
      %v1764 = vunpack.c.0.s8 %v1763
      %v1765 = vlaneseq
      %v1766 = vshrl.u32 %v1765, 7
      %v1767 = vsub.s32 %v1764, %v1766
      %v1768 = vrot.slane %v1754, %v1767
      %v1769 = vcombine.low %v1736, %v1752
      %v1770 = vcombine.high %v1736, %v1752
      %v1772 = vunpack.c.l.s4 1934713408
      %v1773 = vunpack.c.0.s8 %v1772
      %v1774 = vlaneseq
      %v1775 = vshrl.u32 %v1774, 7
      %v1776 = vsub.s32 %v1773, %v1775
      %v1777 = vrot.slane %v1769, %v1776
      %v1779 = vunpack.c.l.s4 1934713408
      %v1780 = vunpack.c.0.s8 %v1779
      %v1781 = vlaneseq
      %v1782 = vshrl.u32 %v1781, 7
      %v1783 = vsub.s32 %v1780, %v1782
      %v1784 = vrot.slane %v1770, %v1783
      %v1785 = vcombine.high %v1761, 0.0
      %v1786 = vcombine.high %v1768, 0.0
      %v1787 = vcombine.high %v1777, 0.0
      %v1788 = vcombine.high %v1784, 0.0
      %v1789 = vcombine.low %v1714, %v1718
      %v1790 = vcombine.high %v1714, %v1718
      %v1792 = vunpack.c.l.s4 1983009808
      %v1793 = vunpack.c.0.s8 %v1792
      %v1794 = vlaneseq
      %v1795 = vshrl.u32 %v1794, 7
      %v1796 = vsub.s32 %v1793, %v1795
      %v1797 = vrot.slane %v1789, %v1796
      %v1799 = vunpack.c.l.s4 1983009808
      %v1800 = vunpack.c.0.s8 %v1799
      %v1801 = vlaneseq
      %v1802 = vshrl.u32 %v1801, 7
      %v1803 = vsub.s32 %v1800, %v1802
      %v1804 = vrot.slane %v1790, %v1803
      %v1805 = vcombine.low %v1716, %v1720
      %v1806 = vcombine.high %v1716, %v1720
      %v1808 = vunpack.c.l.s4 1983009808
      %v1809 = vunpack.c.0.s8 %v1808
      %v1810 = vlaneseq
      %v1811 = vshrl.u32 %v1810, 7
      %v1812 = vsub.s32 %v1809, %v1811
      %v1813 = vrot.slane %v1805, %v1812
      %v1815 = vunpack.c.l.s4 1983009808
      %v1816 = vunpack.c.0.s8 %v1815
      %v1817 = vlaneseq
      %v1818 = vshrl.u32 %v1817, 7
      %v1819 = vsub.s32 %v1816, %v1818
      %v1820 = vrot.slane %v1806, %v1819
      %v1821 = vcombine.low %v1797, %v1813
      %v1822 = vcombine.high %v1797, %v1813
      %v1824 = vunpack.c.l.s4 1934713408
      %v1825 = vunpack.c.0.s8 %v1824
      %v1826 = vlaneseq
      %v1827 = vshrl.u32 %v1826, 7
      %v1828 = vsub.s32 %v1825, %v1827
      %v1829 = vrot.slane %v1821, %v1828
      %v1831 = vunpack.c.l.s4 1934713408
      %v1832 = vunpack.c.0.s8 %v1831
      %v1833 = vlaneseq
      %v1834 = vshrl.u32 %v1833, 7
      %v1835 = vsub.s32 %v1832, %v1834
      %v1836 = vrot.slane %v1822, %v1835
      %v1837 = vcombine.low %v1804, %v1820
      %v1838 = vcombine.high %v1804, %v1820
      %v1840 = vunpack.c.l.s4 1934713408
      %v1841 = vunpack.c.0.s8 %v1840
      %v1842 = vlaneseq
      %v1843 = vshrl.u32 %v1842, 7
      %v1844 = vsub.s32 %v1841, %v1843
      %v1845 = vrot.slane %v1837, %v1844
      %v1847 = vunpack.c.l.s4 1934713408
      %v1848 = vunpack.c.0.s8 %v1847
      %v1849 = vlaneseq
      %v1850 = vshrl.u32 %v1849, 7
      %v1851 = vsub.s32 %v1848, %v1850
      %v1852 = vrot.slane %v1838, %v1851
      %v1853 = vcombine.high %v1829, 0.0
      %v1854 = vcombine.high %v1836, 0.0
      %v1855 = vcombine.high %v1845, 0.0
      %v1856 = vcombine.high %v1852, 0.0
      %1858 = vrot.lane.b32.xlu0 %v1785, 16
      %v1859 = vpop.permute.xlu0 %1858
      %1862 = vrot.lane.b32.xlu0 %v1768, 32
      %v1863 = vpop.permute.xlu0 %1862
      %1866 = vrot.lane.b32.xlu0 %v1786, 48
      %v1867 = vpop.permute.xlu0 %1866
      %1870 = vrot.lane.b32.xlu0 %v1777, 64
      %v1871 = vpop.permute.xlu0 %1870
      %1874 = vrot.lane.b32.xlu0 %v1787, 80
      %v1875 = vpop.permute.xlu0 %1874
      %1878 = vrot.lane.b32.xlu0 %v1784, 96
      %v1879 = vpop.permute.xlu0 %1878
      %1882 = vrot.lane.b32.xlu0 %v1788, 112
      %v1883 = vpop.permute.xlu0 %1882
      %1886 = vrot.lane.b32.xlu0 %v1853, 16
      %v1887 = vpop.permute.xlu0 %1886
      %1890 = vrot.lane.b32.xlu0 %v1836, 32
      %v1891 = vpop.permute.xlu0 %1890
      %1894 = vrot.lane.b32.xlu0 %v1854, 48
      %v1895 = vpop.permute.xlu0 %1894
      %1898 = vrot.lane.b32.xlu0 %v1845, 64
      %v1899 = vpop.permute.xlu0 %1898
      %1902 = vrot.lane.b32.xlu0 %v1855, 80
      %v1903 = vpop.permute.xlu0 %1902
      %1906 = vrot.lane.b32.xlu0 %v1852, 96
      %v1907 = vpop.permute.xlu0 %1906
      %1910 = vrot.lane.b32.xlu0 %v1856, 112
      %v1911 = vpop.permute.xlu0 %1910
      %v1913 = vsel %vm1188, %v1761, %v1859
      %v1914 = vsel %vm1190, %v1913, %v1863
      %v1915 = vsel %vm1192, %v1914, %v1867
      %v1916 = vsel %vm1194, %v1915, %v1871
      %v1917 = vsel %vm1196, %v1916, %v1875
      %v1918 = vsel %vm1198, %v1917, %v1879
      %v1919 = vsel %vm1200, %v1918, %v1883
      %v1920 = vsel %vm1188, %v1829, %v1887
      %v1921 = vsel %vm1190, %v1920, %v1891
      %v1922 = vsel %vm1192, %v1921, %v1895
      %v1923 = vsel %vm1194, %v1922, %v1899
      %v1924 = vsel %vm1196, %v1923, %v1903
      %v1925 = vsel %vm1198, %v1924, %v1907
      %v1926 = vsel %vm1200, %v1925, %v1911
      %v1929 = vrot.slane %v1919, 4
      %v1930 = vrot.slane %v1926, 4
      %1933 = vst [vmem:[#allocation3 + $0x10] sm:$0xf0] %v1929
      %1934 = vst [vmem:[#allocation3 + $0x18] sm:$0xf0] %v1930
      %v1935 = vld [vmem:[#allocation2 + $0x1] sm:$0xff]
      %v1936 = vld [vmem:[#allocation2 + $0x9] sm:$0xff]
      %v1937 = vld [vmem:[#allocation2 + $0x19] sm:$0xff]
      %v1938 = vld [vmem:[#allocation2 + $0x21] sm:$0xff]
      %v1939 = vld [vmem:[#allocation2 + $0x31] sm:$0xff]
      %v1940 = vld [vmem:[#allocation2 + $0x39] sm:$0xff]
      %v1941 = vld [vmem:[#allocation2 + $0x49] sm:$0xff]
      %v1942 = vld [vmem:[#allocation2 + $0x51] sm:$0xff]
      %1951 = vrot.lane.b32.xlu0 %v1935, 127
      %v1952 = vpop.permute.xlu0 %1951
      %1953 = vrot.lane.b32.xlu0 %v1936, 127
      %v1954 = vpop.permute.xlu0 %1953
      %1955 = vrot.lane.b32.xlu0 %v1937, 127
      %v1956 = vpop.permute.xlu0 %1955
      %1957 = vrot.lane.b32.xlu0 %v1938, 127
      %v1958 = vpop.permute.xlu0 %1957
      %1959 = vrot.lane.b32.xlu0 %v1939, 127
      %v1960 = vpop.permute.xlu0 %1959
      %1961 = vrot.lane.b32.xlu0 %v1940, 127
      %v1962 = vpop.permute.xlu0 %1961
      %1963 = vrot.lane.b32.xlu0 %v1941, 127
      %v1964 = vpop.permute.xlu0 %1963
      %1965 = vrot.lane.b32.xlu0 %v1942, 127
      %v1966 = vpop.permute.xlu0 %1965
      %v1975 = vcombine.low %v1952, %v1960
      %v1976 = vcombine.high %v1952, %v1960
      %v1978 = vunpack.c.l.s4 1983009808
      %v1979 = vunpack.c.0.s8 %v1978
      %v1980 = vlaneseq
      %v1981 = vshrl.u32 %v1980, 7
      %v1982 = vsub.s32 %v1979, %v1981
      %v1983 = vrot.slane %v1975, %v1982
      %v1985 = vunpack.c.l.s4 1983009808
      %v1986 = vunpack.c.0.s8 %v1985
      %v1987 = vlaneseq
      %v1988 = vshrl.u32 %v1987, 7
      %v1989 = vsub.s32 %v1986, %v1988
      %v1990 = vrot.slane %v1976, %v1989
      %v1991 = vcombine.low %v1956, %v1964
      %v1992 = vcombine.high %v1956, %v1964
      %v1994 = vunpack.c.l.s4 1983009808
      %v1995 = vunpack.c.0.s8 %v1994
      %v1996 = vlaneseq
      %v1997 = vshrl.u32 %v1996, 7
      %v1998 = vsub.s32 %v1995, %v1997
      %v1999 = vrot.slane %v1991, %v1998
      %v2001 = vunpack.c.l.s4 1983009808
      %v2002 = vunpack.c.0.s8 %v2001
      %v2003 = vlaneseq
      %v2004 = vshrl.u32 %v2003, 7
      %v2005 = vsub.s32 %v2002, %v2004
      %v2006 = vrot.slane %v1992, %v2005
      %v2007 = vcombine.low %v1983, %v1999
      %v2008 = vcombine.high %v1983, %v1999
      %v2010 = vunpack.c.l.s4 1934713408
      %v2011 = vunpack.c.0.s8 %v2010
      %v2012 = vlaneseq
      %v2013 = vshrl.u32 %v2012, 7
      %v2014 = vsub.s32 %v2011, %v2013
      %v2015 = vrot.slane %v2007, %v2014
      %v2017 = vunpack.c.l.s4 1934713408
      %v2018 = vunpack.c.0.s8 %v2017
      %v2019 = vlaneseq
      %v2020 = vshrl.u32 %v2019, 7
      %v2021 = vsub.s32 %v2018, %v2020
      %v2022 = vrot.slane %v2008, %v2021
      %v2023 = vcombine.low %v1990, %v2006
      %v2024 = vcombine.high %v1990, %v2006
      %v2026 = vunpack.c.l.s4 1934713408
      %v2027 = vunpack.c.0.s8 %v2026
      %v2028 = vlaneseq
      %v2029 = vshrl.u32 %v2028, 7
      %v2030 = vsub.s32 %v2027, %v2029
      %v2031 = vrot.slane %v2023, %v2030
      %v2033 = vunpack.c.l.s4 1934713408
      %v2034 = vunpack.c.0.s8 %v2033
      %v2035 = vlaneseq
      %v2036 = vshrl.u32 %v2035, 7
      %v2037 = vsub.s32 %v2034, %v2036
      %v2038 = vrot.slane %v2024, %v2037
      %v2039 = vcombine.high %v2015, 0.0
      %v2040 = vcombine.high %v2022, 0.0
      %v2041 = vcombine.high %v2031, 0.0
      %v2042 = vcombine.high %v2038, 0.0
      %v2043 = vcombine.low %v1954, %v1962
      %v2044 = vcombine.high %v1954, %v1962
      %v2046 = vunpack.c.l.s4 1983009808
      %v2047 = vunpack.c.0.s8 %v2046
      %v2048 = vlaneseq
      %v2049 = vshrl.u32 %v2048, 7
      %v2050 = vsub.s32 %v2047, %v2049
      %v2051 = vrot.slane %v2043, %v2050
      %v2053 = vunpack.c.l.s4 1983009808
      %v2054 = vunpack.c.0.s8 %v2053
      %v2055 = vlaneseq
      %v2056 = vshrl.u32 %v2055, 7
      %v2057 = vsub.s32 %v2054, %v2056
      %v2058 = vrot.slane %v2044, %v2057
      %v2059 = vcombine.low %v1958, %v1966
      %v2060 = vcombine.high %v1958, %v1966
      %v2062 = vunpack.c.l.s4 1983009808
      %v2063 = vunpack.c.0.s8 %v2062
      %v2064 = vlaneseq
      %v2065 = vshrl.u32 %v2064, 7
      %v2066 = vsub.s32 %v2063, %v2065
      %v2067 = vrot.slane %v2059, %v2066
      %v2069 = vunpack.c.l.s4 1983009808
      %v2070 = vunpack.c.0.s8 %v2069
      %v2071 = vlaneseq
      %v2072 = vshrl.u32 %v2071, 7
      %v2073 = vsub.s32 %v2070, %v2072
      %v2074 = vrot.slane %v2060, %v2073
      %v2075 = vcombine.low %v2051, %v2067
      %v2076 = vcombine.high %v2051, %v2067
      %v2078 = vunpack.c.l.s4 1934713408
      %v2079 = vunpack.c.0.s8 %v2078
      %v2080 = vlaneseq
      %v2081 = vshrl.u32 %v2080, 7
      %v2082 = vsub.s32 %v2079, %v2081
      %v2083 = vrot.slane %v2075, %v2082
      %v2085 = vunpack.c.l.s4 1934713408
      %v2086 = vunpack.c.0.s8 %v2085
      %v2087 = vlaneseq
      %v2088 = vshrl.u32 %v2087, 7
      %v2089 = vsub.s32 %v2086, %v2088
      %v2090 = vrot.slane %v2076, %v2089
      %v2091 = vcombine.low %v2058, %v2074
      %v2092 = vcombine.high %v2058, %v2074
      %v2094 = vunpack.c.l.s4 1934713408
      %v2095 = vunpack.c.0.s8 %v2094
      %v2096 = vlaneseq
      %v2097 = vshrl.u32 %v2096, 7
      %v2098 = vsub.s32 %v2095, %v2097
      %v2099 = vrot.slane %v2091, %v2098
      %v2101 = vunpack.c.l.s4 1934713408
      %v2102 = vunpack.c.0.s8 %v2101
      %v2103 = vlaneseq
      %v2104 = vshrl.u32 %v2103, 7
      %v2105 = vsub.s32 %v2102, %v2104
      %v2106 = vrot.slane %v2092, %v2105
      %v2107 = vcombine.high %v2083, 0.0
      %v2108 = vcombine.high %v2090, 0.0
      %v2109 = vcombine.high %v2099, 0.0
      %v2110 = vcombine.high %v2106, 0.0
      %2112 = vrot.lane.b32.xlu0 %v2039, 16
      %v2113 = vpop.permute.xlu0 %2112
      %2116 = vrot.lane.b32.xlu0 %v2022, 32
      %v2117 = vpop.permute.xlu0 %2116
      %2120 = vrot.lane.b32.xlu0 %v2040, 48
      %v2121 = vpop.permute.xlu0 %2120
      %2124 = vrot.lane.b32.xlu0 %v2031, 64
      %v2125 = vpop.permute.xlu0 %2124
      %2128 = vrot.lane.b32.xlu0 %v2041, 80
      %v2129 = vpop.permute.xlu0 %2128
      %2132 = vrot.lane.b32.xlu0 %v2038, 96
      %v2133 = vpop.permute.xlu0 %2132
      %2136 = vrot.lane.b32.xlu0 %v2042, 112
      %v2137 = vpop.permute.xlu0 %2136
      %2140 = vrot.lane.b32.xlu0 %v2107, 16
      %v2141 = vpop.permute.xlu0 %2140
      %2144 = vrot.lane.b32.xlu0 %v2090, 32
      %v2145 = vpop.permute.xlu0 %2144
      %2148 = vrot.lane.b32.xlu0 %v2108, 48
      %v2149 = vpop.permute.xlu0 %2148
      %2152 = vrot.lane.b32.xlu0 %v2099, 64
      %v2153 = vpop.permute.xlu0 %2152
      %2156 = vrot.lane.b32.xlu0 %v2109, 80
      %v2157 = vpop.permute.xlu0 %2156
      %2160 = vrot.lane.b32.xlu0 %v2106, 96
      %v2161 = vpop.permute.xlu0 %2160
      %2164 = vrot.lane.b32.xlu0 %v2110, 112
      %v2165 = vpop.permute.xlu0 %2164
      %v2167 = vsel %vm1188, %v2015, %v2113
      %v2168 = vsel %vm1190, %v2167, %v2117
      %v2169 = vsel %vm1192, %v2168, %v2121
      %v2170 = vsel %vm1194, %v2169, %v2125
      %v2171 = vsel %vm1196, %v2170, %v2129
      %v2172 = vsel %vm1198, %v2171, %v2133
      %v2173 = vsel %vm1200, %v2172, %v2137
      %v2174 = vsel %vm1188, %v2083, %v2141
      %v2175 = vsel %vm1190, %v2174, %v2145
      %v2176 = vsel %vm1192, %v2175, %v2149
      %v2177 = vsel %vm1194, %v2176, %v2153
      %v2178 = vsel %vm1196, %v2177, %v2157
      %v2179 = vsel %vm1198, %v2178, %v2161
      %v2180 = vsel %vm1200, %v2179, %v2165
      %2181 = vst [vmem:[#allocation3 + $0x20] sm:$0xf] %v2173
      %2182 = vst [vmem:[#allocation3 + $0x28] sm:$0xf] %v2180
      %v2183 = vld [vmem:[#allocation2 + $0x1] sm:$0xff]
      %v2184 = vld [vmem:[#allocation2 + $0x9] sm:$0xff]
      %v2185 = vld [vmem:[#allocation2 + $0x19] sm:$0xff]
      %v2186 = vld [vmem:[#allocation2 + $0x21] sm:$0xff]
      %v2187 = vld [vmem:[#allocation2 + $0x31] sm:$0xff]
      %v2188 = vld [vmem:[#allocation2 + $0x39] sm:$0xff]
      %v2189 = vld [vmem:[#allocation2 + $0x49] sm:$0xff]
      %v2190 = vld [vmem:[#allocation2 + $0x51] sm:$0xff]
      %2199 = vrot.lane.b32.xlu0 %v2183, 126
      %v2200 = vpop.permute.xlu0 %2199
      %2201 = vrot.lane.b32.xlu0 %v2184, 126
      %v2202 = vpop.permute.xlu0 %2201
      %2203 = vrot.lane.b32.xlu0 %v2185, 126
      %v2204 = vpop.permute.xlu0 %2203
      %2205 = vrot.lane.b32.xlu0 %v2186, 126
      %v2206 = vpop.permute.xlu0 %2205
      %2207 = vrot.lane.b32.xlu0 %v2187, 126
      %v2208 = vpop.permute.xlu0 %2207
      %2209 = vrot.lane.b32.xlu0 %v2188, 126
      %v2210 = vpop.permute.xlu0 %2209
      %2211 = vrot.lane.b32.xlu0 %v2189, 126
      %v2212 = vpop.permute.xlu0 %2211
      %2213 = vrot.lane.b32.xlu0 %v2190, 126
      %v2214 = vpop.permute.xlu0 %2213
      %v2223 = vcombine.low %v2200, %v2208
      %v2224 = vcombine.high %v2200, %v2208
      %v2226 = vunpack.c.l.s4 1983009808
      %v2227 = vunpack.c.0.s8 %v2226
      %v2228 = vlaneseq
      %v2229 = vshrl.u32 %v2228, 7
      %v2230 = vsub.s32 %v2227, %v2229
      %v2231 = vrot.slane %v2223, %v2230
      %v2233 = vunpack.c.l.s4 1983009808
      %v2234 = vunpack.c.0.s8 %v2233
      %v2235 = vlaneseq
      %v2236 = vshrl.u32 %v2235, 7
      %v2237 = vsub.s32 %v2234, %v2236
      %v2238 = vrot.slane %v2224, %v2237
      %v2239 = vcombine.low %v2204, %v2212
      %v2240 = vcombine.high %v2204, %v2212
      %v2242 = vunpack.c.l.s4 1983009808
      %v2243 = vunpack.c.0.s8 %v2242
      %v2244 = vlaneseq
      %v2245 = vshrl.u32 %v2244, 7
      %v2246 = vsub.s32 %v2243, %v2245
      %v2247 = vrot.slane %v2239, %v2246
      %v2249 = vunpack.c.l.s4 1983009808
      %v2250 = vunpack.c.0.s8 %v2249
      %v2251 = vlaneseq
      %v2252 = vshrl.u32 %v2251, 7
      %v2253 = vsub.s32 %v2250, %v2252
      %v2254 = vrot.slane %v2240, %v2253
      %v2255 = vcombine.low %v2231, %v2247
      %v2256 = vcombine.high %v2231, %v2247
      %v2258 = vunpack.c.l.s4 1934713408
      %v2259 = vunpack.c.0.s8 %v2258
      %v2260 = vlaneseq
      %v2261 = vshrl.u32 %v2260, 7
      %v2262 = vsub.s32 %v2259, %v2261
      %v2263 = vrot.slane %v2255, %v2262
      %v2265 = vunpack.c.l.s4 1934713408
      %v2266 = vunpack.c.0.s8 %v2265
      %v2267 = vlaneseq
      %v2268 = vshrl.u32 %v2267, 7
      %v2269 = vsub.s32 %v2266, %v2268
      %v2270 = vrot.slane %v2256, %v2269
      %v2271 = vcombine.low %v2238, %v2254
      %v2272 = vcombine.high %v2238, %v2254
      %v2274 = vunpack.c.l.s4 1934713408
      %v2275 = vunpack.c.0.s8 %v2274
      %v2276 = vlaneseq
      %v2277 = vshrl.u32 %v2276, 7
      %v2278 = vsub.s32 %v2275, %v2277
      %v2279 = vrot.slane %v2271, %v2278
      %v2281 = vunpack.c.l.s4 1934713408
      %v2282 = vunpack.c.0.s8 %v2281
      %v2283 = vlaneseq
      %v2284 = vshrl.u32 %v2283, 7
      %v2285 = vsub.s32 %v2282, %v2284
      %v2286 = vrot.slane %v2272, %v2285
      %v2287 = vcombine.high %v2263, 0.0
      %v2288 = vcombine.high %v2270, 0.0
      %v2289 = vcombine.high %v2279, 0.0
      %v2290 = vcombine.high %v2286, 0.0
      %v2291 = vcombine.low %v2202, %v2210
      %v2292 = vcombine.high %v2202, %v2210
      %v2294 = vunpack.c.l.s4 1983009808
      %v2295 = vunpack.c.0.s8 %v2294
      %v2296 = vlaneseq
      %v2297 = vshrl.u32 %v2296, 7
      %v2298 = vsub.s32 %v2295, %v2297
      %v2299 = vrot.slane %v2291, %v2298
      %v2301 = vunpack.c.l.s4 1983009808
      %v2302 = vunpack.c.0.s8 %v2301
      %v2303 = vlaneseq
      %v2304 = vshrl.u32 %v2303, 7
      %v2305 = vsub.s32 %v2302, %v2304
      %v2306 = vrot.slane %v2292, %v2305
      %v2307 = vcombine.low %v2206, %v2214
      %v2308 = vcombine.high %v2206, %v2214
      %v2310 = vunpack.c.l.s4 1983009808
      %v2311 = vunpack.c.0.s8 %v2310
      %v2312 = vlaneseq
      %v2313 = vshrl.u32 %v2312, 7
      %v2314 = vsub.s32 %v2311, %v2313
      %v2315 = vrot.slane %v2307, %v2314
      %v2317 = vunpack.c.l.s4 1983009808
      %v2318 = vunpack.c.0.s8 %v2317
      %v2319 = vlaneseq
      %v2320 = vshrl.u32 %v2319, 7
      %v2321 = vsub.s32 %v2318, %v2320
      %v2322 = vrot.slane %v2308, %v2321
      %v2323 = vcombine.low %v2299, %v2315
      %v2324 = vcombine.high %v2299, %v2315
      %v2326 = vunpack.c.l.s4 1934713408
      %v2327 = vunpack.c.0.s8 %v2326
      %v2328 = vlaneseq
      %v2329 = vshrl.u32 %v2328, 7
      %v2330 = vsub.s32 %v2327, %v2329
      %v2331 = vrot.slane %v2323, %v2330
      %v2333 = vunpack.c.l.s4 1934713408
      %v2334 = vunpack.c.0.s8 %v2333
      %v2335 = vlaneseq
      %v2336 = vshrl.u32 %v2335, 7
      %v2337 = vsub.s32 %v2334, %v2336
      %v2338 = vrot.slane %v2324, %v2337
      %v2339 = vcombine.low %v2306, %v2322
      %v2340 = vcombine.high %v2306, %v2322
      %v2342 = vunpack.c.l.s4 1934713408
      %v2343 = vunpack.c.0.s8 %v2342
      %v2344 = vlaneseq
      %v2345 = vshrl.u32 %v2344, 7
      %v2346 = vsub.s32 %v2343, %v2345
      %v2347 = vrot.slane %v2339, %v2346
      %v2349 = vunpack.c.l.s4 1934713408
      %v2350 = vunpack.c.0.s8 %v2349
      %v2351 = vlaneseq
      %v2352 = vshrl.u32 %v2351, 7
      %v2353 = vsub.s32 %v2350, %v2352
      %v2354 = vrot.slane %v2340, %v2353
      %v2355 = vcombine.high %v2331, 0.0
      %v2356 = vcombine.high %v2338, 0.0
      %v2357 = vcombine.high %v2347, 0.0
      %v2358 = vcombine.high %v2354, 0.0
      %2360 = vrot.lane.b32.xlu0 %v2287, 16
      %v2361 = vpop.permute.xlu0 %2360
      %2364 = vrot.lane.b32.xlu0 %v2270, 32
      %v2365 = vpop.permute.xlu0 %2364
      %2368 = vrot.lane.b32.xlu0 %v2288, 48
      %v2369 = vpop.permute.xlu0 %2368
      %2372 = vrot.lane.b32.xlu0 %v2279, 64
      %v2373 = vpop.permute.xlu0 %2372
      %2376 = vrot.lane.b32.xlu0 %v2289, 80
      %v2377 = vpop.permute.xlu0 %2376
      %2380 = vrot.lane.b32.xlu0 %v2286, 96
      %v2381 = vpop.permute.xlu0 %2380
      %2384 = vrot.lane.b32.xlu0 %v2290, 112
      %v2385 = vpop.permute.xlu0 %2384
      %2388 = vrot.lane.b32.xlu0 %v2355, 16
      %v2389 = vpop.permute.xlu0 %2388
      %2392 = vrot.lane.b32.xlu0 %v2338, 32
      %v2393 = vpop.permute.xlu0 %2392
      %2396 = vrot.lane.b32.xlu0 %v2356, 48
      %v2397 = vpop.permute.xlu0 %2396
      %2400 = vrot.lane.b32.xlu0 %v2347, 64
      %v2401 = vpop.permute.xlu0 %2400
      %2404 = vrot.lane.b32.xlu0 %v2357, 80
      %v2405 = vpop.permute.xlu0 %2404
      %2408 = vrot.lane.b32.xlu0 %v2354, 96
      %v2409 = vpop.permute.xlu0 %2408
      %2412 = vrot.lane.b32.xlu0 %v2358, 112
      %v2413 = vpop.permute.xlu0 %2412
      %v2415 = vsel %vm1188, %v2263, %v2361
      %v2416 = vsel %vm1190, %v2415, %v2365
      %v2417 = vsel %vm1192, %v2416, %v2369
      %v2418 = vsel %vm1194, %v2417, %v2373
      %v2419 = vsel %vm1196, %v2418, %v2377
      %v2420 = vsel %vm1198, %v2419, %v2381
      %v2421 = vsel %vm1200, %v2420, %v2385
      %v2422 = vsel %vm1188, %v2331, %v2389
      %v2423 = vsel %vm1190, %v2422, %v2393
      %v2424 = vsel %vm1192, %v2423, %v2397
      %v2425 = vsel %vm1194, %v2424, %v2401
      %v2426 = vsel %vm1196, %v2425, %v2405
      %v2427 = vsel %vm1198, %v2426, %v2409
      %v2428 = vsel %vm1200, %v2427, %v2413
      %v2431 = vrot.slane %v2421, 4
      %v2432 = vrot.slane %v2428, 4
      %2435 = vst [vmem:[#allocation3 + $0x20] sm:$0xf0] %v2431
      %2436 = vst [vmem:[#allocation3 + $0x28] sm:$0xf0] %v2432
      %v2437 = vld [vmem:[#allocation2 + $0x2] sm:$0xff]
      %v2438 = vld [vmem:[#allocation2 + $0xa] sm:$0xff]
      %v2439 = vld [vmem:[#allocation2 + $0x1a] sm:$0xff]
      %v2440 = vld [vmem:[#allocation2 + $0x22] sm:$0xff]
      %v2441 = vld [vmem:[#allocation2 + $0x32] sm:$0xff]
      %v2442 = vld [vmem:[#allocation2 + $0x3a] sm:$0xff]
      %v2443 = vld [vmem:[#allocation2 + $0x4a] sm:$0xff]
      %v2444 = vld [vmem:[#allocation2 + $0x52] sm:$0xff]
      %v2445 = vcombine.low %v2437, %v2441
      %v2446 = vcombine.high %v2437, %v2441
      %v2448 = vunpack.c.l.s4 1983009808
      %v2449 = vunpack.c.0.s8 %v2448
      %v2450 = vlaneseq
      %v2451 = vshrl.u32 %v2450, 7
      %v2452 = vsub.s32 %v2449, %v2451
      %v2453 = vrot.slane %v2445, %v2452
      %v2455 = vunpack.c.l.s4 1983009808
      %v2456 = vunpack.c.0.s8 %v2455
      %v2457 = vlaneseq
      %v2458 = vshrl.u32 %v2457, 7
      %v2459 = vsub.s32 %v2456, %v2458
      %v2460 = vrot.slane %v2446, %v2459
      %v2461 = vcombine.low %v2439, %v2443
      %v2462 = vcombine.high %v2439, %v2443
      %v2464 = vunpack.c.l.s4 1983009808
      %v2465 = vunpack.c.0.s8 %v2464
      %v2466 = vlaneseq
      %v2467 = vshrl.u32 %v2466, 7
      %v2468 = vsub.s32 %v2465, %v2467
      %v2469 = vrot.slane %v2461, %v2468
      %v2471 = vunpack.c.l.s4 1983009808
      %v2472 = vunpack.c.0.s8 %v2471
      %v2473 = vlaneseq
      %v2474 = vshrl.u32 %v2473, 7
      %v2475 = vsub.s32 %v2472, %v2474
      %v2476 = vrot.slane %v2462, %v2475
      %v2477 = vcombine.low %v2453, %v2469
      %v2478 = vcombine.high %v2453, %v2469
      %v2480 = vunpack.c.l.s4 1934713408
      %v2481 = vunpack.c.0.s8 %v2480
      %v2482 = vlaneseq
      %v2483 = vshrl.u32 %v2482, 7
      %v2484 = vsub.s32 %v2481, %v2483
      %v2485 = vrot.slane %v2477, %v2484
      %v2487 = vunpack.c.l.s4 1934713408
      %v2488 = vunpack.c.0.s8 %v2487
      %v2489 = vlaneseq
      %v2490 = vshrl.u32 %v2489, 7
      %v2491 = vsub.s32 %v2488, %v2490
      %v2492 = vrot.slane %v2478, %v2491
      %v2493 = vcombine.low %v2460, %v2476
      %v2494 = vcombine.high %v2460, %v2476
      %v2496 = vunpack.c.l.s4 1934713408
      %v2497 = vunpack.c.0.s8 %v2496
      %v2498 = vlaneseq
      %v2499 = vshrl.u32 %v2498, 7
      %v2500 = vsub.s32 %v2497, %v2499
      %v2501 = vrot.slane %v2493, %v2500
      %v2503 = vunpack.c.l.s4 1934713408
      %v2504 = vunpack.c.0.s8 %v2503
      %v2505 = vlaneseq
      %v2506 = vshrl.u32 %v2505, 7
      %v2507 = vsub.s32 %v2504, %v2506
      %v2508 = vrot.slane %v2494, %v2507
      %v2509 = vcombine.high %v2485, 0.0
      %v2510 = vcombine.high %v2492, 0.0
      %v2511 = vcombine.high %v2501, 0.0
      %v2512 = vcombine.high %v2508, 0.0
      %v2513 = vcombine.low %v2438, %v2442
      %v2514 = vcombine.high %v2438, %v2442
      %v2516 = vunpack.c.l.s4 1983009808
      %v2517 = vunpack.c.0.s8 %v2516
      %v2518 = vlaneseq
      %v2519 = vshrl.u32 %v2518, 7
      %v2520 = vsub.s32 %v2517, %v2519
      %v2521 = vrot.slane %v2513, %v2520
      %v2523 = vunpack.c.l.s4 1983009808
      %v2524 = vunpack.c.0.s8 %v2523
      %v2525 = vlaneseq
      %v2526 = vshrl.u32 %v2525, 7
      %v2527 = vsub.s32 %v2524, %v2526
      %v2528 = vrot.slane %v2514, %v2527
      %v2529 = vcombine.low %v2440, %v2444
      %v2530 = vcombine.high %v2440, %v2444
      %v2532 = vunpack.c.l.s4 1983009808
      %v2533 = vunpack.c.0.s8 %v2532
      %v2534 = vlaneseq
      %v2535 = vshrl.u32 %v2534, 7
      %v2536 = vsub.s32 %v2533, %v2535
      %v2537 = vrot.slane %v2529, %v2536
      %v2539 = vunpack.c.l.s4 1983009808
      %v2540 = vunpack.c.0.s8 %v2539
      %v2541 = vlaneseq
      %v2542 = vshrl.u32 %v2541, 7
      %v2543 = vsub.s32 %v2540, %v2542
      %v2544 = vrot.slane %v2530, %v2543
      %v2545 = vcombine.low %v2521, %v2537
      %v2546 = vcombine.high %v2521, %v2537
      %v2548 = vunpack.c.l.s4 1934713408
      %v2549 = vunpack.c.0.s8 %v2548
      %v2550 = vlaneseq
      %v2551 = vshrl.u32 %v2550, 7
      %v2552 = vsub.s32 %v2549, %v2551
      %v2553 = vrot.slane %v2545, %v2552
      %v2555 = vunpack.c.l.s4 1934713408
      %v2556 = vunpack.c.0.s8 %v2555
      %v2557 = vlaneseq
      %v2558 = vshrl.u32 %v2557, 7
      %v2559 = vsub.s32 %v2556, %v2558
      %v2560 = vrot.slane %v2546, %v2559
      %v2561 = vcombine.low %v2528, %v2544
      %v2562 = vcombine.high %v2528, %v2544
      %v2564 = vunpack.c.l.s4 1934713408
      %v2565 = vunpack.c.0.s8 %v2564
      %v2566 = vlaneseq
      %v2567 = vshrl.u32 %v2566, 7
      %v2568 = vsub.s32 %v2565, %v2567
      %v2569 = vrot.slane %v2561, %v2568
      %v2571 = vunpack.c.l.s4 1934713408
      %v2572 = vunpack.c.0.s8 %v2571
      %v2573 = vlaneseq
      %v2574 = vshrl.u32 %v2573, 7
      %v2575 = vsub.s32 %v2572, %v2574
      %v2576 = vrot.slane %v2562, %v2575
      %v2577 = vcombine.high %v2553, 0.0
      %v2578 = vcombine.high %v2560, 0.0
      %v2579 = vcombine.high %v2569, 0.0
      %v2580 = vcombine.high %v2576, 0.0
      %2582 = vrot.lane.b32.xlu0 %v2509, 16
      %v2583 = vpop.permute.xlu0 %2582
      %2586 = vrot.lane.b32.xlu0 %v2492, 32
      %v2587 = vpop.permute.xlu0 %2586
      %2590 = vrot.lane.b32.xlu0 %v2510, 48
      %v2591 = vpop.permute.xlu0 %2590
      %2594 = vrot.lane.b32.xlu0 %v2501, 64
      %v2595 = vpop.permute.xlu0 %2594
      %2598 = vrot.lane.b32.xlu0 %v2511, 80
      %v2599 = vpop.permute.xlu0 %2598
      %2602 = vrot.lane.b32.xlu0 %v2508, 96
      %v2603 = vpop.permute.xlu0 %2602
      %2606 = vrot.lane.b32.xlu0 %v2512, 112
      %v2607 = vpop.permute.xlu0 %2606
      %2610 = vrot.lane.b32.xlu0 %v2577, 16
      %v2611 = vpop.permute.xlu0 %2610
      %2614 = vrot.lane.b32.xlu0 %v2560, 32
      %v2615 = vpop.permute.xlu0 %2614
      %2618 = vrot.lane.b32.xlu0 %v2578, 48
      %v2619 = vpop.permute.xlu0 %2618
      %2622 = vrot.lane.b32.xlu0 %v2569, 64
      %v2623 = vpop.permute.xlu0 %2622
      %2626 = vrot.lane.b32.xlu0 %v2579, 80
      %v2627 = vpop.permute.xlu0 %2626
      %2630 = vrot.lane.b32.xlu0 %v2576, 96
      %v2631 = vpop.permute.xlu0 %2630
      %2634 = vrot.lane.b32.xlu0 %v2580, 112
      %v2635 = vpop.permute.xlu0 %2634
      %v2637 = vsel %vm1188, %v2485, %v2583
      %v2638 = vsel %vm1190, %v2637, %v2587
      %v2639 = vsel %vm1192, %v2638, %v2591
      %v2640 = vsel %vm1194, %v2639, %v2595
      %v2641 = vsel %vm1196, %v2640, %v2599
      %v2642 = vsel %vm1198, %v2641, %v2603
      %v2643 = vsel %vm1200, %v2642, %v2607
      %v2644 = vsel %vm1188, %v2553, %v2611
      %v2645 = vsel %vm1190, %v2644, %v2615
      %v2646 = vsel %vm1192, %v2645, %v2619
      %v2647 = vsel %vm1194, %v2646, %v2623
      %v2648 = vsel %vm1196, %v2647, %v2627
      %v2649 = vsel %vm1198, %v2648, %v2631
      %v2650 = vsel %vm1200, %v2649, %v2635
      %2651 = vst [vmem:[#allocation3 + $0x30] sm:$0xf] %v2643
      %2652 = vst [vmem:[#allocation3 + $0x38] sm:$0xf] %v2650
      %v2653 = vld [vmem:[#allocation2 + $0x2] sm:$0xff]
      %v2654 = vld [vmem:[#allocation2 + $0xa] sm:$0xff]
      %v2655 = vld [vmem:[#allocation2 + $0x1a] sm:$0xff]
      %v2656 = vld [vmem:[#allocation2 + $0x22] sm:$0xff]
      %v2657 = vld [vmem:[#allocation2 + $0x32] sm:$0xff]
      %v2658 = vld [vmem:[#allocation2 + $0x3a] sm:$0xff]
      %v2659 = vld [vmem:[#allocation2 + $0x4a] sm:$0xff]
      %v2660 = vld [vmem:[#allocation2 + $0x52] sm:$0xff]
      %2669 = vrot.lane.b32.xlu0 %v2653, 127
      %v2670 = vpop.permute.xlu0 %2669
      %2671 = vrot.lane.b32.xlu0 %v2654, 127
      %v2672 = vpop.permute.xlu0 %2671
      %2673 = vrot.lane.b32.xlu0 %v2655, 127
      %v2674 = vpop.permute.xlu0 %2673
      %2675 = vrot.lane.b32.xlu0 %v2656, 127
      %v2676 = vpop.permute.xlu0 %2675
      %2677 = vrot.lane.b32.xlu0 %v2657, 127
      %v2678 = vpop.permute.xlu0 %2677
      %2679 = vrot.lane.b32.xlu0 %v2658, 127
      %v2680 = vpop.permute.xlu0 %2679
      %2681 = vrot.lane.b32.xlu0 %v2659, 127
      %v2682 = vpop.permute.xlu0 %2681
      %2683 = vrot.lane.b32.xlu0 %v2660, 127
      %v2684 = vpop.permute.xlu0 %2683
      %v2693 = vcombine.low %v2670, %v2678
      %v2694 = vcombine.high %v2670, %v2678
      %v2696 = vunpack.c.l.s4 1983009808
      %v2697 = vunpack.c.0.s8 %v2696
      %v2698 = vlaneseq
      %v2699 = vshrl.u32 %v2698, 7
      %v2700 = vsub.s32 %v2697, %v2699
      %v2701 = vrot.slane %v2693, %v2700
      %v2703 = vunpack.c.l.s4 1983009808
      %v2704 = vunpack.c.0.s8 %v2703
      %v2705 = vlaneseq
      %v2706 = vshrl.u32 %v2705, 7
      %v2707 = vsub.s32 %v2704, %v2706
      %v2708 = vrot.slane %v2694, %v2707
      %v2709 = vcombine.low %v2674, %v2682
      %v2710 = vcombine.high %v2674, %v2682
      %v2712 = vunpack.c.l.s4 1983009808
      %v2713 = vunpack.c.0.s8 %v2712
      %v2714 = vlaneseq
      %v2715 = vshrl.u32 %v2714, 7
      %v2716 = vsub.s32 %v2713, %v2715
      %v2717 = vrot.slane %v2709, %v2716
      %v2719 = vunpack.c.l.s4 1983009808
      %v2720 = vunpack.c.0.s8 %v2719
      %v2721 = vlaneseq
      %v2722 = vshrl.u32 %v2721, 7
      %v2723 = vsub.s32 %v2720, %v2722
      %v2724 = vrot.slane %v2710, %v2723
      %v2725 = vcombine.low %v2701, %v2717
      %v2726 = vcombine.high %v2701, %v2717
      %v2728 = vunpack.c.l.s4 1934713408
      %v2729 = vunpack.c.0.s8 %v2728
      %v2730 = vlaneseq
      %v2731 = vshrl.u32 %v2730, 7
      %v2732 = vsub.s32 %v2729, %v2731
      %v2733 = vrot.slane %v2725, %v2732
      %v2735 = vunpack.c.l.s4 1934713408
      %v2736 = vunpack.c.0.s8 %v2735
      %v2737 = vlaneseq
      %v2738 = vshrl.u32 %v2737, 7
      %v2739 = vsub.s32 %v2736, %v2738
      %v2740 = vrot.slane %v2726, %v2739
      %v2741 = vcombine.low %v2708, %v2724
      %v2742 = vcombine.high %v2708, %v2724
      %v2744 = vunpack.c.l.s4 1934713408
      %v2745 = vunpack.c.0.s8 %v2744
      %v2746 = vlaneseq
      %v2747 = vshrl.u32 %v2746, 7
      %v2748 = vsub.s32 %v2745, %v2747
      %v2749 = vrot.slane %v2741, %v2748
      %v2751 = vunpack.c.l.s4 1934713408
      %v2752 = vunpack.c.0.s8 %v2751
      %v2753 = vlaneseq
      %v2754 = vshrl.u32 %v2753, 7
      %v2755 = vsub.s32 %v2752, %v2754
      %v2756 = vrot.slane %v2742, %v2755
      %v2757 = vcombine.high %v2733, 0.0
      %v2758 = vcombine.high %v2740, 0.0
      %v2759 = vcombine.high %v2749, 0.0
      %v2760 = vcombine.high %v2756, 0.0
      %v2761 = vcombine.low %v2672, %v2680
      %v2762 = vcombine.high %v2672, %v2680
      %v2764 = vunpack.c.l.s4 1983009808
      %v2765 = vunpack.c.0.s8 %v2764
      %v2766 = vlaneseq
      %v2767 = vshrl.u32 %v2766, 7
      %v2768 = vsub.s32 %v2765, %v2767
      %v2769 = vrot.slane %v2761, %v2768
      %v2771 = vunpack.c.l.s4 1983009808
      %v2772 = vunpack.c.0.s8 %v2771
      %v2773 = vlaneseq
      %v2774 = vshrl.u32 %v2773, 7
      %v2775 = vsub.s32 %v2772, %v2774
      %v2776 = vrot.slane %v2762, %v2775
      %v2777 = vcombine.low %v2676, %v2684
      %v2778 = vcombine.high %v2676, %v2684
      %v2780 = vunpack.c.l.s4 1983009808
      %v2781 = vunpack.c.0.s8 %v2780
      %v2782 = vlaneseq
      %v2783 = vshrl.u32 %v2782, 7
      %v2784 = vsub.s32 %v2781, %v2783
      %v2785 = vrot.slane %v2777, %v2784
      %v2787 = vunpack.c.l.s4 1983009808
      %v2788 = vunpack.c.0.s8 %v2787
      %v2789 = vlaneseq
      %v2790 = vshrl.u32 %v2789, 7
      %v2791 = vsub.s32 %v2788, %v2790
      %v2792 = vrot.slane %v2778, %v2791
      %v2793 = vcombine.low %v2769, %v2785
      %v2794 = vcombine.high %v2769, %v2785
      %v2796 = vunpack.c.l.s4 1934713408
      %v2797 = vunpack.c.0.s8 %v2796
      %v2798 = vlaneseq
      %v2799 = vshrl.u32 %v2798, 7
      %v2800 = vsub.s32 %v2797, %v2799
      %v2801 = vrot.slane %v2793, %v2800
      %v2803 = vunpack.c.l.s4 1934713408
      %v2804 = vunpack.c.0.s8 %v2803
      %v2805 = vlaneseq
      %v2806 = vshrl.u32 %v2805, 7
      %v2807 = vsub.s32 %v2804, %v2806
      %v2808 = vrot.slane %v2794, %v2807
      %v2809 = vcombine.low %v2776, %v2792
      %v2810 = vcombine.high %v2776, %v2792
      %v2812 = vunpack.c.l.s4 1934713408
      %v2813 = vunpack.c.0.s8 %v2812
      %v2814 = vlaneseq
      %v2815 = vshrl.u32 %v2814, 7
      %v2816 = vsub.s32 %v2813, %v2815
      %v2817 = vrot.slane %v2809, %v2816
      %v2819 = vunpack.c.l.s4 1934713408
      %v2820 = vunpack.c.0.s8 %v2819
      %v2821 = vlaneseq
      %v2822 = vshrl.u32 %v2821, 7
      %v2823 = vsub.s32 %v2820, %v2822
      %v2824 = vrot.slane %v2810, %v2823
      %v2825 = vcombine.high %v2801, 0.0
      %v2826 = vcombine.high %v2808, 0.0
      %v2827 = vcombine.high %v2817, 0.0
      %v2828 = vcombine.high %v2824, 0.0
      %2830 = vrot.lane.b32.xlu0 %v2757, 16
      %v2831 = vpop.permute.xlu0 %2830
      %2834 = vrot.lane.b32.xlu0 %v2740, 32
      %v2835 = vpop.permute.xlu0 %2834
      %2838 = vrot.lane.b32.xlu0 %v2758, 48
      %v2839 = vpop.permute.xlu0 %2838
      %2842 = vrot.lane.b32.xlu0 %v2749, 64
      %v2843 = vpop.permute.xlu0 %2842
      %2846 = vrot.lane.b32.xlu0 %v2759, 80
      %v2847 = vpop.permute.xlu0 %2846
      %2850 = vrot.lane.b32.xlu0 %v2756, 96
      %v2851 = vpop.permute.xlu0 %2850
      %2854 = vrot.lane.b32.xlu0 %v2760, 112
      %v2855 = vpop.permute.xlu0 %2854
      %2858 = vrot.lane.b32.xlu0 %v2825, 16
      %v2859 = vpop.permute.xlu0 %2858
      %2862 = vrot.lane.b32.xlu0 %v2808, 32
      %v2863 = vpop.permute.xlu0 %2862
      %2866 = vrot.lane.b32.xlu0 %v2826, 48
      %v2867 = vpop.permute.xlu0 %2866
      %2870 = vrot.lane.b32.xlu0 %v2817, 64
      %v2871 = vpop.permute.xlu0 %2870
      %2874 = vrot.lane.b32.xlu0 %v2827, 80
      %v2875 = vpop.permute.xlu0 %2874
      %2878 = vrot.lane.b32.xlu0 %v2824, 96
      %v2879 = vpop.permute.xlu0 %2878
      %2882 = vrot.lane.b32.xlu0 %v2828, 112
      %v2883 = vpop.permute.xlu0 %2882
      %v2885 = vsel %vm1188, %v2733, %v2831
      %v2886 = vsel %vm1190, %v2885, %v2835
      %v2887 = vsel %vm1192, %v2886, %v2839
      %v2888 = vsel %vm1194, %v2887, %v2843
      %v2889 = vsel %vm1196, %v2888, %v2847
      %v2890 = vsel %vm1198, %v2889, %v2851
      %v2891 = vsel %vm1200, %v2890, %v2855
      %v2892 = vsel %vm1188, %v2801, %v2859
      %v2893 = vsel %vm1190, %v2892, %v2863
      %v2894 = vsel %vm1192, %v2893, %v2867
      %v2895 = vsel %vm1194, %v2894, %v2871
      %v2896 = vsel %vm1196, %v2895, %v2875
      %v2897 = vsel %vm1198, %v2896, %v2879
      %v2898 = vsel %vm1200, %v2897, %v2883
      %v2901 = vrot.slane %v2891, 4
      %v2902 = vrot.slane %v2898, 4
      %2905 = vst [vmem:[#allocation3 + $0x30] sm:$0xf0] %v2901
      %2906 = vst [vmem:[#allocation3 + $0x38] sm:$0xf0] %v2902
      %v2907 = vld [vmem:[#allocation2 + $0x2] sm:$0xff]
      %v2908 = vld [vmem:[#allocation2 + $0xa] sm:$0xff]
      %v2909 = vld [vmem:[#allocation2 + $0x1a] sm:$0xff]
      %v2910 = vld [vmem:[#allocation2 + $0x22] sm:$0xff]
      %v2911 = vld [vmem:[#allocation2 + $0x32] sm:$0xff]
      %v2912 = vld [vmem:[#allocation2 + $0x3a] sm:$0xff]
      %v2913 = vld [vmem:[#allocation2 + $0x4a] sm:$0xff]
      %v2914 = vld [vmem:[#allocation2 + $0x52] sm:$0xff]
      %2923 = vrot.lane.b32.xlu0 %v2907, 126
      %v2924 = vpop.permute.xlu0 %2923
      %2925 = vrot.lane.b32.xlu0 %v2908, 126
      %v2926 = vpop.permute.xlu0 %2925
      %2927 = vrot.lane.b32.xlu0 %v2909, 126
      %v2928 = vpop.permute.xlu0 %2927
      %2929 = vrot.lane.b32.xlu0 %v2910, 126
      %v2930 = vpop.permute.xlu0 %2929
      %2931 = vrot.lane.b32.xlu0 %v2911, 126
      %v2932 = vpop.permute.xlu0 %2931
      %2933 = vrot.lane.b32.xlu0 %v2912, 126
      %v2934 = vpop.permute.xlu0 %2933
      %2935 = vrot.lane.b32.xlu0 %v2913, 126
      %v2936 = vpop.permute.xlu0 %2935
      %2937 = vrot.lane.b32.xlu0 %v2914, 126
      %v2938 = vpop.permute.xlu0 %2937
      %v2947 = vcombine.low %v2924, %v2932
      %v2948 = vcombine.high %v2924, %v2932
      %v2950 = vunpack.c.l.s4 1983009808
      %v2951 = vunpack.c.0.s8 %v2950
      %v2952 = vlaneseq
      %v2953 = vshrl.u32 %v2952, 7
      %v2954 = vsub.s32 %v2951, %v2953
      %v2955 = vrot.slane %v2947, %v2954
      %v2957 = vunpack.c.l.s4 1983009808
      %v2958 = vunpack.c.0.s8 %v2957
      %v2959 = vlaneseq
      %v2960 = vshrl.u32 %v2959, 7
      %v2961 = vsub.s32 %v2958, %v2960
      %v2962 = vrot.slane %v2948, %v2961
      %v2963 = vcombine.low %v2928, %v2936
      %v2964 = vcombine.high %v2928, %v2936
      %v2966 = vunpack.c.l.s4 1983009808
      %v2967 = vunpack.c.0.s8 %v2966
      %v2968 = vlaneseq
      %v2969 = vshrl.u32 %v2968, 7
      %v2970 = vsub.s32 %v2967, %v2969
      %v2971 = vrot.slane %v2963, %v2970
      %v2973 = vunpack.c.l.s4 1983009808
      %v2974 = vunpack.c.0.s8 %v2973
      %v2975 = vlaneseq
      %v2976 = vshrl.u32 %v2975, 7
      %v2977 = vsub.s32 %v2974, %v2976
      %v2978 = vrot.slane %v2964, %v2977
      %v2979 = vcombine.low %v2955, %v2971
      %v2980 = vcombine.high %v2955, %v2971
      %v2982 = vunpack.c.l.s4 1934713408
      %v2983 = vunpack.c.0.s8 %v2982
      %v2984 = vlaneseq
      %v2985 = vshrl.u32 %v2984, 7
      %v2986 = vsub.s32 %v2983, %v2985
      %v2987 = vrot.slane %v2979, %v2986
      %v2989 = vunpack.c.l.s4 1934713408
      %v2990 = vunpack.c.0.s8 %v2989
      %v2991 = vlaneseq
      %v2992 = vshrl.u32 %v2991, 7
      %v2993 = vsub.s32 %v2990, %v2992
      %v2994 = vrot.slane %v2980, %v2993
      %v2995 = vcombine.low %v2962, %v2978
      %v2996 = vcombine.high %v2962, %v2978
      %v2998 = vunpack.c.l.s4 1934713408
      %v2999 = vunpack.c.0.s8 %v2998
      %v3000 = vlaneseq
      %v3001 = vshrl.u32 %v3000, 7
      %v3002 = vsub.s32 %v2999, %v3001
      %v3003 = vrot.slane %v2995, %v3002
      %v3005 = vunpack.c.l.s4 1934713408
      %v3006 = vunpack.c.0.s8 %v3005
      %v3007 = vlaneseq
      %v3008 = vshrl.u32 %v3007, 7
      %v3009 = vsub.s32 %v3006, %v3008
      %v3010 = vrot.slane %v2996, %v3009
      %v3011 = vcombine.high %v2987, 0.0
      %v3012 = vcombine.high %v2994, 0.0
      %v3013 = vcombine.high %v3003, 0.0
      %v3014 = vcombine.high %v3010, 0.0
      %v3015 = vcombine.low %v2926, %v2934
      %v3016 = vcombine.high %v2926, %v2934
      %v3018 = vunpack.c.l.s4 1983009808
      %v3019 = vunpack.c.0.s8 %v3018
      %v3020 = vlaneseq
      %v3021 = vshrl.u32 %v3020, 7
      %v3022 = vsub.s32 %v3019, %v3021
      %v3023 = vrot.slane %v3015, %v3022
      %v3025 = vunpack.c.l.s4 1983009808
      %v3026 = vunpack.c.0.s8 %v3025
      %v3027 = vlaneseq
      %v3028 = vshrl.u32 %v3027, 7
      %v3029 = vsub.s32 %v3026, %v3028
      %v3030 = vrot.slane %v3016, %v3029
      %v3031 = vcombine.low %v2930, %v2938
      %v3032 = vcombine.high %v2930, %v2938
      %v3034 = vunpack.c.l.s4 1983009808
      %v3035 = vunpack.c.0.s8 %v3034
      %v3036 = vlaneseq
      %v3037 = vshrl.u32 %v3036, 7
      %v3038 = vsub.s32 %v3035, %v3037
      %v3039 = vrot.slane %v3031, %v3038
      %v3041 = vunpack.c.l.s4 1983009808
      %v3042 = vunpack.c.0.s8 %v3041
      %v3043 = vlaneseq
      %v3044 = vshrl.u32 %v3043, 7
      %v3045 = vsub.s32 %v3042, %v3044
      %v3046 = vrot.slane %v3032, %v3045
      %v3047 = vcombine.low %v3023, %v3039
      %v3048 = vcombine.high %v3023, %v3039
      %v3050 = vunpack.c.l.s4 1934713408
      %v3051 = vunpack.c.0.s8 %v3050
      %v3052 = vlaneseq
      %v3053 = vshrl.u32 %v3052, 7
      %v3054 = vsub.s32 %v3051, %v3053
      %v3055 = vrot.slane %v3047, %v3054
      %v3057 = vunpack.c.l.s4 1934713408
      %v3058 = vunpack.c.0.s8 %v3057
      %v3059 = vlaneseq
      %v3060 = vshrl.u32 %v3059, 7
      %v3061 = vsub.s32 %v3058, %v3060
      %v3062 = vrot.slane %v3048, %v3061
      %v3063 = vcombine.low %v3030, %v3046
      %v3064 = vcombine.high %v3030, %v3046
      %v3066 = vunpack.c.l.s4 1934713408
      %v3067 = vunpack.c.0.s8 %v3066
      %v3068 = vlaneseq
      %v3069 = vshrl.u32 %v3068, 7
      %v3070 = vsub.s32 %v3067, %v3069
      %v3071 = vrot.slane %v3063, %v3070
      %v3073 = vunpack.c.l.s4 1934713408
      %v3074 = vunpack.c.0.s8 %v3073
      %v3075 = vlaneseq
      %v3076 = vshrl.u32 %v3075, 7
      %v3077 = vsub.s32 %v3074, %v3076
      %v3078 = vrot.slane %v3064, %v3077
      %v3079 = vcombine.high %v3055, 0.0
      %v3080 = vcombine.high %v3062, 0.0
      %v3081 = vcombine.high %v3071, 0.0
      %v3082 = vcombine.high %v3078, 0.0
      %3084 = vrot.lane.b32.xlu0 %v3011, 16
      %v3085 = vpop.permute.xlu0 %3084
      %3088 = vrot.lane.b32.xlu0 %v2994, 32
      %v3089 = vpop.permute.xlu0 %3088
      %3092 = vrot.lane.b32.xlu0 %v3012, 48
      %v3093 = vpop.permute.xlu0 %3092
      %3096 = vrot.lane.b32.xlu0 %v3003, 64
      %v3097 = vpop.permute.xlu0 %3096
      %3100 = vrot.lane.b32.xlu0 %v3013, 80
      %v3101 = vpop.permute.xlu0 %3100
      %3104 = vrot.lane.b32.xlu0 %v3010, 96
      %v3105 = vpop.permute.xlu0 %3104
      %3108 = vrot.lane.b32.xlu0 %v3014, 112
      %v3109 = vpop.permute.xlu0 %3108
      %3112 = vrot.lane.b32.xlu0 %v3079, 16
      %v3113 = vpop.permute.xlu0 %3112
      %3116 = vrot.lane.b32.xlu0 %v3062, 32
      %v3117 = vpop.permute.xlu0 %3116
      %3120 = vrot.lane.b32.xlu0 %v3080, 48
      %v3121 = vpop.permute.xlu0 %3120
      %3124 = vrot.lane.b32.xlu0 %v3071, 64
      %v3125 = vpop.permute.xlu0 %3124
      %3128 = vrot.lane.b32.xlu0 %v3081, 80
      %v3129 = vpop.permute.xlu0 %3128
      %3132 = vrot.lane.b32.xlu0 %v3078, 96
      %v3133 = vpop.permute.xlu0 %3132
      %3136 = vrot.lane.b32.xlu0 %v3082, 112
      %v3137 = vpop.permute.xlu0 %3136
      %v3139 = vsel %vm1188, %v2987, %v3085
      %v3140 = vsel %vm1190, %v3139, %v3089
      %v3141 = vsel %vm1192, %v3140, %v3093
      %v3142 = vsel %vm1194, %v3141, %v3097
      %v3143 = vsel %vm1196, %v3142, %v3101
      %v3144 = vsel %vm1198, %v3143, %v3105
      %v3145 = vsel %vm1200, %v3144, %v3109
      %v3146 = vsel %vm1188, %v3055, %v3113
      %v3147 = vsel %vm1190, %v3146, %v3117
      %v3148 = vsel %vm1192, %v3147, %v3121
      %v3149 = vsel %vm1194, %v3148, %v3125
      %v3150 = vsel %vm1196, %v3149, %v3129
      %v3151 = vsel %vm1198, %v3150, %v3133
      %v3152 = vsel %vm1200, %v3151, %v3137
      %3153 = vst [vmem:[#allocation3 + $0x40] sm:$0xf] %v3145
      %3154 = vst [vmem:[#allocation3 + $0x48] sm:$0xf] %v3152
      %v3155 = vld [vmem:[%s3] sm:$0x3]
      %v3156 = vld [vmem:[#allocation3] sm:$0xff]
      %v3157 = vld [vmem:[#allocation3 + $0x8] sm:$0xff]
      %v3158 = vld [vmem:[#allocation3 + $0x10] sm:$0xff]
      %v3159 = vld [vmem:[#allocation3 + $0x18] sm:$0xff]
      %v3160 = vld [vmem:[#allocation3 + $0x20] sm:$0xff]
      %v3161 = vld [vmem:[#allocation3 + $0x28] sm:$0xff]
      %v3162 = vld [vmem:[#allocation3 + $0x30] sm:$0xff]
      %v3163 = vld [vmem:[#allocation3 + $0x38] sm:$0xff]
      %v3164 = vld [vmem:[#allocation3 + $0x40] sm:$0xf]
      %v3165 = vld [vmem:[#allocation3 + $0x48] sm:$0xf]
      %v3166 = vpack.c.bf16 %v3158, %v3156
      %v3167 = vpack.c.bf16 %v3159, %v3157
      %v3168 = vpack.c.bf16 %v3162, %v3160
      %v3169 = vpack.c.bf16 %v3163, %v3161
      %v3170 = vpack.c.bf16 %v3164, %v3164
      %v3171 = vpack.c.bf16 %v3165, %v3165
      %v3172 = vld [vmem:[%s4] sm:$0xf]
      %3174 = vset.pattern.permute.xlu0 0
      %3175 = vperm.xlu0 %3174, %v3172
      %v3176 = vpop.permute.xlu0 %3175
      %vm3178 = vcmask 293888
      %v3180 = vsel %vm3178, %v3155, 0
      %vm3182 = vcmask 1041408
      %v3184 = vsel %vm3182, %v3170, 0
      %v3187 = vsel %vm3182, %v3171, 0
      %3189 = vmatprep.subr.bf16.mxu0 %v3167
      %3190 = vmatpush1.bf16.msra.mxu0 %v3166
      %3191 = vmatprep.subr.bf16.mxu0 %v3169
      %3192 = vmatpush1.bf16.msra.mxu0 %v3168
      %3193 = vmatprep.subr.bf16.mxu0 %v3187
      %3194 = vmatpush1.bf16.msra.mxu0 %v3184
      %3195 = vmatprep.subr.bf16.mxu0 0
      %3196 = vmatpush1.bf16.msra.mxu0 0
      %3197 = vmatprep.subr.bf16.mxu0 0
      %3198 = vmatpush1.bf16.msra.mxu0 0
      %3199 = vmatprep.subr.bf16.mxu0 0
      %3200 = vmatpush1.bf16.msra.mxu0 0
      %3201 = vmatprep.subr.bf16.mxu0 0
      %3202 = vmatpush1.bf16.msra.mxu0 0
      %3203 = vmatprep.subr.bf16.mxu0 0
      %3204 = vmatpush1.bf16.msra.mxu0 0
      %3205 = vmatprep.subr.bf16.mxu0 0
      %3206 = vmatpush1.bf16.msra.mxu0 0
      %3207 = vmatprep.subr.bf16.mxu0 0
      %3208 = vmatpush1.bf16.msra.mxu0 0
      %3209 = vmatprep.subr.bf16.mxu0 0
      %3210 = vmatpush1.bf16.msra.mxu0 0
      %3211 = vmatprep.subr.bf16.mxu0 0
      %3212 = vmatpush1.bf16.msra.mxu0 0
      %3213 = vmatprep.subr.bf16.mxu0 0
      %3214 = vmatpush1.bf16.msra.mxu0 0
      %3215 = vmatprep.subr.bf16.mxu0 0
      %3216 = vmatpush1.bf16.msra.mxu0 0
      %3217 = vmatprep.subr.bf16.mxu0 0
      %3218 = vmatpush1.bf16.msra.mxu0 0
      %3219 = vmatprep.subr.bf16.mxu0 0
      %3220 = vmatpush1.bf16.msra.mxu0 0
      %3221 = vmatprep.mubr.bf16.mxu0 0
      %3222 = vmatmul.mubr.bf16.gmra.mrb[0].mxu0 %v3180
      %v3223 = vpop.f32.mrb[0].mxu0
      %v3224 = vadd.f32 %v3176, %v3223
      %v3225 = vpop.f32.mrb[0].mxu0
      %v3226 = vadd.f32 %v3176, %v3225
      %v3227 = vpop.f32.mrb[0].mxu0
      %v3228 = vpop.f32.mrb[0].mxu0
      %3229 = vdwg.mxu0
      %v3230 = vsub.f32 0.0, %v3224
      %v3231 = vsub.f32 0.0, %v3226
      %v3232 = vmul.f32 %v3230, 1.442695
      %v3233 = vpow.pop %v3232
      %v3234 = vmul.f32 %v3231, 1.442695
      %v3235 = vpow.pop %v3234
      %v3236 = vadd.f32 %v3233, 1.0
      %v3237 = vadd.f32 %v3235, 1.0
      %v3238 = vrcp.pop %v3236
      %v3239 = vrcp.pop %v3237
      %v3240 = vmul.f32 %v3224, %v3238
      %v3241 = vmul.f32 %v3226, %v3239
      %v3242 = vld [vmem:[%s5] sm:$0xf]
      %3244 = vrot.lane.b32.xlu0 %v3240, 112
      %v3245 = vpop.permute.xlu0 %3244
      %3247 = vrot.lane.b32.xlu0 %v3240, 96
      %v3248 = vpop.permute.xlu0 %3247
      %3250 = vrot.lane.b32.xlu0 %v3240, 80
      %v3251 = vpop.permute.xlu0 %3250
      %3253 = vrot.lane.b32.xlu0 %v3240, 64
      %v3254 = vpop.permute.xlu0 %3253
      %3256 = vrot.lane.b32.xlu0 %v3240, 48
      %v3257 = vpop.permute.xlu0 %3256
      %3259 = vrot.lane.b32.xlu0 %v3240, 32
      %v3260 = vpop.permute.xlu0 %3259
      %3262 = vrot.lane.b32.xlu0 %v3240, 16
      %v3263 = vpop.permute.xlu0 %3262
      %3266 = vrot.lane.b32.xlu0 %v3241, 112
      %v3267 = vpop.permute.xlu0 %3266
      %3269 = vrot.lane.b32.xlu0 %v3241, 96
      %v3270 = vpop.permute.xlu0 %3269
      %3272 = vrot.lane.b32.xlu0 %v3241, 80
      %v3273 = vpop.permute.xlu0 %3272
      %3275 = vrot.lane.b32.xlu0 %v3241, 64
      %v3276 = vpop.permute.xlu0 %3275
      %3278 = vrot.lane.b32.xlu0 %v3241, 48
      %v3279 = vpop.permute.xlu0 %3278
      %3281 = vrot.lane.b32.xlu0 %v3241, 32
      %v3282 = vpop.permute.xlu0 %3281
      %3284 = vrot.lane.b32.xlu0 %v3241, 16
      %v3285 = vpop.permute.xlu0 %3284
      %v3287 = vcombine.low %v3240, %v3248
      %v3289 = vunpack.c.l.s4 1983009808
      %v3290 = vunpack.c.0.s8 %v3289
      %v3291 = vlaneseq
      %v3292 = vshrl.u32 %v3291, 7
      %v3293 = vsub.s32 %v3290, %v3292
      %v3294 = vrot.slane %v3287, %v3293
      %v3295 = vcombine.low %v3245, %v3251
      %v3297 = vunpack.c.l.s4 1983009808
      %v3298 = vunpack.c.0.s8 %v3297
      %v3299 = vlaneseq
      %v3300 = vshrl.u32 %v3299, 7
      %v3301 = vsub.s32 %v3298, %v3300
      %v3302 = vrot.slane %v3295, %v3301
      %v3303 = vcombine.low %v3254, %v3260
      %v3305 = vunpack.c.l.s4 1983009808
      %v3306 = vunpack.c.0.s8 %v3305
      %v3307 = vlaneseq
      %v3308 = vshrl.u32 %v3307, 7
      %v3309 = vsub.s32 %v3306, %v3308
      %v3310 = vrot.slane %v3303, %v3309
      %v3311 = vcombine.low %v3257, %v3263
      %v3313 = vunpack.c.l.s4 1983009808
      %v3314 = vunpack.c.0.s8 %v3313
      %v3315 = vlaneseq
      %v3316 = vshrl.u32 %v3315, 7
      %v3317 = vsub.s32 %v3314, %v3316
      %v3318 = vrot.slane %v3311, %v3317
      %v3319 = vcombine.low %v3294, %v3302
      %v3320 = vcombine.high %v3294, %v3302
      %v3322 = vunpack.c.l.s4 1934713408
      %v3323 = vunpack.c.0.s8 %v3322
      %v3324 = vlaneseq
      %v3325 = vshrl.u32 %v3324, 7
      %v3326 = vsub.s32 %v3323, %v3325
      %v3327 = vrot.slane %v3319, %v3326
      %v3329 = vunpack.c.l.s4 1934713408
      %v3330 = vunpack.c.0.s8 %v3329
      %v3331 = vlaneseq
      %v3332 = vshrl.u32 %v3331, 7
      %v3333 = vsub.s32 %v3330, %v3332
      %v3334 = vrot.slane %v3320, %v3333
      %v3335 = vcombine.low %v3310, %v3318
      %v3336 = vcombine.high %v3310, %v3318
      %v3338 = vunpack.c.l.s4 1934713408
      %v3339 = vunpack.c.0.s8 %v3338
      %v3340 = vlaneseq
      %v3341 = vshrl.u32 %v3340, 7
      %v3342 = vsub.s32 %v3339, %v3341
      %v3343 = vrot.slane %v3335, %v3342
      %v3345 = vunpack.c.l.s4 1934713408
      %v3346 = vunpack.c.0.s8 %v3345
      %v3347 = vlaneseq
      %v3348 = vshrl.u32 %v3347, 7
      %v3349 = vsub.s32 %v3346, %v3348
      %v3350 = vrot.slane %v3336, %v3349
      %v3351 = vcombine.low %v3327, %v3343
      %v3352 = vcombine.high %v3327, %v3343
      %v3353 = vcombine.low %v3334, %v3350
      %v3354 = vcombine.high %v3334, %v3350
      %v3355 = vcombine.low %v3241, %v3270
      %v3357 = vunpack.c.l.s4 1983009808
      %v3358 = vunpack.c.0.s8 %v3357
      %v3359 = vlaneseq
      %v3360 = vshrl.u32 %v3359, 7
      %v3361 = vsub.s32 %v3358, %v3360
      %v3362 = vrot.slane %v3355, %v3361
      %v3363 = vcombine.low %v3267, %v3273
      %v3365 = vunpack.c.l.s4 1983009808
      %v3366 = vunpack.c.0.s8 %v3365
      %v3367 = vlaneseq
      %v3368 = vshrl.u32 %v3367, 7
      %v3369 = vsub.s32 %v3366, %v3368
      %v3370 = vrot.slane %v3363, %v3369
      %v3371 = vcombine.low %v3276, %v3282
      %v3373 = vunpack.c.l.s4 1983009808
      %v3374 = vunpack.c.0.s8 %v3373
      %v3375 = vlaneseq
      %v3376 = vshrl.u32 %v3375, 7
      %v3377 = vsub.s32 %v3374, %v3376
      %v3378 = vrot.slane %v3371, %v3377
      %v3379 = vcombine.low %v3279, %v3285
      %v3381 = vunpack.c.l.s4 1983009808
      %v3382 = vunpack.c.0.s8 %v3381
      %v3383 = vlaneseq
      %v3384 = vshrl.u32 %v3383, 7
      %v3385 = vsub.s32 %v3382, %v3384
      %v3386 = vrot.slane %v3379, %v3385
      %v3387 = vcombine.low %v3362, %v3370
      %v3388 = vcombine.high %v3362, %v3370
      %v3390 = vunpack.c.l.s4 1934713408
      %v3391 = vunpack.c.0.s8 %v3390
      %v3392 = vlaneseq
      %v3393 = vshrl.u32 %v3392, 7
      %v3394 = vsub.s32 %v3391, %v3393
      %v3395 = vrot.slane %v3387, %v3394
      %v3397 = vunpack.c.l.s4 1934713408
      %v3398 = vunpack.c.0.s8 %v3397
      %v3399 = vlaneseq
      %v3400 = vshrl.u32 %v3399, 7
      %v3401 = vsub.s32 %v3398, %v3400
      %v3402 = vrot.slane %v3388, %v3401
      %v3403 = vcombine.low %v3378, %v3386
      %v3404 = vcombine.high %v3378, %v3386
      %v3406 = vunpack.c.l.s4 1934713408
      %v3407 = vunpack.c.0.s8 %v3406
      %v3408 = vlaneseq
      %v3409 = vshrl.u32 %v3408, 7
      %v3410 = vsub.s32 %v3407, %v3409
      %v3411 = vrot.slane %v3403, %v3410
      %v3413 = vunpack.c.l.s4 1934713408
      %v3414 = vunpack.c.0.s8 %v3413
      %v3415 = vlaneseq
      %v3416 = vshrl.u32 %v3415, 7
      %v3417 = vsub.s32 %v3414, %v3416
      %v3418 = vrot.slane %v3404, %v3417
      %v3419 = vcombine.low %v3395, %v3411
      %v3420 = vcombine.high %v3395, %v3411
      %v3421 = vcombine.low %v3402, %v3418
      %v3422 = vcombine.high %v3402, %v3418
      %3431 = vrot.lane.b32.xlu0 %v3351, 1
      %v3432 = vpop.permute.xlu0 %3431
      %3433 = vrot.lane.b32.xlu0 %v3419, 1
      %v3434 = vpop.permute.xlu0 %3433
      %3435 = vrot.lane.b32.xlu0 %v3352, 1
      %v3436 = vpop.permute.xlu0 %3435
      %3437 = vrot.lane.b32.xlu0 %v3420, 1
      %v3438 = vpop.permute.xlu0 %3437
      %3439 = vrot.lane.b32.xlu0 %v3353, 1
      %v3440 = vpop.permute.xlu0 %3439
      %3441 = vrot.lane.b32.xlu0 %v3421, 1
      %v3442 = vpop.permute.xlu0 %3441
      %3443 = vrot.lane.b32.xlu0 %v3354, 1
      %v3444 = vpop.permute.xlu0 %3443
      %3445 = vrot.lane.b32.xlu0 %v3422, 1
      %v3446 = vpop.permute.xlu0 %3445
      %3455 = vst.msk [vmem:[#allocation2 + $0x1] sm:$0xff] %vm979, %v3432
      %3456 = vst.msk [vmem:[#allocation2 + $0x9] sm:$0xff] %vm979, %v3434
      %3457 = vst.msk [vmem:[#allocation2 + $0x19] sm:$0xff] %vm979, %v3436
      %3458 = vst.msk [vmem:[#allocation2 + $0x21] sm:$0xff] %vm979, %v3438
      %3459 = vst.msk [vmem:[#allocation2 + $0x31] sm:$0xff] %vm979, %v3440
      %3460 = vst.msk [vmem:[#allocation2 + $0x39] sm:$0xff] %vm979, %v3442
      %3461 = vst.msk [vmem:[#allocation2 + $0x49] sm:$0xff] %vm979, %v3444
      %3462 = vst.msk [vmem:[#allocation2 + $0x51] sm:$0xff] %vm979, %v3446
      %v3463 = vld [vmem:[#allocation2] sm:$0xff]
      %v3464 = vld [vmem:[#allocation2 + $0x8] sm:$0xff]
      %v3465 = vld [vmem:[#allocation2 + $0x18] sm:$0xff]
      %v3466 = vld [vmem:[#allocation2 + $0x20] sm:$0xff]
      %v3467 = vld [vmem:[#allocation2 + $0x30] sm:$0xff]
      %v3468 = vld [vmem:[#allocation2 + $0x38] sm:$0xff]
      %v3469 = vld [vmem:[#allocation2 + $0x48] sm:$0xff]
      %v3470 = vld [vmem:[#allocation2 + $0x50] sm:$0xff]
      %v3471 = vcombine.low %v3463, %v3467
      %v3472 = vcombine.high %v3463, %v3467
      %v3474 = vunpack.c.l.s4 1983009808
      %v3475 = vunpack.c.0.s8 %v3474
      %v3476 = vlaneseq
      %v3477 = vshrl.u32 %v3476, 7
      %v3478 = vsub.s32 %v3475, %v3477
      %v3479 = vrot.slane %v3471, %v3478
      %v3481 = vunpack.c.l.s4 1983009808
      %v3482 = vunpack.c.0.s8 %v3481
      %v3483 = vlaneseq
      %v3484 = vshrl.u32 %v3483, 7
      %v3485 = vsub.s32 %v3482, %v3484
      %v3486 = vrot.slane %v3472, %v3485
      %v3487 = vcombine.low %v3465, %v3469
      %v3488 = vcombine.high %v3465, %v3469
      %v3490 = vunpack.c.l.s4 1983009808
      %v3491 = vunpack.c.0.s8 %v3490
      %v3492 = vlaneseq
      %v3493 = vshrl.u32 %v3492, 7
      %v3494 = vsub.s32 %v3491, %v3493
      %v3495 = vrot.slane %v3487, %v3494
      %v3497 = vunpack.c.l.s4 1983009808
      %v3498 = vunpack.c.0.s8 %v3497
      %v3499 = vlaneseq
      %v3500 = vshrl.u32 %v3499, 7
      %v3501 = vsub.s32 %v3498, %v3500
      %v3502 = vrot.slane %v3488, %v3501
      %v3503 = vcombine.low %v3479, %v3495
      %v3504 = vcombine.high %v3479, %v3495
      %v3506 = vunpack.c.l.s4 1934713408
      %v3507 = vunpack.c.0.s8 %v3506
      %v3508 = vlaneseq
      %v3509 = vshrl.u32 %v3508, 7
      %v3510 = vsub.s32 %v3507, %v3509
      %v3511 = vrot.slane %v3503, %v3510
      %v3513 = vunpack.c.l.s4 1934713408
      %v3514 = vunpack.c.0.s8 %v3513
      %v3515 = vlaneseq
      %v3516 = vshrl.u32 %v3515, 7
      %v3517 = vsub.s32 %v3514, %v3516
      %v3518 = vrot.slane %v3504, %v3517
      %v3519 = vcombine.low %v3486, %v3502
      %v3520 = vcombine.high %v3486, %v3502
      %v3522 = vunpack.c.l.s4 1934713408
      %v3523 = vunpack.c.0.s8 %v3522
      %v3524 = vlaneseq
      %v3525 = vshrl.u32 %v3524, 7
      %v3526 = vsub.s32 %v3523, %v3525
      %v3527 = vrot.slane %v3519, %v3526
      %v3529 = vunpack.c.l.s4 1934713408
      %v3530 = vunpack.c.0.s8 %v3529
      %v3531 = vlaneseq
      %v3532 = vshrl.u32 %v3531, 7
      %v3533 = vsub.s32 %v3530, %v3532
      %v3534 = vrot.slane %v3520, %v3533
      %v3535 = vcombine.high %v3511, 0.0
      %v3536 = vcombine.high %v3518, 0.0
      %v3537 = vcombine.high %v3527, 0.0
      %v3538 = vcombine.high %v3534, 0.0
      %v3539 = vcombine.low %v3464, %v3468
      %v3540 = vcombine.high %v3464, %v3468
      %v3542 = vunpack.c.l.s4 1983009808
      %v3543 = vunpack.c.0.s8 %v3542
      %v3544 = vlaneseq
      %v3545 = vshrl.u32 %v3544, 7
      %v3546 = vsub.s32 %v3543, %v3545
      %v3547 = vrot.slane %v3539, %v3546
      %v3549 = vunpack.c.l.s4 1983009808
      %v3550 = vunpack.c.0.s8 %v3549
      %v3551 = vlaneseq
      %v3552 = vshrl.u32 %v3551, 7
      %v3553 = vsub.s32 %v3550, %v3552
      %v3554 = vrot.slane %v3540, %v3553
      %v3555 = vcombine.low %v3466, %v3470
      %v3556 = vcombine.high %v3466, %v3470
      %v3558 = vunpack.c.l.s4 1983009808
      %v3559 = vunpack.c.0.s8 %v3558
      %v3560 = vlaneseq
      %v3561 = vshrl.u32 %v3560, 7
      %v3562 = vsub.s32 %v3559, %v3561
      %v3563 = vrot.slane %v3555, %v3562
      %v3565 = vunpack.c.l.s4 1983009808
      %v3566 = vunpack.c.0.s8 %v3565
      %v3567 = vlaneseq
      %v3568 = vshrl.u32 %v3567, 7
      %v3569 = vsub.s32 %v3566, %v3568
      %v3570 = vrot.slane %v3556, %v3569
      %v3571 = vcombine.low %v3547, %v3563
      %v3572 = vcombine.high %v3547, %v3563
      %v3574 = vunpack.c.l.s4 1934713408
      %v3575 = vunpack.c.0.s8 %v3574
      %v3576 = vlaneseq
      %v3577 = vshrl.u32 %v3576, 7
      %v3578 = vsub.s32 %v3575, %v3577
      %v3579 = vrot.slane %v3571, %v3578
      %v3581 = vunpack.c.l.s4 1934713408
      %v3582 = vunpack.c.0.s8 %v3581
      %v3583 = vlaneseq
      %v3584 = vshrl.u32 %v3583, 7
      %v3585 = vsub.s32 %v3582, %v3584
      %v3586 = vrot.slane %v3572, %v3585
      %v3587 = vcombine.low %v3554, %v3570
      %v3588 = vcombine.high %v3554, %v3570
      %v3590 = vunpack.c.l.s4 1934713408
      %v3591 = vunpack.c.0.s8 %v3590
      %v3592 = vlaneseq
      %v3593 = vshrl.u32 %v3592, 7
      %v3594 = vsub.s32 %v3591, %v3593
      %v3595 = vrot.slane %v3587, %v3594
      %v3597 = vunpack.c.l.s4 1934713408
      %v3598 = vunpack.c.0.s8 %v3597
      %v3599 = vlaneseq
      %v3600 = vshrl.u32 %v3599, 7
      %v3601 = vsub.s32 %v3598, %v3600
      %v3602 = vrot.slane %v3588, %v3601
      %v3603 = vcombine.high %v3579, 0.0
      %v3604 = vcombine.high %v3586, 0.0
      %v3605 = vcombine.high %v3595, 0.0
      %v3606 = vcombine.high %v3602, 0.0
      %3608 = vrot.lane.b32.xlu0 %v3535, 16
      %v3609 = vpop.permute.xlu0 %3608
      %3612 = vrot.lane.b32.xlu0 %v3518, 32
      %v3613 = vpop.permute.xlu0 %3612
      %3616 = vrot.lane.b32.xlu0 %v3536, 48
      %v3617 = vpop.permute.xlu0 %3616
      %3620 = vrot.lane.b32.xlu0 %v3527, 64
      %v3621 = vpop.permute.xlu0 %3620
      %3624 = vrot.lane.b32.xlu0 %v3537, 80
      %v3625 = vpop.permute.xlu0 %3624
      %3628 = vrot.lane.b32.xlu0 %v3534, 96
      %v3629 = vpop.permute.xlu0 %3628
      %3632 = vrot.lane.b32.xlu0 %v3538, 112
      %v3633 = vpop.permute.xlu0 %3632
      %3636 = vrot.lane.b32.xlu0 %v3603, 16
      %v3637 = vpop.permute.xlu0 %3636
      %3640 = vrot.lane.b32.xlu0 %v3586, 32
      %v3641 = vpop.permute.xlu0 %3640
      %3644 = vrot.lane.b32.xlu0 %v3604, 48
      %v3645 = vpop.permute.xlu0 %3644
      %3648 = vrot.lane.b32.xlu0 %v3595, 64
      %v3649 = vpop.permute.xlu0 %3648
      %3652 = vrot.lane.b32.xlu0 %v3605, 80
      %v3653 = vpop.permute.xlu0 %3652
      %3656 = vrot.lane.b32.xlu0 %v3602, 96
      %v3657 = vpop.permute.xlu0 %3656
      %3660 = vrot.lane.b32.xlu0 %v3606, 112
      %v3661 = vpop.permute.xlu0 %3660
      %v3663 = vsel %vm1188, %v3511, %v3609
      %v3664 = vsel %vm1190, %v3663, %v3613
      %v3665 = vsel %vm1192, %v3664, %v3617
      %v3666 = vsel %vm1194, %v3665, %v3621
      %v3667 = vsel %vm1196, %v3666, %v3625
      %v3668 = vsel %vm1198, %v3667, %v3629
      %v3669 = vsel %vm1200, %v3668, %v3633
      %v3670 = vsel %vm1188, %v3579, %v3637
      %v3671 = vsel %vm1190, %v3670, %v3641
      %v3672 = vsel %vm1192, %v3671, %v3645
      %v3673 = vsel %vm1194, %v3672, %v3649
      %v3674 = vsel %vm1196, %v3673, %v3653
      %v3675 = vsel %vm1198, %v3674, %v3657
      %v3676 = vsel %vm1200, %v3675, %v3661
      %3678 = vset.pattern.permute.xlu0 0
      %3679 = vperm.xlu0 %3678, %v3242
      %v3680 = vpop.permute.xlu0 %3679
      %v3682 = vmul.f32 %v3669, %v3680
      %v3683 = vmul.f32 %v3676, %v3680
      %v3684 = vadd.f32 %v3682, 0.0
      %v3685 = vadd.f32 %v3683, 0.0
      %v3686 = vld [vmem:[#allocation2] sm:$0xff]
      %v3687 = vld [vmem:[#allocation2 + $0x8] sm:$0xff]
      %v3688 = vld [vmem:[#allocation2 + $0x18] sm:$0xff]
      %v3689 = vld [vmem:[#allocation2 + $0x20] sm:$0xff]
      %v3690 = vld [vmem:[#allocation2 + $0x30] sm:$0xff]
      %v3691 = vld [vmem:[#allocation2 + $0x38] sm:$0xff]
      %v3692 = vld [vmem:[#allocation2 + $0x48] sm:$0xff]
      %v3693 = vld [vmem:[#allocation2 + $0x50] sm:$0xff]
      %3702 = vrot.lane.b32.xlu0 %v3686, 127
      %v3703 = vpop.permute.xlu0 %3702
      %3704 = vrot.lane.b32.xlu0 %v3687, 127
      %v3705 = vpop.permute.xlu0 %3704
      %3706 = vrot.lane.b32.xlu0 %v3688, 127
      %v3707 = vpop.permute.xlu0 %3706
      %3708 = vrot.lane.b32.xlu0 %v3689, 127
      %v3709 = vpop.permute.xlu0 %3708
      %3710 = vrot.lane.b32.xlu0 %v3690, 127
      %v3711 = vpop.permute.xlu0 %3710
      %3712 = vrot.lane.b32.xlu0 %v3691, 127
      %v3713 = vpop.permute.xlu0 %3712
      %3714 = vrot.lane.b32.xlu0 %v3692, 127
      %v3715 = vpop.permute.xlu0 %3714
      %3716 = vrot.lane.b32.xlu0 %v3693, 127
      %v3717 = vpop.permute.xlu0 %3716
      %v3726 = vcombine.low %v3703, %v3711
      %v3727 = vcombine.high %v3703, %v3711
      %v3729 = vunpack.c.l.s4 1983009808
      %v3730 = vunpack.c.0.s8 %v3729
      %v3731 = vlaneseq
      %v3732 = vshrl.u32 %v3731, 7
      %v3733 = vsub.s32 %v3730, %v3732
      %v3734 = vrot.slane %v3726, %v3733
      %v3736 = vunpack.c.l.s4 1983009808
      %v3737 = vunpack.c.0.s8 %v3736
      %v3738 = vlaneseq
      %v3739 = vshrl.u32 %v3738, 7
      %v3740 = vsub.s32 %v3737, %v3739
      %v3741 = vrot.slane %v3727, %v3740
      %v3742 = vcombine.low %v3707, %v3715
      %v3743 = vcombine.high %v3707, %v3715
      %v3745 = vunpack.c.l.s4 1983009808
      %v3746 = vunpack.c.0.s8 %v3745
      %v3747 = vlaneseq
      %v3748 = vshrl.u32 %v3747, 7
      %v3749 = vsub.s32 %v3746, %v3748
      %v3750 = vrot.slane %v3742, %v3749
      %v3752 = vunpack.c.l.s4 1983009808
      %v3753 = vunpack.c.0.s8 %v3752
      %v3754 = vlaneseq
      %v3755 = vshrl.u32 %v3754, 7
      %v3756 = vsub.s32 %v3753, %v3755
      %v3757 = vrot.slane %v3743, %v3756
      %v3758 = vcombine.low %v3734, %v3750
      %v3759 = vcombine.high %v3734, %v3750
      %v3761 = vunpack.c.l.s4 1934713408
      %v3762 = vunpack.c.0.s8 %v3761
      %v3763 = vlaneseq
      %v3764 = vshrl.u32 %v3763, 7
      %v3765 = vsub.s32 %v3762, %v3764
      %v3766 = vrot.slane %v3758, %v3765
      %v3768 = vunpack.c.l.s4 1934713408
      %v3769 = vunpack.c.0.s8 %v3768
      %v3770 = vlaneseq
      %v3771 = vshrl.u32 %v3770, 7
      %v3772 = vsub.s32 %v3769, %v3771
      %v3773 = vrot.slane %v3759, %v3772
      %v3774 = vcombine.low %v3741, %v3757
      %v3775 = vcombine.high %v3741, %v3757
      %v3777 = vunpack.c.l.s4 1934713408
      %v3778 = vunpack.c.0.s8 %v3777
      %v3779 = vlaneseq
      %v3780 = vshrl.u32 %v3779, 7
      %v3781 = vsub.s32 %v3778, %v3780
      %v3782 = vrot.slane %v3774, %v3781
      %v3784 = vunpack.c.l.s4 1934713408
      %v3785 = vunpack.c.0.s8 %v3784
      %v3786 = vlaneseq
      %v3787 = vshrl.u32 %v3786, 7
      %v3788 = vsub.s32 %v3785, %v3787
      %v3789 = vrot.slane %v3775, %v3788
      %v3790 = vcombine.high %v3766, 0.0
      %v3791 = vcombine.high %v3773, 0.0
      %v3792 = vcombine.high %v3782, 0.0
      %v3793 = vcombine.high %v3789, 0.0
      %v3794 = vcombine.low %v3705, %v3713
      %v3795 = vcombine.high %v3705, %v3713
      %v3797 = vunpack.c.l.s4 1983009808
      %v3798 = vunpack.c.0.s8 %v3797
      %v3799 = vlaneseq
      %v3800 = vshrl.u32 %v3799, 7
      %v3801 = vsub.s32 %v3798, %v3800
      %v3802 = vrot.slane %v3794, %v3801
      %v3804 = vunpack.c.l.s4 1983009808
      %v3805 = vunpack.c.0.s8 %v3804
      %v3806 = vlaneseq
      %v3807 = vshrl.u32 %v3806, 7
      %v3808 = vsub.s32 %v3805, %v3807
      %v3809 = vrot.slane %v3795, %v3808
      %v3810 = vcombine.low %v3709, %v3717
      %v3811 = vcombine.high %v3709, %v3717
      %v3813 = vunpack.c.l.s4 1983009808
      %v3814 = vunpack.c.0.s8 %v3813
      %v3815 = vlaneseq
      %v3816 = vshrl.u32 %v3815, 7
      %v3817 = vsub.s32 %v3814, %v3816
      %v3818 = vrot.slane %v3810, %v3817
      %v3820 = vunpack.c.l.s4 1983009808
      %v3821 = vunpack.c.0.s8 %v3820
      %v3822 = vlaneseq
      %v3823 = vshrl.u32 %v3822, 7
      %v3824 = vsub.s32 %v3821, %v3823
      %v3825 = vrot.slane %v3811, %v3824
      %v3826 = vcombine.low %v3802, %v3818
      %v3827 = vcombine.high %v3802, %v3818
      %v3829 = vunpack.c.l.s4 1934713408
      %v3830 = vunpack.c.0.s8 %v3829
      %v3831 = vlaneseq
      %v3832 = vshrl.u32 %v3831, 7
      %v3833 = vsub.s32 %v3830, %v3832
      %v3834 = vrot.slane %v3826, %v3833
      %v3836 = vunpack.c.l.s4 1934713408
      %v3837 = vunpack.c.0.s8 %v3836
      %v3838 = vlaneseq
      %v3839 = vshrl.u32 %v3838, 7
      %v3840 = vsub.s32 %v3837, %v3839
      %v3841 = vrot.slane %v3827, %v3840
      %v3842 = vcombine.low %v3809, %v3825
      %v3843 = vcombine.high %v3809, %v3825
      %v3845 = vunpack.c.l.s4 1934713408
      %v3846 = vunpack.c.0.s8 %v3845
      %v3847 = vlaneseq
      %v3848 = vshrl.u32 %v3847, 7
      %v3849 = vsub.s32 %v3846, %v3848
      %v3850 = vrot.slane %v3842, %v3849
      %v3852 = vunpack.c.l.s4 1934713408
      %v3853 = vunpack.c.0.s8 %v3852
      %v3854 = vlaneseq
      %v3855 = vshrl.u32 %v3854, 7
      %v3856 = vsub.s32 %v3853, %v3855
      %v3857 = vrot.slane %v3843, %v3856
      %v3858 = vcombine.high %v3834, 0.0
      %v3859 = vcombine.high %v3841, 0.0
      %v3860 = vcombine.high %v3850, 0.0
      %v3861 = vcombine.high %v3857, 0.0
      %3863 = vrot.lane.b32.xlu0 %v3790, 16
      %v3864 = vpop.permute.xlu0 %3863
      %3867 = vrot.lane.b32.xlu0 %v3773, 32
      %v3868 = vpop.permute.xlu0 %3867
      %3871 = vrot.lane.b32.xlu0 %v3791, 48
      %v3872 = vpop.permute.xlu0 %3871
      %3875 = vrot.lane.b32.xlu0 %v3782, 64
      %v3876 = vpop.permute.xlu0 %3875
      %3879 = vrot.lane.b32.xlu0 %v3792, 80
      %v3880 = vpop.permute.xlu0 %3879
      %3883 = vrot.lane.b32.xlu0 %v3789, 96
      %v3884 = vpop.permute.xlu0 %3883
      %3887 = vrot.lane.b32.xlu0 %v3793, 112
      %v3888 = vpop.permute.xlu0 %3887
      %3891 = vrot.lane.b32.xlu0 %v3858, 16
      %v3892 = vpop.permute.xlu0 %3891
      %3895 = vrot.lane.b32.xlu0 %v3841, 32
      %v3896 = vpop.permute.xlu0 %3895
      %3899 = vrot.lane.b32.xlu0 %v3859, 48
      %v3900 = vpop.permute.xlu0 %3899
      %3903 = vrot.lane.b32.xlu0 %v3850, 64
      %v3904 = vpop.permute.xlu0 %3903
      %3907 = vrot.lane.b32.xlu0 %v3860, 80
      %v3908 = vpop.permute.xlu0 %3907
      %3911 = vrot.lane.b32.xlu0 %v3857, 96
      %v3912 = vpop.permute.xlu0 %3911
      %3915 = vrot.lane.b32.xlu0 %v3861, 112
      %v3916 = vpop.permute.xlu0 %3915
      %v3918 = vsel %vm1188, %v3766, %v3864
      %v3919 = vsel %vm1190, %v3918, %v3868
      %v3920 = vsel %vm1192, %v3919, %v3872
      %v3921 = vsel %vm1194, %v3920, %v3876
      %v3922 = vsel %vm1196, %v3921, %v3880
      %v3923 = vsel %vm1198, %v3922, %v3884
      %v3924 = vsel %vm1200, %v3923, %v3888
      %v3925 = vsel %vm1188, %v3834, %v3892
      %v3926 = vsel %vm1190, %v3925, %v3896
      %v3927 = vsel %vm1192, %v3926, %v3900
      %v3928 = vsel %vm1194, %v3927, %v3904
      %v3929 = vsel %vm1196, %v3928, %v3908
      %v3930 = vsel %vm1198, %v3929, %v3912
      %v3931 = vsel %vm1200, %v3930, %v3916
      %3932 = vset.pattern.permute.xlu0 1
      %3933 = vperm.xlu0 %3932, %v3242
      %v3934 = vpop.permute.xlu0 %3933
      %v3936 = vmul.f32 %v3924, %v3934
      %v3937 = vmul.f32 %v3931, %v3934
      %v3938 = vadd.f32 %v3684, %v3936
      %v3939 = vadd.f32 %v3685, %v3937
      %v3940 = vld [vmem:[#allocation2] sm:$0xff]
      %v3941 = vld [vmem:[#allocation2 + $0x8] sm:$0xff]
      %v3942 = vld [vmem:[#allocation2 + $0x18] sm:$0xff]
      %v3943 = vld [vmem:[#allocation2 + $0x20] sm:$0xff]
      %v3944 = vld [vmem:[#allocation2 + $0x30] sm:$0xff]
      %v3945 = vld [vmem:[#allocation2 + $0x38] sm:$0xff]
      %v3946 = vld [vmem:[#allocation2 + $0x48] sm:$0xff]
      %v3947 = vld [vmem:[#allocation2 + $0x50] sm:$0xff]
      %3956 = vrot.lane.b32.xlu0 %v3940, 126
      %v3957 = vpop.permute.xlu0 %3956
      %3958 = vrot.lane.b32.xlu0 %v3941, 126
      %v3959 = vpop.permute.xlu0 %3958
      %3960 = vrot.lane.b32.xlu0 %v3942, 126
      %v3961 = vpop.permute.xlu0 %3960
      %3962 = vrot.lane.b32.xlu0 %v3943, 126
      %v3963 = vpop.permute.xlu0 %3962
      %3964 = vrot.lane.b32.xlu0 %v3944, 126
      %v3965 = vpop.permute.xlu0 %3964
      %3966 = vrot.lane.b32.xlu0 %v3945, 126
      %v3967 = vpop.permute.xlu0 %3966
      %3968 = vrot.lane.b32.xlu0 %v3946, 126
      %v3969 = vpop.permute.xlu0 %3968
      %3970 = vrot.lane.b32.xlu0 %v3947, 126
      %v3971 = vpop.permute.xlu0 %3970
      %v3980 = vcombine.low %v3957, %v3965
      %v3981 = vcombine.high %v3957, %v3965
      %v3983 = vunpack.c.l.s4 1983009808
      %v3984 = vunpack.c.0.s8 %v3983
      %v3985 = vlaneseq
      %v3986 = vshrl.u32 %v3985, 7
      %v3987 = vsub.s32 %v3984, %v3986
      %v3988 = vrot.slane %v3980, %v3987
      %v3990 = vunpack.c.l.s4 1983009808
      %v3991 = vunpack.c.0.s8 %v3990
      %v3992 = vlaneseq
      %v3993 = vshrl.u32 %v3992, 7
      %v3994 = vsub.s32 %v3991, %v3993
      %v3995 = vrot.slane %v3981, %v3994
      %v3996 = vcombine.low %v3961, %v3969
      %v3997 = vcombine.high %v3961, %v3969
      %v3999 = vunpack.c.l.s4 1983009808
      %v4000 = vunpack.c.0.s8 %v3999
      %v4001 = vlaneseq
      %v4002 = vshrl.u32 %v4001, 7
      %v4003 = vsub.s32 %v4000, %v4002
      %v4004 = vrot.slane %v3996, %v4003
      %v4006 = vunpack.c.l.s4 1983009808
      %v4007 = vunpack.c.0.s8 %v4006
      %v4008 = vlaneseq
      %v4009 = vshrl.u32 %v4008, 7
      %v4010 = vsub.s32 %v4007, %v4009
      %v4011 = vrot.slane %v3997, %v4010
      %v4012 = vcombine.low %v3988, %v4004
      %v4013 = vcombine.high %v3988, %v4004
      %v4015 = vunpack.c.l.s4 1934713408
      %v4016 = vunpack.c.0.s8 %v4015
      %v4017 = vlaneseq
      %v4018 = vshrl.u32 %v4017, 7
      %v4019 = vsub.s32 %v4016, %v4018
      %v4020 = vrot.slane %v4012, %v4019
      %v4022 = vunpack.c.l.s4 1934713408
      %v4023 = vunpack.c.0.s8 %v4022
      %v4024 = vlaneseq
      %v4025 = vshrl.u32 %v4024, 7
      %v4026 = vsub.s32 %v4023, %v4025
      %v4027 = vrot.slane %v4013, %v4026
      %v4028 = vcombine.low %v3995, %v4011
      %v4029 = vcombine.high %v3995, %v4011
      %v4031 = vunpack.c.l.s4 1934713408
      %v4032 = vunpack.c.0.s8 %v4031
      %v4033 = vlaneseq
      %v4034 = vshrl.u32 %v4033, 7
      %v4035 = vsub.s32 %v4032, %v4034
      %v4036 = vrot.slane %v4028, %v4035
      %v4038 = vunpack.c.l.s4 1934713408
      %v4039 = vunpack.c.0.s8 %v4038
      %v4040 = vlaneseq
      %v4041 = vshrl.u32 %v4040, 7
      %v4042 = vsub.s32 %v4039, %v4041
      %v4043 = vrot.slane %v4029, %v4042
      %v4044 = vcombine.high %v4020, 0.0
      %v4045 = vcombine.high %v4027, 0.0
      %v4046 = vcombine.high %v4036, 0.0
      %v4047 = vcombine.high %v4043, 0.0
      %v4048 = vcombine.low %v3959, %v3967
      %v4049 = vcombine.high %v3959, %v3967
      %v4051 = vunpack.c.l.s4 1983009808
      %v4052 = vunpack.c.0.s8 %v4051
      %v4053 = vlaneseq
      %v4054 = vshrl.u32 %v4053, 7
      %v4055 = vsub.s32 %v4052, %v4054
      %v4056 = vrot.slane %v4048, %v4055
      %v4058 = vunpack.c.l.s4 1983009808
      %v4059 = vunpack.c.0.s8 %v4058
      %v4060 = vlaneseq
      %v4061 = vshrl.u32 %v4060, 7
      %v4062 = vsub.s32 %v4059, %v4061
      %v4063 = vrot.slane %v4049, %v4062
      %v4064 = vcombine.low %v3963, %v3971
      %v4065 = vcombine.high %v3963, %v3971
      %v4067 = vunpack.c.l.s4 1983009808
      %v4068 = vunpack.c.0.s8 %v4067
      %v4069 = vlaneseq
      %v4070 = vshrl.u32 %v4069, 7
      %v4071 = vsub.s32 %v4068, %v4070
      %v4072 = vrot.slane %v4064, %v4071
      %v4074 = vunpack.c.l.s4 1983009808
      %v4075 = vunpack.c.0.s8 %v4074
      %v4076 = vlaneseq
      %v4077 = vshrl.u32 %v4076, 7
      %v4078 = vsub.s32 %v4075, %v4077
      %v4079 = vrot.slane %v4065, %v4078
      %v4080 = vcombine.low %v4056, %v4072
      %v4081 = vcombine.high %v4056, %v4072
      %v4083 = vunpack.c.l.s4 1934713408
      %v4084 = vunpack.c.0.s8 %v4083
      %v4085 = vlaneseq
      %v4086 = vshrl.u32 %v4085, 7
      %v4087 = vsub.s32 %v4084, %v4086
      %v4088 = vrot.slane %v4080, %v4087
      %v4090 = vunpack.c.l.s4 1934713408
      %v4091 = vunpack.c.0.s8 %v4090
      %v4092 = vlaneseq
      %v4093 = vshrl.u32 %v4092, 7
      %v4094 = vsub.s32 %v4091, %v4093
      %v4095 = vrot.slane %v4081, %v4094
      %v4096 = vcombine.low %v4063, %v4079
      %v4097 = vcombine.high %v4063, %v4079
      %v4099 = vunpack.c.l.s4 1934713408
      %v4100 = vunpack.c.0.s8 %v4099
      %v4101 = vlaneseq
      %v4102 = vshrl.u32 %v4101, 7
      %v4103 = vsub.s32 %v4100, %v4102
      %v4104 = vrot.slane %v4096, %v4103
      %v4106 = vunpack.c.l.s4 1934713408
      %v4107 = vunpack.c.0.s8 %v4106
      %v4108 = vlaneseq
      %v4109 = vshrl.u32 %v4108, 7
      %v4110 = vsub.s32 %v4107, %v4109
      %v4111 = vrot.slane %v4097, %v4110
      %v4112 = vcombine.high %v4088, 0.0
      %v4113 = vcombine.high %v4095, 0.0
      %v4114 = vcombine.high %v4104, 0.0
      %v4115 = vcombine.high %v4111, 0.0
      %4117 = vrot.lane.b32.xlu0 %v4044, 16
      %v4118 = vpop.permute.xlu0 %4117
      %4121 = vrot.lane.b32.xlu0 %v4027, 32
      %v4122 = vpop.permute.xlu0 %4121
      %4125 = vrot.lane.b32.xlu0 %v4045, 48
      %v4126 = vpop.permute.xlu0 %4125
      %4129 = vrot.lane.b32.xlu0 %v4036, 64
      %v4130 = vpop.permute.xlu0 %4129
      %4133 = vrot.lane.b32.xlu0 %v4046, 80
      %v4134 = vpop.permute.xlu0 %4133
      %4137 = vrot.lane.b32.xlu0 %v4043, 96
      %v4138 = vpop.permute.xlu0 %4137
      %4141 = vrot.lane.b32.xlu0 %v4047, 112
      %v4142 = vpop.permute.xlu0 %4141
      %4145 = vrot.lane.b32.xlu0 %v4112, 16
      %v4146 = vpop.permute.xlu0 %4145
      %4149 = vrot.lane.b32.xlu0 %v4095, 32
      %v4150 = vpop.permute.xlu0 %4149
      %4153 = vrot.lane.b32.xlu0 %v4113, 48
      %v4154 = vpop.permute.xlu0 %4153
      %4157 = vrot.lane.b32.xlu0 %v4104, 64
      %v4158 = vpop.permute.xlu0 %4157
      %4161 = vrot.lane.b32.xlu0 %v4114, 80
      %v4162 = vpop.permute.xlu0 %4161
      %4165 = vrot.lane.b32.xlu0 %v4111, 96
      %v4166 = vpop.permute.xlu0 %4165
      %4169 = vrot.lane.b32.xlu0 %v4115, 112
      %v4170 = vpop.permute.xlu0 %4169
      %v4172 = vsel %vm1188, %v4020, %v4118
      %v4173 = vsel %vm1190, %v4172, %v4122
      %v4174 = vsel %vm1192, %v4173, %v4126
      %v4175 = vsel %vm1194, %v4174, %v4130
      %v4176 = vsel %vm1196, %v4175, %v4134
      %v4177 = vsel %vm1198, %v4176, %v4138
      %v4178 = vsel %vm1200, %v4177, %v4142
      %v4179 = vsel %vm1188, %v4088, %v4146
      %v4180 = vsel %vm1190, %v4179, %v4150
      %v4181 = vsel %vm1192, %v4180, %v4154
      %v4182 = vsel %vm1194, %v4181, %v4158
      %v4183 = vsel %vm1196, %v4182, %v4162
      %v4184 = vsel %vm1198, %v4183, %v4166
      %v4185 = vsel %vm1200, %v4184, %v4170
      %4186 = vset.pattern.permute.xlu0 2
      %4187 = vperm.xlu0 %4186, %v3242
      %v4188 = vpop.permute.xlu0 %4187
      %v4190 = vmul.f32 %v4178, %v4188
      %v4191 = vmul.f32 %v4185, %v4188
      %v4192 = vadd.f32 %v3938, %v4190
      %v4193 = vadd.f32 %v3939, %v4191
      %v4194 = vld [vmem:[#allocation2 + $0x1] sm:$0xff]
      %v4195 = vld [vmem:[#allocation2 + $0x9] sm:$0xff]
      %v4196 = vld [vmem:[#allocation2 + $0x19] sm:$0xff]
      %v4197 = vld [vmem:[#allocation2 + $0x21] sm:$0xff]
      %v4198 = vld [vmem:[#allocation2 + $0x31] sm:$0xff]
      %v4199 = vld [vmem:[#allocation2 + $0x39] sm:$0xff]
      %v4200 = vld [vmem:[#allocation2 + $0x49] sm:$0xff]
      %v4201 = vld [vmem:[#allocation2 + $0x51] sm:$0xff]
      %v4202 = vcombine.low %v4194, %v4198
      %v4203 = vcombine.high %v4194, %v4198
      %v4205 = vunpack.c.l.s4 1983009808
      %v4206 = vunpack.c.0.s8 %v4205
      %v4207 = vlaneseq
      %v4208 = vshrl.u32 %v4207, 7
      %v4209 = vsub.s32 %v4206, %v4208
      %v4210 = vrot.slane %v4202, %v4209
      %v4212 = vunpack.c.l.s4 1983009808
      %v4213 = vunpack.c.0.s8 %v4212
      %v4214 = vlaneseq
      %v4215 = vshrl.u32 %v4214, 7
      %v4216 = vsub.s32 %v4213, %v4215
      %v4217 = vrot.slane %v4203, %v4216
      %v4218 = vcombine.low %v4196, %v4200
      %v4219 = vcombine.high %v4196, %v4200
      %v4221 = vunpack.c.l.s4 1983009808
      %v4222 = vunpack.c.0.s8 %v4221
      %v4223 = vlaneseq
      %v4224 = vshrl.u32 %v4223, 7
      %v4225 = vsub.s32 %v4222, %v4224
      %v4226 = vrot.slane %v4218, %v4225
      %v4228 = vunpack.c.l.s4 1983009808
      %v4229 = vunpack.c.0.s8 %v4228
      %v4230 = vlaneseq
      %v4231 = vshrl.u32 %v4230, 7
      %v4232 = vsub.s32 %v4229, %v4231
      %v4233 = vrot.slane %v4219, %v4232
      %v4234 = vcombine.low %v4210, %v4226
      %v4235 = vcombine.high %v4210, %v4226
      %v4237 = vunpack.c.l.s4 1934713408
      %v4238 = vunpack.c.0.s8 %v4237
      %v4239 = vlaneseq
      %v4240 = vshrl.u32 %v4239, 7
      %v4241 = vsub.s32 %v4238, %v4240
      %v4242 = vrot.slane %v4234, %v4241
      %v4244 = vunpack.c.l.s4 1934713408
      %v4245 = vunpack.c.0.s8 %v4244
      %v4246 = vlaneseq
      %v4247 = vshrl.u32 %v4246, 7
      %v4248 = vsub.s32 %v4245, %v4247
      %v4249 = vrot.slane %v4235, %v4248
      %v4250 = vcombine.low %v4217, %v4233
      %v4251 = vcombine.high %v4217, %v4233
      %v4253 = vunpack.c.l.s4 1934713408
      %v4254 = vunpack.c.0.s8 %v4253
      %v4255 = vlaneseq
      %v4256 = vshrl.u32 %v4255, 7
      %v4257 = vsub.s32 %v4254, %v4256
      %v4258 = vrot.slane %v4250, %v4257
      %v4260 = vunpack.c.l.s4 1934713408
      %v4261 = vunpack.c.0.s8 %v4260
      %v4262 = vlaneseq
      %v4263 = vshrl.u32 %v4262, 7
      %v4264 = vsub.s32 %v4261, %v4263
      %v4265 = vrot.slane %v4251, %v4264
      %v4266 = vcombine.high %v4242, 0.0
      %v4267 = vcombine.high %v4249, 0.0
      %v4268 = vcombine.high %v4258, 0.0
      %v4269 = vcombine.high %v4265, 0.0
      %v4270 = vcombine.low %v4195, %v4199
      %v4271 = vcombine.high %v4195, %v4199
      %v4273 = vunpack.c.l.s4 1983009808
      %v4274 = vunpack.c.0.s8 %v4273
      %v4275 = vlaneseq
      %v4276 = vshrl.u32 %v4275, 7
      %v4277 = vsub.s32 %v4274, %v4276
      %v4278 = vrot.slane %v4270, %v4277
      %v4280 = vunpack.c.l.s4 1983009808
      %v4281 = vunpack.c.0.s8 %v4280
      %v4282 = vlaneseq
      %v4283 = vshrl.u32 %v4282, 7
      %v4284 = vsub.s32 %v4281, %v4283
      %v4285 = vrot.slane %v4271, %v4284
      %v4286 = vcombine.low %v4197, %v4201
      %v4287 = vcombine.high %v4197, %v4201
      %v4289 = vunpack.c.l.s4 1983009808
      %v4290 = vunpack.c.0.s8 %v4289
      %v4291 = vlaneseq
      %v4292 = vshrl.u32 %v4291, 7
      %v4293 = vsub.s32 %v4290, %v4292
      %v4294 = vrot.slane %v4286, %v4293
      %v4296 = vunpack.c.l.s4 1983009808
      %v4297 = vunpack.c.0.s8 %v4296
      %v4298 = vlaneseq
      %v4299 = vshrl.u32 %v4298, 7
      %v4300 = vsub.s32 %v4297, %v4299
      %v4301 = vrot.slane %v4287, %v4300
      %v4302 = vcombine.low %v4278, %v4294
      %v4303 = vcombine.high %v4278, %v4294
      %v4305 = vunpack.c.l.s4 1934713408
      %v4306 = vunpack.c.0.s8 %v4305
      %v4307 = vlaneseq
      %v4308 = vshrl.u32 %v4307, 7
      %v4309 = vsub.s32 %v4306, %v4308
      %v4310 = vrot.slane %v4302, %v4309
      %v4312 = vunpack.c.l.s4 1934713408
      %v4313 = vunpack.c.0.s8 %v4312
      %v4314 = vlaneseq
      %v4315 = vshrl.u32 %v4314, 7
      %v4316 = vsub.s32 %v4313, %v4315
      %v4317 = vrot.slane %v4303, %v4316
      %v4318 = vcombine.low %v4285, %v4301
      %v4319 = vcombine.high %v4285, %v4301
      %v4321 = vunpack.c.l.s4 1934713408
      %v4322 = vunpack.c.0.s8 %v4321
      %v4323 = vlaneseq
      %v4324 = vshrl.u32 %v4323, 7
      %v4325 = vsub.s32 %v4322, %v4324
      %v4326 = vrot.slane %v4318, %v4325
      %v4328 = vunpack.c.l.s4 1934713408
      %v4329 = vunpack.c.0.s8 %v4328
      %v4330 = vlaneseq
      %v4331 = vshrl.u32 %v4330, 7
      %v4332 = vsub.s32 %v4329, %v4331
      %v4333 = vrot.slane %v4319, %v4332
      %v4334 = vcombine.high %v4310, 0.0
      %v4335 = vcombine.high %v4317, 0.0
      %v4336 = vcombine.high %v4326, 0.0
      %v4337 = vcombine.high %v4333, 0.0
      %4339 = vrot.lane.b32.xlu0 %v4266, 16
      %v4340 = vpop.permute.xlu0 %4339
      %4343 = vrot.lane.b32.xlu0 %v4249, 32
      %v4344 = vpop.permute.xlu0 %4343
      %4347 = vrot.lane.b32.xlu0 %v4267, 48
      %v4348 = vpop.permute.xlu0 %4347
      %4351 = vrot.lane.b32.xlu0 %v4258, 64
      %v4352 = vpop.permute.xlu0 %4351
      %4355 = vrot.lane.b32.xlu0 %v4268, 80
      %v4356 = vpop.permute.xlu0 %4355
      %4359 = vrot.lane.b32.xlu0 %v4265, 96
      %v4360 = vpop.permute.xlu0 %4359
      %4363 = vrot.lane.b32.xlu0 %v4269, 112
      %v4364 = vpop.permute.xlu0 %4363
      %4367 = vrot.lane.b32.xlu0 %v4334, 16
      %v4368 = vpop.permute.xlu0 %4367
      %4371 = vrot.lane.b32.xlu0 %v4317, 32
      %v4372 = vpop.permute.xlu0 %4371
      %4375 = vrot.lane.b32.xlu0 %v4335, 48
      %v4376 = vpop.permute.xlu0 %4375
      %4379 = vrot.lane.b32.xlu0 %v4326, 64
      %v4380 = vpop.permute.xlu0 %4379
      %4383 = vrot.lane.b32.xlu0 %v4336, 80
      %v4384 = vpop.permute.xlu0 %4383
      %4387 = vrot.lane.b32.xlu0 %v4333, 96
      %v4388 = vpop.permute.xlu0 %4387
      %4391 = vrot.lane.b32.xlu0 %v4337, 112
      %v4392 = vpop.permute.xlu0 %4391
      %v4394 = vsel %vm1188, %v4242, %v4340
      %v4395 = vsel %vm1190, %v4394, %v4344
      %v4396 = vsel %vm1192, %v4395, %v4348
      %v4397 = vsel %vm1194, %v4396, %v4352
      %v4398 = vsel %vm1196, %v4397, %v4356
      %v4399 = vsel %vm1198, %v4398, %v4360
      %v4400 = vsel %vm1200, %v4399, %v4364
      %v4401 = vsel %vm1188, %v4310, %v4368
      %v4402 = vsel %vm1190, %v4401, %v4372
      %v4403 = vsel %vm1192, %v4402, %v4376
      %v4404 = vsel %vm1194, %v4403, %v4380
      %v4405 = vsel %vm1196, %v4404, %v4384
      %v4406 = vsel %vm1198, %v4405, %v4388
      %v4407 = vsel %vm1200, %v4406, %v4392
      %4408 = vset.pattern.permute.xlu0 3
      %4409 = vperm.xlu0 %4408, %v3242
      %v4410 = vpop.permute.xlu0 %4409
      %v4412 = vmul.f32 %v4400, %v4410
      %v4413 = vmul.f32 %v4407, %v4410
      %v4414 = vadd.f32 %v4192, %v4412
      %v4415 = vadd.f32 %v4193, %v4413
      %v4416 = vld [vmem:[#allocation2 + $0x1] sm:$0xff]
      %v4417 = vld [vmem:[#allocation2 + $0x9] sm:$0xff]
      %v4418 = vld [vmem:[#allocation2 + $0x19] sm:$0xff]
      %v4419 = vld [vmem:[#allocation2 + $0x21] sm:$0xff]
      %v4420 = vld [vmem:[#allocation2 + $0x31] sm:$0xff]
      %v4421 = vld [vmem:[#allocation2 + $0x39] sm:$0xff]
      %v4422 = vld [vmem:[#allocation2 + $0x49] sm:$0xff]
      %v4423 = vld [vmem:[#allocation2 + $0x51] sm:$0xff]
      %4432 = vrot.lane.b32.xlu0 %v4416, 127
      %v4433 = vpop.permute.xlu0 %4432
      %4434 = vrot.lane.b32.xlu0 %v4417, 127
      %v4435 = vpop.permute.xlu0 %4434
      %4436 = vrot.lane.b32.xlu0 %v4418, 127
      %v4437 = vpop.permute.xlu0 %4436
      %4438 = vrot.lane.b32.xlu0 %v4419, 127
      %v4439 = vpop.permute.xlu0 %4438
      %4440 = vrot.lane.b32.xlu0 %v4420, 127
      %v4441 = vpop.permute.xlu0 %4440
      %4442 = vrot.lane.b32.xlu0 %v4421, 127
      %v4443 = vpop.permute.xlu0 %4442
      %4444 = vrot.lane.b32.xlu0 %v4422, 127
      %v4445 = vpop.permute.xlu0 %4444
      %4446 = vrot.lane.b32.xlu0 %v4423, 127
      %v4447 = vpop.permute.xlu0 %4446
      %v4456 = vcombine.low %v4433, %v4441
      %v4457 = vcombine.high %v4433, %v4441
      %v4459 = vunpack.c.l.s4 1983009808
      %v4460 = vunpack.c.0.s8 %v4459
      %v4461 = vlaneseq
      %v4462 = vshrl.u32 %v4461, 7
      %v4463 = vsub.s32 %v4460, %v4462
      %v4464 = vrot.slane %v4456, %v4463
      %v4466 = vunpack.c.l.s4 1983009808
      %v4467 = vunpack.c.0.s8 %v4466
      %v4468 = vlaneseq
      %v4469 = vshrl.u32 %v4468, 7
      %v4470 = vsub.s32 %v4467, %v4469
      %v4471 = vrot.slane %v4457, %v4470
      %v4472 = vcombine.low %v4437, %v4445
      %v4473 = vcombine.high %v4437, %v4445
      %v4475 = vunpack.c.l.s4 1983009808
      %v4476 = vunpack.c.0.s8 %v4475
      %v4477 = vlaneseq
      %v4478 = vshrl.u32 %v4477, 7
      %v4479 = vsub.s32 %v4476, %v4478
      %v4480 = vrot.slane %v4472, %v4479
      %v4482 = vunpack.c.l.s4 1983009808
      %v4483 = vunpack.c.0.s8 %v4482
      %v4484 = vlaneseq
      %v4485 = vshrl.u32 %v4484, 7
      %v4486 = vsub.s32 %v4483, %v4485
      %v4487 = vrot.slane %v4473, %v4486
      %v4488 = vcombine.low %v4464, %v4480
      %v4489 = vcombine.high %v4464, %v4480
      %v4491 = vunpack.c.l.s4 1934713408
      %v4492 = vunpack.c.0.s8 %v4491
      %v4493 = vlaneseq
      %v4494 = vshrl.u32 %v4493, 7
      %v4495 = vsub.s32 %v4492, %v4494
      %v4496 = vrot.slane %v4488, %v4495
      %v4498 = vunpack.c.l.s4 1934713408
      %v4499 = vunpack.c.0.s8 %v4498
      %v4500 = vlaneseq
      %v4501 = vshrl.u32 %v4500, 7
      %v4502 = vsub.s32 %v4499, %v4501
      %v4503 = vrot.slane %v4489, %v4502
      %v4504 = vcombine.low %v4471, %v4487
      %v4505 = vcombine.high %v4471, %v4487
      %v4507 = vunpack.c.l.s4 1934713408
      %v4508 = vunpack.c.0.s8 %v4507
      %v4509 = vlaneseq
      %v4510 = vshrl.u32 %v4509, 7
      %v4511 = vsub.s32 %v4508, %v4510
      %v4512 = vrot.slane %v4504, %v4511
      %v4514 = vunpack.c.l.s4 1934713408
      %v4515 = vunpack.c.0.s8 %v4514
      %v4516 = vlaneseq
      %v4517 = vshrl.u32 %v4516, 7
      %v4518 = vsub.s32 %v4515, %v4517
      %v4519 = vrot.slane %v4505, %v4518
      %v4520 = vcombine.high %v4496, 0.0
      %v4521 = vcombine.high %v4503, 0.0
      %v4522 = vcombine.high %v4512, 0.0
      %v4523 = vcombine.high %v4519, 0.0
      %v4524 = vcombine.low %v4435, %v4443
      %v4525 = vcombine.high %v4435, %v4443
      %v4527 = vunpack.c.l.s4 1983009808
      %v4528 = vunpack.c.0.s8 %v4527
      %v4529 = vlaneseq
      %v4530 = vshrl.u32 %v4529, 7
      %v4531 = vsub.s32 %v4528, %v4530
      %v4532 = vrot.slane %v4524, %v4531
      %v4534 = vunpack.c.l.s4 1983009808
      %v4535 = vunpack.c.0.s8 %v4534
      %v4536 = vlaneseq
      %v4537 = vshrl.u32 %v4536, 7
      %v4538 = vsub.s32 %v4535, %v4537
      %v4539 = vrot.slane %v4525, %v4538
      %v4540 = vcombine.low %v4439, %v4447
      %v4541 = vcombine.high %v4439, %v4447
      %v4543 = vunpack.c.l.s4 1983009808
      %v4544 = vunpack.c.0.s8 %v4543
      %v4545 = vlaneseq
      %v4546 = vshrl.u32 %v4545, 7
      %v4547 = vsub.s32 %v4544, %v4546
      %v4548 = vrot.slane %v4540, %v4547
      %v4550 = vunpack.c.l.s4 1983009808
      %v4551 = vunpack.c.0.s8 %v4550
      %v4552 = vlaneseq
      %v4553 = vshrl.u32 %v4552, 7
      %v4554 = vsub.s32 %v4551, %v4553
      %v4555 = vrot.slane %v4541, %v4554
      %v4556 = vcombine.low %v4532, %v4548
      %v4557 = vcombine.high %v4532, %v4548
      %v4559 = vunpack.c.l.s4 1934713408
      %v4560 = vunpack.c.0.s8 %v4559
      %v4561 = vlaneseq
      %v4562 = vshrl.u32 %v4561, 7
      %v4563 = vsub.s32 %v4560, %v4562
      %v4564 = vrot.slane %v4556, %v4563
      %v4566 = vunpack.c.l.s4 1934713408
      %v4567 = vunpack.c.0.s8 %v4566
      %v4568 = vlaneseq
      %v4569 = vshrl.u32 %v4568, 7
      %v4570 = vsub.s32 %v4567, %v4569
      %v4571 = vrot.slane %v4557, %v4570
      %v4572 = vcombine.low %v4539, %v4555
      %v4573 = vcombine.high %v4539, %v4555
      %v4575 = vunpack.c.l.s4 1934713408
      %v4576 = vunpack.c.0.s8 %v4575
      %v4577 = vlaneseq
      %v4578 = vshrl.u32 %v4577, 7
      %v4579 = vsub.s32 %v4576, %v4578
      %v4580 = vrot.slane %v4572, %v4579
      %v4582 = vunpack.c.l.s4 1934713408
      %v4583 = vunpack.c.0.s8 %v4582
      %v4584 = vlaneseq
      %v4585 = vshrl.u32 %v4584, 7
      %v4586 = vsub.s32 %v4583, %v4585
      %v4587 = vrot.slane %v4573, %v4586
      %v4588 = vcombine.high %v4564, 0.0
      %v4589 = vcombine.high %v4571, 0.0
      %v4590 = vcombine.high %v4580, 0.0
      %v4591 = vcombine.high %v4587, 0.0
      %4593 = vrot.lane.b32.xlu0 %v4520, 16
      %v4594 = vpop.permute.xlu0 %4593
      %4597 = vrot.lane.b32.xlu0 %v4503, 32
      %v4598 = vpop.permute.xlu0 %4597
      %4601 = vrot.lane.b32.xlu0 %v4521, 48
      %v4602 = vpop.permute.xlu0 %4601
      %4605 = vrot.lane.b32.xlu0 %v4512, 64
      %v4606 = vpop.permute.xlu0 %4605
      %4609 = vrot.lane.b32.xlu0 %v4522, 80
      %v4610 = vpop.permute.xlu0 %4609
      %4613 = vrot.lane.b32.xlu0 %v4519, 96
      %v4614 = vpop.permute.xlu0 %4613
      %4617 = vrot.lane.b32.xlu0 %v4523, 112
      %v4618 = vpop.permute.xlu0 %4617
      %4621 = vrot.lane.b32.xlu0 %v4588, 16
      %v4622 = vpop.permute.xlu0 %4621
      %4625 = vrot.lane.b32.xlu0 %v4571, 32
      %v4626 = vpop.permute.xlu0 %4625
      %4629 = vrot.lane.b32.xlu0 %v4589, 48
      %v4630 = vpop.permute.xlu0 %4629
      %4633 = vrot.lane.b32.xlu0 %v4580, 64
      %v4634 = vpop.permute.xlu0 %4633
      %4637 = vrot.lane.b32.xlu0 %v4590, 80
      %v4638 = vpop.permute.xlu0 %4637
      %4641 = vrot.lane.b32.xlu0 %v4587, 96
      %v4642 = vpop.permute.xlu0 %4641
      %4645 = vrot.lane.b32.xlu0 %v4591, 112
      %v4646 = vpop.permute.xlu0 %4645
      %v4648 = vsel %vm1188, %v4496, %v4594
      %v4649 = vsel %vm1190, %v4648, %v4598
      %v4650 = vsel %vm1192, %v4649, %v4602
      %v4651 = vsel %vm1194, %v4650, %v4606
      %v4652 = vsel %vm1196, %v4651, %v4610
      %v4653 = vsel %vm1198, %v4652, %v4614
      %v4654 = vsel %vm1200, %v4653, %v4618
      %v4655 = vsel %vm1188, %v4564, %v4622
      %v4656 = vsel %vm1190, %v4655, %v4626
      %v4657 = vsel %vm1192, %v4656, %v4630
      %v4658 = vsel %vm1194, %v4657, %v4634
      %v4659 = vsel %vm1196, %v4658, %v4638
      %v4660 = vsel %vm1198, %v4659, %v4642
      %v4661 = vsel %vm1200, %v4660, %v4646
      %4662 = vset.pattern.permute.xlu0 4
      %4663 = vperm.xlu0 %4662, %v3242
      %v4664 = vpop.permute.xlu0 %4663
      %v4666 = vmul.f32 %v4654, %v4664
      %v4667 = vmul.f32 %v4661, %v4664
      %v4668 = vadd.f32 %v4414, %v4666
      %v4669 = vadd.f32 %v4415, %v4667
      %v4670 = vld [vmem:[#allocation2 + $0x1] sm:$0xff]
      %v4671 = vld [vmem:[#allocation2 + $0x9] sm:$0xff]
      %v4672 = vld [vmem:[#allocation2 + $0x19] sm:$0xff]
      %v4673 = vld [vmem:[#allocation2 + $0x21] sm:$0xff]
      %v4674 = vld [vmem:[#allocation2 + $0x31] sm:$0xff]
      %v4675 = vld [vmem:[#allocation2 + $0x39] sm:$0xff]
      %v4676 = vld [vmem:[#allocation2 + $0x49] sm:$0xff]
      %v4677 = vld [vmem:[#allocation2 + $0x51] sm:$0xff]
      %4686 = vrot.lane.b32.xlu0 %v4670, 126
      %v4687 = vpop.permute.xlu0 %4686
      %4688 = vrot.lane.b32.xlu0 %v4671, 126
      %v4689 = vpop.permute.xlu0 %4688
      %4690 = vrot.lane.b32.xlu0 %v4672, 126
      %v4691 = vpop.permute.xlu0 %4690
      %4692 = vrot.lane.b32.xlu0 %v4673, 126
      %v4693 = vpop.permute.xlu0 %4692
      %4694 = vrot.lane.b32.xlu0 %v4674, 126
      %v4695 = vpop.permute.xlu0 %4694
      %4696 = vrot.lane.b32.xlu0 %v4675, 126
      %v4697 = vpop.permute.xlu0 %4696
      %4698 = vrot.lane.b32.xlu0 %v4676, 126
      %v4699 = vpop.permute.xlu0 %4698
      %4700 = vrot.lane.b32.xlu0 %v4677, 126
      %v4701 = vpop.permute.xlu0 %4700
      %v4710 = vcombine.low %v4687, %v4695
      %v4711 = vcombine.high %v4687, %v4695
      %v4713 = vunpack.c.l.s4 1983009808
      %v4714 = vunpack.c.0.s8 %v4713
      %v4715 = vlaneseq
      %v4716 = vshrl.u32 %v4715, 7
      %v4717 = vsub.s32 %v4714, %v4716
      %v4718 = vrot.slane %v4710, %v4717
      %v4720 = vunpack.c.l.s4 1983009808
      %v4721 = vunpack.c.0.s8 %v4720
      %v4722 = vlaneseq
      %v4723 = vshrl.u32 %v4722, 7
      %v4724 = vsub.s32 %v4721, %v4723
      %v4725 = vrot.slane %v4711, %v4724
      %v4726 = vcombine.low %v4691, %v4699
      %v4727 = vcombine.high %v4691, %v4699
      %v4729 = vunpack.c.l.s4 1983009808
      %v4730 = vunpack.c.0.s8 %v4729
      %v4731 = vlaneseq
      %v4732 = vshrl.u32 %v4731, 7
      %v4733 = vsub.s32 %v4730, %v4732
      %v4734 = vrot.slane %v4726, %v4733
      %v4736 = vunpack.c.l.s4 1983009808
      %v4737 = vunpack.c.0.s8 %v4736
      %v4738 = vlaneseq
      %v4739 = vshrl.u32 %v4738, 7
      %v4740 = vsub.s32 %v4737, %v4739
      %v4741 = vrot.slane %v4727, %v4740
      %v4742 = vcombine.low %v4718, %v4734
      %v4743 = vcombine.high %v4718, %v4734
      %v4745 = vunpack.c.l.s4 1934713408
      %v4746 = vunpack.c.0.s8 %v4745
      %v4747 = vlaneseq
      %v4748 = vshrl.u32 %v4747, 7
      %v4749 = vsub.s32 %v4746, %v4748
      %v4750 = vrot.slane %v4742, %v4749
      %v4752 = vunpack.c.l.s4 1934713408
      %v4753 = vunpack.c.0.s8 %v4752
      %v4754 = vlaneseq
      %v4755 = vshrl.u32 %v4754, 7
      %v4756 = vsub.s32 %v4753, %v4755
      %v4757 = vrot.slane %v4743, %v4756
      %v4758 = vcombine.low %v4725, %v4741
      %v4759 = vcombine.high %v4725, %v4741
      %v4761 = vunpack.c.l.s4 1934713408
      %v4762 = vunpack.c.0.s8 %v4761
      %v4763 = vlaneseq
      %v4764 = vshrl.u32 %v4763, 7
      %v4765 = vsub.s32 %v4762, %v4764
      %v4766 = vrot.slane %v4758, %v4765
      %v4768 = vunpack.c.l.s4 1934713408
      %v4769 = vunpack.c.0.s8 %v4768
      %v4770 = vlaneseq
      %v4771 = vshrl.u32 %v4770, 7
      %v4772 = vsub.s32 %v4769, %v4771
      %v4773 = vrot.slane %v4759, %v4772
      %v4774 = vcombine.high %v4750, 0.0
      %v4775 = vcombine.high %v4757, 0.0
      %v4776 = vcombine.high %v4766, 0.0
      %v4777 = vcombine.high %v4773, 0.0
      %v4778 = vcombine.low %v4689, %v4697
      %v4779 = vcombine.high %v4689, %v4697
      %v4781 = vunpack.c.l.s4 1983009808
      %v4782 = vunpack.c.0.s8 %v4781
      %v4783 = vlaneseq
      %v4784 = vshrl.u32 %v4783, 7
      %v4785 = vsub.s32 %v4782, %v4784
      %v4786 = vrot.slane %v4778, %v4785
      %v4788 = vunpack.c.l.s4 1983009808
      %v4789 = vunpack.c.0.s8 %v4788
      %v4790 = vlaneseq
      %v4791 = vshrl.u32 %v4790, 7
      %v4792 = vsub.s32 %v4789, %v4791
      %v4793 = vrot.slane %v4779, %v4792
      %v4794 = vcombine.low %v4693, %v4701
      %v4795 = vcombine.high %v4693, %v4701
      %v4797 = vunpack.c.l.s4 1983009808
      %v4798 = vunpack.c.0.s8 %v4797
      %v4799 = vlaneseq
      %v4800 = vshrl.u32 %v4799, 7
      %v4801 = vsub.s32 %v4798, %v4800
      %v4802 = vrot.slane %v4794, %v4801
      %v4804 = vunpack.c.l.s4 1983009808
      %v4805 = vunpack.c.0.s8 %v4804
      %v4806 = vlaneseq
      %v4807 = vshrl.u32 %v4806, 7
      %v4808 = vsub.s32 %v4805, %v4807
      %v4809 = vrot.slane %v4795, %v4808
      %v4810 = vcombine.low %v4786, %v4802
      %v4811 = vcombine.high %v4786, %v4802
      %v4813 = vunpack.c.l.s4 1934713408
      %v4814 = vunpack.c.0.s8 %v4813
      %v4815 = vlaneseq
      %v4816 = vshrl.u32 %v4815, 7
      %v4817 = vsub.s32 %v4814, %v4816
      %v4818 = vrot.slane %v4810, %v4817
      %v4820 = vunpack.c.l.s4 1934713408
      %v4821 = vunpack.c.0.s8 %v4820
      %v4822 = vlaneseq
      %v4823 = vshrl.u32 %v4822, 7
      %v4824 = vsub.s32 %v4821, %v4823
      %v4825 = vrot.slane %v4811, %v4824
      %v4826 = vcombine.low %v4793, %v4809
      %v4827 = vcombine.high %v4793, %v4809
      %v4829 = vunpack.c.l.s4 1934713408
      %v4830 = vunpack.c.0.s8 %v4829
      %v4831 = vlaneseq
      %v4832 = vshrl.u32 %v4831, 7
      %v4833 = vsub.s32 %v4830, %v4832
      %v4834 = vrot.slane %v4826, %v4833
      %v4836 = vunpack.c.l.s4 1934713408
      %v4837 = vunpack.c.0.s8 %v4836
      %v4838 = vlaneseq
      %v4839 = vshrl.u32 %v4838, 7
      %v4840 = vsub.s32 %v4837, %v4839
      %v4841 = vrot.slane %v4827, %v4840
      %v4842 = vcombine.high %v4818, 0.0
      %v4843 = vcombine.high %v4825, 0.0
      %v4844 = vcombine.high %v4834, 0.0
      %v4845 = vcombine.high %v4841, 0.0
      %4847 = vrot.lane.b32.xlu0 %v4774, 16
      %v4848 = vpop.permute.xlu0 %4847
      %4851 = vrot.lane.b32.xlu0 %v4757, 32
      %v4852 = vpop.permute.xlu0 %4851
      %4855 = vrot.lane.b32.xlu0 %v4775, 48
      %v4856 = vpop.permute.xlu0 %4855
      %4859 = vrot.lane.b32.xlu0 %v4766, 64
      %v4860 = vpop.permute.xlu0 %4859
      %4863 = vrot.lane.b32.xlu0 %v4776, 80
      %v4864 = vpop.permute.xlu0 %4863
      %4867 = vrot.lane.b32.xlu0 %v4773, 96
      %v4868 = vpop.permute.xlu0 %4867
      %4871 = vrot.lane.b32.xlu0 %v4777, 112
      %v4872 = vpop.permute.xlu0 %4871
      %4875 = vrot.lane.b32.xlu0 %v4842, 16
      %v4876 = vpop.permute.xlu0 %4875
      %4879 = vrot.lane.b32.xlu0 %v4825, 32
      %v4880 = vpop.permute.xlu0 %4879
      %4883 = vrot.lane.b32.xlu0 %v4843, 48
      %v4884 = vpop.permute.xlu0 %4883
      %4887 = vrot.lane.b32.xlu0 %v4834, 64
      %v4888 = vpop.permute.xlu0 %4887
      %4891 = vrot.lane.b32.xlu0 %v4844, 80
      %v4892 = vpop.permute.xlu0 %4891
      %4895 = vrot.lane.b32.xlu0 %v4841, 96
      %v4896 = vpop.permute.xlu0 %4895
      %4899 = vrot.lane.b32.xlu0 %v4845, 112
      %v4900 = vpop.permute.xlu0 %4899
      %v4902 = vsel %vm1188, %v4750, %v4848
      %v4903 = vsel %vm1190, %v4902, %v4852
      %v4904 = vsel %vm1192, %v4903, %v4856
      %v4905 = vsel %vm1194, %v4904, %v4860
      %v4906 = vsel %vm1196, %v4905, %v4864
      %v4907 = vsel %vm1198, %v4906, %v4868
      %v4908 = vsel %vm1200, %v4907, %v4872
      %v4909 = vsel %vm1188, %v4818, %v4876
      %v4910 = vsel %vm1190, %v4909, %v4880
      %v4911 = vsel %vm1192, %v4910, %v4884
      %v4912 = vsel %vm1194, %v4911, %v4888
      %v4913 = vsel %vm1196, %v4912, %v4892
      %v4914 = vsel %vm1198, %v4913, %v4896
      %v4915 = vsel %vm1200, %v4914, %v4900
      %4916 = vset.pattern.permute.xlu0 5
      %4917 = vperm.xlu0 %4916, %v3242
      %v4918 = vpop.permute.xlu0 %4917
      %v4920 = vmul.f32 %v4908, %v4918
      %v4921 = vmul.f32 %v4915, %v4918
      %v4922 = vadd.f32 %v4668, %v4920
      %v4923 = vadd.f32 %v4669, %v4921
      %v4924 = vld [vmem:[#allocation2 + $0x2] sm:$0xff]
      %v4925 = vld [vmem:[#allocation2 + $0xa] sm:$0xff]
      %v4926 = vld [vmem:[#allocation2 + $0x1a] sm:$0xff]
      %v4927 = vld [vmem:[#allocation2 + $0x22] sm:$0xff]
      %v4928 = vld [vmem:[#allocation2 + $0x32] sm:$0xff]
      %v4929 = vld [vmem:[#allocation2 + $0x3a] sm:$0xff]
      %v4930 = vld [vmem:[#allocation2 + $0x4a] sm:$0xff]
      %v4931 = vld [vmem:[#allocation2 + $0x52] sm:$0xff]
      %v4932 = vcombine.low %v4924, %v4928
      %v4933 = vcombine.high %v4924, %v4928
      %v4935 = vunpack.c.l.s4 1983009808
      %v4936 = vunpack.c.0.s8 %v4935
      %v4937 = vlaneseq
      %v4938 = vshrl.u32 %v4937, 7
      %v4939 = vsub.s32 %v4936, %v4938
      %v4940 = vrot.slane %v4932, %v4939
      %v4942 = vunpack.c.l.s4 1983009808
      %v4943 = vunpack.c.0.s8 %v4942
      %v4944 = vlaneseq
      %v4945 = vshrl.u32 %v4944, 7
      %v4946 = vsub.s32 %v4943, %v4945
      %v4947 = vrot.slane %v4933, %v4946
      %v4948 = vcombine.low %v4926, %v4930
      %v4949 = vcombine.high %v4926, %v4930
      %v4951 = vunpack.c.l.s4 1983009808
      %v4952 = vunpack.c.0.s8 %v4951
      %v4953 = vlaneseq
      %v4954 = vshrl.u32 %v4953, 7
      %v4955 = vsub.s32 %v4952, %v4954
      %v4956 = vrot.slane %v4948, %v4955
      %v4958 = vunpack.c.l.s4 1983009808
      %v4959 = vunpack.c.0.s8 %v4958
      %v4960 = vlaneseq
      %v4961 = vshrl.u32 %v4960, 7
      %v4962 = vsub.s32 %v4959, %v4961
      %v4963 = vrot.slane %v4949, %v4962
      %v4964 = vcombine.low %v4940, %v4956
      %v4965 = vcombine.high %v4940, %v4956
      %v4967 = vunpack.c.l.s4 1934713408
      %v4968 = vunpack.c.0.s8 %v4967
      %v4969 = vlaneseq
      %v4970 = vshrl.u32 %v4969, 7
      %v4971 = vsub.s32 %v4968, %v4970
      %v4972 = vrot.slane %v4964, %v4971
      %v4974 = vunpack.c.l.s4 1934713408
      %v4975 = vunpack.c.0.s8 %v4974
      %v4976 = vlaneseq
      %v4977 = vshrl.u32 %v4976, 7
      %v4978 = vsub.s32 %v4975, %v4977
      %v4979 = vrot.slane %v4965, %v4978
      %v4980 = vcombine.low %v4947, %v4963
      %v4981 = vcombine.high %v4947, %v4963
      %v4983 = vunpack.c.l.s4 1934713408
      %v4984 = vunpack.c.0.s8 %v4983
      %v4985 = vlaneseq
      %v4986 = vshrl.u32 %v4985, 7
      %v4987 = vsub.s32 %v4984, %v4986
      %v4988 = vrot.slane %v4980, %v4987
      %v4990 = vunpack.c.l.s4 1934713408
      %v4991 = vunpack.c.0.s8 %v4990
      %v4992 = vlaneseq
      %v4993 = vshrl.u32 %v4992, 7
      %v4994 = vsub.s32 %v4991, %v4993
      %v4995 = vrot.slane %v4981, %v4994
      %v4996 = vcombine.high %v4972, 0.0
      %v4997 = vcombine.high %v4979, 0.0
      %v4998 = vcombine.high %v4988, 0.0
      %v4999 = vcombine.high %v4995, 0.0
      %v5000 = vcombine.low %v4925, %v4929
      %v5001 = vcombine.high %v4925, %v4929
      %v5003 = vunpack.c.l.s4 1983009808
      %v5004 = vunpack.c.0.s8 %v5003
      %v5005 = vlaneseq
      %v5006 = vshrl.u32 %v5005, 7
      %v5007 = vsub.s32 %v5004, %v5006
      %v5008 = vrot.slane %v5000, %v5007
      %v5010 = vunpack.c.l.s4 1983009808
      %v5011 = vunpack.c.0.s8 %v5010
      %v5012 = vlaneseq
      %v5013 = vshrl.u32 %v5012, 7
      %v5014 = vsub.s32 %v5011, %v5013
      %v5015 = vrot.slane %v5001, %v5014
      %v5016 = vcombine.low %v4927, %v4931
      %v5017 = vcombine.high %v4927, %v4931
      %v5019 = vunpack.c.l.s4 1983009808
      %v5020 = vunpack.c.0.s8 %v5019
      %v5021 = vlaneseq
      %v5022 = vshrl.u32 %v5021, 7
      %v5023 = vsub.s32 %v5020, %v5022
      %v5024 = vrot.slane %v5016, %v5023
      %v5026 = vunpack.c.l.s4 1983009808
      %v5027 = vunpack.c.0.s8 %v5026
      %v5028 = vlaneseq
      %v5029 = vshrl.u32 %v5028, 7
      %v5030 = vsub.s32 %v5027, %v5029
      %v5031 = vrot.slane %v5017, %v5030
      %v5032 = vcombine.low %v5008, %v5024
      %v5033 = vcombine.high %v5008, %v5024
      %v5035 = vunpack.c.l.s4 1934713408
      %v5036 = vunpack.c.0.s8 %v5035
      %v5037 = vlaneseq
      %v5038 = vshrl.u32 %v5037, 7
      %v5039 = vsub.s32 %v5036, %v5038
      %v5040 = vrot.slane %v5032, %v5039
      %v5042 = vunpack.c.l.s4 1934713408
      %v5043 = vunpack.c.0.s8 %v5042
      %v5044 = vlaneseq
      %v5045 = vshrl.u32 %v5044, 7
      %v5046 = vsub.s32 %v5043, %v5045
      %v5047 = vrot.slane %v5033, %v5046
      %v5048 = vcombine.low %v5015, %v5031
      %v5049 = vcombine.high %v5015, %v5031
      %v5051 = vunpack.c.l.s4 1934713408
      %v5052 = vunpack.c.0.s8 %v5051
      %v5053 = vlaneseq
      %v5054 = vshrl.u32 %v5053, 7
      %v5055 = vsub.s32 %v5052, %v5054
      %v5056 = vrot.slane %v5048, %v5055
      %v5058 = vunpack.c.l.s4 1934713408
      %v5059 = vunpack.c.0.s8 %v5058
      %v5060 = vlaneseq
      %v5061 = vshrl.u32 %v5060, 7
      %v5062 = vsub.s32 %v5059, %v5061
      %v5063 = vrot.slane %v5049, %v5062
      %v5064 = vcombine.high %v5040, 0.0
      %v5065 = vcombine.high %v5047, 0.0
      %v5066 = vcombine.high %v5056, 0.0
      %v5067 = vcombine.high %v5063, 0.0
      %5069 = vrot.lane.b32.xlu0 %v4996, 16
      %v5070 = vpop.permute.xlu0 %5069
      %5073 = vrot.lane.b32.xlu0 %v4979, 32
      %v5074 = vpop.permute.xlu0 %5073
      %5077 = vrot.lane.b32.xlu0 %v4997, 48
      %v5078 = vpop.permute.xlu0 %5077
      %5081 = vrot.lane.b32.xlu0 %v4988, 64
      %v5082 = vpop.permute.xlu0 %5081
      %5085 = vrot.lane.b32.xlu0 %v4998, 80
      %v5086 = vpop.permute.xlu0 %5085
      %5089 = vrot.lane.b32.xlu0 %v4995, 96
      %v5090 = vpop.permute.xlu0 %5089
      %5093 = vrot.lane.b32.xlu0 %v4999, 112
      %v5094 = vpop.permute.xlu0 %5093
      %5097 = vrot.lane.b32.xlu0 %v5064, 16
      %v5098 = vpop.permute.xlu0 %5097
      %5101 = vrot.lane.b32.xlu0 %v5047, 32
      %v5102 = vpop.permute.xlu0 %5101
      %5105 = vrot.lane.b32.xlu0 %v5065, 48
      %v5106 = vpop.permute.xlu0 %5105
      %5109 = vrot.lane.b32.xlu0 %v5056, 64
      %v5110 = vpop.permute.xlu0 %5109
      %5113 = vrot.lane.b32.xlu0 %v5066, 80
      %v5114 = vpop.permute.xlu0 %5113
      %5117 = vrot.lane.b32.xlu0 %v5063, 96
      %v5118 = vpop.permute.xlu0 %5117
      %5121 = vrot.lane.b32.xlu0 %v5067, 112
      %v5122 = vpop.permute.xlu0 %5121
      %v5124 = vsel %vm1188, %v4972, %v5070
      %v5125 = vsel %vm1190, %v5124, %v5074
      %v5126 = vsel %vm1192, %v5125, %v5078
      %v5127 = vsel %vm1194, %v5126, %v5082
      %v5128 = vsel %vm1196, %v5127, %v5086
      %v5129 = vsel %vm1198, %v5128, %v5090
      %v5130 = vsel %vm1200, %v5129, %v5094
      %v5131 = vsel %vm1188, %v5040, %v5098
      %v5132 = vsel %vm1190, %v5131, %v5102
      %v5133 = vsel %vm1192, %v5132, %v5106
      %v5134 = vsel %vm1194, %v5133, %v5110
      %v5135 = vsel %vm1196, %v5134, %v5114
      %v5136 = vsel %vm1198, %v5135, %v5118
      %v5137 = vsel %vm1200, %v5136, %v5122
      %5138 = vset.pattern.permute.xlu0 6
      %5139 = vperm.xlu0 %5138, %v3242
      %v5140 = vpop.permute.xlu0 %5139
      %v5142 = vmul.f32 %v5130, %v5140
      %v5143 = vmul.f32 %v5137, %v5140
      %v5144 = vadd.f32 %v4922, %v5142
      %v5145 = vadd.f32 %v4923, %v5143
      %v5146 = vld [vmem:[#allocation2 + $0x2] sm:$0xff]
      %v5147 = vld [vmem:[#allocation2 + $0xa] sm:$0xff]
      %v5148 = vld [vmem:[#allocation2 + $0x1a] sm:$0xff]
      %v5149 = vld [vmem:[#allocation2 + $0x22] sm:$0xff]
      %v5150 = vld [vmem:[#allocation2 + $0x32] sm:$0xff]
      %v5151 = vld [vmem:[#allocation2 + $0x3a] sm:$0xff]
      %v5152 = vld [vmem:[#allocation2 + $0x4a] sm:$0xff]
      %v5153 = vld [vmem:[#allocation2 + $0x52] sm:$0xff]
      %5162 = vrot.lane.b32.xlu0 %v5146, 127
      %v5163 = vpop.permute.xlu0 %5162
      %5164 = vrot.lane.b32.xlu0 %v5147, 127
      %v5165 = vpop.permute.xlu0 %5164
      %5166 = vrot.lane.b32.xlu0 %v5148, 127
      %v5167 = vpop.permute.xlu0 %5166
      %5168 = vrot.lane.b32.xlu0 %v5149, 127
      %v5169 = vpop.permute.xlu0 %5168
      %5170 = vrot.lane.b32.xlu0 %v5150, 127
      %v5171 = vpop.permute.xlu0 %5170
      %5172 = vrot.lane.b32.xlu0 %v5151, 127
      %v5173 = vpop.permute.xlu0 %5172
      %5174 = vrot.lane.b32.xlu0 %v5152, 127
      %v5175 = vpop.permute.xlu0 %5174
      %5176 = vrot.lane.b32.xlu0 %v5153, 127
      %v5177 = vpop.permute.xlu0 %5176
      %v5186 = vcombine.low %v5163, %v5171
      %v5187 = vcombine.high %v5163, %v5171
      %v5189 = vunpack.c.l.s4 1983009808
      %v5190 = vunpack.c.0.s8 %v5189
      %v5191 = vlaneseq
      %v5192 = vshrl.u32 %v5191, 7
      %v5193 = vsub.s32 %v5190, %v5192
      %v5194 = vrot.slane %v5186, %v5193
      %v5196 = vunpack.c.l.s4 1983009808
      %v5197 = vunpack.c.0.s8 %v5196
      %v5198 = vlaneseq
      %v5199 = vshrl.u32 %v5198, 7
      %v5200 = vsub.s32 %v5197, %v5199
      %v5201 = vrot.slane %v5187, %v5200
      %v5202 = vcombine.low %v5167, %v5175
      %v5203 = vcombine.high %v5167, %v5175
      %v5205 = vunpack.c.l.s4 1983009808
      %v5206 = vunpack.c.0.s8 %v5205
      %v5207 = vlaneseq
      %v5208 = vshrl.u32 %v5207, 7
      %v5209 = vsub.s32 %v5206, %v5208
      %v5210 = vrot.slane %v5202, %v5209
      %v5212 = vunpack.c.l.s4 1983009808
      %v5213 = vunpack.c.0.s8 %v5212
      %v5214 = vlaneseq
      %v5215 = vshrl.u32 %v5214, 7
      %v5216 = vsub.s32 %v5213, %v5215
      %v5217 = vrot.slane %v5203, %v5216
      %v5218 = vcombine.low %v5194, %v5210
      %v5219 = vcombine.high %v5194, %v5210
      %v5221 = vunpack.c.l.s4 1934713408
      %v5222 = vunpack.c.0.s8 %v5221
      %v5223 = vlaneseq
      %v5224 = vshrl.u32 %v5223, 7
      %v5225 = vsub.s32 %v5222, %v5224
      %v5226 = vrot.slane %v5218, %v5225
      %v5228 = vunpack.c.l.s4 1934713408
      %v5229 = vunpack.c.0.s8 %v5228
      %v5230 = vlaneseq
      %v5231 = vshrl.u32 %v5230, 7
      %v5232 = vsub.s32 %v5229, %v5231
      %v5233 = vrot.slane %v5219, %v5232
      %v5234 = vcombine.low %v5201, %v5217
      %v5235 = vcombine.high %v5201, %v5217
      %v5237 = vunpack.c.l.s4 1934713408
      %v5238 = vunpack.c.0.s8 %v5237
      %v5239 = vlaneseq
      %v5240 = vshrl.u32 %v5239, 7
      %v5241 = vsub.s32 %v5238, %v5240
      %v5242 = vrot.slane %v5234, %v5241
      %v5244 = vunpack.c.l.s4 1934713408
      %v5245 = vunpack.c.0.s8 %v5244
      %v5246 = vlaneseq
      %v5247 = vshrl.u32 %v5246, 7
      %v5248 = vsub.s32 %v5245, %v5247
      %v5249 = vrot.slane %v5235, %v5248
      %v5250 = vcombine.high %v5226, 0.0
      %v5251 = vcombine.high %v5233, 0.0
      %v5252 = vcombine.high %v5242, 0.0
      %v5253 = vcombine.high %v5249, 0.0
      %v5254 = vcombine.low %v5165, %v5173
      %v5255 = vcombine.high %v5165, %v5173
      %v5257 = vunpack.c.l.s4 1983009808
      %v5258 = vunpack.c.0.s8 %v5257
      %v5259 = vlaneseq
      %v5260 = vshrl.u32 %v5259, 7
      %v5261 = vsub.s32 %v5258, %v5260
      %v5262 = vrot.slane %v5254, %v5261
      %v5264 = vunpack.c.l.s4 1983009808
      %v5265 = vunpack.c.0.s8 %v5264
      %v5266 = vlaneseq
      %v5267 = vshrl.u32 %v5266, 7
      %v5268 = vsub.s32 %v5265, %v5267
      %v5269 = vrot.slane %v5255, %v5268
      %v5270 = vcombine.low %v5169, %v5177
      %v5271 = vcombine.high %v5169, %v5177
      %v5273 = vunpack.c.l.s4 1983009808
      %v5274 = vunpack.c.0.s8 %v5273
      %v5275 = vlaneseq
      %v5276 = vshrl.u32 %v5275, 7
      %v5277 = vsub.s32 %v5274, %v5276
      %v5278 = vrot.slane %v5270, %v5277
      %v5280 = vunpack.c.l.s4 1983009808
      %v5281 = vunpack.c.0.s8 %v5280
      %v5282 = vlaneseq
      %v5283 = vshrl.u32 %v5282, 7
      %v5284 = vsub.s32 %v5281, %v5283
      %v5285 = vrot.slane %v5271, %v5284
      %v5286 = vcombine.low %v5262, %v5278
      %v5287 = vcombine.high %v5262, %v5278
      %v5289 = vunpack.c.l.s4 1934713408
      %v5290 = vunpack.c.0.s8 %v5289
      %v5291 = vlaneseq
      %v5292 = vshrl.u32 %v5291, 7
      %v5293 = vsub.s32 %v5290, %v5292
      %v5294 = vrot.slane %v5286, %v5293
      %v5296 = vunpack.c.l.s4 1934713408
      %v5297 = vunpack.c.0.s8 %v5296
      %v5298 = vlaneseq
      %v5299 = vshrl.u32 %v5298, 7
      %v5300 = vsub.s32 %v5297, %v5299
      %v5301 = vrot.slane %v5287, %v5300
      %v5302 = vcombine.low %v5269, %v5285
      %v5303 = vcombine.high %v5269, %v5285
      %v5305 = vunpack.c.l.s4 1934713408
      %v5306 = vunpack.c.0.s8 %v5305
      %v5307 = vlaneseq
      %v5308 = vshrl.u32 %v5307, 7
      %v5309 = vsub.s32 %v5306, %v5308
      %v5310 = vrot.slane %v5302, %v5309
      %v5312 = vunpack.c.l.s4 1934713408
      %v5313 = vunpack.c.0.s8 %v5312
      %v5314 = vlaneseq
      %v5315 = vshrl.u32 %v5314, 7
      %v5316 = vsub.s32 %v5313, %v5315
      %v5317 = vrot.slane %v5303, %v5316
      %v5318 = vcombine.high %v5294, 0.0
      %v5319 = vcombine.high %v5301, 0.0
      %v5320 = vcombine.high %v5310, 0.0
      %v5321 = vcombine.high %v5317, 0.0
      %5323 = vrot.lane.b32.xlu0 %v5250, 16
      %v5324 = vpop.permute.xlu0 %5323
      %5327 = vrot.lane.b32.xlu0 %v5233, 32
      %v5328 = vpop.permute.xlu0 %5327
      %5331 = vrot.lane.b32.xlu0 %v5251, 48
      %v5332 = vpop.permute.xlu0 %5331
      %5335 = vrot.lane.b32.xlu0 %v5242, 64
      %v5336 = vpop.permute.xlu0 %5335
      %5339 = vrot.lane.b32.xlu0 %v5252, 80
      %v5340 = vpop.permute.xlu0 %5339
      %5343 = vrot.lane.b32.xlu0 %v5249, 96
      %v5344 = vpop.permute.xlu0 %5343
      %5347 = vrot.lane.b32.xlu0 %v5253, 112
      %v5348 = vpop.permute.xlu0 %5347
      %5351 = vrot.lane.b32.xlu0 %v5318, 16
      %v5352 = vpop.permute.xlu0 %5351
      %5355 = vrot.lane.b32.xlu0 %v5301, 32
      %v5356 = vpop.permute.xlu0 %5355
      %5359 = vrot.lane.b32.xlu0 %v5319, 48
      %v5360 = vpop.permute.xlu0 %5359
      %5363 = vrot.lane.b32.xlu0 %v5310, 64
      %v5364 = vpop.permute.xlu0 %5363
      %5367 = vrot.lane.b32.xlu0 %v5320, 80
      %v5368 = vpop.permute.xlu0 %5367
      %5371 = vrot.lane.b32.xlu0 %v5317, 96
      %v5372 = vpop.permute.xlu0 %5371
      %5375 = vrot.lane.b32.xlu0 %v5321, 112
      %v5376 = vpop.permute.xlu0 %5375
      %v5378 = vsel %vm1188, %v5226, %v5324
      %v5379 = vsel %vm1190, %v5378, %v5328
      %v5380 = vsel %vm1192, %v5379, %v5332
      %v5381 = vsel %vm1194, %v5380, %v5336
      %v5382 = vsel %vm1196, %v5381, %v5340
      %v5383 = vsel %vm1198, %v5382, %v5344
      %v5384 = vsel %vm1200, %v5383, %v5348
      %v5385 = vsel %vm1188, %v5294, %v5352
      %v5386 = vsel %vm1190, %v5385, %v5356
      %v5387 = vsel %vm1192, %v5386, %v5360
      %v5388 = vsel %vm1194, %v5387, %v5364
      %v5389 = vsel %vm1196, %v5388, %v5368
      %v5390 = vsel %vm1198, %v5389, %v5372
      %v5391 = vsel %vm1200, %v5390, %v5376
      %5392 = vset.pattern.permute.xlu0 7
      %5393 = vperm.xlu0 %5392, %v3242
      %v5394 = vpop.permute.xlu0 %5393
      %v5396 = vmul.f32 %v5384, %v5394
      %v5397 = vmul.f32 %v5391, %v5394
      %v5398 = vadd.f32 %v5144, %v5396
      %v5399 = vadd.f32 %v5145, %v5397
      %v5400 = vld [vmem:[#allocation2 + $0x2] sm:$0xff]
      %v5401 = vld [vmem:[#allocation2 + $0xa] sm:$0xff]
      %v5402 = vld [vmem:[#allocation2 + $0x1a] sm:$0xff]
      %v5403 = vld [vmem:[#allocation2 + $0x22] sm:$0xff]
      %v5404 = vld [vmem:[#allocation2 + $0x32] sm:$0xff]
      %v5405 = vld [vmem:[#allocation2 + $0x3a] sm:$0xff]
      %v5406 = vld [vmem:[#allocation2 + $0x4a] sm:$0xff]
      %v5407 = vld [vmem:[#allocation2 + $0x52] sm:$0xff]
      %5416 = vrot.lane.b32.xlu0 %v5400, 126
      %v5417 = vpop.permute.xlu0 %5416
      %5418 = vrot.lane.b32.xlu0 %v5401, 126
      %v5419 = vpop.permute.xlu0 %5418
      %5420 = vrot.lane.b32.xlu0 %v5402, 126
      %v5421 = vpop.permute.xlu0 %5420
      %5422 = vrot.lane.b32.xlu0 %v5403, 126
      %v5423 = vpop.permute.xlu0 %5422
      %5424 = vrot.lane.b32.xlu0 %v5404, 126
      %v5425 = vpop.permute.xlu0 %5424
      %5426 = vrot.lane.b32.xlu0 %v5405, 126
      %v5427 = vpop.permute.xlu0 %5426
      %5428 = vrot.lane.b32.xlu0 %v5406, 126
      %v5429 = vpop.permute.xlu0 %5428
      %5430 = vrot.lane.b32.xlu0 %v5407, 126
      %v5431 = vpop.permute.xlu0 %5430
      %v5440 = vcombine.low %v5417, %v5425
      %v5441 = vcombine.high %v5417, %v5425
      %v5443 = vunpack.c.l.s4 1983009808
      %v5444 = vunpack.c.0.s8 %v5443
      %v5445 = vlaneseq
      %v5446 = vshrl.u32 %v5445, 7
      %v5447 = vsub.s32 %v5444, %v5446
      %v5448 = vrot.slane %v5440, %v5447
      %v5450 = vunpack.c.l.s4 1983009808
      %v5451 = vunpack.c.0.s8 %v5450
      %v5452 = vlaneseq
      %v5453 = vshrl.u32 %v5452, 7
      %v5454 = vsub.s32 %v5451, %v5453
      %v5455 = vrot.slane %v5441, %v5454
      %v5456 = vcombine.low %v5421, %v5429
      %v5457 = vcombine.high %v5421, %v5429
      %v5459 = vunpack.c.l.s4 1983009808
      %v5460 = vunpack.c.0.s8 %v5459
      %v5461 = vlaneseq
      %v5462 = vshrl.u32 %v5461, 7
      %v5463 = vsub.s32 %v5460, %v5462
      %v5464 = vrot.slane %v5456, %v5463
      %v5466 = vunpack.c.l.s4 1983009808
      %v5467 = vunpack.c.0.s8 %v5466
      %v5468 = vlaneseq
      %v5469 = vshrl.u32 %v5468, 7
      %v5470 = vsub.s32 %v5467, %v5469
      %v5471 = vrot.slane %v5457, %v5470
      %v5472 = vcombine.low %v5448, %v5464
      %v5473 = vcombine.high %v5448, %v5464
      %v5475 = vunpack.c.l.s4 1934713408
      %v5476 = vunpack.c.0.s8 %v5475
      %v5477 = vlaneseq
      %v5478 = vshrl.u32 %v5477, 7
      %v5479 = vsub.s32 %v5476, %v5478
      %v5480 = vrot.slane %v5472, %v5479
      %v5482 = vunpack.c.l.s4 1934713408
      %v5483 = vunpack.c.0.s8 %v5482
      %v5484 = vlaneseq
      %v5485 = vshrl.u32 %v5484, 7
      %v5486 = vsub.s32 %v5483, %v5485
      %v5487 = vrot.slane %v5473, %v5486
      %v5488 = vcombine.low %v5455, %v5471
      %v5489 = vcombine.high %v5455, %v5471
      %v5491 = vunpack.c.l.s4 1934713408
      %v5492 = vunpack.c.0.s8 %v5491
      %v5493 = vlaneseq
      %v5494 = vshrl.u32 %v5493, 7
      %v5495 = vsub.s32 %v5492, %v5494
      %v5496 = vrot.slane %v5488, %v5495
      %v5498 = vunpack.c.l.s4 1934713408
      %v5499 = vunpack.c.0.s8 %v5498
      %v5500 = vlaneseq
      %v5501 = vshrl.u32 %v5500, 7
      %v5502 = vsub.s32 %v5499, %v5501
      %v5503 = vrot.slane %v5489, %v5502
      %v5504 = vcombine.high %v5480, 0.0
      %v5505 = vcombine.high %v5487, 0.0
      %v5506 = vcombine.high %v5496, 0.0
      %v5507 = vcombine.high %v5503, 0.0
      %v5508 = vcombine.low %v5419, %v5427
      %v5509 = vcombine.high %v5419, %v5427
      %v5511 = vunpack.c.l.s4 1983009808
      %v5512 = vunpack.c.0.s8 %v5511
      %v5513 = vlaneseq
      %v5514 = vshrl.u32 %v5513, 7
      %v5515 = vsub.s32 %v5512, %v5514
      %v5516 = vrot.slane %v5508, %v5515
      %v5518 = vunpack.c.l.s4 1983009808
      %v5519 = vunpack.c.0.s8 %v5518
      %v5520 = vlaneseq
      %v5521 = vshrl.u32 %v5520, 7
      %v5522 = vsub.s32 %v5519, %v5521
      %v5523 = vrot.slane %v5509, %v5522
      %v5524 = vcombine.low %v5423, %v5431
      %v5525 = vcombine.high %v5423, %v5431
      %v5527 = vunpack.c.l.s4 1983009808
      %v5528 = vunpack.c.0.s8 %v5527
      %v5529 = vlaneseq
      %v5530 = vshrl.u32 %v5529, 7
      %v5531 = vsub.s32 %v5528, %v5530
      %v5532 = vrot.slane %v5524, %v5531
      %v5534 = vunpack.c.l.s4 1983009808
      %v5535 = vunpack.c.0.s8 %v5534
      %v5536 = vlaneseq
      %v5537 = vshrl.u32 %v5536, 7
      %v5538 = vsub.s32 %v5535, %v5537
      %v5539 = vrot.slane %v5525, %v5538
      %v5540 = vcombine.low %v5516, %v5532
      %v5541 = vcombine.high %v5516, %v5532
      %v5543 = vunpack.c.l.s4 1934713408
      %v5544 = vunpack.c.0.s8 %v5543
      %v5545 = vlaneseq
      %v5546 = vshrl.u32 %v5545, 7
      %v5547 = vsub.s32 %v5544, %v5546
      %v5548 = vrot.slane %v5540, %v5547
      %v5550 = vunpack.c.l.s4 1934713408
      %v5551 = vunpack.c.0.s8 %v5550
      %v5552 = vlaneseq
      %v5553 = vshrl.u32 %v5552, 7
      %v5554 = vsub.s32 %v5551, %v5553
      %v5555 = vrot.slane %v5541, %v5554
      %v5556 = vcombine.low %v5523, %v5539
      %v5557 = vcombine.high %v5523, %v5539
      %v5559 = vunpack.c.l.s4 1934713408
      %v5560 = vunpack.c.0.s8 %v5559
      %v5561 = vlaneseq
      %v5562 = vshrl.u32 %v5561, 7
      %v5563 = vsub.s32 %v5560, %v5562
      %v5564 = vrot.slane %v5556, %v5563
      %v5566 = vunpack.c.l.s4 1934713408
      %v5567 = vunpack.c.0.s8 %v5566
      %v5568 = vlaneseq
      %v5569 = vshrl.u32 %v5568, 7
      %v5570 = vsub.s32 %v5567, %v5569
      %v5571 = vrot.slane %v5557, %v5570
      %v5572 = vcombine.high %v5548, 0.0
      %v5573 = vcombine.high %v5555, 0.0
      %v5574 = vcombine.high %v5564, 0.0
      %v5575 = vcombine.high %v5571, 0.0
      %5577 = vrot.lane.b32.xlu0 %v5504, 16
      %v5578 = vpop.permute.xlu0 %5577
      %5581 = vrot.lane.b32.xlu0 %v5487, 32
      %v5582 = vpop.permute.xlu0 %5581
      %5585 = vrot.lane.b32.xlu0 %v5505, 48
      %v5586 = vpop.permute.xlu0 %5585
      %5589 = vrot.lane.b32.xlu0 %v5496, 64
      %v5590 = vpop.permute.xlu0 %5589
      %5593 = vrot.lane.b32.xlu0 %v5506, 80
      %v5594 = vpop.permute.xlu0 %5593
      %5597 = vrot.lane.b32.xlu0 %v5503, 96
      %v5598 = vpop.permute.xlu0 %5597
      %5601 = vrot.lane.b32.xlu0 %v5507, 112
      %v5602 = vpop.permute.xlu0 %5601
      %5605 = vrot.lane.b32.xlu0 %v5572, 16
      %v5606 = vpop.permute.xlu0 %5605
      %5609 = vrot.lane.b32.xlu0 %v5555, 32
      %v5610 = vpop.permute.xlu0 %5609
      %5613 = vrot.lane.b32.xlu0 %v5573, 48
      %v5614 = vpop.permute.xlu0 %5613
      %5617 = vrot.lane.b32.xlu0 %v5564, 64
      %v5618 = vpop.permute.xlu0 %5617
      %5621 = vrot.lane.b32.xlu0 %v5574, 80
      %v5622 = vpop.permute.xlu0 %5621
      %5625 = vrot.lane.b32.xlu0 %v5571, 96
      %v5626 = vpop.permute.xlu0 %5625
      %5629 = vrot.lane.b32.xlu0 %v5575, 112
      %v5630 = vpop.permute.xlu0 %5629
      %v5632 = vsel %vm1188, %v5480, %v5578
      %v5633 = vsel %vm1190, %v5632, %v5582
      %v5634 = vsel %vm1192, %v5633, %v5586
      %v5635 = vsel %vm1194, %v5634, %v5590
      %v5636 = vsel %vm1196, %v5635, %v5594
      %v5637 = vsel %vm1198, %v5636, %v5598
      %v5638 = vsel %vm1200, %v5637, %v5602
      %v5639 = vsel %vm1188, %v5548, %v5606
      %v5640 = vsel %vm1190, %v5639, %v5610
      %v5641 = vsel %vm1192, %v5640, %v5614
      %v5642 = vsel %vm1194, %v5641, %v5618
      %v5643 = vsel %vm1196, %v5642, %v5622
      %v5644 = vsel %vm1198, %v5643, %v5626
      %v5645 = vsel %vm1200, %v5644, %v5630
      %5646 = vset.pattern.permute.xlu0 8
      %5647 = vperm.xlu0 %5646, %v3242
      %v5648 = vpop.permute.xlu0 %5647
      %v5650 = vmul.f32 %v5638, %v5648
      %v5651 = vmul.f32 %v5645, %v5648
      %v5652 = vadd.f32 %v5398, %v5650
      %v5653 = vadd.f32 %v5399, %v5651
      %v5654 = vld [vmem:[%s6] sm:$0xf]
      %5656 = vset.pattern.permute.xlu0 0
      %5657 = vperm.xlu0 %5656, %v5654
      %v5658 = vpop.permute.xlu0 %5657
      %v5660 = vadd.f32 %v5652, %v5658
      %v5661 = vadd.f32 %v5653, %v5658
      %v5662 = vmul.f32 %v5660, 0.5
      %v5663 = vmul.f32 %v5661, 0.5
      %v5664 = vmul.f32 %v5660, 0.70710677
      %v5665 = vmul.f32 %v5661, 0.70710677
      %v5666 = verf.f32.pop %v5664
      %v5667 = verf.f32.pop %v5665
      %v5668 = vadd.f32 %v5666, 1.0
      %v5669 = vadd.f32 %v5667, 1.0
      %v5670 = vmul.f32 %v5662, %v5668
      %v5671 = vmul.f32 %v5663, %v5669
      %v5672 = vld [vmem:[%s7] sm:$0xf]
      %5674 = vset.pattern.permute.xlu0 0
      %5675 = vperm.xlu0 %5674, %v5672
      %v5676 = vpop.permute.xlu0 %5675
      %v5678 = vmul.f32 %v5670, %v5676
      %v5679 = vmul.f32 %v5671, %v5676
      %v5680 = vld [vmem:[%s8] sm:$0xf]
      %5682 = vset.pattern.permute.xlu0 0
      %5683 = vperm.xlu0 %5682, %v5680
      %v5684 = vpop.permute.xlu0 %5683
      %v5686 = vadd.f32 %v5678, %v5684
      %v5687 = vadd.f32 %v5679, %v5684
      %v5688 = vadd.f32 %v3240, %v5686
      %v5689 = vadd.f32 %v3241, %v5687
      %v5690 = vld [vmem:[%s9] sm:$0xf]
      %v5691 = vld [vmem:[%s9 + $0x4] sm:$0xf]
      %v5692 = vpack.c.bf16 %v5688, %v5688
      %v5693 = vpack.c.bf16 %v5689, %v5689
      %v5694 = vld [vmem:[%s10] sm:$0xff]
      %v5695 = vld [vmem:[%s10 + $0x8] sm:$0xff]
      %5697 = vset.pattern.permute.xlu0 0
      %5698 = vperm.xlu0 %5697, %v5694
      %v5699 = vpop.permute.xlu0 %5698
      %5702 = vset.pattern.permute.xlu0 0
      %5703 = vperm.xlu0 %5702, %v5695
      %v5704 = vpop.permute.xlu0 %5703
      %v5708 = vunpack.c.l.b16 %v5690
      %v5709 = vunpack.c.l.b16 %v5691
      %v5710 = vpack.c.b16 %v5709, %v5708
      %vm5711 = vcmask 31744
      %v5713 = vsel %vm5711, %v5710, 0
      %v5716 = vsel %vm3182, %v5692, 0
      %v5719 = vsel %vm3182, %v5693, 0
      %5721 = vmatprep.subr.bf16.mxu0 %v5719
      %5722 = vmatpush1.bf16.msra.mxu0 %v5716
      %5723 = vmatprep.subr.bf16.mxu0 0
      %5724 = vmatpush1.bf16.msra.mxu0 0
      %5725 = vmatprep.subr.bf16.mxu0 0
      %5726 = vmatpush1.bf16.msra.mxu0 0
      %5727 = vmatprep.subr.bf16.mxu0 0
      %5728 = vmatpush1.bf16.msra.mxu0 0
      %5729 = vmatprep.subr.bf16.mxu0 0
      %5730 = vmatpush1.bf16.msra.mxu0 0
      %5731 = vmatprep.subr.bf16.mxu0 0
      %5732 = vmatpush1.bf16.msra.mxu0 0
      %5733 = vmatprep.subr.bf16.mxu0 0
      %5734 = vmatpush1.bf16.msra.mxu0 0
      %5735 = vmatprep.subr.bf16.mxu0 0
      %5736 = vmatpush1.bf16.msra.mxu0 0
      %5737 = vmatprep.subr.bf16.mxu0 0
      %5738 = vmatpush1.bf16.msra.mxu0 0
      %5739 = vmatprep.subr.bf16.mxu0 0
      %5740 = vmatpush1.bf16.msra.mxu0 0
      %5741 = vmatprep.subr.bf16.mxu0 0
      %5742 = vmatpush1.bf16.msra.mxu0 0
      %5743 = vmatprep.subr.bf16.mxu0 0
      %5744 = vmatpush1.bf16.msra.mxu0 0
      %5745 = vmatprep.subr.bf16.mxu0 0
      %5746 = vmatpush1.bf16.msra.mxu0 0
      %5747 = vmatprep.subr.bf16.mxu0 0
      %5748 = vmatpush1.bf16.msra.mxu0 0
      %5749 = vmatprep.subr.bf16.mxu0 0
      %5750 = vmatpush1.bf16.msra.mxu0 0
      %5751 = vmatprep.subr.bf16.mxu0 0
      %5752 = vmatpush1.bf16.msra.mxu0 0
      %5753 = vmatprep.mubr.bf16.mxu0 0
      %5754 = vmatmul.mubr.bf16.gmra.mrb[0].mxu0 %v5713
      %v5755 = vpop.f32.mrb[0].mxu0
      %v5756 = vadd.f32 %v5699, %v5755
      %v5757 = vpop.f32.mrb[0].mxu0
      %v5758 = vadd.f32 %v5699, %v5757
      %v5759 = vpop.f32.mrb[0].mxu0
      %v5760 = vadd.f32 %v5704, %v5759
      %v5761 = vpop.f32.mrb[0].mxu0
      %v5762 = vadd.f32 %v5704, %v5761
      %5763 = vdwg.mxu0
      %v5764 = vmul.f32 %v5756, 0.5
      %v5765 = vmul.f32 %v5758, 0.5
      %v5766 = vmul.f32 %v5760, 0.5
      %v5767 = vmul.f32 %v5762, 0.5
      %v5768 = vmul.f32 %v5756, 0.70710677
      %v5769 = vmul.f32 %v5758, 0.70710677
      %v5770 = vmul.f32 %v5760, 0.70710677
      %v5771 = vmul.f32 %v5762, 0.70710677
      %v5772 = verf.f32.pop %v5768
      %v5773 = verf.f32.pop %v5769
      %v5774 = verf.f32.pop %v5770
      %v5775 = verf.f32.pop %v5771
      %v5776 = vadd.f32 %v5772, 1.0
      %v5777 = vadd.f32 %v5773, 1.0
      %v5778 = vadd.f32 %v5774, 1.0
      %v5779 = vadd.f32 %v5775, 1.0
      %v5780 = vmul.f32 %v5764, %v5776
      %v5781 = vmul.f32 %v5765, %v5777
      %v5782 = vmul.f32 %v5766, %v5778
      %v5783 = vmul.f32 %v5767, %v5779
      %v5784 = vld [vmem:[%s11] sm:$0xff]
      %v5785 = vld [vmem:[%s11 + $0x8] sm:$0xff]
      %5787 = vset.pattern.permute.xlu0 0
      %5788 = vperm.xlu0 %5787, %v5784
      %v5789 = vpop.permute.xlu0 %5788
      %5792 = vset.pattern.permute.xlu0 0
      %5793 = vperm.xlu0 %5792, %v5785
      %v5794 = vpop.permute.xlu0 %5793
      %v5796 = vmul.f32 %v5780, %v5789
      %v5797 = vmul.f32 %v5781, %v5789
      %v5798 = vmul.f32 %v5782, %v5794
      %v5799 = vmul.f32 %v5783, %v5794
      %v5800 = vld [vmem:[%s12] sm:$0xff]
      %v5801 = vld [vmem:[%s12 + $0x8] sm:$0xff]
      %5803 = vset.pattern.permute.xlu0 0
      %5804 = vperm.xlu0 %5803, %v5800
      %v5805 = vpop.permute.xlu0 %5804
      %5808 = vset.pattern.permute.xlu0 0
      %5809 = vperm.xlu0 %5808, %v5801
      %v5810 = vpop.permute.xlu0 %5809
      %v5812 = vadd.f32 %v5796, %v5805
      %v5813 = vadd.f32 %v5797, %v5805
      %v5814 = vadd.f32 %v5798, %v5810
      %v5815 = vadd.f32 %v5799, %v5810
      %v5816 = vld [vmem:[%s13] sm:$0x3]
      %v5817 = vpack.c.bf16 %v5814, %v5812
      %v5818 = vpack.c.bf16 %v5815, %v5813
      %v5819 = vld [vmem:[%s14] sm:$0xf]
      %5821 = vset.pattern.permute.xlu0 0
      %5822 = vperm.xlu0 %5821, %v5819
      %v5823 = vpop.permute.xlu0 %5822
      %v5826 = vsel %vm1188, %v5816, 0
      %5828 = vmatprep.subr.bf16.mxu0 %v5818
      %5829 = vmatpush1.bf16.msra.mxu0 %v5817
      %5830 = vmatprep.subr.bf16.mxu0 0
      %5831 = vmatpush1.bf16.msra.mxu0 0
      %5832 = vmatprep.subr.bf16.mxu0 0
      %5833 = vmatpush1.bf16.msra.mxu0 0
      %5834 = vmatprep.subr.bf16.mxu0 0
      %5835 = vmatpush1.bf16.msra.mxu0 0
      %5836 = vmatprep.subr.bf16.mxu0 0
      %5837 = vmatpush1.bf16.msra.mxu0 0
      %5838 = vmatprep.subr.bf16.mxu0 0
      %5839 = vmatpush1.bf16.msra.mxu0 0
      %5840 = vmatprep.subr.bf16.mxu0 0
      %5841 = vmatpush1.bf16.msra.mxu0 0
      %5842 = vmatprep.subr.bf16.mxu0 0
      %5843 = vmatpush1.bf16.msra.mxu0 0
      %5844 = vmatprep.subr.bf16.mxu0 0
      %5845 = vmatpush1.bf16.msra.mxu0 0
      %5846 = vmatprep.subr.bf16.mxu0 0
      %5847 = vmatpush1.bf16.msra.mxu0 0
      %5848 = vmatprep.subr.bf16.mxu0 0
      %5849 = vmatpush1.bf16.msra.mxu0 0
      %5850 = vmatprep.subr.bf16.mxu0 0
      %5851 = vmatpush1.bf16.msra.mxu0 0
      %5852 = vmatprep.subr.bf16.mxu0 0
      %5853 = vmatpush1.bf16.msra.mxu0 0
      %5854 = vmatprep.subr.bf16.mxu0 0
      %5855 = vmatpush1.bf16.msra.mxu0 0
      %5856 = vmatprep.subr.bf16.mxu0 0
      %5857 = vmatpush1.bf16.msra.mxu0 0
      %5858 = vmatprep.subr.bf16.mxu0 0
      %5859 = vmatpush1.bf16.msra.mxu0 0
      %5860 = vmatprep.mubr.bf16.mxu0 0
      %5861 = vmatmul.mubr.bf16.gmra.mrb[0].mxu0 %v5826
      %v5862 = vpop.f32.mrb[0].mxu0
      %v5863 = vadd.f32 %v5823, %v5862
      %v5864 = vpop.f32.mrb[0].mxu0
      %v5865 = vadd.f32 %v5823, %v5864
      %v5866 = vpop.f32.mrb[0].mxu0
      %v5867 = vpop.f32.mrb[0].mxu0
      %5868 = vdwg.mxu0
      %v5869 = vmul.f32 %v5863, 0.5
      %v5870 = vmul.f32 %v5865, 0.5
      %v5871 = vmul.f32 %v5863, 0.70710677
      %v5872 = vmul.f32 %v5865, 0.70710677
      %v5873 = verf.f32.pop %v5871
      %v5874 = verf.f32.pop %v5872
      %v5875 = vadd.f32 %v5873, 1.0
      %v5876 = vadd.f32 %v5874, 1.0
      %v5877 = vmul.f32 %v5869, %v5875
      %v5878 = vmul.f32 %v5870, %v5876
      %v5879 = vld [vmem:[%s15] sm:$0xf]
      %5881 = vset.pattern.permute.xlu0 0
      %5882 = vperm.xlu0 %5881, %v5879
      %v5883 = vpop.permute.xlu0 %5882
      %v5885 = vmul.f32 %v5877, %v5883
      %v5886 = vmul.f32 %v5878, %v5883
      %v5887 = vld [vmem:[%s16] sm:$0xf]
      %5889 = vset.pattern.permute.xlu0 0
      %5890 = vperm.xlu0 %5889, %v5887
      %v5891 = vpop.permute.xlu0 %5890
      %v5893 = vadd.f32 %v5885, %v5891
      %v5894 = vadd.f32 %v5886, %v5891
      %5896 = vrot.lane.b32.xlu0 %v5893, 112
      %v5897 = vpop.permute.xlu0 %5896
      %5899 = vrot.lane.b32.xlu0 %v5893, 96
      %v5900 = vpop.permute.xlu0 %5899
      %5902 = vrot.lane.b32.xlu0 %v5893, 80
      %v5903 = vpop.permute.xlu0 %5902
      %5905 = vrot.lane.b32.xlu0 %v5893, 64
      %v5906 = vpop.permute.xlu0 %5905
      %5908 = vrot.lane.b32.xlu0 %v5893, 48
      %v5909 = vpop.permute.xlu0 %5908
      %5911 = vrot.lane.b32.xlu0 %v5893, 32
      %v5912 = vpop.permute.xlu0 %5911
      %5914 = vrot.lane.b32.xlu0 %v5893, 16
      %v5915 = vpop.permute.xlu0 %5914
      %5918 = vrot.lane.b32.xlu0 %v5894, 112
      %v5919 = vpop.permute.xlu0 %5918
      %5921 = vrot.lane.b32.xlu0 %v5894, 96
      %v5922 = vpop.permute.xlu0 %5921
      %5924 = vrot.lane.b32.xlu0 %v5894, 80
      %v5925 = vpop.permute.xlu0 %5924
      %5927 = vrot.lane.b32.xlu0 %v5894, 64
      %v5928 = vpop.permute.xlu0 %5927
      %5930 = vrot.lane.b32.xlu0 %v5894, 48
      %v5931 = vpop.permute.xlu0 %5930
      %5933 = vrot.lane.b32.xlu0 %v5894, 32
      %v5934 = vpop.permute.xlu0 %5933
      %5936 = vrot.lane.b32.xlu0 %v5894, 16
      %v5937 = vpop.permute.xlu0 %5936
      %v5939 = vcombine.low %v5893, %v5900
      %v5941 = vunpack.c.l.s4 1983009808
      %v5942 = vunpack.c.0.s8 %v5941
      %v5943 = vlaneseq
      %v5944 = vshrl.u32 %v5943, 7
      %v5945 = vsub.s32 %v5942, %v5944
      %v5946 = vrot.slane %v5939, %v5945
      %v5947 = vcombine.low %v5897, %v5903
      %v5949 = vunpack.c.l.s4 1983009808
      %v5950 = vunpack.c.0.s8 %v5949
      %v5951 = vlaneseq
      %v5952 = vshrl.u32 %v5951, 7
      %v5953 = vsub.s32 %v5950, %v5952
      %v5954 = vrot.slane %v5947, %v5953
      %v5955 = vcombine.low %v5906, %v5912
      %v5957 = vunpack.c.l.s4 1983009808
      %v5958 = vunpack.c.0.s8 %v5957
      %v5959 = vlaneseq
      %v5960 = vshrl.u32 %v5959, 7
      %v5961 = vsub.s32 %v5958, %v5960
      %v5962 = vrot.slane %v5955, %v5961
      %v5963 = vcombine.low %v5909, %v5915
      %v5965 = vunpack.c.l.s4 1983009808
      %v5966 = vunpack.c.0.s8 %v5965
      %v5967 = vlaneseq
      %v5968 = vshrl.u32 %v5967, 7
      %v5969 = vsub.s32 %v5966, %v5968
      %v5970 = vrot.slane %v5963, %v5969
      %v5971 = vcombine.low %v5946, %v5954
      %v5972 = vcombine.high %v5946, %v5954
      %v5974 = vunpack.c.l.s4 1934713408
      %v5975 = vunpack.c.0.s8 %v5974
      %v5976 = vlaneseq
      %v5977 = vshrl.u32 %v5976, 7
      %v5978 = vsub.s32 %v5975, %v5977
      %v5979 = vrot.slane %v5971, %v5978
      %v5981 = vunpack.c.l.s4 1934713408
      %v5982 = vunpack.c.0.s8 %v5981
      %v5983 = vlaneseq
      %v5984 = vshrl.u32 %v5983, 7
      %v5985 = vsub.s32 %v5982, %v5984
      %v5986 = vrot.slane %v5972, %v5985
      %v5987 = vcombine.low %v5962, %v5970
      %v5988 = vcombine.high %v5962, %v5970
      %v5990 = vunpack.c.l.s4 1934713408
      %v5991 = vunpack.c.0.s8 %v5990
      %v5992 = vlaneseq
      %v5993 = vshrl.u32 %v5992, 7
      %v5994 = vsub.s32 %v5991, %v5993
      %v5995 = vrot.slane %v5987, %v5994
      %v5997 = vunpack.c.l.s4 1934713408
      %v5998 = vunpack.c.0.s8 %v5997
      %v5999 = vlaneseq
      %v6000 = vshrl.u32 %v5999, 7
      %v6001 = vsub.s32 %v5998, %v6000
      %v6002 = vrot.slane %v5988, %v6001
      %v6003 = vcombine.low %v5979, %v5995
      %v6004 = vcombine.high %v5979, %v5995
      %v6005 = vcombine.low %v5986, %v6002
      %v6006 = vcombine.high %v5986, %v6002
      %v6007 = vcombine.low %v5894, %v5922
      %v6009 = vunpack.c.l.s4 1983009808
      %v6010 = vunpack.c.0.s8 %v6009
      %v6011 = vlaneseq
      %v6012 = vshrl.u32 %v6011, 7
      %v6013 = vsub.s32 %v6010, %v6012
      %v6014 = vrot.slane %v6007, %v6013
      %v6015 = vcombine.low %v5919, %v5925
      %v6017 = vunpack.c.l.s4 1983009808
      %v6018 = vunpack.c.0.s8 %v6017
      %v6019 = vlaneseq
      %v6020 = vshrl.u32 %v6019, 7
      %v6021 = vsub.s32 %v6018, %v6020
      %v6022 = vrot.slane %v6015, %v6021
      %v6023 = vcombine.low %v5928, %v5934
      %v6025 = vunpack.c.l.s4 1983009808
      %v6026 = vunpack.c.0.s8 %v6025
      %v6027 = vlaneseq
      %v6028 = vshrl.u32 %v6027, 7
      %v6029 = vsub.s32 %v6026, %v6028
      %v6030 = vrot.slane %v6023, %v6029
      %v6031 = vcombine.low %v5931, %v5937
      %v6033 = vunpack.c.l.s4 1983009808
      %v6034 = vunpack.c.0.s8 %v6033
      %v6035 = vlaneseq
      %v6036 = vshrl.u32 %v6035, 7
      %v6037 = vsub.s32 %v6034, %v6036
      %v6038 = vrot.slane %v6031, %v6037
      %v6039 = vcombine.low %v6014, %v6022
      %v6040 = vcombine.high %v6014, %v6022
      %v6042 = vunpack.c.l.s4 1934713408
      %v6043 = vunpack.c.0.s8 %v6042
      %v6044 = vlaneseq
      %v6045 = vshrl.u32 %v6044, 7
      %v6046 = vsub.s32 %v6043, %v6045
      %v6047 = vrot.slane %v6039, %v6046
      %v6049 = vunpack.c.l.s4 1934713408
      %v6050 = vunpack.c.0.s8 %v6049
      %v6051 = vlaneseq
      %v6052 = vshrl.u32 %v6051, 7
      %v6053 = vsub.s32 %v6050, %v6052
      %v6054 = vrot.slane %v6040, %v6053
      %v6055 = vcombine.low %v6030, %v6038
      %v6056 = vcombine.high %v6030, %v6038
      %v6058 = vunpack.c.l.s4 1934713408
      %v6059 = vunpack.c.0.s8 %v6058
      %v6060 = vlaneseq
      %v6061 = vshrl.u32 %v6060, 7
      %v6062 = vsub.s32 %v6059, %v6061
      %v6063 = vrot.slane %v6055, %v6062
      %v6065 = vunpack.c.l.s4 1934713408
      %v6066 = vunpack.c.0.s8 %v6065
      %v6067 = vlaneseq
      %v6068 = vshrl.u32 %v6067, 7
      %v6069 = vsub.s32 %v6066, %v6068
      %v6070 = vrot.slane %v6056, %v6069
      %v6071 = vcombine.low %v6047, %v6063
      %v6072 = vcombine.high %v6047, %v6063
      %v6073 = vcombine.low %v6054, %v6070
      %v6074 = vcombine.high %v6054, %v6070
      %6083 = vrot.lane.b32.xlu0 %v6003, 1
      %v6084 = vpop.permute.xlu0 %6083
      %6085 = vrot.lane.b32.xlu0 %v6071, 1
      %v6086 = vpop.permute.xlu0 %6085
      %6087 = vrot.lane.b32.xlu0 %v6004, 1
      %v6088 = vpop.permute.xlu0 %6087
      %6089 = vrot.lane.b32.xlu0 %v6072, 1
      %v6090 = vpop.permute.xlu0 %6089
      %6091 = vrot.lane.b32.xlu0 %v6005, 1
      %v6092 = vpop.permute.xlu0 %6091
      %6093 = vrot.lane.b32.xlu0 %v6073, 1
      %v6094 = vpop.permute.xlu0 %6093
      %6095 = vrot.lane.b32.xlu0 %v6006, 1
      %v6096 = vpop.permute.xlu0 %6095
      %6097 = vrot.lane.b32.xlu0 %v6074, 1
      %v6098 = vpop.permute.xlu0 %6097
      %6107 = vst.msk [vmem:[#allocation2 + $0x1] sm:$0xff] %vm979, %v6084
      %6108 = vst.msk [vmem:[#allocation2 + $0x9] sm:$0xff] %vm979, %v6086
      %6109 = vst.msk [vmem:[#allocation2 + $0x19] sm:$0xff] %vm979, %v6088
      %6110 = vst.msk [vmem:[#allocation2 + $0x21] sm:$0xff] %vm979, %v6090
      %6111 = vst.msk [vmem:[#allocation2 + $0x31] sm:$0xff] %vm979, %v6092
      %6112 = vst.msk [vmem:[#allocation2 + $0x39] sm:$0xff] %vm979, %v6094
      %6113 = vst.msk [vmem:[#allocation2 + $0x49] sm:$0xff] %vm979, %v6096
      %6114 = vst.msk [vmem:[#allocation2 + $0x51] sm:$0xff] %vm979, %v6098
      %v6115 = vld [vmem:[#allocation2] sm:$0xff]
      %v6116 = vld [vmem:[#allocation2 + $0x8] sm:$0xff]
      %v6117 = vld [vmem:[#allocation2 + $0x18] sm:$0xff]
      %v6118 = vld [vmem:[#allocation2 + $0x20] sm:$0xff]
      %v6119 = vld [vmem:[#allocation2 + $0x30] sm:$0xff]
      %v6120 = vld [vmem:[#allocation2 + $0x38] sm:$0xff]
      %v6121 = vld [vmem:[#allocation2 + $0x48] sm:$0xff]
      %v6122 = vld [vmem:[#allocation2 + $0x50] sm:$0xff]
      %v6123 = vcombine.low %v6115, %v6119
      %v6124 = vcombine.high %v6115, %v6119
      %v6126 = vunpack.c.l.s4 1983009808
      %v6127 = vunpack.c.0.s8 %v6126
      %v6128 = vlaneseq
      %v6129 = vshrl.u32 %v6128, 7
      %v6130 = vsub.s32 %v6127, %v6129
      %v6131 = vrot.slane %v6123, %v6130
      %v6133 = vunpack.c.l.s4 1983009808
      %v6134 = vunpack.c.0.s8 %v6133
      %v6135 = vlaneseq
      %v6136 = vshrl.u32 %v6135, 7
      %v6137 = vsub.s32 %v6134, %v6136
      %v6138 = vrot.slane %v6124, %v6137
      %v6139 = vcombine.low %v6117, %v6121
      %v6140 = vcombine.high %v6117, %v6121
      %v6142 = vunpack.c.l.s4 1983009808
      %v6143 = vunpack.c.0.s8 %v6142
      %v6144 = vlaneseq
      %v6145 = vshrl.u32 %v6144, 7
      %v6146 = vsub.s32 %v6143, %v6145
      %v6147 = vrot.slane %v6139, %v6146
      %v6149 = vunpack.c.l.s4 1983009808
      %v6150 = vunpack.c.0.s8 %v6149
      %v6151 = vlaneseq
      %v6152 = vshrl.u32 %v6151, 7
      %v6153 = vsub.s32 %v6150, %v6152
      %v6154 = vrot.slane %v6140, %v6153
      %v6155 = vcombine.low %v6131, %v6147
      %v6156 = vcombine.high %v6131, %v6147
      %v6158 = vunpack.c.l.s4 1934713408
      %v6159 = vunpack.c.0.s8 %v6158
      %v6160 = vlaneseq
      %v6161 = vshrl.u32 %v6160, 7
      %v6162 = vsub.s32 %v6159, %v6161
      %v6163 = vrot.slane %v6155, %v6162
      %v6165 = vunpack.c.l.s4 1934713408
      %v6166 = vunpack.c.0.s8 %v6165
      %v6167 = vlaneseq
      %v6168 = vshrl.u32 %v6167, 7
      %v6169 = vsub.s32 %v6166, %v6168
      %v6170 = vrot.slane %v6156, %v6169
      %v6171 = vcombine.low %v6138, %v6154
      %v6172 = vcombine.high %v6138, %v6154
      %v6174 = vunpack.c.l.s4 1934713408
      %v6175 = vunpack.c.0.s8 %v6174
      %v6176 = vlaneseq
      %v6177 = vshrl.u32 %v6176, 7
      %v6178 = vsub.s32 %v6175, %v6177
      %v6179 = vrot.slane %v6171, %v6178
      %v6181 = vunpack.c.l.s4 1934713408
      %v6182 = vunpack.c.0.s8 %v6181
      %v6183 = vlaneseq
      %v6184 = vshrl.u32 %v6183, 7
      %v6185 = vsub.s32 %v6182, %v6184
      %v6186 = vrot.slane %v6172, %v6185
      %v6187 = vcombine.high %v6163, 0.0
      %v6188 = vcombine.high %v6170, 0.0
      %v6189 = vcombine.high %v6179, 0.0
      %v6190 = vcombine.high %v6186, 0.0
      %v6191 = vcombine.low %v6116, %v6120
      %v6192 = vcombine.high %v6116, %v6120
      %v6194 = vunpack.c.l.s4 1983009808
      %v6195 = vunpack.c.0.s8 %v6194
      %v6196 = vlaneseq
      %v6197 = vshrl.u32 %v6196, 7
      %v6198 = vsub.s32 %v6195, %v6197
      %v6199 = vrot.slane %v6191, %v6198
      %v6201 = vunpack.c.l.s4 1983009808
      %v6202 = vunpack.c.0.s8 %v6201
      %v6203 = vlaneseq
      %v6204 = vshrl.u32 %v6203, 7
      %v6205 = vsub.s32 %v6202, %v6204
      %v6206 = vrot.slane %v6192, %v6205
      %v6207 = vcombine.low %v6118, %v6122
      %v6208 = vcombine.high %v6118, %v6122
      %v6210 = vunpack.c.l.s4 1983009808
      %v6211 = vunpack.c.0.s8 %v6210
      %v6212 = vlaneseq
      %v6213 = vshrl.u32 %v6212, 7
      %v6214 = vsub.s32 %v6211, %v6213
      %v6215 = vrot.slane %v6207, %v6214
      %v6217 = vunpack.c.l.s4 1983009808
      %v6218 = vunpack.c.0.s8 %v6217
      %v6219 = vlaneseq
      %v6220 = vshrl.u32 %v6219, 7
      %v6221 = vsub.s32 %v6218, %v6220
      %v6222 = vrot.slane %v6208, %v6221
      %v6223 = vcombine.low %v6199, %v6215
      %v6224 = vcombine.high %v6199, %v6215
      %v6226 = vunpack.c.l.s4 1934713408
      %v6227 = vunpack.c.0.s8 %v6226
      %v6228 = vlaneseq
      %v6229 = vshrl.u32 %v6228, 7
      %v6230 = vsub.s32 %v6227, %v6229
      %v6231 = vrot.slane %v6223, %v6230
      %v6233 = vunpack.c.l.s4 1934713408
      %v6234 = vunpack.c.0.s8 %v6233
      %v6235 = vlaneseq
      %v6236 = vshrl.u32 %v6235, 7
      %v6237 = vsub.s32 %v6234, %v6236
      %v6238 = vrot.slane %v6224, %v6237
      %v6239 = vcombine.low %v6206, %v6222
      %v6240 = vcombine.high %v6206, %v6222
      %v6242 = vunpack.c.l.s4 1934713408
      %v6243 = vunpack.c.0.s8 %v6242
      %v6244 = vlaneseq
      %v6245 = vshrl.u32 %v6244, 7
      %v6246 = vsub.s32 %v6243, %v6245
      %v6247 = vrot.slane %v6239, %v6246
      %v6249 = vunpack.c.l.s4 1934713408
      %v6250 = vunpack.c.0.s8 %v6249
      %v6251 = vlaneseq
      %v6252 = vshrl.u32 %v6251, 7
      %v6253 = vsub.s32 %v6250, %v6252
      %v6254 = vrot.slane %v6240, %v6253
      %v6255 = vcombine.high %v6231, 0.0
      %v6256 = vcombine.high %v6238, 0.0
      %v6257 = vcombine.high %v6247, 0.0
      %v6258 = vcombine.high %v6254, 0.0
      %6260 = vrot.lane.b32.xlu0 %v6187, 16
      %v6261 = vpop.permute.xlu0 %6260
      %6264 = vrot.lane.b32.xlu0 %v6170, 32
      %v6265 = vpop.permute.xlu0 %6264
      %6268 = vrot.lane.b32.xlu0 %v6188, 48
      %v6269 = vpop.permute.xlu0 %6268
      %6272 = vrot.lane.b32.xlu0 %v6179, 64
      %v6273 = vpop.permute.xlu0 %6272
      %6276 = vrot.lane.b32.xlu0 %v6189, 80
      %v6277 = vpop.permute.xlu0 %6276
      %6280 = vrot.lane.b32.xlu0 %v6186, 96
      %v6281 = vpop.permute.xlu0 %6280
      %6284 = vrot.lane.b32.xlu0 %v6190, 112
      %v6285 = vpop.permute.xlu0 %6284
      %6288 = vrot.lane.b32.xlu0 %v6255, 16
      %v6289 = vpop.permute.xlu0 %6288
      %6292 = vrot.lane.b32.xlu0 %v6238, 32
      %v6293 = vpop.permute.xlu0 %6292
      %6296 = vrot.lane.b32.xlu0 %v6256, 48
      %v6297 = vpop.permute.xlu0 %6296
      %6300 = vrot.lane.b32.xlu0 %v6247, 64
      %v6301 = vpop.permute.xlu0 %6300
      %6304 = vrot.lane.b32.xlu0 %v6257, 80
      %v6305 = vpop.permute.xlu0 %6304
      %6308 = vrot.lane.b32.xlu0 %v6254, 96
      %v6309 = vpop.permute.xlu0 %6308
      %6312 = vrot.lane.b32.xlu0 %v6258, 112
      %v6313 = vpop.permute.xlu0 %6312
      %v6315 = vsel %vm1188, %v6163, %v6261
      %v6316 = vsel %vm1190, %v6315, %v6265
      %v6317 = vsel %vm1192, %v6316, %v6269
      %v6318 = vsel %vm1194, %v6317, %v6273
      %v6319 = vsel %vm1196, %v6318, %v6277
      %v6320 = vsel %vm1198, %v6319, %v6281
      %v6321 = vsel %vm1200, %v6320, %v6285
      %v6322 = vsel %vm1188, %v6231, %v6289
      %v6323 = vsel %vm1190, %v6322, %v6293
      %v6324 = vsel %vm1192, %v6323, %v6297
      %v6325 = vsel %vm1194, %v6324, %v6301
      %v6326 = vsel %vm1196, %v6325, %v6305
      %v6327 = vsel %vm1198, %v6326, %v6309
      %v6328 = vsel %vm1200, %v6327, %v6313
      %6329 = vst [vmem:[#allocation3] sm:$0xf] %v6321
      %6330 = vst [vmem:[#allocation3 + $0x8] sm:$0xf] %v6328
      %v6331 = vld [vmem:[#allocation2] sm:$0xff]
      %v6332 = vld [vmem:[#allocation2 + $0x8] sm:$0xff]
      %v6333 = vld [vmem:[#allocation2 + $0x18] sm:$0xff]
      %v6334 = vld [vmem:[#allocation2 + $0x20] sm:$0xff]
      %v6335 = vld [vmem:[#allocation2 + $0x30] sm:$0xff]
      %v6336 = vld [vmem:[#allocation2 + $0x38] sm:$0xff]
      %v6337 = vld [vmem:[#allocation2 + $0x48] sm:$0xff]
      %v6338 = vld [vmem:[#allocation2 + $0x50] sm:$0xff]
      %6347 = vrot.lane.b32.xlu0 %v6331, 127
      %v6348 = vpop.permute.xlu0 %6347
      %6349 = vrot.lane.b32.xlu0 %v6332, 127
      %v6350 = vpop.permute.xlu0 %6349
      %6351 = vrot.lane.b32.xlu0 %v6333, 127
      %v6352 = vpop.permute.xlu0 %6351
      %6353 = vrot.lane.b32.xlu0 %v6334, 127
      %v6354 = vpop.permute.xlu0 %6353
      %6355 = vrot.lane.b32.xlu0 %v6335, 127
      %v6356 = vpop.permute.xlu0 %6355
      %6357 = vrot.lane.b32.xlu0 %v6336, 127
      %v6358 = vpop.permute.xlu0 %6357
      %6359 = vrot.lane.b32.xlu0 %v6337, 127
      %v6360 = vpop.permute.xlu0 %6359
      %6361 = vrot.lane.b32.xlu0 %v6338, 127
      %v6362 = vpop.permute.xlu0 %6361
      %v6371 = vcombine.low %v6348, %v6356
      %v6372 = vcombine.high %v6348, %v6356
      %v6374 = vunpack.c.l.s4 1983009808
      %v6375 = vunpack.c.0.s8 %v6374
      %v6376 = vlaneseq
      %v6377 = vshrl.u32 %v6376, 7
      %v6378 = vsub.s32 %v6375, %v6377
      %v6379 = vrot.slane %v6371, %v6378
      %v6381 = vunpack.c.l.s4 1983009808
      %v6382 = vunpack.c.0.s8 %v6381
      %v6383 = vlaneseq
      %v6384 = vshrl.u32 %v6383, 7
      %v6385 = vsub.s32 %v6382, %v6384
      %v6386 = vrot.slane %v6372, %v6385
      %v6387 = vcombine.low %v6352, %v6360
      %v6388 = vcombine.high %v6352, %v6360
      %v6390 = vunpack.c.l.s4 1983009808
      %v6391 = vunpack.c.0.s8 %v6390
      %v6392 = vlaneseq
      %v6393 = vshrl.u32 %v6392, 7
      %v6394 = vsub.s32 %v6391, %v6393
      %v6395 = vrot.slane %v6387, %v6394
      %v6397 = vunpack.c.l.s4 1983009808
      %v6398 = vunpack.c.0.s8 %v6397
      %v6399 = vlaneseq
      %v6400 = vshrl.u32 %v6399, 7
      %v6401 = vsub.s32 %v6398, %v6400
      %v6402 = vrot.slane %v6388, %v6401
      %v6403 = vcombine.low %v6379, %v6395
      %v6404 = vcombine.high %v6379, %v6395
      %v6406 = vunpack.c.l.s4 1934713408
      %v6407 = vunpack.c.0.s8 %v6406
      %v6408 = vlaneseq
      %v6409 = vshrl.u32 %v6408, 7
      %v6410 = vsub.s32 %v6407, %v6409
      %v6411 = vrot.slane %v6403, %v6410
      %v6413 = vunpack.c.l.s4 1934713408
      %v6414 = vunpack.c.0.s8 %v6413
      %v6415 = vlaneseq
      %v6416 = vshrl.u32 %v6415, 7
      %v6417 = vsub.s32 %v6414, %v6416
      %v6418 = vrot.slane %v6404, %v6417
      %v6419 = vcombine.low %v6386, %v6402
      %v6420 = vcombine.high %v6386, %v6402
      %v6422 = vunpack.c.l.s4 1934713408
      %v6423 = vunpack.c.0.s8 %v6422
      %v6424 = vlaneseq
      %v6425 = vshrl.u32 %v6424, 7
      %v6426 = vsub.s32 %v6423, %v6425
      %v6427 = vrot.slane %v6419, %v6426
      %v6429 = vunpack.c.l.s4 1934713408
      %v6430 = vunpack.c.0.s8 %v6429
      %v6431 = vlaneseq
      %v6432 = vshrl.u32 %v6431, 7
      %v6433 = vsub.s32 %v6430, %v6432
      %v6434 = vrot.slane %v6420, %v6433
      %v6435 = vcombine.high %v6411, 0.0
      %v6436 = vcombine.high %v6418, 0.0
      %v6437 = vcombine.high %v6427, 0.0
      %v6438 = vcombine.high %v6434, 0.0
      %v6439 = vcombine.low %v6350, %v6358
      %v6440 = vcombine.high %v6350, %v6358
      %v6442 = vunpack.c.l.s4 1983009808
      %v6443 = vunpack.c.0.s8 %v6442
      %v6444 = vlaneseq
      %v6445 = vshrl.u32 %v6444, 7
      %v6446 = vsub.s32 %v6443, %v6445
      %v6447 = vrot.slane %v6439, %v6446
      %v6449 = vunpack.c.l.s4 1983009808
      %v6450 = vunpack.c.0.s8 %v6449
      %v6451 = vlaneseq
      %v6452 = vshrl.u32 %v6451, 7
      %v6453 = vsub.s32 %v6450, %v6452
      %v6454 = vrot.slane %v6440, %v6453
      %v6455 = vcombine.low %v6354, %v6362
      %v6456 = vcombine.high %v6354, %v6362
      %v6458 = vunpack.c.l.s4 1983009808
      %v6459 = vunpack.c.0.s8 %v6458
      %v6460 = vlaneseq
      %v6461 = vshrl.u32 %v6460, 7
      %v6462 = vsub.s32 %v6459, %v6461
      %v6463 = vrot.slane %v6455, %v6462
      %v6465 = vunpack.c.l.s4 1983009808
      %v6466 = vunpack.c.0.s8 %v6465
      %v6467 = vlaneseq
      %v6468 = vshrl.u32 %v6467, 7
      %v6469 = vsub.s32 %v6466, %v6468
      %v6470 = vrot.slane %v6456, %v6469
      %v6471 = vcombine.low %v6447, %v6463
      %v6472 = vcombine.high %v6447, %v6463
      %v6474 = vunpack.c.l.s4 1934713408
      %v6475 = vunpack.c.0.s8 %v6474
      %v6476 = vlaneseq
      %v6477 = vshrl.u32 %v6476, 7
      %v6478 = vsub.s32 %v6475, %v6477
      %v6479 = vrot.slane %v6471, %v6478
      %v6481 = vunpack.c.l.s4 1934713408
      %v6482 = vunpack.c.0.s8 %v6481
      %v6483 = vlaneseq
      %v6484 = vshrl.u32 %v6483, 7
      %v6485 = vsub.s32 %v6482, %v6484
      %v6486 = vrot.slane %v6472, %v6485
      %v6487 = vcombine.low %v6454, %v6470
      %v6488 = vcombine.high %v6454, %v6470
      %v6490 = vunpack.c.l.s4 1934713408
      %v6491 = vunpack.c.0.s8 %v6490
      %v6492 = vlaneseq
      %v6493 = vshrl.u32 %v6492, 7
      %v6494 = vsub.s32 %v6491, %v6493
      %v6495 = vrot.slane %v6487, %v6494
      %v6497 = vunpack.c.l.s4 1934713408
      %v6498 = vunpack.c.0.s8 %v6497
      %v6499 = vlaneseq
      %v6500 = vshrl.u32 %v6499, 7
      %v6501 = vsub.s32 %v6498, %v6500
      %v6502 = vrot.slane %v6488, %v6501
      %v6503 = vcombine.high %v6479, 0.0
      %v6504 = vcombine.high %v6486, 0.0
      %v6505 = vcombine.high %v6495, 0.0
      %v6506 = vcombine.high %v6502, 0.0
      %6508 = vrot.lane.b32.xlu0 %v6435, 16
      %v6509 = vpop.permute.xlu0 %6508
      %6512 = vrot.lane.b32.xlu0 %v6418, 32
      %v6513 = vpop.permute.xlu0 %6512
      %6516 = vrot.lane.b32.xlu0 %v6436, 48
      %v6517 = vpop.permute.xlu0 %6516
      %6520 = vrot.lane.b32.xlu0 %v6427, 64
      %v6521 = vpop.permute.xlu0 %6520
      %6524 = vrot.lane.b32.xlu0 %v6437, 80
      %v6525 = vpop.permute.xlu0 %6524
      %6528 = vrot.lane.b32.xlu0 %v6434, 96
      %v6529 = vpop.permute.xlu0 %6528
      %6532 = vrot.lane.b32.xlu0 %v6438, 112
      %v6533 = vpop.permute.xlu0 %6532
      %6536 = vrot.lane.b32.xlu0 %v6503, 16
      %v6537 = vpop.permute.xlu0 %6536
      %6540 = vrot.lane.b32.xlu0 %v6486, 32
      %v6541 = vpop.permute.xlu0 %6540
      %6544 = vrot.lane.b32.xlu0 %v6504, 48
      %v6545 = vpop.permute.xlu0 %6544
      %6548 = vrot.lane.b32.xlu0 %v6495, 64
      %v6549 = vpop.permute.xlu0 %6548
      %6552 = vrot.lane.b32.xlu0 %v6505, 80
      %v6553 = vpop.permute.xlu0 %6552
      %6556 = vrot.lane.b32.xlu0 %v6502, 96
      %v6557 = vpop.permute.xlu0 %6556
      %6560 = vrot.lane.b32.xlu0 %v6506, 112
      %v6561 = vpop.permute.xlu0 %6560
      %v6563 = vsel %vm1188, %v6411, %v6509
      %v6564 = vsel %vm1190, %v6563, %v6513
      %v6565 = vsel %vm1192, %v6564, %v6517
      %v6566 = vsel %vm1194, %v6565, %v6521
      %v6567 = vsel %vm1196, %v6566, %v6525
      %v6568 = vsel %vm1198, %v6567, %v6529
      %v6569 = vsel %vm1200, %v6568, %v6533
      %v6570 = vsel %vm1188, %v6479, %v6537
      %v6571 = vsel %vm1190, %v6570, %v6541
      %v6572 = vsel %vm1192, %v6571, %v6545
      %v6573 = vsel %vm1194, %v6572, %v6549
      %v6574 = vsel %vm1196, %v6573, %v6553
      %v6575 = vsel %vm1198, %v6574, %v6557
      %v6576 = vsel %vm1200, %v6575, %v6561
      %v6579 = vrot.slane %v6569, 4
      %v6580 = vrot.slane %v6576, 4
      %6583 = vst [vmem:[#allocation3] sm:$0xf0] %v6579
      %6584 = vst [vmem:[#allocation3 + $0x8] sm:$0xf0] %v6580
      %v6585 = vld [vmem:[#allocation2] sm:$0xff]
      %v6586 = vld [vmem:[#allocation2 + $0x8] sm:$0xff]
      %v6587 = vld [vmem:[#allocation2 + $0x18] sm:$0xff]
      %v6588 = vld [vmem:[#allocation2 + $0x20] sm:$0xff]
      %v6589 = vld [vmem:[#allocation2 + $0x30] sm:$0xff]
      %v6590 = vld [vmem:[#allocation2 + $0x38] sm:$0xff]
      %v6591 = vld [vmem:[#allocation2 + $0x48] sm:$0xff]
      %v6592 = vld [vmem:[#allocation2 + $0x50] sm:$0xff]
      %6601 = vrot.lane.b32.xlu0 %v6585, 126
      %v6602 = vpop.permute.xlu0 %6601
      %6603 = vrot.lane.b32.xlu0 %v6586, 126
      %v6604 = vpop.permute.xlu0 %6603
      %6605 = vrot.lane.b32.xlu0 %v6587, 126
      %v6606 = vpop.permute.xlu0 %6605
      %6607 = vrot.lane.b32.xlu0 %v6588, 126
      %v6608 = vpop.permute.xlu0 %6607
      %6609 = vrot.lane.b32.xlu0 %v6589, 126
      %v6610 = vpop.permute.xlu0 %6609
      %6611 = vrot.lane.b32.xlu0 %v6590, 126
      %v6612 = vpop.permute.xlu0 %6611
      %6613 = vrot.lane.b32.xlu0 %v6591, 126
      %v6614 = vpop.permute.xlu0 %6613
      %6615 = vrot.lane.b32.xlu0 %v6592, 126
      %v6616 = vpop.permute.xlu0 %6615
      %v6625 = vcombine.low %v6602, %v6610
      %v6626 = vcombine.high %v6602, %v6610
      %v6628 = vunpack.c.l.s4 1983009808
      %v6629 = vunpack.c.0.s8 %v6628
      %v6630 = vlaneseq
      %v6631 = vshrl.u32 %v6630, 7
      %v6632 = vsub.s32 %v6629, %v6631
      %v6633 = vrot.slane %v6625, %v6632
      %v6635 = vunpack.c.l.s4 1983009808
      %v6636 = vunpack.c.0.s8 %v6635
      %v6637 = vlaneseq
      %v6638 = vshrl.u32 %v6637, 7
      %v6639 = vsub.s32 %v6636, %v6638
      %v6640 = vrot.slane %v6626, %v6639
      %v6641 = vcombine.low %v6606, %v6614
      %v6642 = vcombine.high %v6606, %v6614
      %v6644 = vunpack.c.l.s4 1983009808
      %v6645 = vunpack.c.0.s8 %v6644
      %v6646 = vlaneseq
      %v6647 = vshrl.u32 %v6646, 7
      %v6648 = vsub.s32 %v6645, %v6647
      %v6649 = vrot.slane %v6641, %v6648
      %v6651 = vunpack.c.l.s4 1983009808
      %v6652 = vunpack.c.0.s8 %v6651
      %v6653 = vlaneseq
      %v6654 = vshrl.u32 %v6653, 7
      %v6655 = vsub.s32 %v6652, %v6654
      %v6656 = vrot.slane %v6642, %v6655
      %v6657 = vcombine.low %v6633, %v6649
      %v6658 = vcombine.high %v6633, %v6649
      %v6660 = vunpack.c.l.s4 1934713408
      %v6661 = vunpack.c.0.s8 %v6660
      %v6662 = vlaneseq
      %v6663 = vshrl.u32 %v6662, 7
      %v6664 = vsub.s32 %v6661, %v6663
      %v6665 = vrot.slane %v6657, %v6664
      %v6667 = vunpack.c.l.s4 1934713408
      %v6668 = vunpack.c.0.s8 %v6667
      %v6669 = vlaneseq
      %v6670 = vshrl.u32 %v6669, 7
      %v6671 = vsub.s32 %v6668, %v6670
      %v6672 = vrot.slane %v6658, %v6671
      %v6673 = vcombine.low %v6640, %v6656
      %v6674 = vcombine.high %v6640, %v6656
      %v6676 = vunpack.c.l.s4 1934713408
      %v6677 = vunpack.c.0.s8 %v6676
      %v6678 = vlaneseq
      %v6679 = vshrl.u32 %v6678, 7
      %v6680 = vsub.s32 %v6677, %v6679
      %v6681 = vrot.slane %v6673, %v6680
      %v6683 = vunpack.c.l.s4 1934713408
      %v6684 = vunpack.c.0.s8 %v6683
      %v6685 = vlaneseq
      %v6686 = vshrl.u32 %v6685, 7
      %v6687 = vsub.s32 %v6684, %v6686
      %v6688 = vrot.slane %v6674, %v6687
      %v6689 = vcombine.high %v6665, 0.0
      %v6690 = vcombine.high %v6672, 0.0
      %v6691 = vcombine.high %v6681, 0.0
      %v6692 = vcombine.high %v6688, 0.0
      %v6693 = vcombine.low %v6604, %v6612
      %v6694 = vcombine.high %v6604, %v6612
      %v6696 = vunpack.c.l.s4 1983009808
      %v6697 = vunpack.c.0.s8 %v6696
      %v6698 = vlaneseq
      %v6699 = vshrl.u32 %v6698, 7
      %v6700 = vsub.s32 %v6697, %v6699
      %v6701 = vrot.slane %v6693, %v6700
      %v6703 = vunpack.c.l.s4 1983009808
      %v6704 = vunpack.c.0.s8 %v6703
      %v6705 = vlaneseq
      %v6706 = vshrl.u32 %v6705, 7
      %v6707 = vsub.s32 %v6704, %v6706
      %v6708 = vrot.slane %v6694, %v6707
      %v6709 = vcombine.low %v6608, %v6616
      %v6710 = vcombine.high %v6608, %v6616
      %v6712 = vunpack.c.l.s4 1983009808
      %v6713 = vunpack.c.0.s8 %v6712
      %v6714 = vlaneseq
      %v6715 = vshrl.u32 %v6714, 7
      %v6716 = vsub.s32 %v6713, %v6715
      %v6717 = vrot.slane %v6709, %v6716
      %v6719 = vunpack.c.l.s4 1983009808
      %v6720 = vunpack.c.0.s8 %v6719
      %v6721 = vlaneseq
      %v6722 = vshrl.u32 %v6721, 7
      %v6723 = vsub.s32 %v6720, %v6722
      %v6724 = vrot.slane %v6710, %v6723
      %v6725 = vcombine.low %v6701, %v6717
      %v6726 = vcombine.high %v6701, %v6717
      %v6728 = vunpack.c.l.s4 1934713408
      %v6729 = vunpack.c.0.s8 %v6728
      %v6730 = vlaneseq
      %v6731 = vshrl.u32 %v6730, 7
      %v6732 = vsub.s32 %v6729, %v6731
      %v6733 = vrot.slane %v6725, %v6732
      %v6735 = vunpack.c.l.s4 1934713408
      %v6736 = vunpack.c.0.s8 %v6735
      %v6737 = vlaneseq
      %v6738 = vshrl.u32 %v6737, 7
      %v6739 = vsub.s32 %v6736, %v6738
      %v6740 = vrot.slane %v6726, %v6739
      %v6741 = vcombine.low %v6708, %v6724
      %v6742 = vcombine.high %v6708, %v6724
      %v6744 = vunpack.c.l.s4 1934713408
      %v6745 = vunpack.c.0.s8 %v6744
      %v6746 = vlaneseq
      %v6747 = vshrl.u32 %v6746, 7
      %v6748 = vsub.s32 %v6745, %v6747
      %v6749 = vrot.slane %v6741, %v6748
      %v6751 = vunpack.c.l.s4 1934713408
      %v6752 = vunpack.c.0.s8 %v6751
      %v6753 = vlaneseq
      %v6754 = vshrl.u32 %v6753, 7
      %v6755 = vsub.s32 %v6752, %v6754
      %v6756 = vrot.slane %v6742, %v6755
      %v6757 = vcombine.high %v6733, 0.0
      %v6758 = vcombine.high %v6740, 0.0
      %v6759 = vcombine.high %v6749, 0.0
      %v6760 = vcombine.high %v6756, 0.0
      %6762 = vrot.lane.b32.xlu0 %v6689, 16
      %v6763 = vpop.permute.xlu0 %6762
      %6766 = vrot.lane.b32.xlu0 %v6672, 32
      %v6767 = vpop.permute.xlu0 %6766
      %6770 = vrot.lane.b32.xlu0 %v6690, 48
      %v6771 = vpop.permute.xlu0 %6770
      %6774 = vrot.lane.b32.xlu0 %v6681, 64
      %v6775 = vpop.permute.xlu0 %6774
      %6778 = vrot.lane.b32.xlu0 %v6691, 80
      %v6779 = vpop.permute.xlu0 %6778
      %6782 = vrot.lane.b32.xlu0 %v6688, 96
      %v6783 = vpop.permute.xlu0 %6782
      %6786 = vrot.lane.b32.xlu0 %v6692, 112
      %v6787 = vpop.permute.xlu0 %6786
      %6790 = vrot.lane.b32.xlu0 %v6757, 16
      %v6791 = vpop.permute.xlu0 %6790
      %6794 = vrot.lane.b32.xlu0 %v6740, 32
      %v6795 = vpop.permute.xlu0 %6794
      %6798 = vrot.lane.b32.xlu0 %v6758, 48
      %v6799 = vpop.permute.xlu0 %6798
      %6802 = vrot.lane.b32.xlu0 %v6749, 64
      %v6803 = vpop.permute.xlu0 %6802
      %6806 = vrot.lane.b32.xlu0 %v6759, 80
      %v6807 = vpop.permute.xlu0 %6806
      %6810 = vrot.lane.b32.xlu0 %v6756, 96
      %v6811 = vpop.permute.xlu0 %6810
      %6814 = vrot.lane.b32.xlu0 %v6760, 112
      %v6815 = vpop.permute.xlu0 %6814
      %v6817 = vsel %vm1188, %v6665, %v6763
      %v6818 = vsel %vm1190, %v6817, %v6767
      %v6819 = vsel %vm1192, %v6818, %v6771
      %v6820 = vsel %vm1194, %v6819, %v6775
      %v6821 = vsel %vm1196, %v6820, %v6779
      %v6822 = vsel %vm1198, %v6821, %v6783
      %v6823 = vsel %vm1200, %v6822, %v6787
      %v6824 = vsel %vm1188, %v6733, %v6791
      %v6825 = vsel %vm1190, %v6824, %v6795
      %v6826 = vsel %vm1192, %v6825, %v6799
      %v6827 = vsel %vm1194, %v6826, %v6803
      %v6828 = vsel %vm1196, %v6827, %v6807
      %v6829 = vsel %vm1198, %v6828, %v6811
      %v6830 = vsel %vm1200, %v6829, %v6815
      %6831 = vst [vmem:[#allocation3 + $0x10] sm:$0xf] %v6823
      %6832 = vst [vmem:[#allocation3 + $0x18] sm:$0xf] %v6830
      %v6833 = vld [vmem:[#allocation2 + $0x1] sm:$0xff]
      %v6834 = vld [vmem:[#allocation2 + $0x9] sm:$0xff]
      %v6835 = vld [vmem:[#allocation2 + $0x19] sm:$0xff]
      %v6836 = vld [vmem:[#allocation2 + $0x21] sm:$0xff]
      %v6837 = vld [vmem:[#allocation2 + $0x31] sm:$0xff]
      %v6838 = vld [vmem:[#allocation2 + $0x39] sm:$0xff]
      %v6839 = vld [vmem:[#allocation2 + $0x49] sm:$0xff]
      %v6840 = vld [vmem:[#allocation2 + $0x51] sm:$0xff]
      %v6841 = vcombine.low %v6833, %v6837
      %v6842 = vcombine.high %v6833, %v6837
      %v6844 = vunpack.c.l.s4 1983009808
      %v6845 = vunpack.c.0.s8 %v6844
      %v6846 = vlaneseq
      %v6847 = vshrl.u32 %v6846, 7
      %v6848 = vsub.s32 %v6845, %v6847
      %v6849 = vrot.slane %v6841, %v6848
      %v6851 = vunpack.c.l.s4 1983009808
      %v6852 = vunpack.c.0.s8 %v6851
      %v6853 = vlaneseq
      %v6854 = vshrl.u32 %v6853, 7
      %v6855 = vsub.s32 %v6852, %v6854
      %v6856 = vrot.slane %v6842, %v6855
      %v6857 = vcombine.low %v6835, %v6839
      %v6858 = vcombine.high %v6835, %v6839
      %v6860 = vunpack.c.l.s4 1983009808
      %v6861 = vunpack.c.0.s8 %v6860
      %v6862 = vlaneseq
      %v6863 = vshrl.u32 %v6862, 7
      %v6864 = vsub.s32 %v6861, %v6863
      %v6865 = vrot.slane %v6857, %v6864
      %v6867 = vunpack.c.l.s4 1983009808
      %v6868 = vunpack.c.0.s8 %v6867
      %v6869 = vlaneseq
      %v6870 = vshrl.u32 %v6869, 7
      %v6871 = vsub.s32 %v6868, %v6870
      %v6872 = vrot.slane %v6858, %v6871
      %v6873 = vcombine.low %v6849, %v6865
      %v6874 = vcombine.high %v6849, %v6865
      %v6876 = vunpack.c.l.s4 1934713408
      %v6877 = vunpack.c.0.s8 %v6876
      %v6878 = vlaneseq
      %v6879 = vshrl.u32 %v6878, 7
      %v6880 = vsub.s32 %v6877, %v6879
      %v6881 = vrot.slane %v6873, %v6880
      %v6883 = vunpack.c.l.s4 1934713408
      %v6884 = vunpack.c.0.s8 %v6883
      %v6885 = vlaneseq
      %v6886 = vshrl.u32 %v6885, 7
      %v6887 = vsub.s32 %v6884, %v6886
      %v6888 = vrot.slane %v6874, %v6887
      %v6889 = vcombine.low %v6856, %v6872
      %v6890 = vcombine.high %v6856, %v6872
      %v6892 = vunpack.c.l.s4 1934713408
      %v6893 = vunpack.c.0.s8 %v6892
      %v6894 = vlaneseq
      %v6895 = vshrl.u32 %v6894, 7
      %v6896 = vsub.s32 %v6893, %v6895
      %v6897 = vrot.slane %v6889, %v6896
      %v6899 = vunpack.c.l.s4 1934713408
      %v6900 = vunpack.c.0.s8 %v6899
      %v6901 = vlaneseq
      %v6902 = vshrl.u32 %v6901, 7
      %v6903 = vsub.s32 %v6900, %v6902
      %v6904 = vrot.slane %v6890, %v6903
      %v6905 = vcombine.high %v6881, 0.0
      %v6906 = vcombine.high %v6888, 0.0
      %v6907 = vcombine.high %v6897, 0.0
      %v6908 = vcombine.high %v6904, 0.0
      %v6909 = vcombine.low %v6834, %v6838
      %v6910 = vcombine.high %v6834, %v6838
      %v6912 = vunpack.c.l.s4 1983009808
      %v6913 = vunpack.c.0.s8 %v6912
      %v6914 = vlaneseq
      %v6915 = vshrl.u32 %v6914, 7
      %v6916 = vsub.s32 %v6913, %v6915
      %v6917 = vrot.slane %v6909, %v6916
      %v6919 = vunpack.c.l.s4 1983009808
      %v6920 = vunpack.c.0.s8 %v6919
      %v6921 = vlaneseq
      %v6922 = vshrl.u32 %v6921, 7
      %v6923 = vsub.s32 %v6920, %v6922
      %v6924 = vrot.slane %v6910, %v6923
      %v6925 = vcombine.low %v6836, %v6840
      %v6926 = vcombine.high %v6836, %v6840
      %v6928 = vunpack.c.l.s4 1983009808
      %v6929 = vunpack.c.0.s8 %v6928
      %v6930 = vlaneseq
      %v6931 = vshrl.u32 %v6930, 7
      %v6932 = vsub.s32 %v6929, %v6931
      %v6933 = vrot.slane %v6925, %v6932
      %v6935 = vunpack.c.l.s4 1983009808
      %v6936 = vunpack.c.0.s8 %v6935
      %v6937 = vlaneseq
      %v6938 = vshrl.u32 %v6937, 7
      %v6939 = vsub.s32 %v6936, %v6938
      %v6940 = vrot.slane %v6926, %v6939
      %v6941 = vcombine.low %v6917, %v6933
      %v6942 = vcombine.high %v6917, %v6933
      %v6944 = vunpack.c.l.s4 1934713408
      %v6945 = vunpack.c.0.s8 %v6944
      %v6946 = vlaneseq
      %v6947 = vshrl.u32 %v6946, 7
      %v6948 = vsub.s32 %v6945, %v6947
      %v6949 = vrot.slane %v6941, %v6948
      %v6951 = vunpack.c.l.s4 1934713408
      %v6952 = vunpack.c.0.s8 %v6951
      %v6953 = vlaneseq
      %v6954 = vshrl.u32 %v6953, 7
      %v6955 = vsub.s32 %v6952, %v6954
      %v6956 = vrot.slane %v6942, %v6955
      %v6957 = vcombine.low %v6924, %v6940
      %v6958 = vcombine.high %v6924, %v6940
      %v6960 = vunpack.c.l.s4 1934713408
      %v6961 = vunpack.c.0.s8 %v6960
      %v6962 = vlaneseq
      %v6963 = vshrl.u32 %v6962, 7
      %v6964 = vsub.s32 %v6961, %v6963
      %v6965 = vrot.slane %v6957, %v6964
      %v6967 = vunpack.c.l.s4 1934713408
      %v6968 = vunpack.c.0.s8 %v6967
      %v6969 = vlaneseq
      %v6970 = vshrl.u32 %v6969, 7
      %v6971 = vsub.s32 %v6968, %v6970
      %v6972 = vrot.slane %v6958, %v6971
      %v6973 = vcombine.high %v6949, 0.0
      %v6974 = vcombine.high %v6956, 0.0
      %v6975 = vcombine.high %v6965, 0.0
      %v6976 = vcombine.high %v6972, 0.0
      %6978 = vrot.lane.b32.xlu0 %v6905, 16
      %v6979 = vpop.permute.xlu0 %6978
      %6982 = vrot.lane.b32.xlu0 %v6888, 32
      %v6983 = vpop.permute.xlu0 %6982
      %6986 = vrot.lane.b32.xlu0 %v6906, 48
      %v6987 = vpop.permute.xlu0 %6986
      %6990 = vrot.lane.b32.xlu0 %v6897, 64
      %v6991 = vpop.permute.xlu0 %6990
      %6994 = vrot.lane.b32.xlu0 %v6907, 80
      %v6995 = vpop.permute.xlu0 %6994
      %6998 = vrot.lane.b32.xlu0 %v6904, 96
      %v6999 = vpop.permute.xlu0 %6998
      %7002 = vrot.lane.b32.xlu0 %v6908, 112
      %v7003 = vpop.permute.xlu0 %7002
      %7006 = vrot.lane.b32.xlu0 %v6973, 16
      %v7007 = vpop.permute.xlu0 %7006
      %7010 = vrot.lane.b32.xlu0 %v6956, 32
      %v7011 = vpop.permute.xlu0 %7010
      %7014 = vrot.lane.b32.xlu0 %v6974, 48
      %v7015 = vpop.permute.xlu0 %7014
      %7018 = vrot.lane.b32.xlu0 %v6965, 64
      %v7019 = vpop.permute.xlu0 %7018
      %7022 = vrot.lane.b32.xlu0 %v6975, 80
      %v7023 = vpop.permute.xlu0 %7022
      %7026 = vrot.lane.b32.xlu0 %v6972, 96
      %v7027 = vpop.permute.xlu0 %7026
      %7030 = vrot.lane.b32.xlu0 %v6976, 112
      %v7031 = vpop.permute.xlu0 %7030
      %v7033 = vsel %vm1188, %v6881, %v6979
      %v7034 = vsel %vm1190, %v7033, %v6983
      %v7035 = vsel %vm1192, %v7034, %v6987
      %v7036 = vsel %vm1194, %v7035, %v6991
      %v7037 = vsel %vm1196, %v7036, %v6995
      %v7038 = vsel %vm1198, %v7037, %v6999
      %v7039 = vsel %vm1200, %v7038, %v7003
      %v7040 = vsel %vm1188, %v6949, %v7007
      %v7041 = vsel %vm1190, %v7040, %v7011
      %v7042 = vsel %vm1192, %v7041, %v7015
      %v7043 = vsel %vm1194, %v7042, %v7019
      %v7044 = vsel %vm1196, %v7043, %v7023
      %v7045 = vsel %vm1198, %v7044, %v7027
      %v7046 = vsel %vm1200, %v7045, %v7031
      %v7049 = vrot.slane %v7039, 4
      %v7050 = vrot.slane %v7046, 4
      %7053 = vst [vmem:[#allocation3 + $0x10] sm:$0xf0] %v7049
      %7054 = vst [vmem:[#allocation3 + $0x18] sm:$0xf0] %v7050
      %v7055 = vld [vmem:[#allocation2 + $0x1] sm:$0xff]
      %v7056 = vld [vmem:[#allocation2 + $0x9] sm:$0xff]
      %v7057 = vld [vmem:[#allocation2 + $0x19] sm:$0xff]
      %v7058 = vld [vmem:[#allocation2 + $0x21] sm:$0xff]
      %v7059 = vld [vmem:[#allocation2 + $0x31] sm:$0xff]
      %v7060 = vld [vmem:[#allocation2 + $0x39] sm:$0xff]
      %v7061 = vld [vmem:[#allocation2 + $0x49] sm:$0xff]
      %v7062 = vld [vmem:[#allocation2 + $0x51] sm:$0xff]
      %7071 = vrot.lane.b32.xlu0 %v7055, 127
      %v7072 = vpop.permute.xlu0 %7071
      %7073 = vrot.lane.b32.xlu0 %v7056, 127
      %v7074 = vpop.permute.xlu0 %7073
      %7075 = vrot.lane.b32.xlu0 %v7057, 127
      %v7076 = vpop.permute.xlu0 %7075
      %7077 = vrot.lane.b32.xlu0 %v7058, 127
      %v7078 = vpop.permute.xlu0 %7077
      %7079 = vrot.lane.b32.xlu0 %v7059, 127
      %v7080 = vpop.permute.xlu0 %7079
      %7081 = vrot.lane.b32.xlu0 %v7060, 127
      %v7082 = vpop.permute.xlu0 %7081
      %7083 = vrot.lane.b32.xlu0 %v7061, 127
      %v7084 = vpop.permute.xlu0 %7083
      %7085 = vrot.lane.b32.xlu0 %v7062, 127
      %v7086 = vpop.permute.xlu0 %7085
      %v7095 = vcombine.low %v7072, %v7080
      %v7096 = vcombine.high %v7072, %v7080
      %v7098 = vunpack.c.l.s4 1983009808
      %v7099 = vunpack.c.0.s8 %v7098
      %v7100 = vlaneseq
      %v7101 = vshrl.u32 %v7100, 7
      %v7102 = vsub.s32 %v7099, %v7101
      %v7103 = vrot.slane %v7095, %v7102
      %v7105 = vunpack.c.l.s4 1983009808
      %v7106 = vunpack.c.0.s8 %v7105
      %v7107 = vlaneseq
      %v7108 = vshrl.u32 %v7107, 7
      %v7109 = vsub.s32 %v7106, %v7108
      %v7110 = vrot.slane %v7096, %v7109
      %v7111 = vcombine.low %v7076, %v7084
      %v7112 = vcombine.high %v7076, %v7084
      %v7114 = vunpack.c.l.s4 1983009808
      %v7115 = vunpack.c.0.s8 %v7114
      %v7116 = vlaneseq
      %v7117 = vshrl.u32 %v7116, 7
      %v7118 = vsub.s32 %v7115, %v7117
      %v7119 = vrot.slane %v7111, %v7118
      %v7121 = vunpack.c.l.s4 1983009808
      %v7122 = vunpack.c.0.s8 %v7121
      %v7123 = vlaneseq
      %v7124 = vshrl.u32 %v7123, 7
      %v7125 = vsub.s32 %v7122, %v7124
      %v7126 = vrot.slane %v7112, %v7125
      %v7127 = vcombine.low %v7103, %v7119
      %v7128 = vcombine.high %v7103, %v7119
      %v7130 = vunpack.c.l.s4 1934713408
      %v7131 = vunpack.c.0.s8 %v7130
      %v7132 = vlaneseq
      %v7133 = vshrl.u32 %v7132, 7
      %v7134 = vsub.s32 %v7131, %v7133
      %v7135 = vrot.slane %v7127, %v7134
      %v7137 = vunpack.c.l.s4 1934713408
      %v7138 = vunpack.c.0.s8 %v7137
      %v7139 = vlaneseq
      %v7140 = vshrl.u32 %v7139, 7
      %v7141 = vsub.s32 %v7138, %v7140
      %v7142 = vrot.slane %v7128, %v7141
      %v7143 = vcombine.low %v7110, %v7126
      %v7144 = vcombine.high %v7110, %v7126
      %v7146 = vunpack.c.l.s4 1934713408
      %v7147 = vunpack.c.0.s8 %v7146
      %v7148 = vlaneseq
      %v7149 = vshrl.u32 %v7148, 7
      %v7150 = vsub.s32 %v7147, %v7149
      %v7151 = vrot.slane %v7143, %v7150
      %v7153 = vunpack.c.l.s4 1934713408
      %v7154 = vunpack.c.0.s8 %v7153
      %v7155 = vlaneseq
      %v7156 = vshrl.u32 %v7155, 7
      %v7157 = vsub.s32 %v7154, %v7156
      %v7158 = vrot.slane %v7144, %v7157
      %v7159 = vcombine.high %v7135, 0.0
      %v7160 = vcombine.high %v7142, 0.0
      %v7161 = vcombine.high %v7151, 0.0
      %v7162 = vcombine.high %v7158, 0.0
      %v7163 = vcombine.low %v7074, %v7082
      %v7164 = vcombine.high %v7074, %v7082
      %v7166 = vunpack.c.l.s4 1983009808
      %v7167 = vunpack.c.0.s8 %v7166
      %v7168 = vlaneseq
      %v7169 = vshrl.u32 %v7168, 7
      %v7170 = vsub.s32 %v7167, %v7169
      %v7171 = vrot.slane %v7163, %v7170
      %v7173 = vunpack.c.l.s4 1983009808
      %v7174 = vunpack.c.0.s8 %v7173
      %v7175 = vlaneseq
      %v7176 = vshrl.u32 %v7175, 7
      %v7177 = vsub.s32 %v7174, %v7176
      %v7178 = vrot.slane %v7164, %v7177
      %v7179 = vcombine.low %v7078, %v7086
      %v7180 = vcombine.high %v7078, %v7086
      %v7182 = vunpack.c.l.s4 1983009808
      %v7183 = vunpack.c.0.s8 %v7182
      %v7184 = vlaneseq
      %v7185 = vshrl.u32 %v7184, 7
      %v7186 = vsub.s32 %v7183, %v7185
      %v7187 = vrot.slane %v7179, %v7186
      %v7189 = vunpack.c.l.s4 1983009808
      %v7190 = vunpack.c.0.s8 %v7189
      %v7191 = vlaneseq
      %v7192 = vshrl.u32 %v7191, 7
      %v7193 = vsub.s32 %v7190, %v7192
      %v7194 = vrot.slane %v7180, %v7193
      %v7195 = vcombine.low %v7171, %v7187
      %v7196 = vcombine.high %v7171, %v7187
      %v7198 = vunpack.c.l.s4 1934713408
      %v7199 = vunpack.c.0.s8 %v7198
      %v7200 = vlaneseq
      %v7201 = vshrl.u32 %v7200, 7
      %v7202 = vsub.s32 %v7199, %v7201
      %v7203 = vrot.slane %v7195, %v7202
      %v7205 = vunpack.c.l.s4 1934713408
      %v7206 = vunpack.c.0.s8 %v7205
      %v7207 = vlaneseq
      %v7208 = vshrl.u32 %v7207, 7
      %v7209 = vsub.s32 %v7206, %v7208
      %v7210 = vrot.slane %v7196, %v7209
      %v7211 = vcombine.low %v7178, %v7194
      %v7212 = vcombine.high %v7178, %v7194
      %v7214 = vunpack.c.l.s4 1934713408
      %v7215 = vunpack.c.0.s8 %v7214
      %v7216 = vlaneseq
      %v7217 = vshrl.u32 %v7216, 7
      %v7218 = vsub.s32 %v7215, %v7217
      %v7219 = vrot.slane %v7211, %v7218
      %v7221 = vunpack.c.l.s4 1934713408
      %v7222 = vunpack.c.0.s8 %v7221
      %v7223 = vlaneseq
      %v7224 = vshrl.u32 %v7223, 7
      %v7225 = vsub.s32 %v7222, %v7224
      %v7226 = vrot.slane %v7212, %v7225
      %v7227 = vcombine.high %v7203, 0.0
      %v7228 = vcombine.high %v7210, 0.0
      %v7229 = vcombine.high %v7219, 0.0
      %v7230 = vcombine.high %v7226, 0.0
      %7232 = vrot.lane.b32.xlu0 %v7159, 16
      %v7233 = vpop.permute.xlu0 %7232
      %7236 = vrot.lane.b32.xlu0 %v7142, 32
      %v7237 = vpop.permute.xlu0 %7236
      %7240 = vrot.lane.b32.xlu0 %v7160, 48
      %v7241 = vpop.permute.xlu0 %7240
      %7244 = vrot.lane.b32.xlu0 %v7151, 64
      %v7245 = vpop.permute.xlu0 %7244
      %7248 = vrot.lane.b32.xlu0 %v7161, 80
      %v7249 = vpop.permute.xlu0 %7248
      %7252 = vrot.lane.b32.xlu0 %v7158, 96
      %v7253 = vpop.permute.xlu0 %7252
      %7256 = vrot.lane.b32.xlu0 %v7162, 112
      %v7257 = vpop.permute.xlu0 %7256
      %7260 = vrot.lane.b32.xlu0 %v7227, 16
      %v7261 = vpop.permute.xlu0 %7260
      %7264 = vrot.lane.b32.xlu0 %v7210, 32
      %v7265 = vpop.permute.xlu0 %7264
      %7268 = vrot.lane.b32.xlu0 %v7228, 48
      %v7269 = vpop.permute.xlu0 %7268
      %7272 = vrot.lane.b32.xlu0 %v7219, 64
      %v7273 = vpop.permute.xlu0 %7272
      %7276 = vrot.lane.b32.xlu0 %v7229, 80
      %v7277 = vpop.permute.xlu0 %7276
      %7280 = vrot.lane.b32.xlu0 %v7226, 96
      %v7281 = vpop.permute.xlu0 %7280
      %7284 = vrot.lane.b32.xlu0 %v7230, 112
      %v7285 = vpop.permute.xlu0 %7284
      %v7287 = vsel %vm1188, %v7135, %v7233
      %v7288 = vsel %vm1190, %v7287, %v7237
      %v7289 = vsel %vm1192, %v7288, %v7241
      %v7290 = vsel %vm1194, %v7289, %v7245
      %v7291 = vsel %vm1196, %v7290, %v7249
      %v7292 = vsel %vm1198, %v7291, %v7253
      %v7293 = vsel %vm1200, %v7292, %v7257
      %v7294 = vsel %vm1188, %v7203, %v7261
      %v7295 = vsel %vm1190, %v7294, %v7265
      %v7296 = vsel %vm1192, %v7295, %v7269
      %v7297 = vsel %vm1194, %v7296, %v7273
      %v7298 = vsel %vm1196, %v7297, %v7277
      %v7299 = vsel %vm1198, %v7298, %v7281
      %v7300 = vsel %vm1200, %v7299, %v7285
      %7301 = vst [vmem:[#allocation3 + $0x20] sm:$0xf] %v7293
      %7302 = vst [vmem:[#allocation3 + $0x28] sm:$0xf] %v7300
      %v7303 = vld [vmem:[#allocation2 + $0x1] sm:$0xff]
      %v7304 = vld [vmem:[#allocation2 + $0x9] sm:$0xff]
      %v7305 = vld [vmem:[#allocation2 + $0x19] sm:$0xff]
      %v7306 = vld [vmem:[#allocation2 + $0x21] sm:$0xff]
      %v7307 = vld [vmem:[#allocation2 + $0x31] sm:$0xff]
      %v7308 = vld [vmem:[#allocation2 + $0x39] sm:$0xff]
      %v7309 = vld [vmem:[#allocation2 + $0x49] sm:$0xff]
      %v7310 = vld [vmem:[#allocation2 + $0x51] sm:$0xff]
      %7319 = vrot.lane.b32.xlu0 %v7303, 126
      %v7320 = vpop.permute.xlu0 %7319
      %7321 = vrot.lane.b32.xlu0 %v7304, 126
      %v7322 = vpop.permute.xlu0 %7321
      %7323 = vrot.lane.b32.xlu0 %v7305, 126
      %v7324 = vpop.permute.xlu0 %7323
      %7325 = vrot.lane.b32.xlu0 %v7306, 126
      %v7326 = vpop.permute.xlu0 %7325
      %7327 = vrot.lane.b32.xlu0 %v7307, 126
      %v7328 = vpop.permute.xlu0 %7327
      %7329 = vrot.lane.b32.xlu0 %v7308, 126
      %v7330 = vpop.permute.xlu0 %7329
      %7331 = vrot.lane.b32.xlu0 %v7309, 126
      %v7332 = vpop.permute.xlu0 %7331
      %7333 = vrot.lane.b32.xlu0 %v7310, 126
      %v7334 = vpop.permute.xlu0 %7333
      %v7343 = vcombine.low %v7320, %v7328
      %v7344 = vcombine.high %v7320, %v7328
      %v7346 = vunpack.c.l.s4 1983009808
      %v7347 = vunpack.c.0.s8 %v7346
      %v7348 = vlaneseq
      %v7349 = vshrl.u32 %v7348, 7
      %v7350 = vsub.s32 %v7347, %v7349
      %v7351 = vrot.slane %v7343, %v7350
      %v7353 = vunpack.c.l.s4 1983009808
      %v7354 = vunpack.c.0.s8 %v7353
      %v7355 = vlaneseq
      %v7356 = vshrl.u32 %v7355, 7
      %v7357 = vsub.s32 %v7354, %v7356
      %v7358 = vrot.slane %v7344, %v7357
      %v7359 = vcombine.low %v7324, %v7332
      %v7360 = vcombine.high %v7324, %v7332
      %v7362 = vunpack.c.l.s4 1983009808
      %v7363 = vunpack.c.0.s8 %v7362
      %v7364 = vlaneseq
      %v7365 = vshrl.u32 %v7364, 7
      %v7366 = vsub.s32 %v7363, %v7365
      %v7367 = vrot.slane %v7359, %v7366
      %v7369 = vunpack.c.l.s4 1983009808
      %v7370 = vunpack.c.0.s8 %v7369
      %v7371 = vlaneseq
      %v7372 = vshrl.u32 %v7371, 7
      %v7373 = vsub.s32 %v7370, %v7372
      %v7374 = vrot.slane %v7360, %v7373
      %v7375 = vcombine.low %v7351, %v7367
      %v7376 = vcombine.high %v7351, %v7367
      %v7378 = vunpack.c.l.s4 1934713408
      %v7379 = vunpack.c.0.s8 %v7378
      %v7380 = vlaneseq
      %v7381 = vshrl.u32 %v7380, 7
      %v7382 = vsub.s32 %v7379, %v7381
      %v7383 = vrot.slane %v7375, %v7382
      %v7385 = vunpack.c.l.s4 1934713408
      %v7386 = vunpack.c.0.s8 %v7385
      %v7387 = vlaneseq
      %v7388 = vshrl.u32 %v7387, 7
      %v7389 = vsub.s32 %v7386, %v7388
      %v7390 = vrot.slane %v7376, %v7389
      %v7391 = vcombine.low %v7358, %v7374
      %v7392 = vcombine.high %v7358, %v7374
      %v7394 = vunpack.c.l.s4 1934713408
      %v7395 = vunpack.c.0.s8 %v7394
      %v7396 = vlaneseq
      %v7397 = vshrl.u32 %v7396, 7
      %v7398 = vsub.s32 %v7395, %v7397
      %v7399 = vrot.slane %v7391, %v7398
      %v7401 = vunpack.c.l.s4 1934713408
      %v7402 = vunpack.c.0.s8 %v7401
      %v7403 = vlaneseq
      %v7404 = vshrl.u32 %v7403, 7
      %v7405 = vsub.s32 %v7402, %v7404
      %v7406 = vrot.slane %v7392, %v7405
      %v7407 = vcombine.high %v7383, 0.0
      %v7408 = vcombine.high %v7390, 0.0
      %v7409 = vcombine.high %v7399, 0.0
      %v7410 = vcombine.high %v7406, 0.0
      %v7411 = vcombine.low %v7322, %v7330
      %v7412 = vcombine.high %v7322, %v7330
      %v7414 = vunpack.c.l.s4 1983009808
      %v7415 = vunpack.c.0.s8 %v7414
      %v7416 = vlaneseq
      %v7417 = vshrl.u32 %v7416, 7
      %v7418 = vsub.s32 %v7415, %v7417
      %v7419 = vrot.slane %v7411, %v7418
      %v7421 = vunpack.c.l.s4 1983009808
      %v7422 = vunpack.c.0.s8 %v7421
      %v7423 = vlaneseq
      %v7424 = vshrl.u32 %v7423, 7
      %v7425 = vsub.s32 %v7422, %v7424
      %v7426 = vrot.slane %v7412, %v7425
      %v7427 = vcombine.low %v7326, %v7334
      %v7428 = vcombine.high %v7326, %v7334
      %v7430 = vunpack.c.l.s4 1983009808
      %v7431 = vunpack.c.0.s8 %v7430
      %v7432 = vlaneseq
      %v7433 = vshrl.u32 %v7432, 7
      %v7434 = vsub.s32 %v7431, %v7433
      %v7435 = vrot.slane %v7427, %v7434
      %v7437 = vunpack.c.l.s4 1983009808
      %v7438 = vunpack.c.0.s8 %v7437
      %v7439 = vlaneseq
      %v7440 = vshrl.u32 %v7439, 7
      %v7441 = vsub.s32 %v7438, %v7440
      %v7442 = vrot.slane %v7428, %v7441
      %v7443 = vcombine.low %v7419, %v7435
      %v7444 = vcombine.high %v7419, %v7435
      %v7446 = vunpack.c.l.s4 1934713408
      %v7447 = vunpack.c.0.s8 %v7446
      %v7448 = vlaneseq
      %v7449 = vshrl.u32 %v7448, 7
      %v7450 = vsub.s32 %v7447, %v7449
      %v7451 = vrot.slane %v7443, %v7450
      %v7453 = vunpack.c.l.s4 1934713408
      %v7454 = vunpack.c.0.s8 %v7453
      %v7455 = vlaneseq
      %v7456 = vshrl.u32 %v7455, 7
      %v7457 = vsub.s32 %v7454, %v7456
      %v7458 = vrot.slane %v7444, %v7457
      %v7459 = vcombine.low %v7426, %v7442
      %v7460 = vcombine.high %v7426, %v7442
      %v7462 = vunpack.c.l.s4 1934713408
      %v7463 = vunpack.c.0.s8 %v7462
      %v7464 = vlaneseq
      %v7465 = vshrl.u32 %v7464, 7
      %v7466 = vsub.s32 %v7463, %v7465
      %v7467 = vrot.slane %v7459, %v7466
      %v7469 = vunpack.c.l.s4 1934713408
      %v7470 = vunpack.c.0.s8 %v7469
      %v7471 = vlaneseq
      %v7472 = vshrl.u32 %v7471, 7
      %v7473 = vsub.s32 %v7470, %v7472
      %v7474 = vrot.slane %v7460, %v7473
      %v7475 = vcombine.high %v7451, 0.0
      %v7476 = vcombine.high %v7458, 0.0
      %v7477 = vcombine.high %v7467, 0.0
      %v7478 = vcombine.high %v7474, 0.0
      %7480 = vrot.lane.b32.xlu0 %v7407, 16
      %v7481 = vpop.permute.xlu0 %7480
      %7484 = vrot.lane.b32.xlu0 %v7390, 32
      %v7485 = vpop.permute.xlu0 %7484
      %7488 = vrot.lane.b32.xlu0 %v7408, 48
      %v7489 = vpop.permute.xlu0 %7488
      %7492 = vrot.lane.b32.xlu0 %v7399, 64
      %v7493 = vpop.permute.xlu0 %7492
      %7496 = vrot.lane.b32.xlu0 %v7409, 80
      %v7497 = vpop.permute.xlu0 %7496
      %7500 = vrot.lane.b32.xlu0 %v7406, 96
      %v7501 = vpop.permute.xlu0 %7500
      %7504 = vrot.lane.b32.xlu0 %v7410, 112
      %v7505 = vpop.permute.xlu0 %7504
      %7508 = vrot.lane.b32.xlu0 %v7475, 16
      %v7509 = vpop.permute.xlu0 %7508
      %7512 = vrot.lane.b32.xlu0 %v7458, 32
      %v7513 = vpop.permute.xlu0 %7512
      %7516 = vrot.lane.b32.xlu0 %v7476, 48
      %v7517 = vpop.permute.xlu0 %7516
      %7520 = vrot.lane.b32.xlu0 %v7467, 64
      %v7521 = vpop.permute.xlu0 %7520
      %7524 = vrot.lane.b32.xlu0 %v7477, 80
      %v7525 = vpop.permute.xlu0 %7524
      %7528 = vrot.lane.b32.xlu0 %v7474, 96
      %v7529 = vpop.permute.xlu0 %7528
      %7532 = vrot.lane.b32.xlu0 %v7478, 112
      %v7533 = vpop.permute.xlu0 %7532
      %v7535 = vsel %vm1188, %v7383, %v7481
      %v7536 = vsel %vm1190, %v7535, %v7485
      %v7537 = vsel %vm1192, %v7536, %v7489
      %v7538 = vsel %vm1194, %v7537, %v7493
      %v7539 = vsel %vm1196, %v7538, %v7497
      %v7540 = vsel %vm1198, %v7539, %v7501
      %v7541 = vsel %vm1200, %v7540, %v7505
      %v7542 = vsel %vm1188, %v7451, %v7509
      %v7543 = vsel %vm1190, %v7542, %v7513
      %v7544 = vsel %vm1192, %v7543, %v7517
      %v7545 = vsel %vm1194, %v7544, %v7521
      %v7546 = vsel %vm1196, %v7545, %v7525
      %v7547 = vsel %vm1198, %v7546, %v7529
      %v7548 = vsel %vm1200, %v7547, %v7533
      %v7551 = vrot.slane %v7541, 4
      %v7552 = vrot.slane %v7548, 4
      %7555 = vst [vmem:[#allocation3 + $0x20] sm:$0xf0] %v7551
      %7556 = vst [vmem:[#allocation3 + $0x28] sm:$0xf0] %v7552
      %v7557 = vld [vmem:[#allocation2 + $0x2] sm:$0xff]
      %v7558 = vld [vmem:[#allocation2 + $0xa] sm:$0xff]
      %v7559 = vld [vmem:[#allocation2 + $0x1a] sm:$0xff]
      %v7560 = vld [vmem:[#allocation2 + $0x22] sm:$0xff]
      %v7561 = vld [vmem:[#allocation2 + $0x32] sm:$0xff]
      %v7562 = vld [vmem:[#allocation2 + $0x3a] sm:$0xff]
      %v7563 = vld [vmem:[#allocation2 + $0x4a] sm:$0xff]
      %v7564 = vld [vmem:[#allocation2 + $0x52] sm:$0xff]
      %v7565 = vcombine.low %v7557, %v7561
      %v7566 = vcombine.high %v7557, %v7561
      %v7568 = vunpack.c.l.s4 1983009808
      %v7569 = vunpack.c.0.s8 %v7568
      %v7570 = vlaneseq
      %v7571 = vshrl.u32 %v7570, 7
      %v7572 = vsub.s32 %v7569, %v7571
      %v7573 = vrot.slane %v7565, %v7572
      %v7575 = vunpack.c.l.s4 1983009808
      %v7576 = vunpack.c.0.s8 %v7575
      %v7577 = vlaneseq
      %v7578 = vshrl.u32 %v7577, 7
      %v7579 = vsub.s32 %v7576, %v7578
      %v7580 = vrot.slane %v7566, %v7579
      %v7581 = vcombine.low %v7559, %v7563
      %v7582 = vcombine.high %v7559, %v7563
      %v7584 = vunpack.c.l.s4 1983009808
      %v7585 = vunpack.c.0.s8 %v7584
      %v7586 = vlaneseq
      %v7587 = vshrl.u32 %v7586, 7
      %v7588 = vsub.s32 %v7585, %v7587
      %v7589 = vrot.slane %v7581, %v7588
      %v7591 = vunpack.c.l.s4 1983009808
      %v7592 = vunpack.c.0.s8 %v7591
      %v7593 = vlaneseq
      %v7594 = vshrl.u32 %v7593, 7
      %v7595 = vsub.s32 %v7592, %v7594
      %v7596 = vrot.slane %v7582, %v7595
      %v7597 = vcombine.low %v7573, %v7589
      %v7598 = vcombine.high %v7573, %v7589
      %v7600 = vunpack.c.l.s4 1934713408
      %v7601 = vunpack.c.0.s8 %v7600
      %v7602 = vlaneseq
      %v7603 = vshrl.u32 %v7602, 7
      %v7604 = vsub.s32 %v7601, %v7603
      %v7605 = vrot.slane %v7597, %v7604
      %v7607 = vunpack.c.l.s4 1934713408
      %v7608 = vunpack.c.0.s8 %v7607
      %v7609 = vlaneseq
      %v7610 = vshrl.u32 %v7609, 7
      %v7611 = vsub.s32 %v7608, %v7610
      %v7612 = vrot.slane %v7598, %v7611
      %v7613 = vcombine.low %v7580, %v7596
      %v7614 = vcombine.high %v7580, %v7596
      %v7616 = vunpack.c.l.s4 1934713408
      %v7617 = vunpack.c.0.s8 %v7616
      %v7618 = vlaneseq
      %v7619 = vshrl.u32 %v7618, 7
      %v7620 = vsub.s32 %v7617, %v7619
      %v7621 = vrot.slane %v7613, %v7620
      %v7623 = vunpack.c.l.s4 1934713408
      %v7624 = vunpack.c.0.s8 %v7623
      %v7625 = vlaneseq
      %v7626 = vshrl.u32 %v7625, 7
      %v7627 = vsub.s32 %v7624, %v7626
      %v7628 = vrot.slane %v7614, %v7627
      %v7629 = vcombine.high %v7605, 0.0
      %v7630 = vcombine.high %v7612, 0.0
      %v7631 = vcombine.high %v7621, 0.0
      %v7632 = vcombine.high %v7628, 0.0
      %v7633 = vcombine.low %v7558, %v7562
      %v7634 = vcombine.high %v7558, %v7562
      %v7636 = vunpack.c.l.s4 1983009808
      %v7637 = vunpack.c.0.s8 %v7636
      %v7638 = vlaneseq
      %v7639 = vshrl.u32 %v7638, 7
      %v7640 = vsub.s32 %v7637, %v7639
      %v7641 = vrot.slane %v7633, %v7640
      %v7643 = vunpack.c.l.s4 1983009808
      %v7644 = vunpack.c.0.s8 %v7643
      %v7645 = vlaneseq
      %v7646 = vshrl.u32 %v7645, 7
      %v7647 = vsub.s32 %v7644, %v7646
      %v7648 = vrot.slane %v7634, %v7647
      %v7649 = vcombine.low %v7560, %v7564
      %v7650 = vcombine.high %v7560, %v7564
      %v7652 = vunpack.c.l.s4 1983009808
      %v7653 = vunpack.c.0.s8 %v7652
      %v7654 = vlaneseq
      %v7655 = vshrl.u32 %v7654, 7
      %v7656 = vsub.s32 %v7653, %v7655
      %v7657 = vrot.slane %v7649, %v7656
      %v7659 = vunpack.c.l.s4 1983009808
      %v7660 = vunpack.c.0.s8 %v7659
      %v7661 = vlaneseq
      %v7662 = vshrl.u32 %v7661, 7
      %v7663 = vsub.s32 %v7660, %v7662
      %v7664 = vrot.slane %v7650, %v7663
      %v7665 = vcombine.low %v7641, %v7657
      %v7666 = vcombine.high %v7641, %v7657
      %v7668 = vunpack.c.l.s4 1934713408
      %v7669 = vunpack.c.0.s8 %v7668
      %v7670 = vlaneseq
      %v7671 = vshrl.u32 %v7670, 7
      %v7672 = vsub.s32 %v7669, %v7671
      %v7673 = vrot.slane %v7665, %v7672
      %v7675 = vunpack.c.l.s4 1934713408
      %v7676 = vunpack.c.0.s8 %v7675
      %v7677 = vlaneseq
      %v7678 = vshrl.u32 %v7677, 7
      %v7679 = vsub.s32 %v7676, %v7678
      %v7680 = vrot.slane %v7666, %v7679
      %v7681 = vcombine.low %v7648, %v7664
      %v7682 = vcombine.high %v7648, %v7664
      %v7684 = vunpack.c.l.s4 1934713408
      %v7685 = vunpack.c.0.s8 %v7684
      %v7686 = vlaneseq
      %v7687 = vshrl.u32 %v7686, 7
      %v7688 = vsub.s32 %v7685, %v7687
      %v7689 = vrot.slane %v7681, %v7688
      %v7691 = vunpack.c.l.s4 1934713408
      %v7692 = vunpack.c.0.s8 %v7691
      %v7693 = vlaneseq
      %v7694 = vshrl.u32 %v7693, 7
      %v7695 = vsub.s32 %v7692, %v7694
      %v7696 = vrot.slane %v7682, %v7695
      %v7697 = vcombine.high %v7673, 0.0
      %v7698 = vcombine.high %v7680, 0.0
      %v7699 = vcombine.high %v7689, 0.0
      %v7700 = vcombine.high %v7696, 0.0
      %7702 = vrot.lane.b32.xlu0 %v7629, 16
      %v7703 = vpop.permute.xlu0 %7702
      %7706 = vrot.lane.b32.xlu0 %v7612, 32
      %v7707 = vpop.permute.xlu0 %7706
      %7710 = vrot.lane.b32.xlu0 %v7630, 48
      %v7711 = vpop.permute.xlu0 %7710
      %7714 = vrot.lane.b32.xlu0 %v7621, 64
      %v7715 = vpop.permute.xlu0 %7714
      %7718 = vrot.lane.b32.xlu0 %v7631, 80
      %v7719 = vpop.permute.xlu0 %7718
      %7722 = vrot.lane.b32.xlu0 %v7628, 96
      %v7723 = vpop.permute.xlu0 %7722
      %7726 = vrot.lane.b32.xlu0 %v7632, 112
      %v7727 = vpop.permute.xlu0 %7726
      %7730 = vrot.lane.b32.xlu0 %v7697, 16
      %v7731 = vpop.permute.xlu0 %7730
      %7734 = vrot.lane.b32.xlu0 %v7680, 32
      %v7735 = vpop.permute.xlu0 %7734
      %7738 = vrot.lane.b32.xlu0 %v7698, 48
      %v7739 = vpop.permute.xlu0 %7738
      %7742 = vrot.lane.b32.xlu0 %v7689, 64
      %v7743 = vpop.permute.xlu0 %7742
      %7746 = vrot.lane.b32.xlu0 %v7699, 80
      %v7747 = vpop.permute.xlu0 %7746
      %7750 = vrot.lane.b32.xlu0 %v7696, 96
      %v7751 = vpop.permute.xlu0 %7750
      %7754 = vrot.lane.b32.xlu0 %v7700, 112
      %v7755 = vpop.permute.xlu0 %7754
      %v7757 = vsel %vm1188, %v7605, %v7703
      %v7758 = vsel %vm1190, %v7757, %v7707
      %v7759 = vsel %vm1192, %v7758, %v7711
      %v7760 = vsel %vm1194, %v7759, %v7715
      %v7761 = vsel %vm1196, %v7760, %v7719
      %v7762 = vsel %vm1198, %v7761, %v7723
      %v7763 = vsel %vm1200, %v7762, %v7727
      %v7764 = vsel %vm1188, %v7673, %v7731
      %v7765 = vsel %vm1190, %v7764, %v7735
      %v7766 = vsel %vm1192, %v7765, %v7739
      %v7767 = vsel %vm1194, %v7766, %v7743
      %v7768 = vsel %vm1196, %v7767, %v7747
      %v7769 = vsel %vm1198, %v7768, %v7751
      %v7770 = vsel %vm1200, %v7769, %v7755
      %7771 = vst [vmem:[#allocation3 + $0x30] sm:$0xf] %v7763
      %7772 = vst [vmem:[#allocation3 + $0x38] sm:$0xf] %v7770
      %v7773 = vld [vmem:[#allocation2 + $0x2] sm:$0xff]
      %v7774 = vld [vmem:[#allocation2 + $0xa] sm:$0xff]
      %v7775 = vld [vmem:[#allocation2 + $0x1a] sm:$0xff]
      %v7776 = vld [vmem:[#allocation2 + $0x22] sm:$0xff]
      %v7777 = vld [vmem:[#allocation2 + $0x32] sm:$0xff]
      %v7778 = vld [vmem:[#allocation2 + $0x3a] sm:$0xff]
      %v7779 = vld [vmem:[#allocation2 + $0x4a] sm:$0xff]
      %v7780 = vld [vmem:[#allocation2 + $0x52] sm:$0xff]
      %7789 = vrot.lane.b32.xlu0 %v7773, 127
      %v7790 = vpop.permute.xlu0 %7789
      %7791 = vrot.lane.b32.xlu0 %v7774, 127
      %v7792 = vpop.permute.xlu0 %7791
      %7793 = vrot.lane.b32.xlu0 %v7775, 127
      %v7794 = vpop.permute.xlu0 %7793
      %7795 = vrot.lane.b32.xlu0 %v7776, 127
      %v7796 = vpop.permute.xlu0 %7795
      %7797 = vrot.lane.b32.xlu0 %v7777, 127
      %v7798 = vpop.permute.xlu0 %7797
      %7799 = vrot.lane.b32.xlu0 %v7778, 127
      %v7800 = vpop.permute.xlu0 %7799
      %7801 = vrot.lane.b32.xlu0 %v7779, 127
      %v7802 = vpop.permute.xlu0 %7801
      %7803 = vrot.lane.b32.xlu0 %v7780, 127
      %v7804 = vpop.permute.xlu0 %7803
      %v7813 = vcombine.low %v7790, %v7798
      %v7814 = vcombine.high %v7790, %v7798
      %v7816 = vunpack.c.l.s4 1983009808
      %v7817 = vunpack.c.0.s8 %v7816
      %v7818 = vlaneseq
      %v7819 = vshrl.u32 %v7818, 7
      %v7820 = vsub.s32 %v7817, %v7819
      %v7821 = vrot.slane %v7813, %v7820
      %v7823 = vunpack.c.l.s4 1983009808
      %v7824 = vunpack.c.0.s8 %v7823
      %v7825 = vlaneseq
      %v7826 = vshrl.u32 %v7825, 7
      %v7827 = vsub.s32 %v7824, %v7826
      %v7828 = vrot.slane %v7814, %v7827
      %v7829 = vcombine.low %v7794, %v7802
      %v7830 = vcombine.high %v7794, %v7802
      %v7832 = vunpack.c.l.s4 1983009808
      %v7833 = vunpack.c.0.s8 %v7832
      %v7834 = vlaneseq
      %v7835 = vshrl.u32 %v7834, 7
      %v7836 = vsub.s32 %v7833, %v7835
      %v7837 = vrot.slane %v7829, %v7836
      %v7839 = vunpack.c.l.s4 1983009808
      %v7840 = vunpack.c.0.s8 %v7839
      %v7841 = vlaneseq
      %v7842 = vshrl.u32 %v7841, 7
      %v7843 = vsub.s32 %v7840, %v7842
      %v7844 = vrot.slane %v7830, %v7843
      %v7845 = vcombine.low %v7821, %v7837
      %v7846 = vcombine.high %v7821, %v7837
      %v7848 = vunpack.c.l.s4 1934713408
      %v7849 = vunpack.c.0.s8 %v7848
      %v7850 = vlaneseq
      %v7851 = vshrl.u32 %v7850, 7
      %v7852 = vsub.s32 %v7849, %v7851
      %v7853 = vrot.slane %v7845, %v7852
      %v7855 = vunpack.c.l.s4 1934713408
      %v7856 = vunpack.c.0.s8 %v7855
      %v7857 = vlaneseq
      %v7858 = vshrl.u32 %v7857, 7
      %v7859 = vsub.s32 %v7856, %v7858
      %v7860 = vrot.slane %v7846, %v7859
      %v7861 = vcombine.low %v7828, %v7844
      %v7862 = vcombine.high %v7828, %v7844
      %v7864 = vunpack.c.l.s4 1934713408
      %v7865 = vunpack.c.0.s8 %v7864
      %v7866 = vlaneseq
      %v7867 = vshrl.u32 %v7866, 7
      %v7868 = vsub.s32 %v7865, %v7867
      %v7869 = vrot.slane %v7861, %v7868
      %v7871 = vunpack.c.l.s4 1934713408
      %v7872 = vunpack.c.0.s8 %v7871
      %v7873 = vlaneseq
      %v7874 = vshrl.u32 %v7873, 7
      %v7875 = vsub.s32 %v7872, %v7874
      %v7876 = vrot.slane %v7862, %v7875
      %v7877 = vcombine.high %v7853, 0.0
      %v7878 = vcombine.high %v7860, 0.0
      %v7879 = vcombine.high %v7869, 0.0
      %v7880 = vcombine.high %v7876, 0.0
      %v7881 = vcombine.low %v7792, %v7800
      %v7882 = vcombine.high %v7792, %v7800
      %v7884 = vunpack.c.l.s4 1983009808
      %v7885 = vunpack.c.0.s8 %v7884
      %v7886 = vlaneseq
      %v7887 = vshrl.u32 %v7886, 7
      %v7888 = vsub.s32 %v7885, %v7887
      %v7889 = vrot.slane %v7881, %v7888
      %v7891 = vunpack.c.l.s4 1983009808
      %v7892 = vunpack.c.0.s8 %v7891
      %v7893 = vlaneseq
      %v7894 = vshrl.u32 %v7893, 7
      %v7895 = vsub.s32 %v7892, %v7894
      %v7896 = vrot.slane %v7882, %v7895
      %v7897 = vcombine.low %v7796, %v7804
      %v7898 = vcombine.high %v7796, %v7804
      %v7900 = vunpack.c.l.s4 1983009808
      %v7901 = vunpack.c.0.s8 %v7900
      %v7902 = vlaneseq
      %v7903 = vshrl.u32 %v7902, 7
      %v7904 = vsub.s32 %v7901, %v7903
      %v7905 = vrot.slane %v7897, %v7904
      %v7907 = vunpack.c.l.s4 1983009808
      %v7908 = vunpack.c.0.s8 %v7907
      %v7909 = vlaneseq
      %v7910 = vshrl.u32 %v7909, 7
      %v7911 = vsub.s32 %v7908, %v7910
      %v7912 = vrot.slane %v7898, %v7911
      %v7913 = vcombine.low %v7889, %v7905
      %v7914 = vcombine.high %v7889, %v7905
      %v7916 = vunpack.c.l.s4 1934713408
      %v7917 = vunpack.c.0.s8 %v7916
      %v7918 = vlaneseq
      %v7919 = vshrl.u32 %v7918, 7
      %v7920 = vsub.s32 %v7917, %v7919
      %v7921 = vrot.slane %v7913, %v7920
      %v7923 = vunpack.c.l.s4 1934713408
      %v7924 = vunpack.c.0.s8 %v7923
      %v7925 = vlaneseq
      %v7926 = vshrl.u32 %v7925, 7
      %v7927 = vsub.s32 %v7924, %v7926
      %v7928 = vrot.slane %v7914, %v7927
      %v7929 = vcombine.low %v7896, %v7912
      %v7930 = vcombine.high %v7896, %v7912
      %v7932 = vunpack.c.l.s4 1934713408
      %v7933 = vunpack.c.0.s8 %v7932
      %v7934 = vlaneseq
      %v7935 = vshrl.u32 %v7934, 7
      %v7936 = vsub.s32 %v7933, %v7935
      %v7937 = vrot.slane %v7929, %v7936
      %v7939 = vunpack.c.l.s4 1934713408
      %v7940 = vunpack.c.0.s8 %v7939
      %v7941 = vlaneseq
      %v7942 = vshrl.u32 %v7941, 7
      %v7943 = vsub.s32 %v7940, %v7942
      %v7944 = vrot.slane %v7930, %v7943
      %v7945 = vcombine.high %v7921, 0.0
      %v7946 = vcombine.high %v7928, 0.0
      %v7947 = vcombine.high %v7937, 0.0
      %v7948 = vcombine.high %v7944, 0.0
      %7950 = vrot.lane.b32.xlu0 %v7877, 16
      %v7951 = vpop.permute.xlu0 %7950
      %7954 = vrot.lane.b32.xlu0 %v7860, 32
      %v7955 = vpop.permute.xlu0 %7954
      %7958 = vrot.lane.b32.xlu0 %v7878, 48
      %v7959 = vpop.permute.xlu0 %7958
      %7962 = vrot.lane.b32.xlu0 %v7869, 64
      %v7963 = vpop.permute.xlu0 %7962
      %7966 = vrot.lane.b32.xlu0 %v7879, 80
      %v7967 = vpop.permute.xlu0 %7966
      %7970 = vrot.lane.b32.xlu0 %v7876, 96
      %v7971 = vpop.permute.xlu0 %7970
      %7974 = vrot.lane.b32.xlu0 %v7880, 112
      %v7975 = vpop.permute.xlu0 %7974
      %7978 = vrot.lane.b32.xlu0 %v7945, 16
      %v7979 = vpop.permute.xlu0 %7978
      %7982 = vrot.lane.b32.xlu0 %v7928, 32
      %v7983 = vpop.permute.xlu0 %7982
      %7986 = vrot.lane.b32.xlu0 %v7946, 48
      %v7987 = vpop.permute.xlu0 %7986
      %7990 = vrot.lane.b32.xlu0 %v7937, 64
      %v7991 = vpop.permute.xlu0 %7990
      %7994 = vrot.lane.b32.xlu0 %v7947, 80
      %v7995 = vpop.permute.xlu0 %7994
      %7998 = vrot.lane.b32.xlu0 %v7944, 96
      %v7999 = vpop.permute.xlu0 %7998
      %8002 = vrot.lane.b32.xlu0 %v7948, 112
      %v8003 = vpop.permute.xlu0 %8002
      %v8005 = vsel %vm1188, %v7853, %v7951
      %v8006 = vsel %vm1190, %v8005, %v7955
      %v8007 = vsel %vm1192, %v8006, %v7959
      %v8008 = vsel %vm1194, %v8007, %v7963
      %v8009 = vsel %vm1196, %v8008, %v7967
      %v8010 = vsel %vm1198, %v8009, %v7971
      %v8011 = vsel %vm1200, %v8010, %v7975
      %v8012 = vsel %vm1188, %v7921, %v7979
      %v8013 = vsel %vm1190, %v8012, %v7983
      %v8014 = vsel %vm1192, %v8013, %v7987
      %v8015 = vsel %vm1194, %v8014, %v7991
      %v8016 = vsel %vm1196, %v8015, %v7995
      %v8017 = vsel %vm1198, %v8016, %v7999
      %v8018 = vsel %vm1200, %v8017, %v8003
      %v8021 = vrot.slane %v8011, 4
      %v8022 = vrot.slane %v8018, 4
      %8025 = vst [vmem:[#allocation3 + $0x30] sm:$0xf0] %v8021
      %8026 = vst [vmem:[#allocation3 + $0x38] sm:$0xf0] %v8022
      %v8027 = vld [vmem:[#allocation2 + $0x2] sm:$0xff]
      %v8028 = vld [vmem:[#allocation2 + $0xa] sm:$0xff]
      %v8029 = vld [vmem:[#allocation2 + $0x1a] sm:$0xff]
      %v8030 = vld [vmem:[#allocation2 + $0x22] sm:$0xff]
      %v8031 = vld [vmem:[#allocation2 + $0x32] sm:$0xff]
      %v8032 = vld [vmem:[#allocation2 + $0x3a] sm:$0xff]
      %v8033 = vld [vmem:[#allocation2 + $0x4a] sm:$0xff]
      %v8034 = vld [vmem:[#allocation2 + $0x52] sm:$0xff]
      %8043 = vrot.lane.b32.xlu0 %v8027, 126
      %v8044 = vpop.permute.xlu0 %8043
      %8045 = vrot.lane.b32.xlu0 %v8028, 126
      %v8046 = vpop.permute.xlu0 %8045
      %8047 = vrot.lane.b32.xlu0 %v8029, 126
      %v8048 = vpop.permute.xlu0 %8047
      %8049 = vrot.lane.b32.xlu0 %v8030, 126
      %v8050 = vpop.permute.xlu0 %8049
      %8051 = vrot.lane.b32.xlu0 %v8031, 126
      %v8052 = vpop.permute.xlu0 %8051
      %8053 = vrot.lane.b32.xlu0 %v8032, 126
      %v8054 = vpop.permute.xlu0 %8053
      %8055 = vrot.lane.b32.xlu0 %v8033, 126
      %v8056 = vpop.permute.xlu0 %8055
      %8057 = vrot.lane.b32.xlu0 %v8034, 126
      %v8058 = vpop.permute.xlu0 %8057
      %v8067 = vcombine.low %v8044, %v8052
      %v8068 = vcombine.high %v8044, %v8052
      %v8070 = vunpack.c.l.s4 1983009808
      %v8071 = vunpack.c.0.s8 %v8070
      %v8072 = vlaneseq
      %v8073 = vshrl.u32 %v8072, 7
      %v8074 = vsub.s32 %v8071, %v8073
      %v8075 = vrot.slane %v8067, %v8074
      %v8077 = vunpack.c.l.s4 1983009808
      %v8078 = vunpack.c.0.s8 %v8077
      %v8079 = vlaneseq
      %v8080 = vshrl.u32 %v8079, 7
      %v8081 = vsub.s32 %v8078, %v8080
      %v8082 = vrot.slane %v8068, %v8081
      %v8083 = vcombine.low %v8048, %v8056
      %v8084 = vcombine.high %v8048, %v8056
      %v8086 = vunpack.c.l.s4 1983009808
      %v8087 = vunpack.c.0.s8 %v8086
      %v8088 = vlaneseq
      %v8089 = vshrl.u32 %v8088, 7
      %v8090 = vsub.s32 %v8087, %v8089
      %v8091 = vrot.slane %v8083, %v8090
      %v8093 = vunpack.c.l.s4 1983009808
      %v8094 = vunpack.c.0.s8 %v8093
      %v8095 = vlaneseq
      %v8096 = vshrl.u32 %v8095, 7
      %v8097 = vsub.s32 %v8094, %v8096
      %v8098 = vrot.slane %v8084, %v8097
      %v8099 = vcombine.low %v8075, %v8091
      %v8100 = vcombine.high %v8075, %v8091
      %v8102 = vunpack.c.l.s4 1934713408
      %v8103 = vunpack.c.0.s8 %v8102
      %v8104 = vlaneseq
      %v8105 = vshrl.u32 %v8104, 7
      %v8106 = vsub.s32 %v8103, %v8105
      %v8107 = vrot.slane %v8099, %v8106
      %v8109 = vunpack.c.l.s4 1934713408
      %v8110 = vunpack.c.0.s8 %v8109
      %v8111 = vlaneseq
      %v8112 = vshrl.u32 %v8111, 7
      %v8113 = vsub.s32 %v8110, %v8112
      %v8114 = vrot.slane %v8100, %v8113
      %v8115 = vcombine.low %v8082, %v8098
      %v8116 = vcombine.high %v8082, %v8098
      %v8118 = vunpack.c.l.s4 1934713408
      %v8119 = vunpack.c.0.s8 %v8118
      %v8120 = vlaneseq
      %v8121 = vshrl.u32 %v8120, 7
      %v8122 = vsub.s32 %v8119, %v8121
      %v8123 = vrot.slane %v8115, %v8122
      %v8125 = vunpack.c.l.s4 1934713408
      %v8126 = vunpack.c.0.s8 %v8125
      %v8127 = vlaneseq
      %v8128 = vshrl.u32 %v8127, 7
      %v8129 = vsub.s32 %v8126, %v8128
      %v8130 = vrot.slane %v8116, %v8129
      %v8131 = vcombine.high %v8107, 0.0
      %v8132 = vcombine.high %v8114, 0.0
      %v8133 = vcombine.high %v8123, 0.0
      %v8134 = vcombine.high %v8130, 0.0
      %v8135 = vcombine.low %v8046, %v8054
      %v8136 = vcombine.high %v8046, %v8054
      %v8138 = vunpack.c.l.s4 1983009808
      %v8139 = vunpack.c.0.s8 %v8138
      %v8140 = vlaneseq
      %v8141 = vshrl.u32 %v8140, 7
      %v8142 = vsub.s32 %v8139, %v8141
      %v8143 = vrot.slane %v8135, %v8142
      %v8145 = vunpack.c.l.s4 1983009808
      %v8146 = vunpack.c.0.s8 %v8145
      %v8147 = vlaneseq
      %v8148 = vshrl.u32 %v8147, 7
      %v8149 = vsub.s32 %v8146, %v8148
      %v8150 = vrot.slane %v8136, %v8149
      %v8151 = vcombine.low %v8050, %v8058
      %v8152 = vcombine.high %v8050, %v8058
      %v8154 = vunpack.c.l.s4 1983009808
      %v8155 = vunpack.c.0.s8 %v8154
      %v8156 = vlaneseq
      %v8157 = vshrl.u32 %v8156, 7
      %v8158 = vsub.s32 %v8155, %v8157
      %v8159 = vrot.slane %v8151, %v8158
      %v8161 = vunpack.c.l.s4 1983009808
      %v8162 = vunpack.c.0.s8 %v8161
      %v8163 = vlaneseq
      %v8164 = vshrl.u32 %v8163, 7
      %v8165 = vsub.s32 %v8162, %v8164
      %v8166 = vrot.slane %v8152, %v8165
      %v8167 = vcombine.low %v8143, %v8159
      %v8168 = vcombine.high %v8143, %v8159
      %v8170 = vunpack.c.l.s4 1934713408
      %v8171 = vunpack.c.0.s8 %v8170
      %v8172 = vlaneseq
      %v8173 = vshrl.u32 %v8172, 7
      %v8174 = vsub.s32 %v8171, %v8173
      %v8175 = vrot.slane %v8167, %v8174
      %v8177 = vunpack.c.l.s4 1934713408
      %v8178 = vunpack.c.0.s8 %v8177
      %v8179 = vlaneseq
      %v8180 = vshrl.u32 %v8179, 7
      %v8181 = vsub.s32 %v8178, %v8180
      %v8182 = vrot.slane %v8168, %v8181
      %v8183 = vcombine.low %v8150, %v8166
      %v8184 = vcombine.high %v8150, %v8166
      %v8186 = vunpack.c.l.s4 1934713408
      %v8187 = vunpack.c.0.s8 %v8186
      %v8188 = vlaneseq
      %v8189 = vshrl.u32 %v8188, 7
      %v8190 = vsub.s32 %v8187, %v8189
      %v8191 = vrot.slane %v8183, %v8190
      %v8193 = vunpack.c.l.s4 1934713408
      %v8194 = vunpack.c.0.s8 %v8193
      %v8195 = vlaneseq
      %v8196 = vshrl.u32 %v8195, 7
      %v8197 = vsub.s32 %v8194, %v8196
      %v8198 = vrot.slane %v8184, %v8197
      %v8199 = vcombine.high %v8175, 0.0
      %v8200 = vcombine.high %v8182, 0.0
      %v8201 = vcombine.high %v8191, 0.0
      %v8202 = vcombine.high %v8198, 0.0
      %8204 = vrot.lane.b32.xlu0 %v8131, 16
      %v8205 = vpop.permute.xlu0 %8204
      %8208 = vrot.lane.b32.xlu0 %v8114, 32
      %v8209 = vpop.permute.xlu0 %8208
      %8212 = vrot.lane.b32.xlu0 %v8132, 48
      %v8213 = vpop.permute.xlu0 %8212
      %8216 = vrot.lane.b32.xlu0 %v8123, 64
      %v8217 = vpop.permute.xlu0 %8216
      %8220 = vrot.lane.b32.xlu0 %v8133, 80
      %v8221 = vpop.permute.xlu0 %8220
      %8224 = vrot.lane.b32.xlu0 %v8130, 96
      %v8225 = vpop.permute.xlu0 %8224
      %8228 = vrot.lane.b32.xlu0 %v8134, 112
      %v8229 = vpop.permute.xlu0 %8228
      %8232 = vrot.lane.b32.xlu0 %v8199, 16
      %v8233 = vpop.permute.xlu0 %8232
      %8236 = vrot.lane.b32.xlu0 %v8182, 32
      %v8237 = vpop.permute.xlu0 %8236
      %8240 = vrot.lane.b32.xlu0 %v8200, 48
      %v8241 = vpop.permute.xlu0 %8240
      %8244 = vrot.lane.b32.xlu0 %v8191, 64
      %v8245 = vpop.permute.xlu0 %8244
      %8248 = vrot.lane.b32.xlu0 %v8201, 80
      %v8249 = vpop.permute.xlu0 %8248
      %8252 = vrot.lane.b32.xlu0 %v8198, 96
      %v8253 = vpop.permute.xlu0 %8252
      %8256 = vrot.lane.b32.xlu0 %v8202, 112
      %v8257 = vpop.permute.xlu0 %8256
      %v8259 = vsel %vm1188, %v8107, %v8205
      %v8260 = vsel %vm1190, %v8259, %v8209
      %v8261 = vsel %vm1192, %v8260, %v8213
      %v8262 = vsel %vm1194, %v8261, %v8217
      %v8263 = vsel %vm1196, %v8262, %v8221
      %v8264 = vsel %vm1198, %v8263, %v8225
      %v8265 = vsel %vm1200, %v8264, %v8229
      %v8266 = vsel %vm1188, %v8175, %v8233
      %v8267 = vsel %vm1190, %v8266, %v8237
      %v8268 = vsel %vm1192, %v8267, %v8241
      %v8269 = vsel %vm1194, %v8268, %v8245
      %v8270 = vsel %vm1196, %v8269, %v8249
      %v8271 = vsel %vm1198, %v8270, %v8253
      %v8272 = vsel %vm1200, %v8271, %v8257
      %8273 = vst [vmem:[#allocation3 + $0x40] sm:$0xf] %v8265
      %8274 = vst [vmem:[#allocation3 + $0x48] sm:$0xf] %v8272
      %v8275 = vld [vmem:[%s17] sm:$0x3]
      %v8276 = vld [vmem:[#allocation3] sm:$0xff]
      %v8277 = vld [vmem:[#allocation3 + $0x8] sm:$0xff]
      %v8278 = vld [vmem:[#allocation3 + $0x10] sm:$0xff]
      %v8279 = vld [vmem:[#allocation3 + $0x18] sm:$0xff]
      %v8280 = vld [vmem:[#allocation3 + $0x20] sm:$0xff]
      %v8281 = vld [vmem:[#allocation3 + $0x28] sm:$0xff]
      %v8282 = vld [vmem:[#allocation3 + $0x30] sm:$0xff]
      %v8283 = vld [vmem:[#allocation3 + $0x38] sm:$0xff]
      %v8284 = vld [vmem:[#allocation3 + $0x40] sm:$0xf]
      %v8285 = vld [vmem:[#allocation3 + $0x48] sm:$0xf]
      %v8286 = vpack.c.bf16 %v8278, %v8276
      %v8287 = vpack.c.bf16 %v8279, %v8277
      %v8288 = vpack.c.bf16 %v8282, %v8280
      %v8289 = vpack.c.bf16 %v8283, %v8281
      %v8290 = vpack.c.bf16 %v8284, %v8284
      %v8291 = vpack.c.bf16 %v8285, %v8285
      %v8292 = vld [vmem:[%s18] sm:$0xf]
      %8294 = vset.pattern.permute.xlu0 0
      %8295 = vperm.xlu0 %8294, %v8292
      %v8296 = vpop.permute.xlu0 %8295
      %v8299 = vsel %vm3178, %v8275, 0
      %v8302 = vsel %vm3182, %v8290, 0
      %v8305 = vsel %vm3182, %v8291, 0
      %8307 = vmatprep.subr.bf16.mxu0 %v8287
      %8308 = vmatpush1.bf16.msra.mxu0 %v8286
      %8309 = vmatprep.subr.bf16.mxu0 %v8289
      %8310 = vmatpush1.bf16.msra.mxu0 %v8288
      %8311 = vmatprep.subr.bf16.mxu0 %v8305
      %8312 = vmatpush1.bf16.msra.mxu0 %v8302
      %8313 = vmatprep.subr.bf16.mxu0 0
      %8314 = vmatpush1.bf16.msra.mxu0 0
      %8315 = vmatprep.subr.bf16.mxu0 0
      %8316 = vmatpush1.bf16.msra.mxu0 0
      %8317 = vmatprep.subr.bf16.mxu0 0
      %8318 = vmatpush1.bf16.msra.mxu0 0
      %8319 = vmatprep.subr.bf16.mxu0 0
      %8320 = vmatpush1.bf16.msra.mxu0 0
      %8321 = vmatprep.subr.bf16.mxu0 0
      %8322 = vmatpush1.bf16.msra.mxu0 0
      %8323 = vmatprep.subr.bf16.mxu0 0
      %8324 = vmatpush1.bf16.msra.mxu0 0
      %8325 = vmatprep.subr.bf16.mxu0 0
      %8326 = vmatpush1.bf16.msra.mxu0 0
      %8327 = vmatprep.subr.bf16.mxu0 0
      %8328 = vmatpush1.bf16.msra.mxu0 0
      %8329 = vmatprep.subr.bf16.mxu0 0
      %8330 = vmatpush1.bf16.msra.mxu0 0
      %8331 = vmatprep.subr.bf16.mxu0 0
      %8332 = vmatpush1.bf16.msra.mxu0 0
      %8333 = vmatprep.subr.bf16.mxu0 0
      %8334 = vmatpush1.bf16.msra.mxu0 0
      %8335 = vmatprep.subr.bf16.mxu0 0
      %8336 = vmatpush1.bf16.msra.mxu0 0
      %8337 = vmatprep.subr.bf16.mxu0 0
      %8338 = vmatpush1.bf16.msra.mxu0 0
      %8339 = vmatprep.mubr.bf16.mxu0 0
      %8340 = vmatmul.mubr.bf16.gmra.mrb[0].mxu0 %v8299
      %v8341 = vpop.f32.mrb[0].mxu0
      %v8342 = vadd.f32 %v8296, %v8341
      %v8343 = vpop.f32.mrb[0].mxu0
      %v8344 = vadd.f32 %v8296, %v8343
      %v8345 = vpop.f32.mrb[0].mxu0
      %v8346 = vpop.f32.mrb[0].mxu0
      %8347 = vdwg.mxu0
      %v8348 = vsub.f32 0.0, %v8342
      %v8349 = vsub.f32 0.0, %v8344
      %v8350 = vmul.f32 %v8348, 1.442695
      %v8351 = vpow.pop %v8350
      %v8352 = vmul.f32 %v8349, 1.442695
      %v8353 = vpow.pop %v8352
      %v8354 = vadd.f32 %v8351, 1.0
      %v8355 = vadd.f32 %v8353, 1.0
      %v8356 = vrcp.pop %v8354
      %v8357 = vrcp.pop %v8355
      %v8358 = vmul.f32 %v8342, %v8356
      %v8359 = vmul.f32 %v8344, %v8357
      %8360 = vst [vmem:[#allocation4 + $0x10] sm:$0xf] %v8358
      %8361 = vst [vmem:[#allocation4 + $0x18] sm:$0xf] %v8359
      %v8362 = vld [vmem:[%s19] sm:$0xf]
      %v8363 = vld [vmem:[#allocation4] sm:$0xff]
      %v8364 = vld [vmem:[#allocation4 + $0x8] sm:$0xff]
      %v8365 = vld [vmem:[#allocation4 + $0x10] sm:$0xf]
      %v8366 = vld [vmem:[#allocation4 + $0x18] sm:$0xf]
      %v8367 = vpack.c.bf16 %v8365, %v8363
      %v8368 = vpack.c.bf16 %v8366, %v8364
      %v8369 = vld [vmem:[%s20] sm:$0xff]
      %8371 = vset.pattern.permute.xlu0 0
      %8372 = vperm.xlu0 %8371, %v8369
      %v8373 = vpop.permute.xlu0 %8372
      %vm8375 = vcmask 97280
      %v8377 = vsel %vm8375, %v8362, 0
      %vm8379 = vcmask 1045504
      %v8381 = vsel %vm8379, %v8367, 0
      %v8384 = vsel %vm8379, %v8368, 0
      %8386 = vmatprep.subr.bf16.mxu0 %v8384
      %8387 = vmatpush1.bf16.msra.mxu0 %v8381
      %8388 = vmatprep.subr.bf16.mxu0 0
      %8389 = vmatpush1.bf16.msra.mxu0 0
      %8390 = vmatprep.subr.bf16.mxu0 0
      %8391 = vmatpush1.bf16.msra.mxu0 0
      %8392 = vmatprep.subr.bf16.mxu0 0
      %8393 = vmatpush1.bf16.msra.mxu0 0
      %8394 = vmatprep.subr.bf16.mxu0 0
      %8395 = vmatpush1.bf16.msra.mxu0 0
      %8396 = vmatprep.subr.bf16.mxu0 0
      %8397 = vmatpush1.bf16.msra.mxu0 0
      %8398 = vmatprep.subr.bf16.mxu0 0
      %8399 = vmatpush1.bf16.msra.mxu0 0
      %8400 = vmatprep.subr.bf16.mxu0 0
      %8401 = vmatpush1.bf16.msra.mxu0 0
      %8402 = vmatprep.subr.bf16.mxu0 0
      %8403 = vmatpush1.bf16.msra.mxu0 0
      %8404 = vmatprep.subr.bf16.mxu0 0
      %8405 = vmatpush1.bf16.msra.mxu0 0
      %8406 = vmatprep.subr.bf16.mxu0 0
      %8407 = vmatpush1.bf16.msra.mxu0 0
      %8408 = vmatprep.subr.bf16.mxu0 0
      %8409 = vmatpush1.bf16.msra.mxu0 0
      %8410 = vmatprep.subr.bf16.mxu0 0
      %8411 = vmatpush1.bf16.msra.mxu0 0
      %8412 = vmatprep.subr.bf16.mxu0 0
      %8413 = vmatpush1.bf16.msra.mxu0 0
      %8414 = vmatprep.subr.bf16.mxu0 0
      %8415 = vmatpush1.bf16.msra.mxu0 0
      %8416 = vmatprep.subr.bf16.mxu0 0
      %8417 = vmatpush1.bf16.msra.mxu0 0
      %8418 = vmatprep.mubr.bf16.mxu0 0
      %8419 = vmatmul.mubr.bf16.gmra.mrb[0].mxu0 %v8377
      %v8420 = vpop.f32.mrb[0].mxu0
      %v8421 = vadd.f32 %v8373, %v8420
      %v8422 = vpop.f32.mrb[0].mxu0
      %v8423 = vadd.f32 %v8373, %v8422
      %v8424 = vpop.f32.mrb[0].mxu0
      %v8425 = vpop.f32.mrb[0].mxu0
      %8426 = vdwg.mxu0
      %v8427 = vsub.f32 0.0, %v8421
      %v8428 = vsub.f32 0.0, %v8423
      %v8429 = vmul.f32 %v8427, 1.442695
      %v8430 = vpow.pop %v8429
      %v8431 = vmul.f32 %v8428, 1.442695
      %v8432 = vpow.pop %v8431
      %v8433 = vadd.f32 %v8430, 1.0
      %v8434 = vadd.f32 %v8432, 1.0
      %v8435 = vrcp.pop %v8433
      %v8436 = vrcp.pop %v8434
      %v8437 = vmul.f32 %v8421, %v8435
      %v8438 = vmul.f32 %v8423, %v8436
      %8439 = vst [vmem:[%s656] sm:$0xff] %v8437
      %8440 = vst [vmem:[%s656 + $0x8] sm:$0xff] %v8438
      %p8441 = scmp.lt.s32.totalorder %s32, 1
      %s8442 = scalar_select %p8441, %s32, 1
      %s8443 = smul.addr %s8442, 2
      %s8444 = smul.addr %s8443, 8
      %s8445 = scalar_lea.vmem %s21, %s8444
      // Predicated region
      $region105: #{c2f_cmunextb_forward.1} parent=103 // pred_check
        %p8446 = pneg %p496
      $region106: #{c2f_cmunextb_forward.1} parent=103 // pred_check_branch
        %8448 = sbr.rel (%p8446) target = $region108
      $region107: #{c2f_cmunextb_forward.1} parent=103 // pred_region
        _
      $region108: #{c2f_cmunextb_forward.1} parent=103 // pred_fallthru
        _
    $region104: #{c2f_cmunextb_forward.1} parent=5 // pred_fallthru
      _
    %p8449 = scmp.le.s32.totalorder 2, %s27
    // Predicated region
    $region109: #{c2f_cmunextb_forward.1} parent=5 // pred_check
      %p8450 = pneg %p8449
    $region110: #{c2f_cmunextb_forward.1} parent=5 // pred_check_branch
      %8452 = sbr.rel (%p8450) target = $region112
    $region111: #{c2f_cmunextb_forward.1} parent=5 // pred_region
      %s8453 = ssub.s32 %s27, 2
      // Predicated region
      $region113: #{c2f_cmunextb_forward.1} parent=111 // pred_check
        %p8454 = pneg %p502
      $region114: #{c2f_cmunextb_forward.1} parent=111 // pred_check_branch
        %8456 = sbr.rel (%p8454) target = $region116
      $region115: #{c2f_cmunextb_forward.1} parent=111 // pred_region
        %p8457 = scmp.lt.s32.totalorder %s33, 1
        %s8458 = scalar_select %p8457, %s33, 1
        %s8459 = smul.addr %s8458, 2
        %s8460 = smul.addr %s8459, 8
        %s8461 = scalar_lea.vmem %s21, %s8460
      $region116: #{c2f_cmunextb_forward.1} parent=111 // pred_fallthru
        _
    $region112: #{c2f_cmunextb_forward.1} parent=5 // pred_fallthru
      _
  $region6: #{c2f_cmunextb_forward.1} parent=0 // loop_footer
    %s31 = sadd.s32 1, %s27
  $region7: #{c2f_cmunextb_forward.1} parent=0 // loop_footer_branch
    %26 = sbr.rel target = $region3
  $region8: #{c2f_cmunextb_forward.1} parent=0 // loop_exit
    _

</llo_original>
